<compile_context>
chip_gen: v7x
topology: tpu7x:2x2x1
jax: 0.10.0
libtpu: 0.0.40
codegen_flags: <defaults>
</compile_context>

<pallas_src>
import jax
import jax.numpy as jnp
from jax.experimental import pallas as pl
from jax.experimental.pallas import tpu as pltpu


# ----------------------------- Pallas kernels ------------------------------ #

def _matmul_bias_relu_kernel(x_ref, w_ref, b_ref, o_ref):
    acc = jnp.dot(x_ref[...], w_ref[...], preferred_element_type=jnp.float32)
    o_ref[...] = jnp.maximum(acc + b_ref[...], 0.0).astype(o_ref.dtype)


def matmul_bias_relu(x, w, b):
    """relu(x @ w + b).  x:[M,K] bf16, w:[K,N] bf16, b:[1,N] f32 -> [M,N] bf16.

    Single full-M / full-K block: at GT_Net sizes (M <= 3528, K <= 256) the
    whole GEMM is well under 1 MB of VMEM, so one grid step beats any tiling —
    the ~0.35 us per-step overhead dominates these tiny layers."""
    M, K = x.shape
    _, N = w.shape
    # TODO(synk): add an M-tiled (cdiv grid, "parallel" for v7x megacore) path
    # for training-size batches; full-M blocks are right at inference scale.
    return pl.pallas_call(
        _matmul_bias_relu_kernel,
        out_shape=jax.ShapeDtypeStruct((M, N), jnp.bfloat16),
        grid=(1,),
        in_specs=[
            pl.BlockSpec((M, K), lambda i: (0, 0)),
            pl.BlockSpec((K, N), lambda i: (0, 0)),
            pl.BlockSpec((1, N), lambda i: (0, 0)),
        ],
        out_specs=pl.BlockSpec((M, N), lambda i: (0, 0)),
        compiler_params=pltpu.CompilerParams(dimension_semantics=("arbitrary",)),
    )(x, w, b)


def _head_kernel(x_ref, w1_ref, b1_ref, g_ref, beta_ref, w2_ref, b2_ref, o_ref):
    # dense1: bf16 operands, f32 accumulation; K = 3136 in one block so there
    # is no K pipeline and no pad columns.
    h = jnp.dot(x_ref[...], w1_ref[...], preferred_element_type=jnp.float32)
    h = h + b1_ref[...]
    # BatchNorm1d, training-mode forward (batch statistics, biased variance,
    # eps=1e-5) — matches the PyTorch module default.  Requires the whole
    # batch in this single block; kept entirely in f32 (v5e VPU/EUP have no
    # bf16, and BN stats want f32 anyway).
    mean = jnp.mean(h, axis=0, keepdims=True)
    var = jnp.mean((h - mean) ** 2, axis=0, keepdims=True)
    h = (h - mean) * jax.lax.rsqrt(var + 1e-5) * g_ref[...] + beta_ref[...]
    h = jnp.maximum(h, 0.0)
    out = jnp.dot(h.astype(w2_ref.dtype), w2_ref[...],
                  preferred_element_type=jnp.float32) + b2_ref[...]
    o_ref[...] = out.astype(o_ref.dtype)


def head(x, w1, b1, gamma, beta, w2, b2):
    """dense2(relu(BN(dense1(x)))).  x:[B,3136] bf16, w1:[3136,256] bf16."""
    B, K = x.shape
    _, H = w1.shape
    _, O = w2.shape
    # TODO(synk): v5e cross-call prefetch of dense1_w (P10 future) and a v7x
    # fp8 dense1_w path are left out; the head is one call, one block.
    return pl.pallas_call(
        _head_kernel,
        out_shape=jax.ShapeDtypeStruct((B, O), jnp.float32),
        grid=(1,),
        in_specs=[
            pl.BlockSpec((B, K), lambda i: (0, 0)),
            pl.BlockSpec((K, H), lambda i: (0, 0)),
            pl.BlockSpec((1, H), lambda i: (0, 0)),
            pl.BlockSpec((1, H), lambda i: (0, 0)),
            pl.BlockSpec((1, H), lambda i: (0, 0)),
            pl.BlockSpec((H, O), lambda i: (0, 0)),
            pl.BlockSpec((1, O), lambda i: (0, 0)),
        ],
        out_specs=pl.BlockSpec((B, O), lambda i: (0, 0)),
        compiler_params=pltpu.CompilerParams(dimension_semantics=("arbitrary",)),
    )(x, w1, b1, gamma, beta, w2, b2)


# ------------------------------- JAX glue ---------------------------------- #

def _im2col_k4s2p1(x):
    """NHWC im2col for conv1 (k=4, stride=2, pad=1): [B,H,W,C] -> [B*oh*ow,16C]."""
    x = jnp.pad(x, ((0, 0), (1, 1), (1, 1), (0, 0)))
    B, H, W, C = x.shape
    oh = (H - 4) // 2 + 1
    ow = (W - 4) // 2 + 1
    cols = []
    for i in range(4):
        for j in range(4):
            cols.append(x[:, i:i + 2 * oh:2, j:j + 2 * ow:2, :])
    patches = jnp.stack(cols, axis=3)                      # [B, oh, ow, 16, C]
    return patches.reshape(B * oh * ow, 16 * C), oh, ow


def _im2col_k2s2p1(x):
    """NHWC im2col for k=2, stride=2, pad=1: patches are the NON-overlapping
    2x2 blocks of the padded input, so a reshape+transpose suffices — no
    k*k slice/stack duplication (1x instead of 4x HBM materialization)."""
    x = jnp.pad(x, ((0, 0), (1, 1), (1, 1), (0, 0)))
    B, Hp, Wp, C = x.shape
    oh, ow = Hp // 2, Wp // 2
    p = x.reshape(B, oh, 2, ow, 2, C).transpose(0, 1, 3, 2, 4, 5)  # [B,oh,ow,2,2,C]
    return p.reshape(B * oh * ow, 4 * C), oh, ow


# ------------------------------- parameters -------------------------------- #

def init_torch_params(key, num_channels):
    """Random params in PyTorch layouts (what GT_Net's state_dict would hold)."""
    ks = jax.random.split(key, 12)

    def u(k, shape, fan_in):  # torch default init: U(-1/sqrt(fan_in), 1/sqrt(fan_in))
        bound = 1.0 / jnp.sqrt(jnp.float32(fan_in))
        return jax.random.uniform(k, shape, jnp.float32, -bound, bound)

    p = {}
    p["conv1_w"] = u(ks[0], (32, num_channels, 4, 4), num_channels * 16)
    p["conv1_b"] = u(ks[1], (32,), num_channels * 16)
    p["conv2_w"] = u(ks[2], (32, 32, 2, 2), 32 * 4)
    p["conv2_b"] = u(ks[3], (32,), 32 * 4)
    p["conv3_w"] = u(ks[4], (64, 32, 2, 2), 32 * 4)
    p["conv3_b"] = u(ks[5], (64,), 32 * 4)
    p["conv4_w"] = u(ks[6], (64, 64, 2, 2), 64 * 4)
    p["conv4_b"] = u(ks[7], (64,), 64 * 4)
    p["dense1_w"] = u(ks[8], (256, 3136), 3136)            # torch Linear [out, in]
    p["dense1_b"] = u(ks[9], (256,), 3136)
    p["dense2_w"] = u(ks[10], (4 * num_channels, 256), 256)
    p["dense2_b"] = u(ks[11], (4 * num_channels,), 256)
    p["bn_gamma"] = jnp.ones((256,), jnp.float32)
    p["bn_beta"] = jnp.zeros((256,), jnp.float32)
    return p


def prepare_params(p):
    """One-time conversion to kernel layouts (never repeated in the forward):
      - conv weights  [O,C,kh,kw] -> [kh*kw*C, O]  bf16 (matches im2col order)
      - dense1 weight rows permuted from NCHW-flatten order (c*49 + h*7 + w)
        to NHWC-flatten order ((h*7+w)*64 + c), kept at K=3136 (no padding), bf16
      - dense2 weight transposed to [256, 4C] bf16
      - biases / BN params reshaped to [1, N], kept f32."""
    def conv_w(w):
        O, C, kh, kw = w.shape
        return w.transpose(2, 3, 1, 0).reshape(kh * kw * C, O).astype(jnp.bfloat16)

    q = {}
    for i in (1, 2, 3, 4):
        q[f"conv{i}_w"] = conv_w(p[f"conv{i}_w"])
        q[f"conv{i}_b"] = p[f"conv{i}_b"].reshape(1, -1)

    w1 = p["dense1_w"].T                                   # [3136,256], rows = c*49+h*7+w
    w1 = w1.reshape(64, 7, 7, 256).transpose(1, 2, 0, 3)   # -> (h, w, c, out)
    q["dense1_w"] = w1.reshape(3136, 256).astype(jnp.bfloat16)   # rows = (h*7+w)*64+c
    q["dense1_b"] = p["dense1_b"].reshape(1, -1)
    q["dense2_w"] = p["dense2_w"].T.astype(jnp.bfloat16)
    q["dense2_b"] = p["dense2_b"].reshape(1, -1)
    q["bn_gamma"] = p["bn_gamma"].reshape(1, -1)
    q["bn_beta"] = p["bn_beta"].reshape(1, -1)
    return q


# -------------------------------- forward ---------------------------------- #

def gt_net_forward(params, x_nchw):
    # Single NCHW->NHWC conversion of the small input; the conv tower then
    # stays in NHWC / [B*oh*ow, O] bf16 form end-to-end.
    B = x_nchw.shape[0]
    x = jnp.transpose(x_nchw, (0, 2, 3, 1)).astype(jnp.bfloat16)

    p, oh, ow = _im2col_k4s2p1(x)                                              # [B*42*42, 16C]
    h = matmul_bias_relu(p, params["conv1_w"], params["conv1_b"]).reshape(B, oh, ow, 32)

    p, oh, ow = _im2col_k2s2p1(h)                                              # [B*22*22, 128]
    h = matmul_bias_relu(p, params["conv2_w"], params["conv2_b"]).reshape(B, oh, ow, 32)

    p, oh, ow = _im2col_k2s2p1(h)                                              # [B*12*12, 128]
    h = matmul_bias_relu(p, params["conv3_w"], params["conv3_b"]).reshape(B, oh, ow, 64)

    p, oh, ow = _im2col_k2s2p1(h)                                              # [B*7*7, 256]
    h = matmul_bias_relu(p, params["conv4_w"], params["conv4_b"])              # [B*49, 64]

    # NHWC flatten: [B*49, 64] -> [B, 3136] is a contiguous row-major reshape
    # (no copy, no pad); dense1_w rows were permuted once to match.
    h = h.reshape(B, oh * ow * 64)
    return head(h, params["dense1_w"], params["dense1_b"],
                params["bn_gamma"], params["bn_beta"],
                params["dense2_w"], params["dense2_b"])      # [B, 4*num_channels] f32


if __name__ == "__main__":
    num_channels = 4
    key = jax.random.PRNGKey(0)
    pkey, xkey = jax.random.split(key)
    params = prepare_params(init_torch_params(pkey, num_channels))
    # Spatial size 84 is what dense1's in_features=3136 (=64*7*7) implies.
    x = jax.random.normal(xkey, (2, num_channels, 84, 84), jnp.float32)
    out = jax.jit(gt_net_forward)(params, x)
    jax.block_until_ready(out)
    assert out.shape == (2, 4 * num_channels), out.shape
    assert bool(jnp.all(jnp.isfinite(out)))
    print("KERNEL_OK")
</pallas_src>

<mosaic_0001>
module attributes {stable_mosaic.version = 11 : i64} {
  func.func @_matmul_bias_relu_kernel(%arg0: i32, %arg1: memref<3528x64xbf16, #tpu.memory_space<vmem>>, %arg2: memref<64x32xbf16, #tpu.memory_space<vmem>>, %arg3: memref<1x32xf32, #tpu.memory_space<vmem>>, %arg4: memref<3528x32xbf16, #tpu.memory_space<vmem>>) attributes {dimension_semantics = [#tpu.dimension_semantics<arbitrary>], iteration_bounds = array<i64: 1>, scalar_prefetch = 0 : i64, scratch_operands = 0 : i64, tpu.core_type = #tpu.core_type<tc>, window_params = [{pipeline_mode = #tpu.pipeline_mode<synchronous>, transform_indices = @transform_0, window_bounds = array<i64: 3528, 64>}, {pipeline_mode = #tpu.pipeline_mode<synchronous>, transform_indices = @transform_1, window_bounds = array<i64: 64, 32>}, {pipeline_mode = #tpu.pipeline_mode<synchronous>, transform_indices = @transform_2, window_bounds = array<i64: 1, 32>}, {pipeline_mode = #tpu.pipeline_mode<synchronous>, transform_indices = @transform_3, window_bounds = array<i64: 3528, 32>}]} {
    %c0 = arith.constant 0 : index
    %c0_0 = arith.constant 0 : index
    %0 = vector.load %arg1[%c0, %c0_0] : memref<3528x64xbf16, #tpu.memory_space<vmem>>, vector<3528x64xbf16>
    %c0_1 = arith.constant 0 : index
    %c0_2 = arith.constant 0 : index
    %1 = vector.load %arg2[%c0_1, %c0_2] : memref<64x32xbf16, #tpu.memory_space<vmem>>, vector<64x32xbf16>
    %cst = arith.constant dense<0.000000e+00> : vector<3528x32xf32>
    %2 = tpu.matmul %0, %1, %cst {dimension_numbers = #tpu.dot_dimension_numbers<[1], [0], [0], [1], [0, 0, 1, 1], [], []>} : vector<3528x64xbf16>, vector<64x32xbf16>, vector<3528x32xf32> -> vector<3528x32xf32>
    %c0_3 = arith.constant 0 : index
    %c0_4 = arith.constant 0 : index
    %3 = vector.load %arg3[%c0_3, %c0_4] : memref<1x32xf32, #tpu.memory_space<vmem>>, vector<1x32xf32>
    %4 = vector.broadcast %3 : vector<1x32xf32> to vector<3528x32xf32>
    %5 = arith.addf %2, %4 : vector<3528x32xf32>
    %cst_5 = arith.constant 0.000000e+00 : f32
    %6 = vector.broadcast %cst_5 : f32 to vector<3528x32xf32>
    %7 = arith.maximumf %5, %6 : vector<3528x32xf32>
    %8 = arith.truncf %7 : vector<3528x32xf32> to vector<3528x32xbf16>
    %c0_6 = arith.constant 0 : index
    %c0_7 = arith.constant 0 : index
    %9 = vector.load %arg4[%c0_6, %c0_7] : memref<3528x32xbf16, #tpu.memory_space<vmem>>, vector<3528x32xbf16>
    tpu.vector_store %arg4[%c0_6, %c0_7], %8 {strides = array<i32>} : memref<3528x32xbf16, #tpu.memory_space<vmem>>, vector<3528x32xbf16>,
    return
  }
  func.func @transform_0(%arg0: i32) -> (i32, i32) {
    %c0_i32 = arith.constant 0 : i32
    %c0_i32_0 = arith.constant 0 : i32
    %c0_i32_1 = arith.constant 0 : i32
    return %c0_i32, %c0_i32_0 : i32, i32
  }
  func.func @transform_1(%arg0: i32) -> (i32, i32) {
    %c0_i32 = arith.constant 0 : i32
    %c0_i32_0 = arith.constant 0 : i32
    %c0_i32_1 = arith.constant 0 : i32
    return %c0_i32, %c0_i32_0 : i32, i32
  }
  func.func @transform_2(%arg0: i32) -> (i32, i32) {
    %c0_i32 = arith.constant 0 : i32
    %c0_i32_0 = arith.constant 0 : i32
    %c0_i32_1 = arith.constant 0 : i32
    return %c0_i32, %c0_i32_0 : i32, i32
  }
  func.func @transform_3(%arg0: i32) -> (i32, i32) {
    %c0_i32 = arith.constant 0 : i32
    %c0_i32_0 = arith.constant 0 : i32
    %c0_i32_1 = arith.constant 0 : i32
    return %c0_i32, %c0_i32_0 : i32, i32
  }
}

module attributes {stable_mosaic.version = 11 : i64} {
  func.func @_matmul_bias_relu_kernel(%arg0: i32, %arg1: memref<968x128xbf16, #tpu.memory_space<vmem>>, %arg2: memref<128x32xbf16, #tpu.memory_space<vmem>>, %arg3: memref<1x32xf32, #tpu.memory_space<vmem>>, %arg4: memref<968x32xbf16, #tpu.memory_space<vmem>>) attributes {dimension_semantics = [#tpu.dimension_semantics<arbitrary>], iteration_bounds = array<i64: 1>, scalar_prefetch = 0 : i64, scratch_operands = 0 : i64, tpu.core_type = #tpu.core_type<tc>, window_params = [{pipeline_mode = #tpu.pipeline_mode<synchronous>, transform_indices = @transform_0, window_bounds = array<i64: 968, 128>}, {pipeline_mode = #tpu.pipeline_mode<synchronous>, transform_indices = @transform_1, window_bounds = array<i64: 128, 32>}, {pipeline_mode = #tpu.pipeline_mode<synchronous>, transform_indices = @transform_2, window_bounds = array<i64: 1, 32>}, {pipeline_mode = #tpu.pipeline_mode<synchronous>, transform_indices = @transform_3, window_bounds = array<i64: 968, 32>}]} {
    %c0 = arith.constant 0 : index
    %c0_0 = arith.constant 0 : index
    %0 = vector.load %arg1[%c0, %c0_0] : memref<968x128xbf16, #tpu.memory_space<vmem>>, vector<968x128xbf16>
    %c0_1 = arith.constant 0 : index
    %c0_2 = arith.constant 0 : index
    %1 = vector.load %arg2[%c0_1, %c0_2] : memref<128x32xbf16, #tpu.memory_space<vmem>>, vector<128x32xbf16>
    %cst = arith.constant dense<0.000000e+00> : vector<968x32xf32>
    %2 = tpu.matmul %0, %1, %cst {dimension_numbers = #tpu.dot_dimension_numbers<[1], [0], [0], [1], [0, 0, 1, 1], [], []>} : vector<968x128xbf16>, vector<128x32xbf16>, vector<968x32xf32> -> vector<968x32xf32>
    %c0_3 = arith.constant 0 : index
    %c0_4 = arith.constant 0 : index
    %3 = vector.load %arg3[%c0_3, %c0_4] : memref<1x32xf32, #tpu.memory_space<vmem>>, vector<1x32xf32>
    %4 = vector.broadcast %3 : vector<1x32xf32> to vector<968x32xf32>
    %5 = arith.addf %2, %4 : vector<968x32xf32>
    %cst_5 = arith.constant 0.000000e+00 : f32
    %6 = vector.broadcast %cst_5 : f32 to vector<968x32xf32>
    %7 = arith.maximumf %5, %6 : vector<968x32xf32>
    %8 = arith.truncf %7 : vector<968x32xf32> to vector<968x32xbf16>
    %c0_6 = arith.constant 0 : index
    %c0_7 = arith.constant 0 : index
    %9 = vector.load %arg4[%c0_6, %c0_7] : memref<968x32xbf16, #tpu.memory_space<vmem>>, vector<968x32xbf16>
    tpu.vector_store %arg4[%c0_6, %c0_7], %8 {strides = array<i32>} : memref<968x32xbf16, #tpu.memory_space<vmem>>, vector<968x32xbf16>,
    return
  }
  func.func @transform_0(%arg0: i32) -> (i32, i32) {
    %c0_i32 = arith.constant 0 : i32
    %c0_i32_0 = arith.constant 0 : i32
    %c0_i32_1 = arith.constant 0 : i32
    return %c0_i32, %c0_i32_0 : i32, i32
  }
  func.func @transform_1(%arg0: i32) -> (i32, i32) {
    %c0_i32 = arith.constant 0 : i32
    %c0_i32_0 = arith.constant 0 : i32
    %c0_i32_1 = arith.constant 0 : i32
    return %c0_i32, %c0_i32_0 : i32, i32
  }
  func.func @transform_2(%arg0: i32) -> (i32, i32) {
    %c0_i32 = arith.constant 0 : i32
    %c0_i32_0 = arith.constant 0 : i32
    %c0_i32_1 = arith.constant 0 : i32
    return %c0_i32, %c0_i32_0 : i32, i32
  }
  func.func @transform_3(%arg0: i32) -> (i32, i32) {
    %c0_i32 = arith.constant 0 : i32
    %c0_i32_0 = arith.constant 0 : i32
    %c0_i32_1 = arith.constant 0 : i32
    return %c0_i32, %c0_i32_0 : i32, i32
  }
}

module attributes {stable_mosaic.version = 11 : i64} {
  func.func @_matmul_bias_relu_kernel(%arg0: i32, %arg1: memref<288x128xbf16, #tpu.memory_space<vmem>>, %arg2: memref<128x64xbf16, #tpu.memory_space<vmem>>, %arg3: memref<1x64xf32, #tpu.memory_space<vmem>>, %arg4: memref<288x64xbf16, #tpu.memory_space<vmem>>) attributes {dimension_semantics = [#tpu.dimension_semantics<arbitrary>], iteration_bounds = array<i64: 1>, scalar_prefetch = 0 : i64, scratch_operands = 0 : i64, tpu.core_type = #tpu.core_type<tc>, window_params = [{pipeline_mode = #tpu.pipeline_mode<synchronous>, transform_indices = @transform_0, window_bounds = array<i64: 288, 128>}, {pipeline_mode = #tpu.pipeline_mode<synchronous>, transform_indices = @transform_1, window_bounds = array<i64: 128, 64>}, {pipeline_mode = #tpu.pipeline_mode<synchronous>, transform_indices = @transform_2, window_bounds = array<i64: 1, 64>}, {pipeline_mode = #tpu.pipeline_mode<synchronous>, transform_indices = @transform_3, window_bounds = array<i64: 288, 64>}]} {
    %c0 = arith.constant 0 : index
    %c0_0 = arith.constant 0 : index
    %0 = vector.load %arg1[%c0, %c0_0] : memref<288x128xbf16, #tpu.memory_space<vmem>>, vector<288x128xbf16>
    %c0_1 = arith.constant 0 : index
    %c0_2 = arith.constant 0 : index
    %1 = vector.load %arg2[%c0_1, %c0_2] : memref<128x64xbf16, #tpu.memory_space<vmem>>, vector<128x64xbf16>
    %cst = arith.constant dense<0.000000e+00> : vector<288x64xf32>
    %2 = tpu.matmul %0, %1, %cst {dimension_numbers = #tpu.dot_dimension_numbers<[1], [0], [0], [1], [0, 0, 1, 1], [], []>} : vector<288x128xbf16>, vector<128x64xbf16>, vector<288x64xf32> -> vector<288x64xf32>
    %c0_3 = arith.constant 0 : index
    %c0_4 = arith.constant 0 : index
    %3 = vector.load %arg3[%c0_3, %c0_4] : memref<1x64xf32, #tpu.memory_space<vmem>>, vector<1x64xf32>
    %4 = vector.broadcast %3 : vector<1x64xf32> to vector<288x64xf32>
    %5 = arith.addf %2, %4 : vector<288x64xf32>
    %cst_5 = arith.constant 0.000000e+00 : f32
    %6 = vector.broadcast %cst_5 : f32 to vector<288x64xf32>
    %7 = arith.maximumf %5, %6 : vector<288x64xf32>
    %8 = arith.truncf %7 : vector<288x64xf32> to vector<288x64xbf16>
    %c0_6 = arith.constant 0 : index
    %c0_7 = arith.constant 0 : index
    %9 = vector.load %arg4[%c0_6, %c0_7] : memref<288x64xbf16, #tpu.memory_space<vmem>>, vector<288x64xbf16>
    tpu.vector_store %arg4[%c0_6, %c0_7], %8 {strides = array<i32>} : memref<288x64xbf16, #tpu.memory_space<vmem>>, vector<288x64xbf16>,
    return
  }
  func.func @transform_0(%arg0: i32) -> (i32, i32) {
    %c0_i32 = arith.constant 0 : i32
    %c0_i32_0 = arith.constant 0 : i32
    %c0_i32_1 = arith.constant 0 : i32
    return %c0_i32, %c0_i32_0 : i32, i32
  }
  func.func @transform_1(%arg0: i32) -> (i32, i32) {
    %c0_i32 = arith.constant 0 : i32
    %c0_i32_0 = arith.constant 0 : i32
    %c0_i32_1 = arith.constant 0 : i32
    return %c0_i32, %c0_i32_0 : i32, i32
  }
  func.func @transform_2(%arg0: i32) -> (i32, i32) {
    %c0_i32 = arith.constant 0 : i32
    %c0_i32_0 = arith.constant 0 : i32
    %c0_i32_1 = arith.constant 0 : i32
    return %c0_i32, %c0_i32_0 : i32, i32
  }
  func.func @transform_3(%arg0: i32) -> (i32, i32) {
    %c0_i32 = arith.constant 0 : i32
    %c0_i32_0 = arith.constant 0 : i32
    %c0_i32_1 = arith.constant 0 : i32
    return %c0_i32, %c0_i32_0 : i32, i32
  }
}

module attributes {stable_mosaic.version = 11 : i64} {
  func.func @_matmul_bias_relu_kernel(%arg0: i32, %arg1: memref<98x256xbf16, #tpu.memory_space<vmem>>, %arg2: memref<256x64xbf16, #tpu.memory_space<vmem>>, %arg3: memref<1x64xf32, #tpu.memory_space<vmem>>, %arg4: memref<98x64xbf16, #tpu.memory_space<vmem>>) attributes {dimension_semantics = [#tpu.dimension_semantics<arbitrary>], iteration_bounds = array<i64: 1>, scalar_prefetch = 0 : i64, scratch_operands = 0 : i64, tpu.core_type = #tpu.core_type<tc>, window_params = [{pipeline_mode = #tpu.pipeline_mode<synchronous>, transform_indices = @transform_0, window_bounds = array<i64: 98, 256>}, {pipeline_mode = #tpu.pipeline_mode<synchronous>, transform_indices = @transform_1, window_bounds = array<i64: 256, 64>}, {pipeline_mode = #tpu.pipeline_mode<synchronous>, transform_indices = @transform_2, window_bounds = array<i64: 1, 64>}, {pipeline_mode = #tpu.pipeline_mode<synchronous>, transform_indices = @transform_3, window_bounds = array<i64: 98, 64>}]} {
    %c0 = arith.constant 0 : index
    %c0_0 = arith.constant 0 : index
    %0 = vector.load %arg1[%c0, %c0_0] : memref<98x256xbf16, #tpu.memory_space<vmem>>, vector<98x256xbf16>
    %c0_1 = arith.constant 0 : index
    %c0_2 = arith.constant 0 : index
    %1 = vector.load %arg2[%c0_1, %c0_2] : memref<256x64xbf16, #tpu.memory_space<vmem>>, vector<256x64xbf16>
    %cst = arith.constant dense<0.000000e+00> : vector<98x64xf32>
    %2 = tpu.matmul %0, %1, %cst {dimension_numbers = #tpu.dot_dimension_numbers<[1], [0], [0], [1], [0, 0, 1, 1], [], []>} : vector<98x256xbf16>, vector<256x64xbf16>, vector<98x64xf32> -> vector<98x64xf32>
    %c0_3 = arith.constant 0 : index
    %c0_4 = arith.constant 0 : index
    %3 = vector.load %arg3[%c0_3, %c0_4] : memref<1x64xf32, #tpu.memory_space<vmem>>, vector<1x64xf32>
    %4 = vector.broadcast %3 : vector<1x64xf32> to vector<98x64xf32>
    %5 = arith.addf %2, %4 : vector<98x64xf32>
    %cst_5 = arith.constant 0.000000e+00 : f32
    %6 = vector.broadcast %cst_5 : f32 to vector<98x64xf32>
    %7 = arith.maximumf %5, %6 : vector<98x64xf32>
    %8 = arith.truncf %7 : vector<98x64xf32> to vector<98x64xbf16>
    %c0_6 = arith.constant 0 : index
    %c0_7 = arith.constant 0 : index
    %9 = vector.load %arg4[%c0_6, %c0_7] : memref<98x64xbf16, #tpu.memory_space<vmem>>, vector<98x64xbf16>
    tpu.vector_store %arg4[%c0_6, %c0_7], %8 {strides = array<i32>} : memref<98x64xbf16, #tpu.memory_space<vmem>>, vector<98x64xbf16>,
    return
  }
  func.func @transform_0(%arg0: i32) -> (i32, i32) {
    %c0_i32 = arith.constant 0 : i32
    %c0_i32_0 = arith.constant 0 : i32
    %c0_i32_1 = arith.constant 0 : i32
    return %c0_i32, %c0_i32_0 : i32, i32
  }
  func.func @transform_1(%arg0: i32) -> (i32, i32) {
    %c0_i32 = arith.constant 0 : i32
    %c0_i32_0 = arith.constant 0 : i32
    %c0_i32_1 = arith.constant 0 : i32
    return %c0_i32, %c0_i32_0 : i32, i32
  }
  func.func @transform_2(%arg0: i32) -> (i32, i32) {
    %c0_i32 = arith.constant 0 : i32
    %c0_i32_0 = arith.constant 0 : i32
    %c0_i32_1 = arith.constant 0 : i32
    return %c0_i32, %c0_i32_0 : i32, i32
  }
  func.func @transform_3(%arg0: i32) -> (i32, i32) {
    %c0_i32 = arith.constant 0 : i32
    %c0_i32_0 = arith.constant 0 : i32
    %c0_i32_1 = arith.constant 0 : i32
    return %c0_i32, %c0_i32_0 : i32, i32
  }
}

module attributes {stable_mosaic.version = 11 : i64} {
  func.func @_head_kernel(%arg0: i32, %arg1: memref<2x3136xbf16, #tpu.memory_space<vmem>>, %arg2: memref<3136x256xbf16, #tpu.memory_space<vmem>>, %arg3: memref<1x256xf32, #tpu.memory_space<vmem>>, %arg4: memref<1x256xf32, #tpu.memory_space<vmem>>, %arg5: memref<1x256xf32, #tpu.memory_space<vmem>>, %arg6: memref<256x16xbf16, #tpu.memory_space<vmem>>, %arg7: memref<1x16xf32, #tpu.memory_space<vmem>>, %arg8: memref<2x16xf32, #tpu.memory_space<vmem>>) attributes {dimension_semantics = [#tpu.dimension_semantics<arbitrary>], iteration_bounds = array<i64: 1>, scalar_prefetch = 0 : i64, scratch_operands = 0 : i64, tpu.core_type = #tpu.core_type<tc>, window_params = [{pipeline_mode = #tpu.pipeline_mode<synchronous>, transform_indices = @transform_0, window_bounds = array<i64: 2, 3136>}, {pipeline_mode = #tpu.pipeline_mode<synchronous>, transform_indices = @transform_1, window_bounds = array<i64: 3136, 256>}, {pipeline_mode = #tpu.pipeline_mode<synchronous>, transform_indices = @transform_2, window_bounds = array<i64: 1, 256>}, {pipeline_mode = #tpu.pipeline_mode<synchronous>, transform_indices = @transform_3, window_bounds = array<i64: 1, 256>}, {pipeline_mode = #tpu.pipeline_mode<synchronous>, transform_indices = @transform_4, window_bounds = array<i64: 1, 256>}, {pipeline_mode = #tpu.pipeline_mode<synchronous>, transform_indices = @transform_5, window_bounds = array<i64: 256, 16>}, {pipeline_mode = #tpu.pipeline_mode<synchronous>, transform_indices = @transform_6, window_bounds = array<i64: 1, 16>}, {pipeline_mode = #tpu.pipeline_mode<synchronous>, transform_indices = @transform_7, window_bounds = array<i64: 2, 16>}]} {
    %c0 = arith.constant 0 : index
    %c0_0 = arith.constant 0 : index
    %0 = vector.load %arg1[%c0, %c0_0] : memref<2x3136xbf16, #tpu.memory_space<vmem>>, vector<2x3136xbf16>
    %c0_1 = arith.constant 0 : index
    %c0_2 = arith.constant 0 : index
    %1 = vector.load %arg2[%c0_1, %c0_2] : memref<3136x256xbf16, #tpu.memory_space<vmem>>, vector<3136x256xbf16>
    %cst = arith.constant dense<0.000000e+00> : vector<2x256xf32>
    %2 = tpu.matmul %0, %1, %cst {dimension_numbers = #tpu.dot_dimension_numbers<[1], [0], [0], [1], [0, 0, 1, 1], [], []>} : vector<2x3136xbf16>, vector<3136x256xbf16>, vector<2x256xf32> -> vector<2x256xf32>
    %c0_3 = arith.constant 0 : index
    %c0_4 = arith.constant 0 : index
    %3 = vector.load %arg3[%c0_3, %c0_4] : memref<1x256xf32, #tpu.memory_space<vmem>>, vector<1x256xf32>
    %4 = vector.broadcast %3 : vector<1x256xf32> to vector<2x256xf32>
    %5 = arith.addf %2, %4 : vector<2x256xf32>
    %cst_5 = arith.constant dense<0.000000e+00> : vector<256xf32>
    %6 = vector.multi_reduction <add>, %5, %cst_5 [0] : vector<2x256xf32> to vector<256xf32>
    %7 = vector.shape_cast %6 : vector<256xf32> to vector<1x256xf32>
    %cst_6 = arith.constant 2.000000e+00 : f32
    %8 = vector.broadcast %cst_6 : f32 to vector<1x256xf32>
    %9 = arith.divf %7, %8 : vector<1x256xf32>
    %10 = vector.broadcast %9 : vector<1x256xf32> to vector<2x256xf32>
    %11 = arith.subf %5, %10 : vector<2x256xf32>
    %12 = arith.mulf %11, %11 : vector<2x256xf32>
    %cst_7 = arith.constant dense<0.000000e+00> : vector<256xf32>
    %13 = vector.multi_reduction <add>, %12, %cst_7 [0] : vector<2x256xf32> to vector<256xf32>
    %14 = vector.shape_cast %13 : vector<256xf32> to vector<1x256xf32>
    %cst_8 = arith.constant 2.000000e+00 : f32
    %15 = vector.broadcast %cst_8 : f32 to vector<1x256xf32>
    %16 = arith.divf %14, %15 : vector<1x256xf32>
    %17 = vector.broadcast %9 : vector<1x256xf32> to vector<2x256xf32>
    %18 = arith.subf %5, %17 : vector<2x256xf32>
    %cst_9 = arith.constant 9.99999974E-6 : f32
    %19 = vector.broadcast %cst_9 : f32 to vector<1x256xf32>
    %20 = arith.addf %16, %19 : vector<1x256xf32>
    %21 = math.rsqrt %20 : vector<1x256xf32>
    %22 = vector.broadcast %21 : vector<1x256xf32> to vector<2x256xf32>
    %23 = arith.mulf %18, %22 : vector<2x256xf32>
    %c0_10 = arith.constant 0 : index
    %c0_11 = arith.constant 0 : index
    %24 = vector.load %arg4[%c0_10, %c0_11] : memref<1x256xf32, #tpu.memory_space<vmem>>, vector<1x256xf32>
    %25 = vector.broadcast %24 : vector<1x256xf32> to vector<2x256xf32>
    %26 = arith.mulf %23, %25 : vector<2x256xf32>
    %c0_12 = arith.constant 0 : index
    %c0_13 = arith.constant 0 : index
    %27 = vector.load %arg5[%c0_12, %c0_13] : memref<1x256xf32, #tpu.memory_space<vmem>>, vector<1x256xf32>
    %28 = vector.broadcast %27 : vector<1x256xf32> to vector<2x256xf32>
    %29 = arith.addf %26, %28 : vector<2x256xf32>
    %cst_14 = arith.constant 0.000000e+00 : f32
    %30 = vector.broadcast %cst_14 : f32 to vector<2x256xf32>
    %31 = arith.maximumf %29, %30 : vector<2x256xf32>
    %32 = arith.truncf %31 : vector<2x256xf32> to vector<2x256xbf16>
    %c0_15 = arith.constant 0 : index
    %c0_16 = arith.constant 0 : index
    %33 = vector.load %arg6[%c0_15, %c0_16] : memref<256x16xbf16, #tpu.memory_space<vmem>>, vector<256x16xbf16>
    %cst_17 = arith.constant dense<0.000000e+00> : vector<2x16xf32>
    %34 = tpu.matmul %32, %33, %cst_17 {dimension_numbers = #tpu.dot_dimension_numbers<[1], [0], [0], [1], [0, 0, 1, 1], [], []>} : vector<2x256xbf16>, vector<256x16xbf16>, vector<2x16xf32> -> vector<2x16xf32>
    %c0_18 = arith.constant 0 : index
    %c0_19 = arith.constant 0 : index
    %35 = vector.load %arg7[%c0_18, %c0_19] : memref<1x16xf32, #tpu.memory_space<vmem>>, vector<1x16xf32>
    %36 = vector.broadcast %35 : vector<1x16xf32> to vector<2x16xf32>
    %37 = arith.addf %34, %36 : vector<2x16xf32>
    %c0_20 = arith.constant 0 : index
    %c0_21 = arith.constant 0 : index
    %38 = vector.load %arg8[%c0_20, %c0_21] : memref<2x16xf32, #tpu.memory_space<vmem>>, vector<2x16xf32>
    tpu.vector_store %arg8[%c0_20, %c0_21], %37 {strides = array<i32>} : memref<2x16xf32, #tpu.memory_space<vmem>>, vector<2x16xf32>,
    return
  }
  func.func @transform_0(%arg0: i32) -> (i32, i32) {
    %c0_i32 = arith.constant 0 : i32
    %c0_i32_0 = arith.constant 0 : i32
    %c0_i32_1 = arith.constant 0 : i32
    return %c0_i32, %c0_i32_0 : i32, i32
  }
  func.func @transform_1(%arg0: i32) -> (i32, i32) {
    %c0_i32 = arith.constant 0 : i32
    %c0_i32_0 = arith.constant 0 : i32
    %c0_i32_1 = arith.constant 0 : i32
    return %c0_i32, %c0_i32_0 : i32, i32
  }
  func.func @transform_2(%arg0: i32) -> (i32, i32) {
    %c0_i32 = arith.constant 0 : i32
    %c0_i32_0 = arith.constant 0 : i32
    %c0_i32_1 = arith.constant 0 : i32
    return %c0_i32, %c0_i32_0 : i32, i32
  }
  func.func @transform_3(%arg0: i32) -> (i32, i32) {
    %c0_i32 = arith.constant 0 : i32
    %c0_i32_0 = arith.constant 0 : i32
    %c0_i32_1 = arith.constant 0 : i32
    return %c0_i32, %c0_i32_0 : i32, i32
  }
  func.func @transform_4(%arg0: i32) -> (i32, i32) {
    %c0_i32 = arith.constant 0 : i32
    %c0_i32_0 = arith.constant 0 : i32
    %c0_i32_1 = arith.constant 0 : i32
    return %c0_i32, %c0_i32_0 : i32, i32
  }
  func.func @transform_5(%arg0: i32) -> (i32, i32) {
    %c0_i32 = arith.constant 0 : i32
    %c0_i32_0 = arith.constant 0 : i32
    %c0_i32_1 = arith.constant 0 : i32
    return %c0_i32, %c0_i32_0 : i32, i32
  }
  func.func @transform_6(%arg0: i32) -> (i32, i32) {
    %c0_i32 = arith.constant 0 : i32
    %c0_i32_0 = arith.constant 0 : i32
    %c0_i32_1 = arith.constant 0 : i32
    return %c0_i32, %c0_i32_0 : i32, i32
  }
  func.func @transform_7(%arg0: i32) -> (i32, i32) {
    %c0_i32 = arith.constant 0 : i32
    %c0_i32_0 = arith.constant 0 : i32
    %c0_i32_1 = arith.constant 0 : i32
    return %c0_i32, %c0_i32_0 : i32, i32
  }
}

</mosaic_0001>

<llo_original>
// kernel: gt_net_forward.5
$region0: #{gt_net_forward.5}
  #allocation0 [shape = 'u32[]', space=smem, size = 0x4, offset = 0x4, fixed_abs, tag = 'smem constant byte address 0x4 - core index']
  #allocation1 [shape = 'u32[144,128]{1,0:T(1,128)}', space=vmem, size = 0x12000, scoped, tag = 'internal scratch']
  %s0 = inlined_call_operand.vmem [shape: bf16[3528,64], index: 0, kind: input, shape index: {}]
  %s1 = inlined_call_operand.vmem [shape: bf16[64,32], index: 1, kind: input, shape index: {}]
  %s2 = inlined_call_operand.vmem [shape: f32[1,32], index: 2, kind: input, shape index: {}]
  %s3 = inlined_call_operand.vmem [shape: bf16[3528,32], index: 3, kind: output, shape index: {}]
  %s4 = sld [smem:[#allocation0]]
  $region22: #{gt_net_forward.5} parent=0
    _
  %s6 = ssub.s32 1, %s4
  %s7 = scalar_select 0, %s6, %s4
  // Predicated region
  $region2: #{gt_net_forward.5} parent=0 // pred_check
    _
  $region3: #{gt_net_forward.5} parent=0 // pred_check_branch
    %9 = sbr.rel (0) target = $region5
  $region4: #{gt_net_forward.5} parent=0 // pred_region
    _
  $region5: #{gt_net_forward.5} parent=0 // pred_fallthru
    _
  // Predicated region
  $region6: #{gt_net_forward.5} parent=0 // pred_check
    _
  $region7: #{gt_net_forward.5} parent=0 // pred_check_branch
    %11 = sbr.rel (0) target = $region9
  $region8: #{gt_net_forward.5} parent=0 // pred_region
    _
  $region9: #{gt_net_forward.5} parent=0 // pred_fallthru
    _
  // Predicated region
  $region10: #{gt_net_forward.5} parent=0 // pred_check
    _
  $region11: #{gt_net_forward.5} parent=0 // pred_check_branch
    %13 = sbr.rel (0) target = $region13
  $region12: #{gt_net_forward.5} parent=0 // pred_region
    _
  $region13: #{gt_net_forward.5} parent=0 // pred_fallthru
    _
  %v15 = vld [vmem:[%s0] sm:$0xf]
  %v16 = vld [vmem:[%s0 + $0x4] sm:$0xf]
  %v17 = vld [vmem:[%s0 + $0x8] sm:$0xf]
  %v18 = vld [vmem:[%s0 + $0xc] sm:$0xf]
  %v19 = vld [vmem:[%s0 + $0x10] sm:$0xf]
  %v20 = vld [vmem:[%s0 + $0x14] sm:$0xf]
  %v21 = vld [vmem:[%s0 + $0x18] sm:$0xf]
  %v22 = vld [vmem:[%s0 + $0x1c] sm:$0xf]
  %v23 = vld [vmem:[%s0 + $0x20] sm:$0xf]
  %v24 = vld [vmem:[%s0 + $0x24] sm:$0xf]
  %v25 = vld [vmem:[%s0 + $0x28] sm:$0xf]
  %v26 = vld [vmem:[%s0 + $0x2c] sm:$0xf]
  %v27 = vld [vmem:[%s0 + $0x30] sm:$0xf]
  %v28 = vld [vmem:[%s0 + $0x34] sm:$0xf]
  %v29 = vld [vmem:[%s0 + $0x38] sm:$0xf]
  %v30 = vld [vmem:[%s0 + $0x3c] sm:$0xf]
  %v31 = vld [vmem:[%s0 + $0x40] sm:$0xf]
  %v32 = vld [vmem:[%s0 + $0x44] sm:$0xf]
  %v33 = vld [vmem:[%s0 + $0x48] sm:$0xf]
  %v34 = vld [vmem:[%s0 + $0x4c] sm:$0xf]
  %v35 = vld [vmem:[%s0 + $0x50] sm:$0xf]
  %v36 = vld [vmem:[%s0 + $0x54] sm:$0xf]
  %v37 = vld [vmem:[%s0 + $0x58] sm:$0xf]
  %v38 = vld [vmem:[%s0 + $0x5c] sm:$0xf]
  %v39 = vld [vmem:[%s0 + $0x60] sm:$0xf]
  %v40 = vld [vmem:[%s0 + $0x64] sm:$0xf]
  %v41 = vld [vmem:[%s0 + $0x68] sm:$0xf]
  %v42 = vld [vmem:[%s0 + $0x6c] sm:$0xf]
  %v43 = vld [vmem:[%s0 + $0x70] sm:$0xf]
  %v44 = vld [vmem:[%s0 + $0x74] sm:$0xf]
  %v45 = vld [vmem:[%s0 + $0x78] sm:$0xf]
  %v46 = vld [vmem:[%s0 + $0x7c] sm:$0xf]
  %v47 = vld [vmem:[%s0 + $0x80] sm:$0xf]
  %v48 = vld [vmem:[%s0 + $0x84] sm:$0xf]
  %v49 = vld [vmem:[%s0 + $0x88] sm:$0xf]
  %v50 = vld [vmem:[%s0 + $0x8c] sm:$0xf]
  %v51 = vld [vmem:[%s0 + $0x90] sm:$0xf]
  %v52 = vld [vmem:[%s0 + $0x94] sm:$0xf]
  %v53 = vld [vmem:[%s0 + $0x98] sm:$0xf]
  %v54 = vld [vmem:[%s0 + $0x9c] sm:$0xf]
  %v55 = vld [vmem:[%s0 + $0xa0] sm:$0xf]
  %v56 = vld [vmem:[%s0 + $0xa4] sm:$0xf]
  %v57 = vld [vmem:[%s0 + $0xa8] sm:$0xf]
  %v58 = vld [vmem:[%s0 + $0xac] sm:$0xf]
  %v59 = vld [vmem:[%s0 + $0xb0] sm:$0xf]
  %v60 = vld [vmem:[%s0 + $0xb4] sm:$0xf]
  %v61 = vld [vmem:[%s0 + $0xb8] sm:$0xf]
  %v62 = vld [vmem:[%s0 + $0xbc] sm:$0xf]
  %v63 = vld [vmem:[%s0 + $0xc0] sm:$0xf]
  %v64 = vld [vmem:[%s0 + $0xc4] sm:$0xf]
  %v65 = vld [vmem:[%s0 + $0xc8] sm:$0xf]
  %v66 = vld [vmem:[%s0 + $0xcc] sm:$0xf]
  %v67 = vld [vmem:[%s0 + $0xd0] sm:$0xf]
  %v68 = vld [vmem:[%s0 + $0xd4] sm:$0xf]
  %v69 = vld [vmem:[%s0 + $0xd8] sm:$0xf]
  %v70 = vld [vmem:[%s0 + $0xdc] sm:$0xf]
  %v71 = vld [vmem:[%s0 + $0xe0] sm:$0xf]
  %v72 = vld [vmem:[%s0 + $0xe4] sm:$0xf]
  %v73 = vld [vmem:[%s0 + $0xe8] sm:$0xf]
  %v74 = vld [vmem:[%s0 + $0xec] sm:$0xf]
  %v75 = vld [vmem:[%s0 + $0xf0] sm:$0xf]
  %v76 = vld [vmem:[%s0 + $0xf4] sm:$0xf]
  %v77 = vld [vmem:[%s0 + $0xf8] sm:$0xf]
  %v78 = vld [vmem:[%s0 + $0xfc] sm:$0xf]
  %v79 = vld [vmem:[%s0 + $0x100] sm:$0xf]
  %v80 = vld [vmem:[%s0 + $0x104] sm:$0xf]
  %v81 = vld [vmem:[%s0 + $0x108] sm:$0xf]
  %v82 = vld [vmem:[%s0 + $0x10c] sm:$0xf]
  %v83 = vld [vmem:[%s0 + $0x110] sm:$0xf]
  %v84 = vld [vmem:[%s0 + $0x114] sm:$0xf]
  %v85 = vld [vmem:[%s0 + $0x118] sm:$0xf]
  %v86 = vld [vmem:[%s0 + $0x11c] sm:$0xf]
  %v87 = vld [vmem:[%s0 + $0x120] sm:$0xf]
  %v88 = vld [vmem:[%s0 + $0x124] sm:$0xf]
  %v89 = vld [vmem:[%s0 + $0x128] sm:$0xf]
  %v90 = vld [vmem:[%s0 + $0x12c] sm:$0xf]
  %v91 = vld [vmem:[%s0 + $0x130] sm:$0xf]
  %v92 = vld [vmem:[%s0 + $0x134] sm:$0xf]
  %v93 = vld [vmem:[%s0 + $0x138] sm:$0xf]
  %v94 = vld [vmem:[%s0 + $0x13c] sm:$0xf]
  %v95 = vld [vmem:[%s0 + $0x140] sm:$0xf]
  %v96 = vld [vmem:[%s0 + $0x144] sm:$0xf]
  %v97 = vld [vmem:[%s0 + $0x148] sm:$0xf]
  %v98 = vld [vmem:[%s0 + $0x14c] sm:$0xf]
  %v99 = vld [vmem:[%s0 + $0x150] sm:$0xf]
  %v100 = vld [vmem:[%s0 + $0x154] sm:$0xf]
  %v101 = vld [vmem:[%s0 + $0x158] sm:$0xf]
  %v102 = vld [vmem:[%s0 + $0x15c] sm:$0xf]
  %v103 = vld [vmem:[%s0 + $0x160] sm:$0xf]
  %v104 = vld [vmem:[%s0 + $0x164] sm:$0xf]
  %v105 = vld [vmem:[%s0 + $0x168] sm:$0xf]
  %v106 = vld [vmem:[%s0 + $0x16c] sm:$0xf]
  %v107 = vld [vmem:[%s0 + $0x170] sm:$0xf]
  %v108 = vld [vmem:[%s0 + $0x174] sm:$0xf]
  %v109 = vld [vmem:[%s0 + $0x178] sm:$0xf]
  %v110 = vld [vmem:[%s0 + $0x17c] sm:$0xf]
  %v111 = vld [vmem:[%s0 + $0x180] sm:$0xf]
  %v112 = vld [vmem:[%s0 + $0x184] sm:$0xf]
  %v113 = vld [vmem:[%s0 + $0x188] sm:$0xf]
  %v114 = vld [vmem:[%s0 + $0x18c] sm:$0xf]
  %v115 = vld [vmem:[%s0 + $0x190] sm:$0xf]
  %v116 = vld [vmem:[%s0 + $0x194] sm:$0xf]
  %v117 = vld [vmem:[%s0 + $0x198] sm:$0xf]
  %v118 = vld [vmem:[%s0 + $0x19c] sm:$0xf]
  %v119 = vld [vmem:[%s0 + $0x1a0] sm:$0xf]
  %v120 = vld [vmem:[%s0 + $0x1a4] sm:$0xf]
  %v121 = vld [vmem:[%s0 + $0x1a8] sm:$0xf]
  %v122 = vld [vmem:[%s0 + $0x1ac] sm:$0xf]
  %v123 = vld [vmem:[%s0 + $0x1b0] sm:$0xf]
  %v124 = vld [vmem:[%s0 + $0x1b4] sm:$0xf]
  %v125 = vld [vmem:[%s0 + $0x1b8] sm:$0xf]
  %v126 = vld [vmem:[%s0 + $0x1bc] sm:$0xf]
  %v127 = vld [vmem:[%s0 + $0x1c0] sm:$0xf]
  %v128 = vld [vmem:[%s0 + $0x1c4] sm:$0xf]
  %v129 = vld [vmem:[%s0 + $0x1c8] sm:$0xf]
  %v130 = vld [vmem:[%s0 + $0x1cc] sm:$0xf]
  %v131 = vld [vmem:[%s0 + $0x1d0] sm:$0xf]
  %v132 = vld [vmem:[%s0 + $0x1d4] sm:$0xf]
  %v133 = vld [vmem:[%s0 + $0x1d8] sm:$0xf]
  %v134 = vld [vmem:[%s0 + $0x1dc] sm:$0xf]
  %v135 = vld [vmem:[%s0 + $0x1e0] sm:$0xf]
  %v136 = vld [vmem:[%s0 + $0x1e4] sm:$0xf]
  %v137 = vld [vmem:[%s0 + $0x1e8] sm:$0xf]
  %v138 = vld [vmem:[%s0 + $0x1ec] sm:$0xf]
  %v139 = vld [vmem:[%s0 + $0x1f0] sm:$0xf]
  %v140 = vld [vmem:[%s0 + $0x1f4] sm:$0xf]
  %v141 = vld [vmem:[%s0 + $0x1f8] sm:$0xf]
  %v142 = vld [vmem:[%s0 + $0x1fc] sm:$0xf]
  %v143 = vld [vmem:[%s0 + $0x200] sm:$0xf]
  %v144 = vld [vmem:[%s0 + $0x204] sm:$0xf]
  %v145 = vld [vmem:[%s0 + $0x208] sm:$0xf]
  %v146 = vld [vmem:[%s0 + $0x20c] sm:$0xf]
  %v147 = vld [vmem:[%s0 + $0x210] sm:$0xf]
  %v148 = vld [vmem:[%s0 + $0x214] sm:$0xf]
  %v149 = vld [vmem:[%s0 + $0x218] sm:$0xf]
  %v150 = vld [vmem:[%s0 + $0x21c] sm:$0xf]
  %v151 = vld [vmem:[%s0 + $0x220] sm:$0xf]
  %v152 = vld [vmem:[%s0 + $0x224] sm:$0xf]
  %v153 = vld [vmem:[%s0 + $0x228] sm:$0xf]
  %v154 = vld [vmem:[%s0 + $0x22c] sm:$0xf]
  %v155 = vld [vmem:[%s0 + $0x230] sm:$0xf]
  %v156 = vld [vmem:[%s0 + $0x234] sm:$0xf]
  %v157 = vld [vmem:[%s0 + $0x238] sm:$0xf]
  %v158 = vld [vmem:[%s0 + $0x23c] sm:$0xf]
  %v159 = vld [vmem:[%s0 + $0x240] sm:$0xf]
  %v160 = vld [vmem:[%s0 + $0x244] sm:$0xf]
  %v161 = vld [vmem:[%s0 + $0x248] sm:$0xf]
  %v162 = vld [vmem:[%s0 + $0x24c] sm:$0xf]
  %v163 = vld [vmem:[%s0 + $0x250] sm:$0xf]
  %v164 = vld [vmem:[%s0 + $0x254] sm:$0xf]
  %v165 = vld [vmem:[%s0 + $0x258] sm:$0xf]
  %v166 = vld [vmem:[%s0 + $0x25c] sm:$0xf]
  %v167 = vld [vmem:[%s0 + $0x260] sm:$0xf]
  %v168 = vld [vmem:[%s0 + $0x264] sm:$0xf]
  %v169 = vld [vmem:[%s0 + $0x268] sm:$0xf]
  %v170 = vld [vmem:[%s0 + $0x26c] sm:$0xf]
  %v171 = vld [vmem:[%s0 + $0x270] sm:$0xf]
  %v172 = vld [vmem:[%s0 + $0x274] sm:$0xf]
  %v173 = vld [vmem:[%s0 + $0x278] sm:$0xf]
  %v174 = vld [vmem:[%s0 + $0x27c] sm:$0xf]
  %v175 = vld [vmem:[%s0 + $0x280] sm:$0xf]
  %v176 = vld [vmem:[%s0 + $0x284] sm:$0xf]
  %v177 = vld [vmem:[%s0 + $0x288] sm:$0xf]
  %v178 = vld [vmem:[%s0 + $0x28c] sm:$0xf]
  %v179 = vld [vmem:[%s0 + $0x290] sm:$0xf]
  %v180 = vld [vmem:[%s0 + $0x294] sm:$0xf]
  %v181 = vld [vmem:[%s0 + $0x298] sm:$0xf]
  %v182 = vld [vmem:[%s0 + $0x29c] sm:$0xf]
  %v183 = vld [vmem:[%s0 + $0x2a0] sm:$0xf]
  %v184 = vld [vmem:[%s0 + $0x2a4] sm:$0xf]
  %v185 = vld [vmem:[%s0 + $0x2a8] sm:$0xf]
  %v186 = vld [vmem:[%s0 + $0x2ac] sm:$0xf]
  %v187 = vld [vmem:[%s0 + $0x2b0] sm:$0xf]
  %v188 = vld [vmem:[%s0 + $0x2b4] sm:$0xf]
  %v189 = vld [vmem:[%s0 + $0x2b8] sm:$0xf]
  %v190 = vld [vmem:[%s0 + $0x2bc] sm:$0xf]
  %v191 = vld [vmem:[%s0 + $0x2c0] sm:$0xf]
  %v192 = vld [vmem:[%s0 + $0x2c4] sm:$0xf]
  %v193 = vld [vmem:[%s0 + $0x2c8] sm:$0xf]
  %v194 = vld [vmem:[%s0 + $0x2cc] sm:$0xf]
  %v195 = vld [vmem:[%s0 + $0x2d0] sm:$0xf]
  %v196 = vld [vmem:[%s0 + $0x2d4] sm:$0xf]
  %v197 = vld [vmem:[%s0 + $0x2d8] sm:$0xf]
  %v198 = vld [vmem:[%s0 + $0x2dc] sm:$0xf]
  %v199 = vld [vmem:[%s0 + $0x2e0] sm:$0xf]
  %v200 = vld [vmem:[%s0 + $0x2e4] sm:$0xf]
  %v201 = vld [vmem:[%s0 + $0x2e8] sm:$0xf]
  %v202 = vld [vmem:[%s0 + $0x2ec] sm:$0xf]
  %v203 = vld [vmem:[%s0 + $0x2f0] sm:$0xf]
  %v204 = vld [vmem:[%s0 + $0x2f4] sm:$0xf]
  %v205 = vld [vmem:[%s0 + $0x2f8] sm:$0xf]
  %v206 = vld [vmem:[%s0 + $0x2fc] sm:$0xf]
  %v207 = vld [vmem:[%s0 + $0x300] sm:$0xf]
  %v208 = vld [vmem:[%s0 + $0x304] sm:$0xf]
  %v209 = vld [vmem:[%s0 + $0x308] sm:$0xf]
  %v210 = vld [vmem:[%s0 + $0x30c] sm:$0xf]
  %v211 = vld [vmem:[%s0 + $0x310] sm:$0xf]
  %v212 = vld [vmem:[%s0 + $0x314] sm:$0xf]
  %v213 = vld [vmem:[%s0 + $0x318] sm:$0xf]
  %v214 = vld [vmem:[%s0 + $0x31c] sm:$0xf]
  %v215 = vld [vmem:[%s0 + $0x320] sm:$0xf]
  %v216 = vld [vmem:[%s0 + $0x324] sm:$0xf]
  %v217 = vld [vmem:[%s0 + $0x328] sm:$0xf]
  %v218 = vld [vmem:[%s0 + $0x32c] sm:$0xf]
  %v219 = vld [vmem:[%s0 + $0x330] sm:$0xf]
  %v220 = vld [vmem:[%s0 + $0x334] sm:$0xf]
  %v221 = vld [vmem:[%s0 + $0x338] sm:$0xf]
  %v222 = vld [vmem:[%s0 + $0x33c] sm:$0xf]
  %v223 = vld [vmem:[%s0 + $0x340] sm:$0xf]
  %v224 = vld [vmem:[%s0 + $0x344] sm:$0xf]
  %v225 = vld [vmem:[%s0 + $0x348] sm:$0xf]
  %v226 = vld [vmem:[%s0 + $0x34c] sm:$0xf]
  %v227 = vld [vmem:[%s0 + $0x350] sm:$0xf]
  %v228 = vld [vmem:[%s0 + $0x354] sm:$0xf]
  %v229 = vld [vmem:[%s0 + $0x358] sm:$0xf]
  %v230 = vld [vmem:[%s0 + $0x35c] sm:$0xf]
  %v231 = vld [vmem:[%s0 + $0x360] sm:$0xf]
  %v232 = vld [vmem:[%s0 + $0x364] sm:$0xf]
  %v233 = vld [vmem:[%s0 + $0x368] sm:$0xf]
  %v234 = vld [vmem:[%s0 + $0x36c] sm:$0xf]
  %v235 = vld [vmem:[%s0 + $0x370] sm:$0xf]
  %v236 = vld [vmem:[%s0 + $0x374] sm:$0xf]
  %v237 = vld [vmem:[%s0 + $0x378] sm:$0xf]
  %v238 = vld [vmem:[%s0 + $0x37c] sm:$0xf]
  %v239 = vld [vmem:[%s0 + $0x380] sm:$0xf]
  %v240 = vld [vmem:[%s0 + $0x384] sm:$0xf]
  %v241 = vld [vmem:[%s0 + $0x388] sm:$0xf]
  %v242 = vld [vmem:[%s0 + $0x38c] sm:$0xf]
  %v243 = vld [vmem:[%s0 + $0x390] sm:$0xf]
  %v244 = vld [vmem:[%s0 + $0x394] sm:$0xf]
  %v245 = vld [vmem:[%s0 + $0x398] sm:$0xf]
  %v246 = vld [vmem:[%s0 + $0x39c] sm:$0xf]
  %v247 = vld [vmem:[%s0 + $0x3a0] sm:$0xf]
  %v248 = vld [vmem:[%s0 + $0x3a4] sm:$0xf]
  %v249 = vld [vmem:[%s0 + $0x3a8] sm:$0xf]
  %v250 = vld [vmem:[%s0 + $0x3ac] sm:$0xf]
  %v251 = vld [vmem:[%s0 + $0x3b0] sm:$0xf]
  %v252 = vld [vmem:[%s0 + $0x3b4] sm:$0xf]
  %v253 = vld [vmem:[%s0 + $0x3b8] sm:$0xf]
  %v254 = vld [vmem:[%s0 + $0x3bc] sm:$0xf]
  %v255 = vld [vmem:[%s0 + $0x3c0] sm:$0xf]
  %v256 = vld [vmem:[%s0 + $0x3c4] sm:$0xf]
  %v257 = vld [vmem:[%s0 + $0x3c8] sm:$0xf]
  %v258 = vld [vmem:[%s0 + $0x3cc] sm:$0xf]
  %v259 = vld [vmem:[%s0 + $0x3d0] sm:$0xf]
  %v260 = vld [vmem:[%s0 + $0x3d4] sm:$0xf]
  %v261 = vld [vmem:[%s0 + $0x3d8] sm:$0xf]
  %v262 = vld [vmem:[%s0 + $0x3dc] sm:$0xf]
  %v263 = vld [vmem:[%s0 + $0x3e0] sm:$0xf]
  %v264 = vld [vmem:[%s0 + $0x3e4] sm:$0xf]
  %v265 = vld [vmem:[%s0 + $0x3e8] sm:$0xf]
  %v266 = vld [vmem:[%s0 + $0x3ec] sm:$0xf]
  %v267 = vld [vmem:[%s0 + $0x3f0] sm:$0xf]
  %v268 = vld [vmem:[%s0 + $0x3f4] sm:$0xf]
  %v269 = vld [vmem:[%s0 + $0x3f8] sm:$0xf]
  %v270 = vld [vmem:[%s0 + $0x3fc] sm:$0xf]
  %v271 = vld [vmem:[%s0 + $0x400] sm:$0xf]
  %v272 = vld [vmem:[%s0 + $0x404] sm:$0xf]
  %v273 = vld [vmem:[%s0 + $0x408] sm:$0xf]
  %v274 = vld [vmem:[%s0 + $0x40c] sm:$0xf]
  %v275 = vld [vmem:[%s0 + $0x410] sm:$0xf]
  %v276 = vld [vmem:[%s0 + $0x414] sm:$0xf]
  %v277 = vld [vmem:[%s0 + $0x418] sm:$0xf]
  %v278 = vld [vmem:[%s0 + $0x41c] sm:$0xf]
  %v279 = vld [vmem:[%s0 + $0x420] sm:$0xf]
  %v280 = vld [vmem:[%s0 + $0x424] sm:$0xf]
  %v281 = vld [vmem:[%s0 + $0x428] sm:$0xf]
  %v282 = vld [vmem:[%s0 + $0x42c] sm:$0xf]
  %v283 = vld [vmem:[%s0 + $0x430] sm:$0xf]
  %v284 = vld [vmem:[%s0 + $0x434] sm:$0xf]
  %v285 = vld [vmem:[%s0 + $0x438] sm:$0xf]
  %v286 = vld [vmem:[%s0 + $0x43c] sm:$0xf]
  %v287 = vld [vmem:[%s0 + $0x440] sm:$0xf]
  %v288 = vld [vmem:[%s0 + $0x444] sm:$0xf]
  %v289 = vld [vmem:[%s0 + $0x448] sm:$0xf]
  %v290 = vld [vmem:[%s0 + $0x44c] sm:$0xf]
  %v291 = vld [vmem:[%s0 + $0x450] sm:$0xf]
  %v292 = vld [vmem:[%s0 + $0x454] sm:$0xf]
  %v293 = vld [vmem:[%s0 + $0x458] sm:$0xf]
  %v294 = vld [vmem:[%s0 + $0x45c] sm:$0xf]
  %v295 = vld [vmem:[%s0 + $0x460] sm:$0xf]
  %v296 = vld [vmem:[%s0 + $0x464] sm:$0xf]
  %v297 = vld [vmem:[%s0 + $0x468] sm:$0xf]
  %v298 = vld [vmem:[%s0 + $0x46c] sm:$0xf]
  %v299 = vld [vmem:[%s0 + $0x470] sm:$0xf]
  %v300 = vld [vmem:[%s0 + $0x474] sm:$0xf]
  %v301 = vld [vmem:[%s0 + $0x478] sm:$0xf]
  %v302 = vld [vmem:[%s0 + $0x47c] sm:$0xf]
  %v303 = vld [vmem:[%s0 + $0x480] sm:$0xf]
  %v304 = vld [vmem:[%s0 + $0x484] sm:$0xf]
  %v305 = vld [vmem:[%s0 + $0x488] sm:$0xf]
  %v306 = vld [vmem:[%s0 + $0x48c] sm:$0xf]
  %v307 = vld [vmem:[%s0 + $0x490] sm:$0xf]
  %v308 = vld [vmem:[%s0 + $0x494] sm:$0xf]
  %v309 = vld [vmem:[%s0 + $0x498] sm:$0xf]
  %v310 = vld [vmem:[%s0 + $0x49c] sm:$0xf]
  %v311 = vld [vmem:[%s0 + $0x4a0] sm:$0xf]
  %v312 = vld [vmem:[%s0 + $0x4a4] sm:$0xf]
  %v313 = vld [vmem:[%s0 + $0x4a8] sm:$0xf]
  %v314 = vld [vmem:[%s0 + $0x4ac] sm:$0xf]
  %v315 = vld [vmem:[%s0 + $0x4b0] sm:$0xf]
  %v316 = vld [vmem:[%s0 + $0x4b4] sm:$0xf]
  %v317 = vld [vmem:[%s0 + $0x4b8] sm:$0xf]
  %v318 = vld [vmem:[%s0 + $0x4bc] sm:$0xf]
  %v319 = vld [vmem:[%s0 + $0x4c0] sm:$0xf]
  %v320 = vld [vmem:[%s0 + $0x4c4] sm:$0xf]
  %v321 = vld [vmem:[%s0 + $0x4c8] sm:$0xf]
  %v322 = vld [vmem:[%s0 + $0x4cc] sm:$0xf]
  %v323 = vld [vmem:[%s0 + $0x4d0] sm:$0xf]
  %v324 = vld [vmem:[%s0 + $0x4d4] sm:$0xf]
  %v325 = vld [vmem:[%s0 + $0x4d8] sm:$0xf]
  %v326 = vld [vmem:[%s0 + $0x4dc] sm:$0xf]
  %v327 = vld [vmem:[%s0 + $0x4e0] sm:$0xf]
  %v328 = vld [vmem:[%s0 + $0x4e4] sm:$0xf]
  %v329 = vld [vmem:[%s0 + $0x4e8] sm:$0xf]
  %v330 = vld [vmem:[%s0 + $0x4ec] sm:$0xf]
  %v331 = vld [vmem:[%s0 + $0x4f0] sm:$0xf]
  %v332 = vld [vmem:[%s0 + $0x4f4] sm:$0xf]
  %v333 = vld [vmem:[%s0 + $0x4f8] sm:$0xf]
  %v334 = vld [vmem:[%s0 + $0x4fc] sm:$0xf]
  %v335 = vld [vmem:[%s0 + $0x500] sm:$0xf]
  %v336 = vld [vmem:[%s0 + $0x504] sm:$0xf]
  %v337 = vld [vmem:[%s0 + $0x508] sm:$0xf]
  %v338 = vld [vmem:[%s0 + $0x50c] sm:$0xf]
  %v339 = vld [vmem:[%s0 + $0x510] sm:$0xf]
  %v340 = vld [vmem:[%s0 + $0x514] sm:$0xf]
  %v341 = vld [vmem:[%s0 + $0x518] sm:$0xf]
  %v342 = vld [vmem:[%s0 + $0x51c] sm:$0xf]
  %v343 = vld [vmem:[%s0 + $0x520] sm:$0xf]
  %v344 = vld [vmem:[%s0 + $0x524] sm:$0xf]
  %v345 = vld [vmem:[%s0 + $0x528] sm:$0xf]
  %v346 = vld [vmem:[%s0 + $0x52c] sm:$0xf]
  %v347 = vld [vmem:[%s0 + $0x530] sm:$0xf]
  %v348 = vld [vmem:[%s0 + $0x534] sm:$0xf]
  %v349 = vld [vmem:[%s0 + $0x538] sm:$0xf]
  %v350 = vld [vmem:[%s0 + $0x53c] sm:$0xf]
  %v351 = vld [vmem:[%s0 + $0x540] sm:$0xf]
  %v352 = vld [vmem:[%s0 + $0x544] sm:$0xf]
  %v353 = vld [vmem:[%s0 + $0x548] sm:$0xf]
  %v354 = vld [vmem:[%s0 + $0x54c] sm:$0xf]
  %v355 = vld [vmem:[%s0 + $0x550] sm:$0xf]
  %v356 = vld [vmem:[%s0 + $0x554] sm:$0xf]
  %v357 = vld [vmem:[%s0 + $0x558] sm:$0xf]
  %v358 = vld [vmem:[%s0 + $0x55c] sm:$0xf]
  %v359 = vld [vmem:[%s0 + $0x560] sm:$0xf]
  %v360 = vld [vmem:[%s0 + $0x564] sm:$0xf]
  %v361 = vld [vmem:[%s0 + $0x568] sm:$0xf]
  %v362 = vld [vmem:[%s0 + $0x56c] sm:$0xf]
  %v363 = vld [vmem:[%s0 + $0x570] sm:$0xf]
  %v364 = vld [vmem:[%s0 + $0x574] sm:$0xf]
  %v365 = vld [vmem:[%s0 + $0x578] sm:$0xf]
  %v366 = vld [vmem:[%s0 + $0x57c] sm:$0xf]
  %v367 = vld [vmem:[%s0 + $0x580] sm:$0xf]
  %v368 = vld [vmem:[%s0 + $0x584] sm:$0xf]
  %v369 = vld [vmem:[%s0 + $0x588] sm:$0xf]
  %v370 = vld [vmem:[%s0 + $0x58c] sm:$0xf]
  %v371 = vld [vmem:[%s0 + $0x590] sm:$0xf]
  %v372 = vld [vmem:[%s0 + $0x594] sm:$0xf]
  %v373 = vld [vmem:[%s0 + $0x598] sm:$0xf]
  %v374 = vld [vmem:[%s0 + $0x59c] sm:$0xf]
  %v375 = vld [vmem:[%s0 + $0x5a0] sm:$0xf]
  %v376 = vld [vmem:[%s0 + $0x5a4] sm:$0xf]
  %v377 = vld [vmem:[%s0 + $0x5a8] sm:$0xf]
  %v378 = vld [vmem:[%s0 + $0x5ac] sm:$0xf]
  %v379 = vld [vmem:[%s0 + $0x5b0] sm:$0xf]
  %v380 = vld [vmem:[%s0 + $0x5b4] sm:$0xf]
  %v381 = vld [vmem:[%s0 + $0x5b8] sm:$0xf]
  %v382 = vld [vmem:[%s0 + $0x5bc] sm:$0xf]
  %v383 = vld [vmem:[%s0 + $0x5c0] sm:$0xf]
  %v384 = vld [vmem:[%s0 + $0x5c4] sm:$0xf]
  %v385 = vld [vmem:[%s0 + $0x5c8] sm:$0xf]
  %v386 = vld [vmem:[%s0 + $0x5cc] sm:$0xf]
  %v387 = vld [vmem:[%s0 + $0x5d0] sm:$0xf]
  %v388 = vld [vmem:[%s0 + $0x5d4] sm:$0xf]
  %v389 = vld [vmem:[%s0 + $0x5d8] sm:$0xf]
  %v390 = vld [vmem:[%s0 + $0x5dc] sm:$0xf]
  %v391 = vld [vmem:[%s0 + $0x5e0] sm:$0xf]
  %v392 = vld [vmem:[%s0 + $0x5e4] sm:$0xf]
  %v393 = vld [vmem:[%s0 + $0x5e8] sm:$0xf]
  %v394 = vld [vmem:[%s0 + $0x5ec] sm:$0xf]
  %v395 = vld [vmem:[%s0 + $0x5f0] sm:$0xf]
  %v396 = vld [vmem:[%s0 + $0x5f4] sm:$0xf]
  %v397 = vld [vmem:[%s0 + $0x5f8] sm:$0xf]
  %v398 = vld [vmem:[%s0 + $0x5fc] sm:$0xf]
  %v399 = vld [vmem:[%s0 + $0x600] sm:$0xf]
  %v400 = vld [vmem:[%s0 + $0x604] sm:$0xf]
  %v401 = vld [vmem:[%s0 + $0x608] sm:$0xf]
  %v402 = vld [vmem:[%s0 + $0x60c] sm:$0xf]
  %v403 = vld [vmem:[%s0 + $0x610] sm:$0xf]
  %v404 = vld [vmem:[%s0 + $0x614] sm:$0xf]
  %v405 = vld [vmem:[%s0 + $0x618] sm:$0xf]
  %v406 = vld [vmem:[%s0 + $0x61c] sm:$0xf]
  %v407 = vld [vmem:[%s0 + $0x620] sm:$0xf]
  %v408 = vld [vmem:[%s0 + $0x624] sm:$0xf]
  %v409 = vld [vmem:[%s0 + $0x628] sm:$0xf]
  %v410 = vld [vmem:[%s0 + $0x62c] sm:$0xf]
  %v411 = vld [vmem:[%s0 + $0x630] sm:$0xf]
  %v412 = vld [vmem:[%s0 + $0x634] sm:$0xf]
  %v413 = vld [vmem:[%s0 + $0x638] sm:$0xf]
  %v414 = vld [vmem:[%s0 + $0x63c] sm:$0xf]
  %v415 = vld [vmem:[%s0 + $0x640] sm:$0xf]
  %v416 = vld [vmem:[%s0 + $0x644] sm:$0xf]
  %v417 = vld [vmem:[%s0 + $0x648] sm:$0xf]
  %v418 = vld [vmem:[%s0 + $0x64c] sm:$0xf]
  %v419 = vld [vmem:[%s0 + $0x650] sm:$0xf]
  %v420 = vld [vmem:[%s0 + $0x654] sm:$0xf]
  %v421 = vld [vmem:[%s0 + $0x658] sm:$0xf]
  %v422 = vld [vmem:[%s0 + $0x65c] sm:$0xf]
  %v423 = vld [vmem:[%s0 + $0x660] sm:$0xf]
  %v424 = vld [vmem:[%s0 + $0x664] sm:$0xf]
  %v425 = vld [vmem:[%s0 + $0x668] sm:$0xf]
  %v426 = vld [vmem:[%s0 + $0x66c] sm:$0xf]
  %v427 = vld [vmem:[%s0 + $0x670] sm:$0xf]
  %v428 = vld [vmem:[%s0 + $0x674] sm:$0xf]
  %v429 = vld [vmem:[%s0 + $0x678] sm:$0xf]
  %v430 = vld [vmem:[%s0 + $0x67c] sm:$0xf]
  %v431 = vld [vmem:[%s0 + $0x680] sm:$0xf]
  %v432 = vld [vmem:[%s0 + $0x684] sm:$0xf]
  %v433 = vld [vmem:[%s0 + $0x688] sm:$0xf]
  %v434 = vld [vmem:[%s0 + $0x68c] sm:$0xf]
  %v435 = vld [vmem:[%s0 + $0x690] sm:$0xf]
  %v436 = vld [vmem:[%s0 + $0x694] sm:$0xf]
  %v437 = vld [vmem:[%s0 + $0x698] sm:$0xf]
  %v438 = vld [vmem:[%s0 + $0x69c] sm:$0xf]
  %v439 = vld [vmem:[%s0 + $0x6a0] sm:$0xf]
  %v440 = vld [vmem:[%s0 + $0x6a4] sm:$0xf]
  %v441 = vld [vmem:[%s0 + $0x6a8] sm:$0xf]
  %v442 = vld [vmem:[%s0 + $0x6ac] sm:$0xf]
  %v443 = vld [vmem:[%s0 + $0x6b0] sm:$0xf]
  %v444 = vld [vmem:[%s0 + $0x6b4] sm:$0xf]
  %v445 = vld [vmem:[%s0 + $0x6b8] sm:$0xf]
  %v446 = vld [vmem:[%s0 + $0x6bc] sm:$0xf]
  %v447 = vld [vmem:[%s0 + $0x6c0] sm:$0xf]
  %v448 = vld [vmem:[%s0 + $0x6c4] sm:$0xf]
  %v449 = vld [vmem:[%s0 + $0x6c8] sm:$0xf]
  %v450 = vld [vmem:[%s0 + $0x6cc] sm:$0xf]
  %v451 = vld [vmem:[%s0 + $0x6d0] sm:$0xf]
  %v452 = vld [vmem:[%s0 + $0x6d4] sm:$0xf]
  %v453 = vld [vmem:[%s0 + $0x6d8] sm:$0xf]
  %v454 = vld [vmem:[%s0 + $0x6dc] sm:$0xf]
  %v455 = vld [vmem:[%s0 + $0x6e0] sm:$0xf]
  %v456 = vld [vmem:[%s1] sm:$0xf]
  %v457 = vld [vmem:[%s1 + $0x4] sm:$0xf]
  %v458 = vld [vmem:[%s1 + $0x8] sm:$0xf]
  %v459 = vld [vmem:[%s1 + $0xc] sm:$0xf]
  %v460 = vld [vmem:[%s1 + $0x10] sm:$0xf]
  %v461 = vld [vmem:[%s1 + $0x14] sm:$0xf]
  %v462 = vld [vmem:[%s1 + $0x18] sm:$0xf]
  %v463 = vld [vmem:[%s1 + $0x1c] sm:$0xf]
  %v464 = vld [vmem:[%s2] sm:$0x1]
  %v466 = vlaneseq
  %v467 = vshrl.u32 %v466, 7
  %v468 = vsub.s32 0, %v467
  %v469 = vrot.slane %v464, %v468
  %v912 = vunpack.c.l.b16 %v15
  %v913 = vunpack.c.l.b16 %v16
  %v914 = vunpack.c.l.b16 %v17
  %v915 = vunpack.c.l.b16 %v18
  %v916 = vunpack.c.l.b16 %v19
  %v917 = vunpack.c.l.b16 %v20
  %v918 = vunpack.c.l.b16 %v21
  %v919 = vunpack.c.l.b16 %v22
  %v920 = vunpack.c.l.b16 %v23
  %v921 = vunpack.c.l.b16 %v24
  %v922 = vunpack.c.l.b16 %v25
  %v923 = vunpack.c.l.b16 %v26
  %v924 = vunpack.c.l.b16 %v27
  %v925 = vunpack.c.l.b16 %v28
  %v926 = vunpack.c.l.b16 %v29
  %v927 = vunpack.c.l.b16 %v30
  %v928 = vunpack.c.l.b16 %v31
  %v929 = vunpack.c.l.b16 %v32
  %v930 = vunpack.c.l.b16 %v33
  %v931 = vunpack.c.l.b16 %v34
  %v932 = vunpack.c.l.b16 %v35
  %v933 = vunpack.c.l.b16 %v36
  %v934 = vunpack.c.l.b16 %v37
  %v935 = vunpack.c.l.b16 %v38
  %v936 = vunpack.c.l.b16 %v39
  %v937 = vunpack.c.l.b16 %v40
  %v938 = vunpack.c.l.b16 %v41
  %v939 = vunpack.c.l.b16 %v42
  %v940 = vunpack.c.l.b16 %v43
  %v941 = vunpack.c.l.b16 %v44
  %v942 = vunpack.c.l.b16 %v45
  %v943 = vunpack.c.l.b16 %v46
  %v944 = vunpack.c.l.b16 %v47
  %v945 = vunpack.c.l.b16 %v48
  %v946 = vunpack.c.l.b16 %v49
  %v947 = vunpack.c.l.b16 %v50
  %v948 = vunpack.c.l.b16 %v51
  %v949 = vunpack.c.l.b16 %v52
  %v950 = vunpack.c.l.b16 %v53
  %v951 = vunpack.c.l.b16 %v54
  %v952 = vunpack.c.l.b16 %v55
  %v953 = vunpack.c.l.b16 %v56
  %v954 = vunpack.c.l.b16 %v57
  %v955 = vunpack.c.l.b16 %v58
  %v956 = vunpack.c.l.b16 %v59
  %v957 = vunpack.c.l.b16 %v60
  %v958 = vunpack.c.l.b16 %v61
  %v959 = vunpack.c.l.b16 %v62
  %v960 = vunpack.c.l.b16 %v63
  %v961 = vunpack.c.l.b16 %v64
  %v962 = vunpack.c.l.b16 %v65
  %v963 = vunpack.c.l.b16 %v66
  %v964 = vunpack.c.l.b16 %v67
  %v965 = vunpack.c.l.b16 %v68
  %v966 = vunpack.c.l.b16 %v69
  %v967 = vunpack.c.l.b16 %v70
  %v968 = vunpack.c.l.b16 %v71
  %v969 = vunpack.c.l.b16 %v72
  %v970 = vunpack.c.l.b16 %v73
  %v971 = vunpack.c.l.b16 %v74
  %v972 = vunpack.c.l.b16 %v75
  %v973 = vunpack.c.l.b16 %v76
  %v974 = vunpack.c.l.b16 %v77
  %v975 = vunpack.c.l.b16 %v78
  %v976 = vunpack.c.l.b16 %v79
  %v977 = vunpack.c.l.b16 %v80
  %v978 = vunpack.c.l.b16 %v81
  %v979 = vunpack.c.l.b16 %v82
  %v980 = vunpack.c.l.b16 %v83
  %v981 = vunpack.c.l.b16 %v84
  %v982 = vunpack.c.l.b16 %v85
  %v983 = vunpack.c.l.b16 %v86
  %v984 = vunpack.c.l.b16 %v87
  %v985 = vunpack.c.l.b16 %v88
  %v986 = vunpack.c.l.b16 %v89
  %v987 = vunpack.c.l.b16 %v90
  %v988 = vunpack.c.l.b16 %v91
  %v989 = vunpack.c.l.b16 %v92
  %v990 = vunpack.c.l.b16 %v93
  %v991 = vunpack.c.l.b16 %v94
  %v992 = vunpack.c.l.b16 %v95
  %v993 = vunpack.c.l.b16 %v96
  %v994 = vunpack.c.l.b16 %v97
  %v995 = vunpack.c.l.b16 %v98
  %v996 = vunpack.c.l.b16 %v99
  %v997 = vunpack.c.l.b16 %v100
  %v998 = vunpack.c.l.b16 %v101
  %v999 = vunpack.c.l.b16 %v102
  %v1000 = vunpack.c.l.b16 %v103
  %v1001 = vunpack.c.l.b16 %v104
  %v1002 = vunpack.c.l.b16 %v105
  %v1003 = vunpack.c.l.b16 %v106
  %v1004 = vunpack.c.l.b16 %v107
  %v1005 = vunpack.c.l.b16 %v108
  %v1006 = vunpack.c.l.b16 %v109
  %v1007 = vunpack.c.l.b16 %v110
  %v1008 = vunpack.c.l.b16 %v111
  %v1009 = vunpack.c.l.b16 %v112
  %v1010 = vunpack.c.l.b16 %v113
  %v1011 = vunpack.c.l.b16 %v114
  %v1012 = vunpack.c.l.b16 %v115
  %v1013 = vunpack.c.l.b16 %v116
  %v1014 = vunpack.c.l.b16 %v117
  %v1015 = vunpack.c.l.b16 %v118
  %v1016 = vunpack.c.l.b16 %v119
  %v1017 = vunpack.c.l.b16 %v120
  %v1018 = vunpack.c.l.b16 %v121
  %v1019 = vunpack.c.l.b16 %v122
  %v1020 = vunpack.c.l.b16 %v123
  %v1021 = vunpack.c.l.b16 %v124
  %v1022 = vunpack.c.l.b16 %v125
  %v1023 = vunpack.c.l.b16 %v126
  %v1024 = vunpack.c.l.b16 %v127
  %v1025 = vunpack.c.l.b16 %v128
  %v1026 = vunpack.c.l.b16 %v129
  %v1027 = vunpack.c.l.b16 %v130
  %v1028 = vunpack.c.l.b16 %v131
  %v1029 = vunpack.c.l.b16 %v132
  %v1030 = vunpack.c.l.b16 %v133
  %v1031 = vunpack.c.l.b16 %v134
  %v1032 = vunpack.c.l.b16 %v135
  %v1033 = vunpack.c.l.b16 %v136
  %v1034 = vunpack.c.l.b16 %v137
  %v1035 = vunpack.c.l.b16 %v138
  %v1036 = vunpack.c.l.b16 %v139
  %v1037 = vunpack.c.l.b16 %v140
  %v1038 = vunpack.c.l.b16 %v141
  %v1039 = vunpack.c.l.b16 %v142
  %v1040 = vunpack.c.l.b16 %v143
  %v1041 = vunpack.c.l.b16 %v144
  %v1042 = vunpack.c.l.b16 %v145
  %v1043 = vunpack.c.l.b16 %v146
  %v1044 = vunpack.c.l.b16 %v147
  %v1045 = vunpack.c.l.b16 %v148
  %v1046 = vunpack.c.l.b16 %v149
  %v1047 = vunpack.c.l.b16 %v150
  %v1048 = vunpack.c.l.b16 %v151
  %v1049 = vunpack.c.l.b16 %v152
  %v1050 = vunpack.c.l.b16 %v153
  %v1051 = vunpack.c.l.b16 %v154
  %v1052 = vunpack.c.l.b16 %v155
  %v1053 = vunpack.c.l.b16 %v156
  %v1054 = vunpack.c.l.b16 %v157
  %v1055 = vunpack.c.l.b16 %v158
  %v1056 = vunpack.c.l.b16 %v159
  %v1057 = vunpack.c.l.b16 %v160
  %v1058 = vunpack.c.l.b16 %v161
  %v1059 = vunpack.c.l.b16 %v162
  %v1060 = vunpack.c.l.b16 %v163
  %v1061 = vunpack.c.l.b16 %v164
  %v1062 = vunpack.c.l.b16 %v165
  %v1063 = vunpack.c.l.b16 %v166
  %v1064 = vunpack.c.l.b16 %v167
  %v1065 = vunpack.c.l.b16 %v168
  %v1066 = vunpack.c.l.b16 %v169
  %v1067 = vunpack.c.l.b16 %v170
  %v1068 = vunpack.c.l.b16 %v171
  %v1069 = vunpack.c.l.b16 %v172
  %v1070 = vunpack.c.l.b16 %v173
  %v1071 = vunpack.c.l.b16 %v174
  %v1072 = vunpack.c.l.b16 %v175
  %v1073 = vunpack.c.l.b16 %v176
  %v1074 = vunpack.c.l.b16 %v177
  %v1075 = vunpack.c.l.b16 %v178
  %v1076 = vunpack.c.l.b16 %v179
  %v1077 = vunpack.c.l.b16 %v180
  %v1078 = vunpack.c.l.b16 %v181
  %v1079 = vunpack.c.l.b16 %v182
  %v1080 = vunpack.c.l.b16 %v183
  %v1081 = vunpack.c.l.b16 %v184
  %v1082 = vunpack.c.l.b16 %v185
  %v1083 = vunpack.c.l.b16 %v186
  %v1084 = vunpack.c.l.b16 %v187
  %v1085 = vunpack.c.l.b16 %v188
  %v1086 = vunpack.c.l.b16 %v189
  %v1087 = vunpack.c.l.b16 %v190
  %v1088 = vunpack.c.l.b16 %v191
  %v1089 = vunpack.c.l.b16 %v192
  %v1090 = vunpack.c.l.b16 %v193
  %v1091 = vunpack.c.l.b16 %v194
  %v1092 = vunpack.c.l.b16 %v195
  %v1093 = vunpack.c.l.b16 %v196
  %v1094 = vunpack.c.l.b16 %v197
  %v1095 = vunpack.c.l.b16 %v198
  %v1096 = vunpack.c.l.b16 %v199
  %v1097 = vunpack.c.l.b16 %v200
  %v1098 = vunpack.c.l.b16 %v201
  %v1099 = vunpack.c.l.b16 %v202
  %v1100 = vunpack.c.l.b16 %v203
  %v1101 = vunpack.c.l.b16 %v204
  %v1102 = vunpack.c.l.b16 %v205
  %v1103 = vunpack.c.l.b16 %v206
  %v1104 = vunpack.c.l.b16 %v207
  %v1105 = vunpack.c.l.b16 %v208
  %v1106 = vunpack.c.l.b16 %v209
  %v1107 = vunpack.c.l.b16 %v210
  %v1108 = vunpack.c.l.b16 %v211
  %v1109 = vunpack.c.l.b16 %v212
  %v1110 = vunpack.c.l.b16 %v213
  %v1111 = vunpack.c.l.b16 %v214
  %v1112 = vunpack.c.l.b16 %v215
  %v1113 = vunpack.c.l.b16 %v216
  %v1114 = vunpack.c.l.b16 %v217
  %v1115 = vunpack.c.l.b16 %v218
  %v1116 = vunpack.c.l.b16 %v219
  %v1117 = vunpack.c.l.b16 %v220
  %v1118 = vunpack.c.l.b16 %v221
  %v1119 = vunpack.c.l.b16 %v222
  %v1120 = vunpack.c.l.b16 %v223
  %v1121 = vunpack.c.l.b16 %v224
  %v1122 = vunpack.c.l.b16 %v225
  %v1123 = vunpack.c.l.b16 %v226
  %v1124 = vunpack.c.l.b16 %v227
  %v1125 = vunpack.c.l.b16 %v228
  %v1126 = vunpack.c.l.b16 %v229
  %v1127 = vunpack.c.l.b16 %v230
  %v1128 = vunpack.c.l.b16 %v231
  %v1129 = vunpack.c.l.b16 %v232
  %v1130 = vunpack.c.l.b16 %v233
  %v1131 = vunpack.c.l.b16 %v234
  %v1132 = vunpack.c.l.b16 %v235
  %v1133 = vunpack.c.l.b16 %v236
  %v1134 = vunpack.c.l.b16 %v237
  %v1135 = vunpack.c.l.b16 %v238
  %v1136 = vunpack.c.l.b16 %v239
  %v1137 = vunpack.c.l.b16 %v240
  %v1138 = vunpack.c.l.b16 %v241
  %v1139 = vunpack.c.l.b16 %v242
  %v1140 = vunpack.c.l.b16 %v243
  %v1141 = vunpack.c.l.b16 %v244
  %v1142 = vunpack.c.l.b16 %v245
  %v1143 = vunpack.c.l.b16 %v246
  %v1144 = vunpack.c.l.b16 %v247
  %v1145 = vunpack.c.l.b16 %v248
  %v1146 = vunpack.c.l.b16 %v249
  %v1147 = vunpack.c.l.b16 %v250
  %v1148 = vunpack.c.l.b16 %v251
  %v1149 = vunpack.c.l.b16 %v252
  %v1150 = vunpack.c.l.b16 %v253
  %v1151 = vunpack.c.l.b16 %v254
  %v1152 = vunpack.c.l.b16 %v255
  %v1153 = vunpack.c.l.b16 %v256
  %v1154 = vunpack.c.l.b16 %v257
  %v1155 = vunpack.c.l.b16 %v258
  %v1156 = vunpack.c.l.b16 %v259
  %v1157 = vunpack.c.l.b16 %v260
  %v1158 = vunpack.c.l.b16 %v261
  %v1159 = vunpack.c.l.b16 %v262
  %v1160 = vunpack.c.l.b16 %v263
  %v1161 = vunpack.c.l.b16 %v264
  %v1162 = vunpack.c.l.b16 %v265
  %v1163 = vunpack.c.l.b16 %v266
  %v1164 = vunpack.c.l.b16 %v267
  %v1165 = vunpack.c.l.b16 %v268
  %v1166 = vunpack.c.l.b16 %v269
  %v1167 = vunpack.c.l.b16 %v270
  %v1168 = vunpack.c.l.b16 %v271
  %v1169 = vunpack.c.l.b16 %v272
  %v1170 = vunpack.c.l.b16 %v273
  %v1171 = vunpack.c.l.b16 %v274
  %v1172 = vunpack.c.l.b16 %v275
  %v1173 = vunpack.c.l.b16 %v276
  %v1174 = vunpack.c.l.b16 %v277
  %v1175 = vunpack.c.l.b16 %v278
  %v1176 = vunpack.c.l.b16 %v279
  %v1177 = vunpack.c.l.b16 %v280
  %v1178 = vunpack.c.l.b16 %v281
  %v1179 = vunpack.c.l.b16 %v282
  %v1180 = vunpack.c.l.b16 %v283
  %v1181 = vunpack.c.l.b16 %v284
  %v1182 = vunpack.c.l.b16 %v285
  %v1183 = vunpack.c.l.b16 %v286
  %v1184 = vunpack.c.l.b16 %v287
  %v1185 = vunpack.c.l.b16 %v288
  %v1186 = vunpack.c.l.b16 %v289
  %v1187 = vunpack.c.l.b16 %v290
  %v1188 = vunpack.c.l.b16 %v291
  %v1189 = vunpack.c.l.b16 %v292
  %v1190 = vunpack.c.l.b16 %v293
  %v1191 = vunpack.c.l.b16 %v294
  %v1192 = vunpack.c.l.b16 %v295
  %v1193 = vunpack.c.l.b16 %v296
  %v1194 = vunpack.c.l.b16 %v297
  %v1195 = vunpack.c.l.b16 %v298
  %v1196 = vunpack.c.l.b16 %v299
  %v1197 = vunpack.c.l.b16 %v300
  %v1198 = vunpack.c.l.b16 %v301
  %v1199 = vunpack.c.l.b16 %v302
  %v1200 = vunpack.c.l.b16 %v303
  %v1201 = vunpack.c.l.b16 %v304
  %v1202 = vunpack.c.l.b16 %v305
  %v1203 = vunpack.c.l.b16 %v306
  %v1204 = vunpack.c.l.b16 %v307
  %v1205 = vunpack.c.l.b16 %v308
  %v1206 = vunpack.c.l.b16 %v309
  %v1207 = vunpack.c.l.b16 %v310
  %v1208 = vunpack.c.l.b16 %v311
  %v1209 = vunpack.c.l.b16 %v312
  %v1210 = vunpack.c.l.b16 %v313
  %v1211 = vunpack.c.l.b16 %v314
  %v1212 = vunpack.c.l.b16 %v315
  %v1213 = vunpack.c.l.b16 %v316
  %v1214 = vunpack.c.l.b16 %v317
  %v1215 = vunpack.c.l.b16 %v318
  %v1216 = vunpack.c.l.b16 %v319
  %v1217 = vunpack.c.l.b16 %v320
  %v1218 = vunpack.c.l.b16 %v321
  %v1219 = vunpack.c.l.b16 %v322
  %v1220 = vunpack.c.l.b16 %v323
  %v1221 = vunpack.c.l.b16 %v324
  %v1222 = vunpack.c.l.b16 %v325
  %v1223 = vunpack.c.l.b16 %v326
  %v1224 = vunpack.c.l.b16 %v327
  %v1225 = vunpack.c.l.b16 %v328
  %v1226 = vunpack.c.l.b16 %v329
  %v1227 = vunpack.c.l.b16 %v330
  %v1228 = vunpack.c.l.b16 %v331
  %v1229 = vunpack.c.l.b16 %v332
  %v1230 = vunpack.c.l.b16 %v333
  %v1231 = vunpack.c.l.b16 %v334
  %v1232 = vunpack.c.l.b16 %v335
  %v1233 = vunpack.c.l.b16 %v336
  %v1234 = vunpack.c.l.b16 %v337
  %v1235 = vunpack.c.l.b16 %v338
  %v1236 = vunpack.c.l.b16 %v339
  %v1237 = vunpack.c.l.b16 %v340
  %v1238 = vunpack.c.l.b16 %v341
  %v1239 = vunpack.c.l.b16 %v342
  %v1240 = vunpack.c.l.b16 %v343
  %v1241 = vunpack.c.l.b16 %v344
  %v1242 = vunpack.c.l.b16 %v345
  %v1243 = vunpack.c.l.b16 %v346
  %v1244 = vunpack.c.l.b16 %v347
  %v1245 = vunpack.c.l.b16 %v348
  %v1246 = vunpack.c.l.b16 %v349
  %v1247 = vunpack.c.l.b16 %v350
  %v1248 = vunpack.c.l.b16 %v351
  %v1249 = vunpack.c.l.b16 %v352
  %v1250 = vunpack.c.l.b16 %v353
  %v1251 = vunpack.c.l.b16 %v354
  %v1252 = vunpack.c.l.b16 %v355
  %v1253 = vunpack.c.l.b16 %v356
  %v1254 = vunpack.c.l.b16 %v357
  %v1255 = vunpack.c.l.b16 %v358
  %v1256 = vunpack.c.l.b16 %v359
  %v1257 = vunpack.c.l.b16 %v360
  %v1258 = vunpack.c.l.b16 %v361
  %v1259 = vunpack.c.l.b16 %v362
  %v1260 = vunpack.c.l.b16 %v363
  %v1261 = vunpack.c.l.b16 %v364
  %v1262 = vunpack.c.l.b16 %v365
  %v1263 = vunpack.c.l.b16 %v366
  %v1264 = vunpack.c.l.b16 %v367
  %v1265 = vunpack.c.l.b16 %v368
  %v1266 = vunpack.c.l.b16 %v369
  %v1267 = vunpack.c.l.b16 %v370
  %v1268 = vunpack.c.l.b16 %v371
  %v1269 = vunpack.c.l.b16 %v372
  %v1270 = vunpack.c.l.b16 %v373
  %v1271 = vunpack.c.l.b16 %v374
  %v1272 = vunpack.c.l.b16 %v375
  %v1273 = vunpack.c.l.b16 %v376
  %v1274 = vunpack.c.l.b16 %v377
  %v1275 = vunpack.c.l.b16 %v378
  %v1276 = vunpack.c.l.b16 %v379
  %v1277 = vunpack.c.l.b16 %v380
  %v1278 = vunpack.c.l.b16 %v381
  %v1279 = vunpack.c.l.b16 %v382
  %v1280 = vunpack.c.l.b16 %v383
  %v1281 = vunpack.c.l.b16 %v384
  %v1282 = vunpack.c.l.b16 %v385
  %v1283 = vunpack.c.l.b16 %v386
  %v1284 = vunpack.c.l.b16 %v387
  %v1285 = vunpack.c.l.b16 %v388
  %v1286 = vunpack.c.l.b16 %v389
  %v1287 = vunpack.c.l.b16 %v390
  %v1288 = vunpack.c.l.b16 %v391
  %v1289 = vunpack.c.l.b16 %v392
  %v1290 = vunpack.c.l.b16 %v393
  %v1291 = vunpack.c.l.b16 %v394
  %v1292 = vunpack.c.l.b16 %v395
  %v1293 = vunpack.c.l.b16 %v396
  %v1294 = vunpack.c.l.b16 %v397
  %v1295 = vunpack.c.l.b16 %v398
  %v1296 = vunpack.c.l.b16 %v399
  %v1297 = vunpack.c.l.b16 %v400
  %v1298 = vunpack.c.l.b16 %v401
  %v1299 = vunpack.c.l.b16 %v402
  %v1300 = vunpack.c.l.b16 %v403
  %v1301 = vunpack.c.l.b16 %v404
  %v1302 = vunpack.c.l.b16 %v405
  %v1303 = vunpack.c.l.b16 %v406
  %v1304 = vunpack.c.l.b16 %v407
  %v1305 = vunpack.c.l.b16 %v408
  %v1306 = vunpack.c.l.b16 %v409
  %v1307 = vunpack.c.l.b16 %v410
  %v1308 = vunpack.c.l.b16 %v411
  %v1309 = vunpack.c.l.b16 %v412
  %v1310 = vunpack.c.l.b16 %v413
  %v1311 = vunpack.c.l.b16 %v414
  %v1312 = vunpack.c.l.b16 %v415
  %v1313 = vunpack.c.l.b16 %v416
  %v1314 = vunpack.c.l.b16 %v417
  %v1315 = vunpack.c.l.b16 %v418
  %v1316 = vunpack.c.l.b16 %v419
  %v1317 = vunpack.c.l.b16 %v420
  %v1318 = vunpack.c.l.b16 %v421
  %v1319 = vunpack.c.l.b16 %v422
  %v1320 = vunpack.c.l.b16 %v423
  %v1321 = vunpack.c.l.b16 %v424
  %v1322 = vunpack.c.l.b16 %v425
  %v1323 = vunpack.c.l.b16 %v426
  %v1324 = vunpack.c.l.b16 %v427
  %v1325 = vunpack.c.l.b16 %v428
  %v1326 = vunpack.c.l.b16 %v429
  %v1327 = vunpack.c.l.b16 %v430
  %v1328 = vunpack.c.l.b16 %v431
  %v1329 = vunpack.c.l.b16 %v432
  %v1330 = vunpack.c.l.b16 %v433
  %v1331 = vunpack.c.l.b16 %v434
  %v1332 = vunpack.c.l.b16 %v435
  %v1333 = vunpack.c.l.b16 %v436
  %v1334 = vunpack.c.l.b16 %v437
  %v1335 = vunpack.c.l.b16 %v438
  %v1336 = vunpack.c.l.b16 %v439
  %v1337 = vunpack.c.l.b16 %v440
  %v1338 = vunpack.c.l.b16 %v441
  %v1339 = vunpack.c.l.b16 %v442
  %v1340 = vunpack.c.l.b16 %v443
  %v1341 = vunpack.c.l.b16 %v444
  %v1342 = vunpack.c.l.b16 %v445
  %v1343 = vunpack.c.l.b16 %v446
  %v1344 = vunpack.c.l.b16 %v447
  %v1345 = vunpack.c.l.b16 %v448
  %v1346 = vunpack.c.l.b16 %v449
  %v1347 = vunpack.c.l.b16 %v450
  %v1348 = vunpack.c.l.b16 %v451
  %v1349 = vunpack.c.l.b16 %v452
  %v1350 = vunpack.c.l.b16 %v453
  %v1351 = vunpack.c.l.b16 %v454
  %v1352 = vunpack.c.l.b16 %v455
  %v1353 = vpack.c.b16 %v913, %v912
  %v1354 = vpack.c.b16 %v915, %v914
  %v1355 = vpack.c.b16 %v917, %v916
  %v1356 = vpack.c.b16 %v919, %v918
  %v1357 = vpack.c.b16 %v921, %v920
  %v1358 = vpack.c.b16 %v923, %v922
  %v1359 = vpack.c.b16 %v925, %v924
  %v1360 = vpack.c.b16 %v927, %v926
  %v1361 = vpack.c.b16 %v929, %v928
  %v1362 = vpack.c.b16 %v931, %v930
  %v1363 = vpack.c.b16 %v933, %v932
  %v1364 = vpack.c.b16 %v935, %v934
  %v1365 = vpack.c.b16 %v937, %v936
  %v1366 = vpack.c.b16 %v939, %v938
  %v1367 = vpack.c.b16 %v941, %v940
  %v1368 = vpack.c.b16 %v943, %v942
  %v1369 = vpack.c.b16 %v945, %v944
  %v1370 = vpack.c.b16 %v947, %v946
  %v1371 = vpack.c.b16 %v949, %v948
  %v1372 = vpack.c.b16 %v951, %v950
  %v1373 = vpack.c.b16 %v953, %v952
  %v1374 = vpack.c.b16 %v955, %v954
  %v1375 = vpack.c.b16 %v957, %v956
  %v1376 = vpack.c.b16 %v959, %v958
  %v1377 = vpack.c.b16 %v961, %v960
  %v1378 = vpack.c.b16 %v963, %v962
  %v1379 = vpack.c.b16 %v965, %v964
  %v1380 = vpack.c.b16 %v967, %v966
  %v1381 = vpack.c.b16 %v969, %v968
  %v1382 = vpack.c.b16 %v971, %v970
  %v1383 = vpack.c.b16 %v973, %v972
  %v1384 = vpack.c.b16 %v975, %v974
  %v1385 = vpack.c.b16 %v977, %v976
  %v1386 = vpack.c.b16 %v979, %v978
  %v1387 = vpack.c.b16 %v981, %v980
  %v1388 = vpack.c.b16 %v983, %v982
  %v1389 = vpack.c.b16 %v985, %v984
  %v1390 = vpack.c.b16 %v987, %v986
  %v1391 = vpack.c.b16 %v989, %v988
  %v1392 = vpack.c.b16 %v991, %v990
  %v1393 = vpack.c.b16 %v993, %v992
  %v1394 = vpack.c.b16 %v995, %v994
  %v1395 = vpack.c.b16 %v997, %v996
  %v1396 = vpack.c.b16 %v999, %v998
  %v1397 = vpack.c.b16 %v1001, %v1000
  %v1398 = vpack.c.b16 %v1003, %v1002
  %v1399 = vpack.c.b16 %v1005, %v1004
  %v1400 = vpack.c.b16 %v1007, %v1006
  %v1401 = vpack.c.b16 %v1009, %v1008
  %v1402 = vpack.c.b16 %v1011, %v1010
  %v1403 = vpack.c.b16 %v1013, %v1012
  %v1404 = vpack.c.b16 %v1015, %v1014
  %v1405 = vpack.c.b16 %v1017, %v1016
  %v1406 = vpack.c.b16 %v1019, %v1018
  %v1407 = vpack.c.b16 %v1021, %v1020
  %v1408 = vpack.c.b16 %v1023, %v1022
  %v1409 = vpack.c.b16 %v1025, %v1024
  %v1410 = vpack.c.b16 %v1027, %v1026
  %v1411 = vpack.c.b16 %v1029, %v1028
  %v1412 = vpack.c.b16 %v1031, %v1030
  %v1413 = vpack.c.b16 %v1033, %v1032
  %v1414 = vpack.c.b16 %v1035, %v1034
  %v1415 = vpack.c.b16 %v1037, %v1036
  %v1416 = vpack.c.b16 %v1039, %v1038
  %v1417 = vpack.c.b16 %v1041, %v1040
  %v1418 = vpack.c.b16 %v1043, %v1042
  %v1419 = vpack.c.b16 %v1045, %v1044
  %v1420 = vpack.c.b16 %v1047, %v1046
  %v1421 = vpack.c.b16 %v1049, %v1048
  %v1422 = vpack.c.b16 %v1051, %v1050
  %v1423 = vpack.c.b16 %v1053, %v1052
  %v1424 = vpack.c.b16 %v1055, %v1054
  %v1425 = vpack.c.b16 %v1057, %v1056
  %v1426 = vpack.c.b16 %v1059, %v1058
  %v1427 = vpack.c.b16 %v1061, %v1060
  %v1428 = vpack.c.b16 %v1063, %v1062
  %v1429 = vpack.c.b16 %v1065, %v1064
  %v1430 = vpack.c.b16 %v1067, %v1066
  %v1431 = vpack.c.b16 %v1069, %v1068
  %v1432 = vpack.c.b16 %v1071, %v1070
  %v1433 = vpack.c.b16 %v1073, %v1072
  %v1434 = vpack.c.b16 %v1075, %v1074
  %v1435 = vpack.c.b16 %v1077, %v1076
  %v1436 = vpack.c.b16 %v1079, %v1078
  %v1437 = vpack.c.b16 %v1081, %v1080
  %v1438 = vpack.c.b16 %v1083, %v1082
  %v1439 = vpack.c.b16 %v1085, %v1084
  %v1440 = vpack.c.b16 %v1087, %v1086
  %v1441 = vpack.c.b16 %v1089, %v1088
  %v1442 = vpack.c.b16 %v1091, %v1090
  %v1443 = vpack.c.b16 %v1093, %v1092
  %v1444 = vpack.c.b16 %v1095, %v1094
  %v1445 = vpack.c.b16 %v1097, %v1096
  %v1446 = vpack.c.b16 %v1099, %v1098
  %v1447 = vpack.c.b16 %v1101, %v1100
  %v1448 = vpack.c.b16 %v1103, %v1102
  %v1449 = vpack.c.b16 %v1105, %v1104
  %v1450 = vpack.c.b16 %v1107, %v1106
  %v1451 = vpack.c.b16 %v1109, %v1108
  %v1452 = vpack.c.b16 %v1111, %v1110
  %v1453 = vpack.c.b16 %v1113, %v1112
  %v1454 = vpack.c.b16 %v1115, %v1114
  %v1455 = vpack.c.b16 %v1117, %v1116
  %v1456 = vpack.c.b16 %v1119, %v1118
  %v1457 = vpack.c.b16 %v1121, %v1120
  %v1458 = vpack.c.b16 %v1123, %v1122
  %v1459 = vpack.c.b16 %v1125, %v1124
  %v1460 = vpack.c.b16 %v1127, %v1126
  %v1461 = vpack.c.b16 %v1129, %v1128
  %v1462 = vpack.c.b16 %v1131, %v1130
  %v1463 = vpack.c.b16 %v1133, %v1132
  %v1464 = vpack.c.b16 %v1135, %v1134
  %v1465 = vpack.c.b16 %v1137, %v1136
  %v1466 = vpack.c.b16 %v1139, %v1138
  %v1467 = vpack.c.b16 %v1141, %v1140
  %v1468 = vpack.c.b16 %v1143, %v1142
  %v1469 = vpack.c.b16 %v1145, %v1144
  %v1470 = vpack.c.b16 %v1147, %v1146
  %v1471 = vpack.c.b16 %v1149, %v1148
  %v1472 = vpack.c.b16 %v1151, %v1150
  %v1473 = vpack.c.b16 %v1153, %v1152
  %v1474 = vpack.c.b16 %v1155, %v1154
  %v1475 = vpack.c.b16 %v1157, %v1156
  %v1476 = vpack.c.b16 %v1159, %v1158
  %v1477 = vpack.c.b16 %v1161, %v1160
  %v1478 = vpack.c.b16 %v1163, %v1162
  %v1479 = vpack.c.b16 %v1165, %v1164
  %v1480 = vpack.c.b16 %v1167, %v1166
  %v1481 = vpack.c.b16 %v1169, %v1168
  %v1482 = vpack.c.b16 %v1171, %v1170
  %v1483 = vpack.c.b16 %v1173, %v1172
  %v1484 = vpack.c.b16 %v1175, %v1174
  %v1485 = vpack.c.b16 %v1177, %v1176
  %v1486 = vpack.c.b16 %v1179, %v1178
  %v1487 = vpack.c.b16 %v1181, %v1180
  %v1488 = vpack.c.b16 %v1183, %v1182
  %v1489 = vpack.c.b16 %v1185, %v1184
  %v1490 = vpack.c.b16 %v1187, %v1186
  %v1491 = vpack.c.b16 %v1189, %v1188
  %v1492 = vpack.c.b16 %v1191, %v1190
  %v1493 = vpack.c.b16 %v1193, %v1192
  %v1494 = vpack.c.b16 %v1195, %v1194
  %v1495 = vpack.c.b16 %v1197, %v1196
  %v1496 = vpack.c.b16 %v1199, %v1198
  %v1497 = vpack.c.b16 %v1201, %v1200
  %v1498 = vpack.c.b16 %v1203, %v1202
  %v1499 = vpack.c.b16 %v1205, %v1204
  %v1500 = vpack.c.b16 %v1207, %v1206
  %v1501 = vpack.c.b16 %v1209, %v1208
  %v1502 = vpack.c.b16 %v1211, %v1210
  %v1503 = vpack.c.b16 %v1213, %v1212
  %v1504 = vpack.c.b16 %v1215, %v1214
  %v1505 = vpack.c.b16 %v1217, %v1216
  %v1506 = vpack.c.b16 %v1219, %v1218
  %v1507 = vpack.c.b16 %v1221, %v1220
  %v1508 = vpack.c.b16 %v1223, %v1222
  %v1509 = vpack.c.b16 %v1225, %v1224
  %v1510 = vpack.c.b16 %v1227, %v1226
  %v1511 = vpack.c.b16 %v1229, %v1228
  %v1512 = vpack.c.b16 %v1231, %v1230
  %v1513 = vpack.c.b16 %v1233, %v1232
  %v1514 = vpack.c.b16 %v1235, %v1234
  %v1515 = vpack.c.b16 %v1237, %v1236
  %v1516 = vpack.c.b16 %v1239, %v1238
  %v1517 = vpack.c.b16 %v1241, %v1240
  %v1518 = vpack.c.b16 %v1243, %v1242
  %v1519 = vpack.c.b16 %v1245, %v1244
  %v1520 = vpack.c.b16 %v1247, %v1246
  %v1521 = vpack.c.b16 %v1249, %v1248
  %v1522 = vpack.c.b16 %v1251, %v1250
  %v1523 = vpack.c.b16 %v1253, %v1252
  %v1524 = vpack.c.b16 %v1255, %v1254
  %v1525 = vpack.c.b16 %v1257, %v1256
  %v1526 = vpack.c.b16 %v1259, %v1258
  %v1527 = vpack.c.b16 %v1261, %v1260
  %v1528 = vpack.c.b16 %v1263, %v1262
  %v1529 = vpack.c.b16 %v1265, %v1264
  %v1530 = vpack.c.b16 %v1267, %v1266
  %v1531 = vpack.c.b16 %v1269, %v1268
  %v1532 = vpack.c.b16 %v1271, %v1270
  %v1533 = vpack.c.b16 %v1273, %v1272
  %v1534 = vpack.c.b16 %v1275, %v1274
  %v1535 = vpack.c.b16 %v1277, %v1276
  %v1536 = vpack.c.b16 %v1279, %v1278
  %v1537 = vpack.c.b16 %v1281, %v1280
  %v1538 = vpack.c.b16 %v1283, %v1282
  %v1539 = vpack.c.b16 %v1285, %v1284
  %v1540 = vpack.c.b16 %v1287, %v1286
  %v1541 = vpack.c.b16 %v1289, %v1288
  %v1542 = vpack.c.b16 %v1291, %v1290
  %v1543 = vpack.c.b16 %v1293, %v1292
  %v1544 = vpack.c.b16 %v1295, %v1294
  %v1545 = vpack.c.b16 %v1297, %v1296
  %v1546 = vpack.c.b16 %v1299, %v1298
  %v1547 = vpack.c.b16 %v1301, %v1300
  %v1548 = vpack.c.b16 %v1303, %v1302
  %v1549 = vpack.c.b16 %v1305, %v1304
  %v1550 = vpack.c.b16 %v1307, %v1306
  %v1551 = vpack.c.b16 %v1309, %v1308
  %v1552 = vpack.c.b16 %v1311, %v1310
  %v1553 = vpack.c.b16 %v1313, %v1312
  %v1554 = vpack.c.b16 %v1315, %v1314
  %v1555 = vpack.c.b16 %v1317, %v1316
  %v1556 = vpack.c.b16 %v1319, %v1318
  %v1557 = vpack.c.b16 %v1321, %v1320
  %v1558 = vpack.c.b16 %v1323, %v1322
  %v1559 = vpack.c.b16 %v1325, %v1324
  %v1560 = vpack.c.b16 %v1327, %v1326
  %v1561 = vpack.c.b16 %v1329, %v1328
  %v1562 = vpack.c.b16 %v1331, %v1330
  %v1563 = vpack.c.b16 %v1333, %v1332
  %v1564 = vpack.c.b16 %v1335, %v1334
  %v1565 = vpack.c.b16 %v1337, %v1336
  %v1566 = vpack.c.b16 %v1339, %v1338
  %v1567 = vpack.c.b16 %v1341, %v1340
  %v1568 = vpack.c.b16 %v1343, %v1342
  %v1569 = vpack.c.b16 %v1345, %v1344
  %v1570 = vpack.c.b16 %v1347, %v1346
  %v1571 = vpack.c.b16 %v1349, %v1348
  %v1572 = vpack.c.b16 %v1351, %v1350
  %v1573 = vpack.c.b16 %v1352, %v1352
  %v1582 = vunpack.c.l.b16 %v456
  %v1583 = vunpack.c.l.b16 %v457
  %v1584 = vunpack.c.l.b16 %v458
  %v1585 = vunpack.c.l.b16 %v459
  %v1586 = vunpack.c.l.b16 %v460
  %v1587 = vunpack.c.l.b16 %v461
  %v1588 = vunpack.c.l.b16 %v462
  %v1589 = vunpack.c.l.b16 %v463
  %v1590 = vpack.c.b16 %v1583, %v1582
  %v1591 = vpack.c.b16 %v1585, %v1584
  %v1592 = vpack.c.b16 %v1587, %v1586
  %v1593 = vpack.c.b16 %v1589, %v1588
  %vm1598 = vcmask 523264
  %v1600 = vsel %vm1598, %v1353, 0
  %v1603 = vsel %vm1598, %v1354, 0
  %v1606 = vsel %vm1598, %v1355, 0
  %v1609 = vsel %vm1598, %v1356, 0
  %v1612 = vsel %vm1598, %v1357, 0
  %v1615 = vsel %vm1598, %v1358, 0
  %v1618 = vsel %vm1598, %v1359, 0
  %v1621 = vsel %vm1598, %v1360, 0
  %v1624 = vsel %vm1598, %v1361, 0
  %v1627 = vsel %vm1598, %v1362, 0
  %v1630 = vsel %vm1598, %v1363, 0
  %v1633 = vsel %vm1598, %v1364, 0
  %v1636 = vsel %vm1598, %v1365, 0
  %v1639 = vsel %vm1598, %v1366, 0
  %v1642 = vsel %vm1598, %v1367, 0
  %v1645 = vsel %vm1598, %v1368, 0
  %v1648 = vsel %vm1598, %v1369, 0
  %v1651 = vsel %vm1598, %v1370, 0
  %v1654 = vsel %vm1598, %v1371, 0
  %v1657 = vsel %vm1598, %v1372, 0
  %v1660 = vsel %vm1598, %v1373, 0
  %v1663 = vsel %vm1598, %v1374, 0
  %v1666 = vsel %vm1598, %v1375, 0
  %v1669 = vsel %vm1598, %v1376, 0
  %v1672 = vsel %vm1598, %v1377, 0
  %v1675 = vsel %vm1598, %v1378, 0
  %v1678 = vsel %vm1598, %v1379, 0
  %v1681 = vsel %vm1598, %v1380, 0
  %v1684 = vsel %vm1598, %v1381, 0
  %v1687 = vsel %vm1598, %v1382, 0
  %v1690 = vsel %vm1598, %v1383, 0
  %v1693 = vsel %vm1598, %v1384, 0
  %v1696 = vsel %vm1598, %v1385, 0
  %v1699 = vsel %vm1598, %v1386, 0
  %v1702 = vsel %vm1598, %v1387, 0
  %v1705 = vsel %vm1598, %v1388, 0
  %v1708 = vsel %vm1598, %v1389, 0
  %v1711 = vsel %vm1598, %v1390, 0
  %v1714 = vsel %vm1598, %v1391, 0
  %v1717 = vsel %vm1598, %v1392, 0
  %v1720 = vsel %vm1598, %v1393, 0
  %v1723 = vsel %vm1598, %v1394, 0
  %v1726 = vsel %vm1598, %v1395, 0
  %v1729 = vsel %vm1598, %v1396, 0
  %v1732 = vsel %vm1598, %v1397, 0
  %v1735 = vsel %vm1598, %v1398, 0
  %v1738 = vsel %vm1598, %v1399, 0
  %v1741 = vsel %vm1598, %v1400, 0
  %v1744 = vsel %vm1598, %v1401, 0
  %v1747 = vsel %vm1598, %v1402, 0
  %v1750 = vsel %vm1598, %v1403, 0
  %v1753 = vsel %vm1598, %v1404, 0
  %v1756 = vsel %vm1598, %v1405, 0
  %v1759 = vsel %vm1598, %v1406, 0
  %v1762 = vsel %vm1598, %v1407, 0
  %v1765 = vsel %vm1598, %v1408, 0
  %v1768 = vsel %vm1598, %v1409, 0
  %v1771 = vsel %vm1598, %v1410, 0
  %v1774 = vsel %vm1598, %v1411, 0
  %v1777 = vsel %vm1598, %v1412, 0
  %v1780 = vsel %vm1598, %v1413, 0
  %v1783 = vsel %vm1598, %v1414, 0
  %v1786 = vsel %vm1598, %v1415, 0
  %v1789 = vsel %vm1598, %v1416, 0
  %v1792 = vsel %vm1598, %v1417, 0
  %v1795 = vsel %vm1598, %v1418, 0
  %v1798 = vsel %vm1598, %v1419, 0
  %v1801 = vsel %vm1598, %v1420, 0
  %v1804 = vsel %vm1598, %v1421, 0
  %v1807 = vsel %vm1598, %v1422, 0
  %v1810 = vsel %vm1598, %v1423, 0
  %v1813 = vsel %vm1598, %v1424, 0
  %v1816 = vsel %vm1598, %v1425, 0
  %v1819 = vsel %vm1598, %v1426, 0
  %v1822 = vsel %vm1598, %v1427, 0
  %v1825 = vsel %vm1598, %v1428, 0
  %v1828 = vsel %vm1598, %v1429, 0
  %v1831 = vsel %vm1598, %v1430, 0
  %v1834 = vsel %vm1598, %v1431, 0
  %v1837 = vsel %vm1598, %v1432, 0
  %v1840 = vsel %vm1598, %v1433, 0
  %v1843 = vsel %vm1598, %v1434, 0
  %v1846 = vsel %vm1598, %v1435, 0
  %v1849 = vsel %vm1598, %v1436, 0
  %v1852 = vsel %vm1598, %v1437, 0
  %v1855 = vsel %vm1598, %v1438, 0
  %v1858 = vsel %vm1598, %v1439, 0
  %v1861 = vsel %vm1598, %v1440, 0
  %v1864 = vsel %vm1598, %v1441, 0
  %v1867 = vsel %vm1598, %v1442, 0
  %v1870 = vsel %vm1598, %v1443, 0
  %v1873 = vsel %vm1598, %v1444, 0
  %v1876 = vsel %vm1598, %v1445, 0
  %v1879 = vsel %vm1598, %v1446, 0
  %v1882 = vsel %vm1598, %v1447, 0
  %v1885 = vsel %vm1598, %v1448, 0
  %v1888 = vsel %vm1598, %v1449, 0
  %v1891 = vsel %vm1598, %v1450, 0
  %v1894 = vsel %vm1598, %v1451, 0
  %v1897 = vsel %vm1598, %v1452, 0
  %v1900 = vsel %vm1598, %v1453, 0
  %v1903 = vsel %vm1598, %v1454, 0
  %v1906 = vsel %vm1598, %v1455, 0
  %v1909 = vsel %vm1598, %v1456, 0
  %v1912 = vsel %vm1598, %v1457, 0
  %v1915 = vsel %vm1598, %v1458, 0
  %v1918 = vsel %vm1598, %v1459, 0
  %v1921 = vsel %vm1598, %v1460, 0
  %v1924 = vsel %vm1598, %v1461, 0
  %v1927 = vsel %vm1598, %v1462, 0
  %v1930 = vsel %vm1598, %v1463, 0
  %v1933 = vsel %vm1598, %v1464, 0
  %v1936 = vsel %vm1598, %v1465, 0
  %v1939 = vsel %vm1598, %v1466, 0
  %v1942 = vsel %vm1598, %v1467, 0
  %v1945 = vsel %vm1598, %v1468, 0
  %v1948 = vsel %vm1598, %v1469, 0
  %v1951 = vsel %vm1598, %v1470, 0
  %v1954 = vsel %vm1598, %v1471, 0
  %v1957 = vsel %vm1598, %v1472, 0
  %v1960 = vsel %vm1598, %v1473, 0
  %v1963 = vsel %vm1598, %v1474, 0
  %v1966 = vsel %vm1598, %v1475, 0
  %v1969 = vsel %vm1598, %v1476, 0
  %v1972 = vsel %vm1598, %v1477, 0
  %v1975 = vsel %vm1598, %v1478, 0
  %v1978 = vsel %vm1598, %v1479, 0
  %v1981 = vsel %vm1598, %v1480, 0
  %v1984 = vsel %vm1598, %v1481, 0
  %v1987 = vsel %vm1598, %v1482, 0
  %v1990 = vsel %vm1598, %v1483, 0
  %v1993 = vsel %vm1598, %v1484, 0
  %v1996 = vsel %vm1598, %v1485, 0
  %v1999 = vsel %vm1598, %v1486, 0
  %v2002 = vsel %vm1598, %v1487, 0
  %v2005 = vsel %vm1598, %v1488, 0
  %v2008 = vsel %vm1598, %v1489, 0
  %v2011 = vsel %vm1598, %v1490, 0
  %v2014 = vsel %vm1598, %v1491, 0
  %v2017 = vsel %vm1598, %v1492, 0
  %v2020 = vsel %vm1598, %v1493, 0
  %v2023 = vsel %vm1598, %v1494, 0
  %v2026 = vsel %vm1598, %v1495, 0
  %v2029 = vsel %vm1598, %v1496, 0
  %v2032 = vsel %vm1598, %v1497, 0
  %v2035 = vsel %vm1598, %v1498, 0
  %v2038 = vsel %vm1598, %v1499, 0
  %v2041 = vsel %vm1598, %v1500, 0
  %v2044 = vsel %vm1598, %v1501, 0
  %v2047 = vsel %vm1598, %v1502, 0
  %v2050 = vsel %vm1598, %v1503, 0
  %v2053 = vsel %vm1598, %v1504, 0
  %v2056 = vsel %vm1598, %v1505, 0
  %v2059 = vsel %vm1598, %v1506, 0
  %v2062 = vsel %vm1598, %v1507, 0
  %v2065 = vsel %vm1598, %v1508, 0
  %v2068 = vsel %vm1598, %v1509, 0
  %v2071 = vsel %vm1598, %v1510, 0
  %v2074 = vsel %vm1598, %v1511, 0
  %v2077 = vsel %vm1598, %v1512, 0
  %v2080 = vsel %vm1598, %v1513, 0
  %v2083 = vsel %vm1598, %v1514, 0
  %v2086 = vsel %vm1598, %v1515, 0
  %v2089 = vsel %vm1598, %v1516, 0
  %v2092 = vsel %vm1598, %v1517, 0
  %v2095 = vsel %vm1598, %v1518, 0
  %v2098 = vsel %vm1598, %v1519, 0
  %v2101 = vsel %vm1598, %v1520, 0
  %v2104 = vsel %vm1598, %v1521, 0
  %v2107 = vsel %vm1598, %v1522, 0
  %v2110 = vsel %vm1598, %v1523, 0
  %v2113 = vsel %vm1598, %v1524, 0
  %v2116 = vsel %vm1598, %v1525, 0
  %v2119 = vsel %vm1598, %v1526, 0
  %v2122 = vsel %vm1598, %v1527, 0
  %v2125 = vsel %vm1598, %v1528, 0
  %v2128 = vsel %vm1598, %v1529, 0
  %v2131 = vsel %vm1598, %v1530, 0
  %v2134 = vsel %vm1598, %v1531, 0
  %v2137 = vsel %vm1598, %v1532, 0
  %v2140 = vsel %vm1598, %v1533, 0
  %v2143 = vsel %vm1598, %v1534, 0
  %v2146 = vsel %vm1598, %v1535, 0
  %v2149 = vsel %vm1598, %v1536, 0
  %v2152 = vsel %vm1598, %v1537, 0
  %v2155 = vsel %vm1598, %v1538, 0
  %v2158 = vsel %vm1598, %v1539, 0
  %v2161 = vsel %vm1598, %v1540, 0
  %v2164 = vsel %vm1598, %v1541, 0
  %v2167 = vsel %vm1598, %v1542, 0
  %v2170 = vsel %vm1598, %v1543, 0
  %v2173 = vsel %vm1598, %v1544, 0
  %v2176 = vsel %vm1598, %v1545, 0
  %v2179 = vsel %vm1598, %v1546, 0
  %v2182 = vsel %vm1598, %v1547, 0
  %v2185 = vsel %vm1598, %v1548, 0
  %v2188 = vsel %vm1598, %v1549, 0
  %v2191 = vsel %vm1598, %v1550, 0
  %v2194 = vsel %vm1598, %v1551, 0
  %v2197 = vsel %vm1598, %v1552, 0
  %v2200 = vsel %vm1598, %v1553, 0
  %v2203 = vsel %vm1598, %v1554, 0
  %v2206 = vsel %vm1598, %v1555, 0
  %v2209 = vsel %vm1598, %v1556, 0
  %v2212 = vsel %vm1598, %v1557, 0
  %v2215 = vsel %vm1598, %v1558, 0
  %v2218 = vsel %vm1598, %v1559, 0
  %v2221 = vsel %vm1598, %v1560, 0
  %v2224 = vsel %vm1598, %v1561, 0
  %v2227 = vsel %vm1598, %v1562, 0
  %v2230 = vsel %vm1598, %v1563, 0
  %v2233 = vsel %vm1598, %v1564, 0
  %v2236 = vsel %vm1598, %v1565, 0
  %v2239 = vsel %vm1598, %v1566, 0
  %v2242 = vsel %vm1598, %v1567, 0
  %v2245 = vsel %vm1598, %v1568, 0
  %v2248 = vsel %vm1598, %v1569, 0
  %v2251 = vsel %vm1598, %v1570, 0
  %v2254 = vsel %vm1598, %v1571, 0
  %v2257 = vsel %vm1598, %v1572, 0
  %v2260 = vsel %vm1598, %v1573, 0
  %2262 = vmatprep.subr.bf16.mxu0 0
  %2263 = vmatpush1.bf16.msra.mxu0 %v1590
  %2264 = vmatprep.subr.bf16.mxu0 0
  %2265 = vmatpush1.bf16.msra.mxu0 %v1591
  %2266 = vmatprep.subr.bf16.mxu0 0
  %2267 = vmatpush1.bf16.msra.mxu0 %v1592
  %2268 = vmatprep.subr.bf16.mxu0 0
  %2269 = vmatpush1.bf16.msra.mxu0 %v1593
  %2270 = vmatprep.subr.bf16.mxu0 0
  %2271 = vmatpush1.bf16.msra.mxu0 0
  %2272 = vmatprep.subr.bf16.mxu0 0
  %2273 = vmatpush1.bf16.msra.mxu0 0
  %2274 = vmatprep.subr.bf16.mxu0 0
  %2275 = vmatpush1.bf16.msra.mxu0 0
  %2276 = vmatprep.subr.bf16.mxu0 0
  %2277 = vmatpush1.bf16.msra.mxu0 0
  %2278 = vmatprep.subr.bf16.mxu0 0
  %2279 = vmatpush1.bf16.msra.mxu0 0
  %2280 = vmatprep.subr.bf16.mxu0 0
  %2281 = vmatpush1.bf16.msra.mxu0 0
  %2282 = vmatprep.subr.bf16.mxu0 0
  %2283 = vmatpush1.bf16.msra.mxu0 0
  %2284 = vmatprep.subr.bf16.mxu0 0
  %2285 = vmatpush1.bf16.msra.mxu0 0
  %2286 = vmatprep.subr.bf16.mxu0 0
  %2287 = vmatpush1.bf16.msra.mxu0 0
  %2288 = vmatprep.subr.bf16.mxu0 0
  %2289 = vmatpush1.bf16.msra.mxu0 0
  %2290 = vmatprep.subr.bf16.mxu0 0
  %2291 = vmatpush1.bf16.msra.mxu0 0
  %2292 = vmatprep.subr.bf16.mxu0 0
  %2293 = vmatpush1.bf16.msra.mxu0 0
  %2294 = vmatprep.mubr.bf16.mxu0 0
  %2295 = vmatmul.mubr.bf16.gmra.mrb[0].mxu0 %v1600
  %v2296 = vpop.f32.mrb[0].mxu0
  %v2297 = vadd.f32 %v469, %v2296
  %v2298 = vpop.f32.mrb[0].mxu0
  %v2299 = vpop.f32.mrb[0].mxu0
  %v2300 = vadd.f32 %v469, %v2299
  %v2301 = vpop.f32.mrb[0].mxu0
  %2302 = vmatprep.mubr.bf16.mxu0 0
  %2303 = vmatmul.mubr.bf16.gmra.mrb[0].mxu0 %v1603
  %v2304 = vpop.f32.mrb[0].mxu0
  %v2305 = vadd.f32 %v469, %v2304
  %v2306 = vpop.f32.mrb[0].mxu0
  %v2307 = vpop.f32.mrb[0].mxu0
  %v2308 = vadd.f32 %v469, %v2307
  %v2309 = vpop.f32.mrb[0].mxu0
  %2310 = vmatprep.mubr.bf16.mxu0 0
  %2311 = vmatmul.mubr.bf16.gmra.mrb[0].mxu0 %v1606
  %v2312 = vpop.f32.mrb[0].mxu0
  %v2313 = vadd.f32 %v469, %v2312
  %v2314 = vpop.f32.mrb[0].mxu0
  %v2315 = vpop.f32.mrb[0].mxu0
  %v2316 = vadd.f32 %v469, %v2315
  %v2317 = vpop.f32.mrb[0].mxu0
  %2318 = vmatprep.mubr.bf16.mxu0 0
  %2319 = vmatmul.mubr.bf16.gmra.mrb[0].mxu0 %v1609
  %v2320 = vpop.f32.mrb[0].mxu0
  %v2321 = vadd.f32 %v469, %v2320
  %v2322 = vpop.f32.mrb[0].mxu0
  %v2323 = vpop.f32.mrb[0].mxu0
  %v2324 = vadd.f32 %v469, %v2323
  %v2325 = vpop.f32.mrb[0].mxu0
  %2326 = vmatprep.mubr.bf16.mxu0 0
  %2327 = vmatmul.mubr.bf16.gmra.mrb[0].mxu0 %v1612
  %v2328 = vpop.f32.mrb[0].mxu0
  %v2329 = vadd.f32 %v469, %v2328
  %v2330 = vpop.f32.mrb[0].mxu0
  %v2331 = vpop.f32.mrb[0].mxu0
  %v2332 = vadd.f32 %v469, %v2331
  %v2333 = vpop.f32.mrb[0].mxu0
  %2334 = vmatprep.mubr.bf16.mxu0 0
  %2335 = vmatmul.mubr.bf16.gmra.mrb[0].mxu0 %v1615
  %v2336 = vpop.f32.mrb[0].mxu0
  %v2337 = vadd.f32 %v469, %v2336
  %v2338 = vpop.f32.mrb[0].mxu0
  %v2339 = vpop.f32.mrb[0].mxu0
  %v2340 = vadd.f32 %v469, %v2339
  %v2341 = vpop.f32.mrb[0].mxu0
  %2342 = vmatprep.mubr.bf16.mxu0 0
  %2343 = vmatmul.mubr.bf16.gmra.mrb[0].mxu0 %v1618
  %v2344 = vpop.f32.mrb[0].mxu0
  %v2345 = vadd.f32 %v469, %v2344
  %v2346 = vpop.f32.mrb[0].mxu0
  %v2347 = vpop.f32.mrb[0].mxu0
  %v2348 = vadd.f32 %v469, %v2347
  %v2349 = vpop.f32.mrb[0].mxu0
  %2350 = vmatprep.mubr.bf16.mxu0 0
  %2351 = vmatmul.mubr.bf16.gmra.mrb[0].mxu0 %v1621
  %v2352 = vpop.f32.mrb[0].mxu0
  %v2353 = vadd.f32 %v469, %v2352
  %v2354 = vpop.f32.mrb[0].mxu0
  %v2355 = vpop.f32.mrb[0].mxu0
  %v2356 = vadd.f32 %v469, %v2355
  %v2357 = vpop.f32.mrb[0].mxu0
  %2358 = vmatprep.mubr.bf16.mxu0 0
  %2359 = vmatmul.mubr.bf16.gmra.mrb[0].mxu0 %v1624
  %v2360 = vpop.f32.mrb[0].mxu0
  %v2361 = vadd.f32 %v469, %v2360
  %v2362 = vpop.f32.mrb[0].mxu0
  %v2363 = vpop.f32.mrb[0].mxu0
  %v2364 = vadd.f32 %v469, %v2363
  %v2365 = vpop.f32.mrb[0].mxu0
  %2366 = vmatprep.mubr.bf16.mxu0 0
  %2367 = vmatmul.mubr.bf16.gmra.mrb[0].mxu0 %v1627
  %v2368 = vpop.f32.mrb[0].mxu0
  %v2369 = vadd.f32 %v469, %v2368
  %v2370 = vpop.f32.mrb[0].mxu0
  %v2371 = vpop.f32.mrb[0].mxu0
  %v2372 = vadd.f32 %v469, %v2371
  %v2373 = vpop.f32.mrb[0].mxu0
  %2374 = vmatprep.mubr.bf16.mxu0 0
  %2375 = vmatmul.mubr.bf16.gmra.mrb[0].mxu0 %v1630
  %v2376 = vpop.f32.mrb[0].mxu0
  %v2377 = vadd.f32 %v469, %v2376
  %v2378 = vpop.f32.mrb[0].mxu0
  %v2379 = vpop.f32.mrb[0].mxu0
  %v2380 = vadd.f32 %v469, %v2379
  %v2381 = vpop.f32.mrb[0].mxu0
  %2382 = vmatprep.mubr.bf16.mxu0 0
  %2383 = vmatmul.mubr.bf16.gmra.mrb[0].mxu0 %v1633
  %v2384 = vpop.f32.mrb[0].mxu0
  %v2385 = vadd.f32 %v469, %v2384
  %v2386 = vpop.f32.mrb[0].mxu0
  %v2387 = vpop.f32.mrb[0].mxu0
  %v2388 = vadd.f32 %v469, %v2387
  %v2389 = vpop.f32.mrb[0].mxu0
  %2390 = vmatprep.mubr.bf16.mxu0 0
  %2391 = vmatmul.mubr.bf16.gmra.mrb[0].mxu0 %v1636
  %v2392 = vpop.f32.mrb[0].mxu0
  %v2393 = vadd.f32 %v469, %v2392
  %v2394 = vpop.f32.mrb[0].mxu0
  %v2395 = vpop.f32.mrb[0].mxu0
  %v2396 = vadd.f32 %v469, %v2395
  %v2397 = vpop.f32.mrb[0].mxu0
  %2398 = vmatprep.mubr.bf16.mxu0 0
  %2399 = vmatmul.mubr.bf16.gmra.mrb[0].mxu0 %v1639
  %v2400 = vpop.f32.mrb[0].mxu0
  %v2401 = vadd.f32 %v469, %v2400
  %v2402 = vpop.f32.mrb[0].mxu0
  %v2403 = vpop.f32.mrb[0].mxu0
  %v2404 = vadd.f32 %v469, %v2403
  %v2405 = vpop.f32.mrb[0].mxu0
  %2406 = vmatprep.mubr.bf16.mxu0 0
  %2407 = vmatmul.mubr.bf16.gmra.mrb[0].mxu0 %v1642
  %v2408 = vpop.f32.mrb[0].mxu0
  %v2409 = vadd.f32 %v469, %v2408
  %v2410 = vpop.f32.mrb[0].mxu0
  %v2411 = vpop.f32.mrb[0].mxu0
  %v2412 = vadd.f32 %v469, %v2411
  %v2413 = vpop.f32.mrb[0].mxu0
  %2414 = vmatprep.mubr.bf16.mxu0 0
  %2415 = vmatmul.mubr.bf16.gmra.mrb[0].mxu0 %v1645
  %v2416 = vpop.f32.mrb[0].mxu0
  %v2417 = vadd.f32 %v469, %v2416
  %v2418 = vpop.f32.mrb[0].mxu0
  %v2419 = vpop.f32.mrb[0].mxu0
  %v2420 = vadd.f32 %v469, %v2419
  %v2421 = vpop.f32.mrb[0].mxu0
  %2422 = vmatprep.mubr.bf16.mxu0 0
  %2423 = vmatmul.mubr.bf16.gmra.mrb[0].mxu0 %v1648
  %v2424 = vpop.f32.mrb[0].mxu0
  %v2425 = vadd.f32 %v469, %v2424
  %v2426 = vpop.f32.mrb[0].mxu0
  %v2427 = vpop.f32.mrb[0].mxu0
  %v2428 = vadd.f32 %v469, %v2427
  %v2429 = vpop.f32.mrb[0].mxu0
  %2430 = vmatprep.mubr.bf16.mxu0 0
  %2431 = vmatmul.mubr.bf16.gmra.mrb[0].mxu0 %v1651
  %v2432 = vpop.f32.mrb[0].mxu0
  %v2433 = vadd.f32 %v469, %v2432
  %v2434 = vpop.f32.mrb[0].mxu0
  %v2435 = vpop.f32.mrb[0].mxu0
  %v2436 = vadd.f32 %v469, %v2435
  %v2437 = vpop.f32.mrb[0].mxu0
  %2438 = vmatprep.mubr.bf16.mxu0 0
  %2439 = vmatmul.mubr.bf16.gmra.mrb[0].mxu0 %v1654
  %v2440 = vpop.f32.mrb[0].mxu0
  %v2441 = vadd.f32 %v469, %v2440
  %v2442 = vpop.f32.mrb[0].mxu0
  %v2443 = vpop.f32.mrb[0].mxu0
  %v2444 = vadd.f32 %v469, %v2443
  %v2445 = vpop.f32.mrb[0].mxu0
  %2446 = vmatprep.mubr.bf16.mxu0 0
  %2447 = vmatmul.mubr.bf16.gmra.mrb[0].mxu0 %v1657
  %v2448 = vpop.f32.mrb[0].mxu0
  %v2449 = vadd.f32 %v469, %v2448
  %v2450 = vpop.f32.mrb[0].mxu0
  %v2451 = vpop.f32.mrb[0].mxu0
  %v2452 = vadd.f32 %v469, %v2451
  %v2453 = vpop.f32.mrb[0].mxu0
  %2454 = vmatprep.mubr.bf16.mxu0 0
  %2455 = vmatmul.mubr.bf16.gmra.mrb[0].mxu0 %v1660
  %v2456 = vpop.f32.mrb[0].mxu0
  %v2457 = vadd.f32 %v469, %v2456
  %v2458 = vpop.f32.mrb[0].mxu0
  %v2459 = vpop.f32.mrb[0].mxu0
  %v2460 = vadd.f32 %v469, %v2459
  %v2461 = vpop.f32.mrb[0].mxu0
  %2462 = vmatprep.mubr.bf16.mxu0 0
  %2463 = vmatmul.mubr.bf16.gmra.mrb[0].mxu0 %v1663
  %v2464 = vpop.f32.mrb[0].mxu0
  %v2465 = vadd.f32 %v469, %v2464
  %v2466 = vpop.f32.mrb[0].mxu0
  %v2467 = vpop.f32.mrb[0].mxu0
  %v2468 = vadd.f32 %v469, %v2467
  %v2469 = vpop.f32.mrb[0].mxu0
  %2470 = vmatprep.mubr.bf16.mxu0 0
  %2471 = vmatmul.mubr.bf16.gmra.mrb[0].mxu0 %v1666
  %v2472 = vpop.f32.mrb[0].mxu0
  %v2473 = vadd.f32 %v469, %v2472
  %v2474 = vpop.f32.mrb[0].mxu0
  %v2475 = vpop.f32.mrb[0].mxu0
  %v2476 = vadd.f32 %v469, %v2475
  %v2477 = vpop.f32.mrb[0].mxu0
  %2478 = vmatprep.mubr.bf16.mxu0 0
  %2479 = vmatmul.mubr.bf16.gmra.mrb[0].mxu0 %v1669
  %v2480 = vpop.f32.mrb[0].mxu0
  %v2481 = vadd.f32 %v469, %v2480
  %v2482 = vpop.f32.mrb[0].mxu0
  %v2483 = vpop.f32.mrb[0].mxu0
  %v2484 = vadd.f32 %v469, %v2483
  %v2485 = vpop.f32.mrb[0].mxu0
  %2486 = vmatprep.mubr.bf16.mxu0 0
  %2487 = vmatmul.mubr.bf16.gmra.mrb[0].mxu0 %v1672
  %v2488 = vpop.f32.mrb[0].mxu0
  %v2489 = vadd.f32 %v469, %v2488
  %v2490 = vpop.f32.mrb[0].mxu0
  %v2491 = vpop.f32.mrb[0].mxu0
  %v2492 = vadd.f32 %v469, %v2491
  %v2493 = vpop.f32.mrb[0].mxu0
  %2494 = vmatprep.mubr.bf16.mxu0 0
  %2495 = vmatmul.mubr.bf16.gmra.mrb[0].mxu0 %v1675
  %v2496 = vpop.f32.mrb[0].mxu0
  %v2497 = vadd.f32 %v469, %v2496
  %v2498 = vpop.f32.mrb[0].mxu0
  %v2499 = vpop.f32.mrb[0].mxu0
  %v2500 = vadd.f32 %v469, %v2499
  %v2501 = vpop.f32.mrb[0].mxu0
  %2502 = vmatprep.mubr.bf16.mxu0 0
  %2503 = vmatmul.mubr.bf16.gmra.mrb[0].mxu0 %v1678
  %v2504 = vpop.f32.mrb[0].mxu0
  %v2505 = vadd.f32 %v469, %v2504
  %v2506 = vpop.f32.mrb[0].mxu0
  %v2507 = vpop.f32.mrb[0].mxu0
  %v2508 = vadd.f32 %v469, %v2507
  %v2509 = vpop.f32.mrb[0].mxu0
  %2510 = vmatprep.mubr.bf16.mxu0 0
  %2511 = vmatmul.mubr.bf16.gmra.mrb[0].mxu0 %v1681
  %v2512 = vpop.f32.mrb[0].mxu0
  %v2513 = vadd.f32 %v469, %v2512
  %v2514 = vpop.f32.mrb[0].mxu0
  %v2515 = vpop.f32.mrb[0].mxu0
  %v2516 = vadd.f32 %v469, %v2515
  %v2517 = vpop.f32.mrb[0].mxu0
  %2518 = vmatprep.mubr.bf16.mxu0 0
  %2519 = vmatmul.mubr.bf16.gmra.mrb[0].mxu0 %v1684
  %v2520 = vpop.f32.mrb[0].mxu0
  %v2521 = vadd.f32 %v469, %v2520
  %v2522 = vpop.f32.mrb[0].mxu0
  %v2523 = vpop.f32.mrb[0].mxu0
  %v2524 = vadd.f32 %v469, %v2523
  %v2525 = vpop.f32.mrb[0].mxu0
  %2526 = vmatprep.mubr.bf16.mxu0 0
  %2527 = vmatmul.mubr.bf16.gmra.mrb[0].mxu0 %v1687
  %v2528 = vpop.f32.mrb[0].mxu0
  %v2529 = vadd.f32 %v469, %v2528
  %v2530 = vpop.f32.mrb[0].mxu0
  %v2531 = vpop.f32.mrb[0].mxu0
  %v2532 = vadd.f32 %v469, %v2531
  %v2533 = vpop.f32.mrb[0].mxu0
  %2534 = vmatprep.mubr.bf16.mxu0 0
  %2535 = vmatmul.mubr.bf16.gmra.mrb[0].mxu0 %v1690
  %v2536 = vpop.f32.mrb[0].mxu0
  %v2537 = vadd.f32 %v469, %v2536
  %v2538 = vpop.f32.mrb[0].mxu0
  %v2539 = vpop.f32.mrb[0].mxu0
  %v2540 = vadd.f32 %v469, %v2539
  %v2541 = vpop.f32.mrb[0].mxu0
  %2542 = vmatprep.mubr.bf16.mxu0 0
  %2543 = vmatmul.mubr.bf16.gmra.mrb[0].mxu0 %v1693
  %v2544 = vpop.f32.mrb[0].mxu0
  %v2545 = vadd.f32 %v469, %v2544
  %v2546 = vpop.f32.mrb[0].mxu0
  %v2547 = vpop.f32.mrb[0].mxu0
  %v2548 = vadd.f32 %v469, %v2547
  %v2549 = vpop.f32.mrb[0].mxu0
  %2550 = vmatprep.mubr.bf16.mxu0 0
  %2551 = vmatmul.mubr.bf16.gmra.mrb[0].mxu0 %v1696
  %v2552 = vpop.f32.mrb[0].mxu0
  %v2553 = vadd.f32 %v469, %v2552
  %v2554 = vpop.f32.mrb[0].mxu0
  %v2555 = vpop.f32.mrb[0].mxu0
  %v2556 = vadd.f32 %v469, %v2555
  %v2557 = vpop.f32.mrb[0].mxu0
  %2558 = vmatprep.mubr.bf16.mxu0 0
  %2559 = vmatmul.mubr.bf16.gmra.mrb[0].mxu0 %v1699
  %v2560 = vpop.f32.mrb[0].mxu0
  %v2561 = vadd.f32 %v469, %v2560
  %v2562 = vpop.f32.mrb[0].mxu0
  %v2563 = vpop.f32.mrb[0].mxu0
  %v2564 = vadd.f32 %v469, %v2563
  %v2565 = vpop.f32.mrb[0].mxu0
  %2566 = vmatprep.mubr.bf16.mxu0 0
  %2567 = vmatmul.mubr.bf16.gmra.mrb[0].mxu0 %v1702
  %v2568 = vpop.f32.mrb[0].mxu0
  %v2569 = vadd.f32 %v469, %v2568
  %v2570 = vpop.f32.mrb[0].mxu0
  %v2571 = vpop.f32.mrb[0].mxu0
  %v2572 = vadd.f32 %v469, %v2571
  %v2573 = vpop.f32.mrb[0].mxu0
  %2574 = vmatprep.mubr.bf16.mxu0 0
  %2575 = vmatmul.mubr.bf16.gmra.mrb[0].mxu0 %v1705
  %v2576 = vpop.f32.mrb[0].mxu0
  %v2577 = vadd.f32 %v469, %v2576
  %v2578 = vpop.f32.mrb[0].mxu0
  %v2579 = vpop.f32.mrb[0].mxu0
  %v2580 = vadd.f32 %v469, %v2579
  %v2581 = vpop.f32.mrb[0].mxu0
  %2582 = vmatprep.mubr.bf16.mxu0 0
  %2583 = vmatmul.mubr.bf16.gmra.mrb[0].mxu0 %v1708
  %v2584 = vpop.f32.mrb[0].mxu0
  %v2585 = vadd.f32 %v469, %v2584
  %v2586 = vpop.f32.mrb[0].mxu0
  %v2587 = vpop.f32.mrb[0].mxu0
  %v2588 = vadd.f32 %v469, %v2587
  %v2589 = vpop.f32.mrb[0].mxu0
  %2590 = vmatprep.mubr.bf16.mxu0 0
  %2591 = vmatmul.mubr.bf16.gmra.mrb[0].mxu0 %v1711
  %v2592 = vpop.f32.mrb[0].mxu0
  %v2593 = vadd.f32 %v469, %v2592
  %v2594 = vpop.f32.mrb[0].mxu0
  %v2595 = vpop.f32.mrb[0].mxu0
  %v2596 = vadd.f32 %v469, %v2595
  %v2597 = vpop.f32.mrb[0].mxu0
  %2598 = vmatprep.mubr.bf16.mxu0 0
  %2599 = vmatmul.mubr.bf16.gmra.mrb[0].mxu0 %v1714
  %v2600 = vpop.f32.mrb[0].mxu0
  %v2601 = vadd.f32 %v469, %v2600
  %v2602 = vpop.f32.mrb[0].mxu0
  %v2603 = vpop.f32.mrb[0].mxu0
  %v2604 = vadd.f32 %v469, %v2603
  %v2605 = vpop.f32.mrb[0].mxu0
  %2606 = vmatprep.mubr.bf16.mxu0 0
  %2607 = vmatmul.mubr.bf16.gmra.mrb[0].mxu0 %v1717
  %v2608 = vpop.f32.mrb[0].mxu0
  %v2609 = vadd.f32 %v469, %v2608
  %v2610 = vpop.f32.mrb[0].mxu0
  %v2611 = vpop.f32.mrb[0].mxu0
  %v2612 = vadd.f32 %v469, %v2611
  %v2613 = vpop.f32.mrb[0].mxu0
  %2614 = vmatprep.mubr.bf16.mxu0 0
  %2615 = vmatmul.mubr.bf16.gmra.mrb[0].mxu0 %v1720
  %v2616 = vpop.f32.mrb[0].mxu0
  %v2617 = vadd.f32 %v469, %v2616
  %v2618 = vpop.f32.mrb[0].mxu0
  %v2619 = vpop.f32.mrb[0].mxu0
  %v2620 = vadd.f32 %v469, %v2619
  %v2621 = vpop.f32.mrb[0].mxu0
  %2622 = vmatprep.mubr.bf16.mxu0 0
  %2623 = vmatmul.mubr.bf16.gmra.mrb[0].mxu0 %v1723
  %v2624 = vpop.f32.mrb[0].mxu0
  %v2625 = vadd.f32 %v469, %v2624
  %v2626 = vpop.f32.mrb[0].mxu0
  %v2627 = vpop.f32.mrb[0].mxu0
  %v2628 = vadd.f32 %v469, %v2627
  %v2629 = vpop.f32.mrb[0].mxu0
  %2630 = vmatprep.mubr.bf16.mxu0 0
  %2631 = vmatmul.mubr.bf16.gmra.mrb[0].mxu0 %v1726
  %v2632 = vpop.f32.mrb[0].mxu0
  %v2633 = vadd.f32 %v469, %v2632
  %v2634 = vpop.f32.mrb[0].mxu0
  %v2635 = vpop.f32.mrb[0].mxu0
  %v2636 = vadd.f32 %v469, %v2635
  %v2637 = vpop.f32.mrb[0].mxu0
  %2638 = vmatprep.mubr.bf16.mxu0 0
  %2639 = vmatmul.mubr.bf16.gmra.mrb[0].mxu0 %v1729
  %v2640 = vpop.f32.mrb[0].mxu0
  %v2641 = vadd.f32 %v469, %v2640
  %v2642 = vpop.f32.mrb[0].mxu0
  %v2643 = vpop.f32.mrb[0].mxu0
  %v2644 = vadd.f32 %v469, %v2643
  %v2645 = vpop.f32.mrb[0].mxu0
  %2646 = vmatprep.mubr.bf16.mxu0 0
  %2647 = vmatmul.mubr.bf16.gmra.mrb[0].mxu0 %v1732
  %v2648 = vpop.f32.mrb[0].mxu0
  %v2649 = vadd.f32 %v469, %v2648
  %v2650 = vpop.f32.mrb[0].mxu0
  %v2651 = vpop.f32.mrb[0].mxu0
  %v2652 = vadd.f32 %v469, %v2651
  %v2653 = vpop.f32.mrb[0].mxu0
  %2654 = vmatprep.mubr.bf16.mxu0 0
  %2655 = vmatmul.mubr.bf16.gmra.mrb[0].mxu0 %v1735
  %v2656 = vpop.f32.mrb[0].mxu0
  %v2657 = vadd.f32 %v469, %v2656
  %v2658 = vpop.f32.mrb[0].mxu0
  %v2659 = vpop.f32.mrb[0].mxu0
  %v2660 = vadd.f32 %v469, %v2659
  %v2661 = vpop.f32.mrb[0].mxu0
  %2662 = vmatprep.mubr.bf16.mxu0 0
  %2663 = vmatmul.mubr.bf16.gmra.mrb[0].mxu0 %v1738
  %v2664 = vpop.f32.mrb[0].mxu0
  %v2665 = vadd.f32 %v469, %v2664
  %v2666 = vpop.f32.mrb[0].mxu0
  %v2667 = vpop.f32.mrb[0].mxu0
  %v2668 = vadd.f32 %v469, %v2667
  %v2669 = vpop.f32.mrb[0].mxu0
  %2670 = vmatprep.mubr.bf16.mxu0 0
  %2671 = vmatmul.mubr.bf16.gmra.mrb[0].mxu0 %v1741
  %v2672 = vpop.f32.mrb[0].mxu0
  %v2673 = vadd.f32 %v469, %v2672
  %v2674 = vpop.f32.mrb[0].mxu0
  %v2675 = vpop.f32.mrb[0].mxu0
  %v2676 = vadd.f32 %v469, %v2675
  %v2677 = vpop.f32.mrb[0].mxu0
  %2678 = vmatprep.mubr.bf16.mxu0 0
  %2679 = vmatmul.mubr.bf16.gmra.mrb[0].mxu0 %v1744
  %v2680 = vpop.f32.mrb[0].mxu0
  %v2681 = vadd.f32 %v469, %v2680
  %v2682 = vpop.f32.mrb[0].mxu0
  %v2683 = vpop.f32.mrb[0].mxu0
  %v2684 = vadd.f32 %v469, %v2683
  %v2685 = vpop.f32.mrb[0].mxu0
  %2686 = vmatprep.mubr.bf16.mxu0 0
  %2687 = vmatmul.mubr.bf16.gmra.mrb[0].mxu0 %v1747
  %v2688 = vpop.f32.mrb[0].mxu0
  %v2689 = vadd.f32 %v469, %v2688
  %v2690 = vpop.f32.mrb[0].mxu0
  %v2691 = vpop.f32.mrb[0].mxu0
  %v2692 = vadd.f32 %v469, %v2691
  %v2693 = vpop.f32.mrb[0].mxu0
  %2694 = vmatprep.mubr.bf16.mxu0 0
  %2695 = vmatmul.mubr.bf16.gmra.mrb[0].mxu0 %v1750
  %v2696 = vpop.f32.mrb[0].mxu0
  %v2697 = vadd.f32 %v469, %v2696
  %v2698 = vpop.f32.mrb[0].mxu0
  %v2699 = vpop.f32.mrb[0].mxu0
  %v2700 = vadd.f32 %v469, %v2699
  %v2701 = vpop.f32.mrb[0].mxu0
  %2702 = vmatprep.mubr.bf16.mxu0 0
  %2703 = vmatmul.mubr.bf16.gmra.mrb[0].mxu0 %v1753
  %v2704 = vpop.f32.mrb[0].mxu0
  %v2705 = vadd.f32 %v469, %v2704
  %v2706 = vpop.f32.mrb[0].mxu0
  %v2707 = vpop.f32.mrb[0].mxu0
  %v2708 = vadd.f32 %v469, %v2707
  %v2709 = vpop.f32.mrb[0].mxu0
  %2710 = vmatprep.mubr.bf16.mxu0 0
  %2711 = vmatmul.mubr.bf16.gmra.mrb[0].mxu0 %v1756
  %v2712 = vpop.f32.mrb[0].mxu0
  %v2713 = vadd.f32 %v469, %v2712
  %v2714 = vpop.f32.mrb[0].mxu0
  %v2715 = vpop.f32.mrb[0].mxu0
  %v2716 = vadd.f32 %v469, %v2715
  %v2717 = vpop.f32.mrb[0].mxu0
  %2718 = vmatprep.mubr.bf16.mxu0 0
  %2719 = vmatmul.mubr.bf16.gmra.mrb[0].mxu0 %v1759
  %v2720 = vpop.f32.mrb[0].mxu0
  %v2721 = vadd.f32 %v469, %v2720
  %v2722 = vpop.f32.mrb[0].mxu0
  %v2723 = vpop.f32.mrb[0].mxu0
  %v2724 = vadd.f32 %v469, %v2723
  %v2725 = vpop.f32.mrb[0].mxu0
  %2726 = vmatprep.mubr.bf16.mxu0 0
  %2727 = vmatmul.mubr.bf16.gmra.mrb[0].mxu0 %v1762
  %v2728 = vpop.f32.mrb[0].mxu0
  %v2729 = vadd.f32 %v469, %v2728
  %v2730 = vpop.f32.mrb[0].mxu0
  %v2731 = vpop.f32.mrb[0].mxu0
  %v2732 = vadd.f32 %v469, %v2731
  %v2733 = vpop.f32.mrb[0].mxu0
  %2734 = vmatprep.mubr.bf16.mxu0 0
  %2735 = vmatmul.mubr.bf16.gmra.mrb[0].mxu0 %v1765
  %v2736 = vpop.f32.mrb[0].mxu0
  %v2737 = vadd.f32 %v469, %v2736
  %v2738 = vpop.f32.mrb[0].mxu0
  %v2739 = vpop.f32.mrb[0].mxu0
  %v2740 = vadd.f32 %v469, %v2739
  %v2741 = vpop.f32.mrb[0].mxu0
  %2742 = vmatprep.mubr.bf16.mxu0 0
  %2743 = vmatmul.mubr.bf16.gmra.mrb[0].mxu0 %v1768
  %v2744 = vpop.f32.mrb[0].mxu0
  %v2745 = vadd.f32 %v469, %v2744
  %v2746 = vpop.f32.mrb[0].mxu0
  %v2747 = vpop.f32.mrb[0].mxu0
  %v2748 = vadd.f32 %v469, %v2747
  %v2749 = vpop.f32.mrb[0].mxu0
  %2750 = vmatprep.mubr.bf16.mxu0 0
  %2751 = vmatmul.mubr.bf16.gmra.mrb[0].mxu0 %v1771
  %v2752 = vpop.f32.mrb[0].mxu0
  %v2753 = vadd.f32 %v469, %v2752
  %v2754 = vpop.f32.mrb[0].mxu0
  %v2755 = vpop.f32.mrb[0].mxu0
  %v2756 = vadd.f32 %v469, %v2755
  %v2757 = vpop.f32.mrb[0].mxu0
  %2758 = vmatprep.mubr.bf16.mxu0 0
  %2759 = vmatmul.mubr.bf16.gmra.mrb[0].mxu0 %v1774
  %v2760 = vpop.f32.mrb[0].mxu0
  %v2761 = vadd.f32 %v469, %v2760
  %v2762 = vpop.f32.mrb[0].mxu0
  %v2763 = vpop.f32.mrb[0].mxu0
  %v2764 = vadd.f32 %v469, %v2763
  %v2765 = vpop.f32.mrb[0].mxu0
  %2766 = vmatprep.mubr.bf16.mxu0 0
  %2767 = vmatmul.mubr.bf16.gmra.mrb[0].mxu0 %v1777
  %v2768 = vpop.f32.mrb[0].mxu0
  %v2769 = vadd.f32 %v469, %v2768
  %v2770 = vpop.f32.mrb[0].mxu0
  %v2771 = vpop.f32.mrb[0].mxu0
  %v2772 = vadd.f32 %v469, %v2771
  %v2773 = vpop.f32.mrb[0].mxu0
  %2774 = vmatprep.mubr.bf16.mxu0 0
  %2775 = vmatmul.mubr.bf16.gmra.mrb[0].mxu0 %v1780
  %v2776 = vpop.f32.mrb[0].mxu0
  %v2777 = vadd.f32 %v469, %v2776
  %v2778 = vpop.f32.mrb[0].mxu0
  %v2779 = vpop.f32.mrb[0].mxu0
  %v2780 = vadd.f32 %v469, %v2779
  %v2781 = vpop.f32.mrb[0].mxu0
  %2782 = vmatprep.mubr.bf16.mxu0 0
  %2783 = vmatmul.mubr.bf16.gmra.mrb[0].mxu0 %v1783
  %v2784 = vpop.f32.mrb[0].mxu0
  %v2785 = vadd.f32 %v469, %v2784
  %v2786 = vpop.f32.mrb[0].mxu0
  %v2787 = vpop.f32.mrb[0].mxu0
  %v2788 = vadd.f32 %v469, %v2787
  %v2789 = vpop.f32.mrb[0].mxu0
  %2790 = vmatprep.mubr.bf16.mxu0 0
  %2791 = vmatmul.mubr.bf16.gmra.mrb[0].mxu0 %v1786
  %v2792 = vpop.f32.mrb[0].mxu0
  %v2793 = vadd.f32 %v469, %v2792
  %v2794 = vpop.f32.mrb[0].mxu0
  %v2795 = vpop.f32.mrb[0].mxu0
  %v2796 = vadd.f32 %v469, %v2795
  %v2797 = vpop.f32.mrb[0].mxu0
  %2798 = vmatprep.mubr.bf16.mxu0 0
  %2799 = vmatmul.mubr.bf16.gmra.mrb[0].mxu0 %v1789
  %v2800 = vpop.f32.mrb[0].mxu0
  %v2801 = vadd.f32 %v469, %v2800
  %v2802 = vpop.f32.mrb[0].mxu0
  %v2803 = vpop.f32.mrb[0].mxu0
  %v2804 = vadd.f32 %v469, %v2803
  %v2805 = vpop.f32.mrb[0].mxu0
  %2806 = vmatprep.mubr.bf16.mxu0 0
  %2807 = vmatmul.mubr.bf16.gmra.mrb[0].mxu0 %v1792
  %v2808 = vpop.f32.mrb[0].mxu0
  %v2809 = vadd.f32 %v469, %v2808
  %v2810 = vpop.f32.mrb[0].mxu0
  %v2811 = vpop.f32.mrb[0].mxu0
  %v2812 = vadd.f32 %v469, %v2811
  %v2813 = vpop.f32.mrb[0].mxu0
  %2814 = vmatprep.mubr.bf16.mxu0 0
  %2815 = vmatmul.mubr.bf16.gmra.mrb[0].mxu0 %v1795
  %v2816 = vpop.f32.mrb[0].mxu0
  %v2817 = vadd.f32 %v469, %v2816
  %v2818 = vpop.f32.mrb[0].mxu0
  %v2819 = vpop.f32.mrb[0].mxu0
  %v2820 = vadd.f32 %v469, %v2819
  %v2821 = vpop.f32.mrb[0].mxu0
  %2822 = vmatprep.mubr.bf16.mxu0 0
  %2823 = vmatmul.mubr.bf16.gmra.mrb[0].mxu0 %v1798
  %v2824 = vpop.f32.mrb[0].mxu0
  %v2825 = vadd.f32 %v469, %v2824
  %v2826 = vpop.f32.mrb[0].mxu0
  %v2827 = vpop.f32.mrb[0].mxu0
  %v2828 = vadd.f32 %v469, %v2827
  %v2829 = vpop.f32.mrb[0].mxu0
  %2830 = vmatprep.mubr.bf16.mxu0 0
  %2831 = vmatmul.mubr.bf16.gmra.mrb[0].mxu0 %v1801
  %v2832 = vpop.f32.mrb[0].mxu0
  %v2833 = vadd.f32 %v469, %v2832
  %v2834 = vpop.f32.mrb[0].mxu0
  %v2835 = vpop.f32.mrb[0].mxu0
  %v2836 = vadd.f32 %v469, %v2835
  %v2837 = vpop.f32.mrb[0].mxu0
  %2838 = vmatprep.mubr.bf16.mxu0 0
  %2839 = vmatmul.mubr.bf16.gmra.mrb[0].mxu0 %v1804
  %v2840 = vpop.f32.mrb[0].mxu0
  %v2841 = vadd.f32 %v469, %v2840
  %v2842 = vpop.f32.mrb[0].mxu0
  %v2843 = vpop.f32.mrb[0].mxu0
  %v2844 = vadd.f32 %v469, %v2843
  %v2845 = vpop.f32.mrb[0].mxu0
  %2846 = vmatprep.mubr.bf16.mxu0 0
  %2847 = vmatmul.mubr.bf16.gmra.mrb[0].mxu0 %v1807
  %v2848 = vpop.f32.mrb[0].mxu0
  %v2849 = vadd.f32 %v469, %v2848
  %v2850 = vpop.f32.mrb[0].mxu0
  %v2851 = vpop.f32.mrb[0].mxu0
  %v2852 = vadd.f32 %v469, %v2851
  %v2853 = vpop.f32.mrb[0].mxu0
  %2854 = vmatprep.mubr.bf16.mxu0 0
  %2855 = vmatmul.mubr.bf16.gmra.mrb[0].mxu0 %v1810
  %v2856 = vpop.f32.mrb[0].mxu0
  %v2857 = vadd.f32 %v469, %v2856
  %v2858 = vpop.f32.mrb[0].mxu0
  %v2859 = vpop.f32.mrb[0].mxu0
  %v2860 = vadd.f32 %v469, %v2859
  %v2861 = vpop.f32.mrb[0].mxu0
  %2862 = vmatprep.mubr.bf16.mxu0 0
  %2863 = vmatmul.mubr.bf16.gmra.mrb[0].mxu0 %v1813
  %v2864 = vpop.f32.mrb[0].mxu0
  %v2865 = vadd.f32 %v469, %v2864
  %v2866 = vpop.f32.mrb[0].mxu0
  %v2867 = vpop.f32.mrb[0].mxu0
  %v2868 = vadd.f32 %v469, %v2867
  %v2869 = vpop.f32.mrb[0].mxu0
  %2870 = vmatprep.mubr.bf16.mxu0 0
  %2871 = vmatmul.mubr.bf16.gmra.mrb[0].mxu0 %v1816
  %v2872 = vpop.f32.mrb[0].mxu0
  %v2873 = vadd.f32 %v469, %v2872
  %v2874 = vpop.f32.mrb[0].mxu0
  %v2875 = vpop.f32.mrb[0].mxu0
  %v2876 = vadd.f32 %v469, %v2875
  %v2877 = vpop.f32.mrb[0].mxu0
  %2878 = vmatprep.mubr.bf16.mxu0 0
  %2879 = vmatmul.mubr.bf16.gmra.mrb[0].mxu0 %v1819
  %v2880 = vpop.f32.mrb[0].mxu0
  %v2881 = vadd.f32 %v469, %v2880
  %v2882 = vpop.f32.mrb[0].mxu0
  %v2883 = vpop.f32.mrb[0].mxu0
  %v2884 = vadd.f32 %v469, %v2883
  %v2885 = vpop.f32.mrb[0].mxu0
  %2886 = vmatprep.mubr.bf16.mxu0 0
  %2887 = vmatmul.mubr.bf16.gmra.mrb[0].mxu0 %v1822
  %v2888 = vpop.f32.mrb[0].mxu0
  %v2889 = vadd.f32 %v469, %v2888
  %v2890 = vpop.f32.mrb[0].mxu0
  %v2891 = vpop.f32.mrb[0].mxu0
  %v2892 = vadd.f32 %v469, %v2891
  %v2893 = vpop.f32.mrb[0].mxu0
  %2894 = vmatprep.mubr.bf16.mxu0 0
  %2895 = vmatmul.mubr.bf16.gmra.mrb[0].mxu0 %v1825
  %v2896 = vpop.f32.mrb[0].mxu0
  %v2897 = vadd.f32 %v469, %v2896
  %v2898 = vpop.f32.mrb[0].mxu0
  %v2899 = vpop.f32.mrb[0].mxu0
  %v2900 = vadd.f32 %v469, %v2899
  %v2901 = vpop.f32.mrb[0].mxu0
  %2902 = vmatprep.mubr.bf16.mxu0 0
  %2903 = vmatmul.mubr.bf16.gmra.mrb[0].mxu0 %v1828
  %v2904 = vpop.f32.mrb[0].mxu0
  %v2905 = vadd.f32 %v469, %v2904
  %v2906 = vpop.f32.mrb[0].mxu0
  %v2907 = vpop.f32.mrb[0].mxu0
  %v2908 = vadd.f32 %v469, %v2907
  %v2909 = vpop.f32.mrb[0].mxu0
  %2910 = vmatprep.mubr.bf16.mxu0 0
  %2911 = vmatmul.mubr.bf16.gmra.mrb[0].mxu0 %v1831
  %v2912 = vpop.f32.mrb[0].mxu0
  %v2913 = vadd.f32 %v469, %v2912
  %v2914 = vpop.f32.mrb[0].mxu0
  %v2915 = vpop.f32.mrb[0].mxu0
  %v2916 = vadd.f32 %v469, %v2915
  %v2917 = vpop.f32.mrb[0].mxu0
  %2918 = vmatprep.mubr.bf16.mxu0 0
  %2919 = vmatmul.mubr.bf16.gmra.mrb[0].mxu0 %v1834
  %v2920 = vpop.f32.mrb[0].mxu0
  %v2921 = vadd.f32 %v469, %v2920
  %v2922 = vpop.f32.mrb[0].mxu0
  %v2923 = vpop.f32.mrb[0].mxu0
  %v2924 = vadd.f32 %v469, %v2923
  %v2925 = vpop.f32.mrb[0].mxu0
  %2926 = vmatprep.mubr.bf16.mxu0 0
  %2927 = vmatmul.mubr.bf16.gmra.mrb[0].mxu0 %v1837
  %v2928 = vpop.f32.mrb[0].mxu0
  %v2929 = vadd.f32 %v469, %v2928
  %v2930 = vpop.f32.mrb[0].mxu0
  %v2931 = vpop.f32.mrb[0].mxu0
  %v2932 = vadd.f32 %v469, %v2931
  %v2933 = vpop.f32.mrb[0].mxu0
  %2934 = vmatprep.mubr.bf16.mxu0 0
  %2935 = vmatmul.mubr.bf16.gmra.mrb[0].mxu0 %v1840
  %v2936 = vpop.f32.mrb[0].mxu0
  %v2937 = vadd.f32 %v469, %v2936
  %v2938 = vpop.f32.mrb[0].mxu0
  %v2939 = vpop.f32.mrb[0].mxu0
  %v2940 = vadd.f32 %v469, %v2939
  %v2941 = vpop.f32.mrb[0].mxu0
  %2942 = vmatprep.mubr.bf16.mxu0 0
  %2943 = vmatmul.mubr.bf16.gmra.mrb[0].mxu0 %v1843
  %v2944 = vpop.f32.mrb[0].mxu0
  %v2945 = vadd.f32 %v469, %v2944
  %v2946 = vpop.f32.mrb[0].mxu0
  %v2947 = vpop.f32.mrb[0].mxu0
  %v2948 = vadd.f32 %v469, %v2947
  %v2949 = vpop.f32.mrb[0].mxu0
  %2950 = vmatprep.mubr.bf16.mxu0 0
  %2951 = vmatmul.mubr.bf16.gmra.mrb[0].mxu0 %v1846
  %v2952 = vpop.f32.mrb[0].mxu0
  %v2953 = vadd.f32 %v469, %v2952
  %v2954 = vpop.f32.mrb[0].mxu0
  %v2955 = vpop.f32.mrb[0].mxu0
  %v2956 = vadd.f32 %v469, %v2955
  %v2957 = vpop.f32.mrb[0].mxu0
  %2958 = vmatprep.mubr.bf16.mxu0 0
  %2959 = vmatmul.mubr.bf16.gmra.mrb[0].mxu0 %v1849
  %v2960 = vpop.f32.mrb[0].mxu0
  %v2961 = vadd.f32 %v469, %v2960
  %v2962 = vpop.f32.mrb[0].mxu0
  %v2963 = vpop.f32.mrb[0].mxu0
  %v2964 = vadd.f32 %v469, %v2963
  %v2965 = vpop.f32.mrb[0].mxu0
  %2966 = vmatprep.mubr.bf16.mxu0 0
  %2967 = vmatmul.mubr.bf16.gmra.mrb[0].mxu0 %v1852
  %v2968 = vpop.f32.mrb[0].mxu0
  %v2969 = vadd.f32 %v469, %v2968
  %v2970 = vpop.f32.mrb[0].mxu0
  %v2971 = vpop.f32.mrb[0].mxu0
  %v2972 = vadd.f32 %v469, %v2971
  %v2973 = vpop.f32.mrb[0].mxu0
  %2974 = vmatprep.mubr.bf16.mxu0 0
  %2975 = vmatmul.mubr.bf16.gmra.mrb[0].mxu0 %v1855
  %v2976 = vpop.f32.mrb[0].mxu0
  %v2977 = vadd.f32 %v469, %v2976
  %v2978 = vpop.f32.mrb[0].mxu0
  %v2979 = vpop.f32.mrb[0].mxu0
  %v2980 = vadd.f32 %v469, %v2979
  %v2981 = vpop.f32.mrb[0].mxu0
  %2982 = vmatprep.mubr.bf16.mxu0 0
  %2983 = vmatmul.mubr.bf16.gmra.mrb[0].mxu0 %v1858
  %v2984 = vpop.f32.mrb[0].mxu0
  %v2985 = vadd.f32 %v469, %v2984
  %v2986 = vpop.f32.mrb[0].mxu0
  %v2987 = vpop.f32.mrb[0].mxu0
  %v2988 = vadd.f32 %v469, %v2987
  %v2989 = vpop.f32.mrb[0].mxu0
  %2990 = vmatprep.mubr.bf16.mxu0 0
  %2991 = vmatmul.mubr.bf16.gmra.mrb[0].mxu0 %v1861
  %v2992 = vpop.f32.mrb[0].mxu0
  %v2993 = vadd.f32 %v469, %v2992
  %v2994 = vpop.f32.mrb[0].mxu0
  %v2995 = vpop.f32.mrb[0].mxu0
  %v2996 = vadd.f32 %v469, %v2995
  %v2997 = vpop.f32.mrb[0].mxu0
  %2998 = vmatprep.mubr.bf16.mxu0 0
  %2999 = vmatmul.mubr.bf16.gmra.mrb[0].mxu0 %v1864
  %v3000 = vpop.f32.mrb[0].mxu0
  %v3001 = vadd.f32 %v469, %v3000
  %v3002 = vpop.f32.mrb[0].mxu0
  %v3003 = vpop.f32.mrb[0].mxu0
  %v3004 = vadd.f32 %v469, %v3003
  %v3005 = vpop.f32.mrb[0].mxu0
  %3006 = vmatprep.mubr.bf16.mxu0 0
  %3007 = vmatmul.mubr.bf16.gmra.mrb[0].mxu0 %v1867
  %v3008 = vpop.f32.mrb[0].mxu0
  %v3009 = vadd.f32 %v469, %v3008
  %v3010 = vpop.f32.mrb[0].mxu0
  %v3011 = vpop.f32.mrb[0].mxu0
  %v3012 = vadd.f32 %v469, %v3011
  %v3013 = vpop.f32.mrb[0].mxu0
  %3014 = vmatprep.mubr.bf16.mxu0 0
  %3015 = vmatmul.mubr.bf16.gmra.mrb[0].mxu0 %v1870
  %v3016 = vpop.f32.mrb[0].mxu0
  %v3017 = vadd.f32 %v469, %v3016
  %v3018 = vpop.f32.mrb[0].mxu0
  %v3019 = vpop.f32.mrb[0].mxu0
  %v3020 = vadd.f32 %v469, %v3019
  %v3021 = vpop.f32.mrb[0].mxu0
  %3022 = vmatprep.mubr.bf16.mxu0 0
  %3023 = vmatmul.mubr.bf16.gmra.mrb[0].mxu0 %v1873
  %v3024 = vpop.f32.mrb[0].mxu0
  %v3025 = vadd.f32 %v469, %v3024
  %v3026 = vpop.f32.mrb[0].mxu0
  %v3027 = vpop.f32.mrb[0].mxu0
  %v3028 = vadd.f32 %v469, %v3027
  %v3029 = vpop.f32.mrb[0].mxu0
  %3030 = vmatprep.mubr.bf16.mxu0 0
  %3031 = vmatmul.mubr.bf16.gmra.mrb[0].mxu0 %v1876
  %v3032 = vpop.f32.mrb[0].mxu0
  %v3033 = vadd.f32 %v469, %v3032
  %v3034 = vpop.f32.mrb[0].mxu0
  %v3035 = vpop.f32.mrb[0].mxu0
  %v3036 = vadd.f32 %v469, %v3035
  %v3037 = vpop.f32.mrb[0].mxu0
  %3038 = vmatprep.mubr.bf16.mxu0 0
  %3039 = vmatmul.mubr.bf16.gmra.mrb[0].mxu0 %v1879
  %v3040 = vpop.f32.mrb[0].mxu0
  %v3041 = vadd.f32 %v469, %v3040
  %v3042 = vpop.f32.mrb[0].mxu0
  %v3043 = vpop.f32.mrb[0].mxu0
  %v3044 = vadd.f32 %v469, %v3043
  %v3045 = vpop.f32.mrb[0].mxu0
  %3046 = vmatprep.mubr.bf16.mxu0 0
  %3047 = vmatmul.mubr.bf16.gmra.mrb[0].mxu0 %v1882
  %v3048 = vpop.f32.mrb[0].mxu0
  %v3049 = vadd.f32 %v469, %v3048
  %v3050 = vpop.f32.mrb[0].mxu0
  %v3051 = vpop.f32.mrb[0].mxu0
  %v3052 = vadd.f32 %v469, %v3051
  %v3053 = vpop.f32.mrb[0].mxu0
  %3054 = vmatprep.mubr.bf16.mxu0 0
  %3055 = vmatmul.mubr.bf16.gmra.mrb[0].mxu0 %v1885
  %v3056 = vpop.f32.mrb[0].mxu0
  %v3057 = vadd.f32 %v469, %v3056
  %v3058 = vpop.f32.mrb[0].mxu0
  %v3059 = vpop.f32.mrb[0].mxu0
  %v3060 = vadd.f32 %v469, %v3059
  %v3061 = vpop.f32.mrb[0].mxu0
  %3062 = vmatprep.mubr.bf16.mxu0 0
  %3063 = vmatmul.mubr.bf16.gmra.mrb[0].mxu0 %v1888
  %v3064 = vpop.f32.mrb[0].mxu0
  %v3065 = vadd.f32 %v469, %v3064
  %v3066 = vpop.f32.mrb[0].mxu0
  %v3067 = vpop.f32.mrb[0].mxu0
  %v3068 = vadd.f32 %v469, %v3067
  %v3069 = vpop.f32.mrb[0].mxu0
  %3070 = vmatprep.mubr.bf16.mxu0 0
  %3071 = vmatmul.mubr.bf16.gmra.mrb[0].mxu0 %v1891
  %v3072 = vpop.f32.mrb[0].mxu0
  %v3073 = vadd.f32 %v469, %v3072
  %v3074 = vpop.f32.mrb[0].mxu0
  %v3075 = vpop.f32.mrb[0].mxu0
  %v3076 = vadd.f32 %v469, %v3075
  %v3077 = vpop.f32.mrb[0].mxu0
  %3078 = vmatprep.mubr.bf16.mxu0 0
  %3079 = vmatmul.mubr.bf16.gmra.mrb[0].mxu0 %v1894
  %v3080 = vpop.f32.mrb[0].mxu0
  %v3081 = vadd.f32 %v469, %v3080
  %v3082 = vpop.f32.mrb[0].mxu0
  %v3083 = vpop.f32.mrb[0].mxu0
  %v3084 = vadd.f32 %v469, %v3083
  %v3085 = vpop.f32.mrb[0].mxu0
  %3086 = vmatprep.mubr.bf16.mxu0 0
  %3087 = vmatmul.mubr.bf16.gmra.mrb[0].mxu0 %v1897
  %v3088 = vpop.f32.mrb[0].mxu0
  %v3089 = vadd.f32 %v469, %v3088
  %v3090 = vpop.f32.mrb[0].mxu0
  %v3091 = vpop.f32.mrb[0].mxu0
  %v3092 = vadd.f32 %v469, %v3091
  %v3093 = vpop.f32.mrb[0].mxu0
  %3094 = vmatprep.mubr.bf16.mxu0 0
  %3095 = vmatmul.mubr.bf16.gmra.mrb[0].mxu0 %v1900
  %v3096 = vpop.f32.mrb[0].mxu0
  %v3097 = vadd.f32 %v469, %v3096
  %v3098 = vpop.f32.mrb[0].mxu0
  %v3099 = vpop.f32.mrb[0].mxu0
  %v3100 = vadd.f32 %v469, %v3099
  %v3101 = vpop.f32.mrb[0].mxu0
  %3102 = vmatprep.mubr.bf16.mxu0 0
  %3103 = vmatmul.mubr.bf16.gmra.mrb[0].mxu0 %v1903
  %v3104 = vpop.f32.mrb[0].mxu0
  %v3105 = vadd.f32 %v469, %v3104
  %v3106 = vpop.f32.mrb[0].mxu0
  %v3107 = vpop.f32.mrb[0].mxu0
  %v3108 = vadd.f32 %v469, %v3107
  %v3109 = vpop.f32.mrb[0].mxu0
  %3110 = vmatprep.mubr.bf16.mxu0 0
  %3111 = vmatmul.mubr.bf16.gmra.mrb[0].mxu0 %v1906
  %v3112 = vpop.f32.mrb[0].mxu0
  %v3113 = vadd.f32 %v469, %v3112
  %v3114 = vpop.f32.mrb[0].mxu0
  %v3115 = vpop.f32.mrb[0].mxu0
  %v3116 = vadd.f32 %v469, %v3115
  %v3117 = vpop.f32.mrb[0].mxu0
  %3118 = vmatprep.mubr.bf16.mxu0 0
  %3119 = vmatmul.mubr.bf16.gmra.mrb[0].mxu0 %v1909
  %v3120 = vpop.f32.mrb[0].mxu0
  %v3121 = vadd.f32 %v469, %v3120
  %v3122 = vpop.f32.mrb[0].mxu0
  %v3123 = vpop.f32.mrb[0].mxu0
  %v3124 = vadd.f32 %v469, %v3123
  %v3125 = vpop.f32.mrb[0].mxu0
  %3126 = vmatprep.mubr.bf16.mxu0 0
  %3127 = vmatmul.mubr.bf16.gmra.mrb[0].mxu0 %v1912
  %v3128 = vpop.f32.mrb[0].mxu0
  %v3129 = vadd.f32 %v469, %v3128
  %v3130 = vpop.f32.mrb[0].mxu0
  %v3131 = vpop.f32.mrb[0].mxu0
  %v3132 = vadd.f32 %v469, %v3131
  %v3133 = vpop.f32.mrb[0].mxu0
  %3134 = vmatprep.mubr.bf16.mxu0 0
  %3135 = vmatmul.mubr.bf16.gmra.mrb[0].mxu0 %v1915
  %v3136 = vpop.f32.mrb[0].mxu0
  %v3137 = vadd.f32 %v469, %v3136
  %v3138 = vpop.f32.mrb[0].mxu0
  %v3139 = vpop.f32.mrb[0].mxu0
  %v3140 = vadd.f32 %v469, %v3139
  %v3141 = vpop.f32.mrb[0].mxu0
  %3142 = vmatprep.mubr.bf16.mxu0 0
  %3143 = vmatmul.mubr.bf16.gmra.mrb[0].mxu0 %v1918
  %v3144 = vpop.f32.mrb[0].mxu0
  %v3145 = vadd.f32 %v469, %v3144
  %v3146 = vpop.f32.mrb[0].mxu0
  %v3147 = vpop.f32.mrb[0].mxu0
  %v3148 = vadd.f32 %v469, %v3147
  %v3149 = vpop.f32.mrb[0].mxu0
  %3150 = vmatprep.mubr.bf16.mxu0 0
  %3151 = vmatmul.mubr.bf16.gmra.mrb[0].mxu0 %v1921
  %v3152 = vpop.f32.mrb[0].mxu0
  %v3153 = vadd.f32 %v469, %v3152
  %v3154 = vpop.f32.mrb[0].mxu0
  %v3155 = vpop.f32.mrb[0].mxu0
  %v3156 = vadd.f32 %v469, %v3155
  %v3157 = vpop.f32.mrb[0].mxu0
  %3158 = vmatprep.mubr.bf16.mxu0 0
  %3159 = vmatmul.mubr.bf16.gmra.mrb[0].mxu0 %v1924
  %v3160 = vpop.f32.mrb[0].mxu0
  %v3161 = vadd.f32 %v469, %v3160
  %v3162 = vpop.f32.mrb[0].mxu0
  %v3163 = vpop.f32.mrb[0].mxu0
  %v3164 = vadd.f32 %v469, %v3163
  %v3165 = vpop.f32.mrb[0].mxu0
  %3166 = vmatprep.mubr.bf16.mxu0 0
  %3167 = vmatmul.mubr.bf16.gmra.mrb[0].mxu0 %v1927
  %v3168 = vpop.f32.mrb[0].mxu0
  %v3169 = vadd.f32 %v469, %v3168
  %v3170 = vpop.f32.mrb[0].mxu0
  %v3171 = vpop.f32.mrb[0].mxu0
  %v3172 = vadd.f32 %v469, %v3171
  %v3173 = vpop.f32.mrb[0].mxu0
  %3174 = vmatprep.mubr.bf16.mxu0 0
  %3175 = vmatmul.mubr.bf16.gmra.mrb[0].mxu0 %v1930
  %v3176 = vpop.f32.mrb[0].mxu0
  %v3177 = vadd.f32 %v469, %v3176
  %v3178 = vpop.f32.mrb[0].mxu0
  %v3179 = vpop.f32.mrb[0].mxu0
  %v3180 = vadd.f32 %v469, %v3179
  %v3181 = vpop.f32.mrb[0].mxu0
  %3182 = vmatprep.mubr.bf16.mxu0 0
  %3183 = vmatmul.mubr.bf16.gmra.mrb[0].mxu0 %v1933
  %v3184 = vpop.f32.mrb[0].mxu0
  %v3185 = vadd.f32 %v469, %v3184
  %v3186 = vpop.f32.mrb[0].mxu0
  %v3187 = vpop.f32.mrb[0].mxu0
  %v3188 = vadd.f32 %v469, %v3187
  %v3189 = vpop.f32.mrb[0].mxu0
  %3190 = vmatprep.mubr.bf16.mxu0 0
  %3191 = vmatmul.mubr.bf16.gmra.mrb[0].mxu0 %v1936
  %v3192 = vpop.f32.mrb[0].mxu0
  %v3193 = vadd.f32 %v469, %v3192
  %v3194 = vpop.f32.mrb[0].mxu0
  %v3195 = vpop.f32.mrb[0].mxu0
  %v3196 = vadd.f32 %v469, %v3195
  %v3197 = vpop.f32.mrb[0].mxu0
  %3198 = vmatprep.mubr.bf16.mxu0 0
  %3199 = vmatmul.mubr.bf16.gmra.mrb[0].mxu0 %v1939
  %v3200 = vpop.f32.mrb[0].mxu0
  %v3201 = vadd.f32 %v469, %v3200
  %v3202 = vpop.f32.mrb[0].mxu0
  %v3203 = vpop.f32.mrb[0].mxu0
  %v3204 = vadd.f32 %v469, %v3203
  %v3205 = vpop.f32.mrb[0].mxu0
  %3206 = vmatprep.mubr.bf16.mxu0 0
  %3207 = vmatmul.mubr.bf16.gmra.mrb[0].mxu0 %v1942
  %v3208 = vpop.f32.mrb[0].mxu0
  %v3209 = vadd.f32 %v469, %v3208
  %v3210 = vpop.f32.mrb[0].mxu0
  %v3211 = vpop.f32.mrb[0].mxu0
  %v3212 = vadd.f32 %v469, %v3211
  %v3213 = vpop.f32.mrb[0].mxu0
  %3214 = vmatprep.mubr.bf16.mxu0 0
  %3215 = vmatmul.mubr.bf16.gmra.mrb[0].mxu0 %v1945
  %v3216 = vpop.f32.mrb[0].mxu0
  %v3217 = vadd.f32 %v469, %v3216
  %v3218 = vpop.f32.mrb[0].mxu0
  %v3219 = vpop.f32.mrb[0].mxu0
  %v3220 = vadd.f32 %v469, %v3219
  %v3221 = vpop.f32.mrb[0].mxu0
  %3222 = vmatprep.mubr.bf16.mxu0 0
  %3223 = vmatmul.mubr.bf16.gmra.mrb[0].mxu0 %v1948
  %v3224 = vpop.f32.mrb[0].mxu0
  %v3225 = vadd.f32 %v469, %v3224
  %v3226 = vpop.f32.mrb[0].mxu0
  %v3227 = vpop.f32.mrb[0].mxu0
  %v3228 = vadd.f32 %v469, %v3227
  %v3229 = vpop.f32.mrb[0].mxu0
  %3230 = vmatprep.mubr.bf16.mxu0 0
  %3231 = vmatmul.mubr.bf16.gmra.mrb[0].mxu0 %v1951
  %v3232 = vpop.f32.mrb[0].mxu0
  %v3233 = vadd.f32 %v469, %v3232
  %v3234 = vpop.f32.mrb[0].mxu0
  %v3235 = vpop.f32.mrb[0].mxu0
  %v3236 = vadd.f32 %v469, %v3235
  %v3237 = vpop.f32.mrb[0].mxu0
  %3238 = vmatprep.mubr.bf16.mxu0 0
  %3239 = vmatmul.mubr.bf16.gmra.mrb[0].mxu0 %v1954
  %v3240 = vpop.f32.mrb[0].mxu0
  %v3241 = vadd.f32 %v469, %v3240
  %v3242 = vpop.f32.mrb[0].mxu0
  %v3243 = vpop.f32.mrb[0].mxu0
  %v3244 = vadd.f32 %v469, %v3243
  %v3245 = vpop.f32.mrb[0].mxu0
  %3246 = vmatprep.mubr.bf16.mxu0 0
  %3247 = vmatmul.mubr.bf16.gmra.mrb[0].mxu0 %v1957
  %v3248 = vpop.f32.mrb[0].mxu0
  %v3249 = vadd.f32 %v469, %v3248
  %v3250 = vpop.f32.mrb[0].mxu0
  %v3251 = vpop.f32.mrb[0].mxu0
  %v3252 = vadd.f32 %v469, %v3251
  %v3253 = vpop.f32.mrb[0].mxu0
  %3254 = vmatprep.mubr.bf16.mxu0 0
  %3255 = vmatmul.mubr.bf16.gmra.mrb[0].mxu0 %v1960
  %v3256 = vpop.f32.mrb[0].mxu0
  %v3257 = vadd.f32 %v469, %v3256
  %v3258 = vpop.f32.mrb[0].mxu0
  %v3259 = vpop.f32.mrb[0].mxu0
  %v3260 = vadd.f32 %v469, %v3259
  %v3261 = vpop.f32.mrb[0].mxu0
  %3262 = vmatprep.mubr.bf16.mxu0 0
  %3263 = vmatmul.mubr.bf16.gmra.mrb[0].mxu0 %v1963
  %v3264 = vpop.f32.mrb[0].mxu0
  %v3265 = vadd.f32 %v469, %v3264
  %v3266 = vpop.f32.mrb[0].mxu0
  %v3267 = vpop.f32.mrb[0].mxu0
  %v3268 = vadd.f32 %v469, %v3267
  %v3269 = vpop.f32.mrb[0].mxu0
  %3270 = vmatprep.mubr.bf16.mxu0 0
  %3271 = vmatmul.mubr.bf16.gmra.mrb[0].mxu0 %v1966
  %v3272 = vpop.f32.mrb[0].mxu0
  %v3273 = vadd.f32 %v469, %v3272
  %v3274 = vpop.f32.mrb[0].mxu0
  %v3275 = vpop.f32.mrb[0].mxu0
  %v3276 = vadd.f32 %v469, %v3275
  %v3277 = vpop.f32.mrb[0].mxu0
  %3278 = vmatprep.mubr.bf16.mxu0 0
  %3279 = vmatmul.mubr.bf16.gmra.mrb[0].mxu0 %v1969
  %v3280 = vpop.f32.mrb[0].mxu0
  %v3281 = vadd.f32 %v469, %v3280
  %v3282 = vpop.f32.mrb[0].mxu0
  %v3283 = vpop.f32.mrb[0].mxu0
  %v3284 = vadd.f32 %v469, %v3283
  %v3285 = vpop.f32.mrb[0].mxu0
  %3286 = vmatprep.mubr.bf16.mxu0 0
  %3287 = vmatmul.mubr.bf16.gmra.mrb[0].mxu0 %v1972
  %v3288 = vpop.f32.mrb[0].mxu0
  %v3289 = vadd.f32 %v469, %v3288
  %v3290 = vpop.f32.mrb[0].mxu0
  %v3291 = vpop.f32.mrb[0].mxu0
  %v3292 = vadd.f32 %v469, %v3291
  %v3293 = vpop.f32.mrb[0].mxu0
  %3294 = vmatprep.mubr.bf16.mxu0 0
  %3295 = vmatmul.mubr.bf16.gmra.mrb[0].mxu0 %v1975
  %v3296 = vpop.f32.mrb[0].mxu0
  %v3297 = vadd.f32 %v469, %v3296
  %v3298 = vpop.f32.mrb[0].mxu0
  %v3299 = vpop.f32.mrb[0].mxu0
  %v3300 = vadd.f32 %v469, %v3299
  %v3301 = vpop.f32.mrb[0].mxu0
  %3302 = vmatprep.mubr.bf16.mxu0 0
  %3303 = vmatmul.mubr.bf16.gmra.mrb[0].mxu0 %v1978
  %v3304 = vpop.f32.mrb[0].mxu0
  %v3305 = vadd.f32 %v469, %v3304
  %v3306 = vpop.f32.mrb[0].mxu0
  %v3307 = vpop.f32.mrb[0].mxu0
  %v3308 = vadd.f32 %v469, %v3307
  %v3309 = vpop.f32.mrb[0].mxu0
  %3310 = vmatprep.mubr.bf16.mxu0 0
  %3311 = vmatmul.mubr.bf16.gmra.mrb[0].mxu0 %v1981
  %v3312 = vpop.f32.mrb[0].mxu0
  %v3313 = vadd.f32 %v469, %v3312
  %v3314 = vpop.f32.mrb[0].mxu0
  %v3315 = vpop.f32.mrb[0].mxu0
  %v3316 = vadd.f32 %v469, %v3315
  %v3317 = vpop.f32.mrb[0].mxu0
  %3318 = vmatprep.mubr.bf16.mxu0 0
  %3319 = vmatmul.mubr.bf16.gmra.mrb[0].mxu0 %v1984
  %v3320 = vpop.f32.mrb[0].mxu0
  %v3321 = vadd.f32 %v469, %v3320
  %v3322 = vpop.f32.mrb[0].mxu0
  %v3323 = vpop.f32.mrb[0].mxu0
  %v3324 = vadd.f32 %v469, %v3323
  %v3325 = vpop.f32.mrb[0].mxu0
  %3326 = vmatprep.mubr.bf16.mxu0 0
  %3327 = vmatmul.mubr.bf16.gmra.mrb[0].mxu0 %v1987
  %v3328 = vpop.f32.mrb[0].mxu0
  %v3329 = vadd.f32 %v469, %v3328
  %v3330 = vpop.f32.mrb[0].mxu0
  %v3331 = vpop.f32.mrb[0].mxu0
  %v3332 = vadd.f32 %v469, %v3331
  %v3333 = vpop.f32.mrb[0].mxu0
  %3334 = vmatprep.mubr.bf16.mxu0 0
  %3335 = vmatmul.mubr.bf16.gmra.mrb[0].mxu0 %v1990
  %v3336 = vpop.f32.mrb[0].mxu0
  %v3337 = vadd.f32 %v469, %v3336
  %v3338 = vpop.f32.mrb[0].mxu0
  %v3339 = vpop.f32.mrb[0].mxu0
  %v3340 = vadd.f32 %v469, %v3339
  %v3341 = vpop.f32.mrb[0].mxu0
  %3342 = vmatprep.mubr.bf16.mxu0 0
  %3343 = vmatmul.mubr.bf16.gmra.mrb[0].mxu0 %v1993
  %v3344 = vpop.f32.mrb[0].mxu0
  %v3345 = vadd.f32 %v469, %v3344
  %v3346 = vpop.f32.mrb[0].mxu0
  %v3347 = vpop.f32.mrb[0].mxu0
  %v3348 = vadd.f32 %v469, %v3347
  %v3349 = vpop.f32.mrb[0].mxu0
  %3350 = vmatprep.mubr.bf16.mxu0 0
  %3351 = vmatmul.mubr.bf16.gmra.mrb[0].mxu0 %v1996
  %v3352 = vpop.f32.mrb[0].mxu0
  %v3353 = vadd.f32 %v469, %v3352
  %v3354 = vpop.f32.mrb[0].mxu0
  %v3355 = vpop.f32.mrb[0].mxu0
  %v3356 = vadd.f32 %v469, %v3355
  %v3357 = vpop.f32.mrb[0].mxu0
  %3358 = vmatprep.mubr.bf16.mxu0 0
  %3359 = vmatmul.mubr.bf16.gmra.mrb[0].mxu0 %v1999
  %v3360 = vpop.f32.mrb[0].mxu0
  %v3361 = vadd.f32 %v469, %v3360
  %v3362 = vpop.f32.mrb[0].mxu0
  %v3363 = vpop.f32.mrb[0].mxu0
  %v3364 = vadd.f32 %v469, %v3363
  %v3365 = vpop.f32.mrb[0].mxu0
  %3366 = vmatprep.mubr.bf16.mxu0 0
  %3367 = vmatmul.mubr.bf16.gmra.mrb[0].mxu0 %v2002
  %v3368 = vpop.f32.mrb[0].mxu0
  %v3369 = vadd.f32 %v469, %v3368
  %v3370 = vpop.f32.mrb[0].mxu0
  %v3371 = vpop.f32.mrb[0].mxu0
  %v3372 = vadd.f32 %v469, %v3371
  %v3373 = vpop.f32.mrb[0].mxu0
  %3374 = vmatprep.mubr.bf16.mxu0 0
  %3375 = vmatmul.mubr.bf16.gmra.mrb[0].mxu0 %v2005
  %v3376 = vpop.f32.mrb[0].mxu0
  %v3377 = vadd.f32 %v469, %v3376
  %v3378 = vpop.f32.mrb[0].mxu0
  %v3379 = vpop.f32.mrb[0].mxu0
  %v3380 = vadd.f32 %v469, %v3379
  %v3381 = vpop.f32.mrb[0].mxu0
  %3382 = vmatprep.mubr.bf16.mxu0 0
  %3383 = vmatmul.mubr.bf16.gmra.mrb[0].mxu0 %v2008
  %v3384 = vpop.f32.mrb[0].mxu0
  %v3385 = vadd.f32 %v469, %v3384
  %v3386 = vpop.f32.mrb[0].mxu0
  %v3387 = vpop.f32.mrb[0].mxu0
  %v3388 = vadd.f32 %v469, %v3387
  %v3389 = vpop.f32.mrb[0].mxu0
  %3390 = vmatprep.mubr.bf16.mxu0 0
  %3391 = vmatmul.mubr.bf16.gmra.mrb[0].mxu0 %v2011
  %v3392 = vpop.f32.mrb[0].mxu0
  %v3393 = vadd.f32 %v469, %v3392
  %v3394 = vpop.f32.mrb[0].mxu0
  %v3395 = vpop.f32.mrb[0].mxu0
  %v3396 = vadd.f32 %v469, %v3395
  %v3397 = vpop.f32.mrb[0].mxu0
  %3398 = vmatprep.mubr.bf16.mxu0 0
  %3399 = vmatmul.mubr.bf16.gmra.mrb[0].mxu0 %v2014
  %v3400 = vpop.f32.mrb[0].mxu0
  %v3401 = vadd.f32 %v469, %v3400
  %v3402 = vpop.f32.mrb[0].mxu0
  %v3403 = vpop.f32.mrb[0].mxu0
  %v3404 = vadd.f32 %v469, %v3403
  %v3405 = vpop.f32.mrb[0].mxu0
  %3406 = vmatprep.mubr.bf16.mxu0 0
  %3407 = vmatmul.mubr.bf16.gmra.mrb[0].mxu0 %v2017
  %v3408 = vpop.f32.mrb[0].mxu0
  %v3409 = vadd.f32 %v469, %v3408
  %v3410 = vpop.f32.mrb[0].mxu0
  %v3411 = vpop.f32.mrb[0].mxu0
  %v3412 = vadd.f32 %v469, %v3411
  %v3413 = vpop.f32.mrb[0].mxu0
  %3414 = vmatprep.mubr.bf16.mxu0 0
  %3415 = vmatmul.mubr.bf16.gmra.mrb[0].mxu0 %v2020
  %v3416 = vpop.f32.mrb[0].mxu0
  %v3417 = vadd.f32 %v469, %v3416
  %v3418 = vpop.f32.mrb[0].mxu0
  %v3419 = vpop.f32.mrb[0].mxu0
  %v3420 = vadd.f32 %v469, %v3419
  %v3421 = vpop.f32.mrb[0].mxu0
  %3422 = vmatprep.mubr.bf16.mxu0 0
  %3423 = vmatmul.mubr.bf16.gmra.mrb[0].mxu0 %v2023
  %v3424 = vpop.f32.mrb[0].mxu0
  %v3425 = vadd.f32 %v469, %v3424
  %v3426 = vpop.f32.mrb[0].mxu0
  %v3427 = vpop.f32.mrb[0].mxu0
  %v3428 = vadd.f32 %v469, %v3427
  %v3429 = vpop.f32.mrb[0].mxu0
  %3430 = vmatprep.mubr.bf16.mxu0 0
  %3431 = vmatmul.mubr.bf16.gmra.mrb[0].mxu0 %v2026
  %v3432 = vpop.f32.mrb[0].mxu0
  %v3433 = vadd.f32 %v469, %v3432
  %v3434 = vpop.f32.mrb[0].mxu0
  %v3435 = vpop.f32.mrb[0].mxu0
  %v3436 = vadd.f32 %v469, %v3435
  %v3437 = vpop.f32.mrb[0].mxu0
  %3438 = vmatprep.mubr.bf16.mxu0 0
  %3439 = vmatmul.mubr.bf16.gmra.mrb[0].mxu0 %v2029
  %v3440 = vpop.f32.mrb[0].mxu0
  %v3441 = vadd.f32 %v469, %v3440
  %v3442 = vpop.f32.mrb[0].mxu0
  %v3443 = vpop.f32.mrb[0].mxu0
  %v3444 = vadd.f32 %v469, %v3443
  %v3445 = vpop.f32.mrb[0].mxu0
  %3446 = vmatprep.mubr.bf16.mxu0 0
  %3447 = vmatmul.mubr.bf16.gmra.mrb[0].mxu0 %v2032
  %v3448 = vpop.f32.mrb[0].mxu0
  %v3449 = vadd.f32 %v469, %v3448
  %v3450 = vpop.f32.mrb[0].mxu0
  %v3451 = vpop.f32.mrb[0].mxu0
  %v3452 = vadd.f32 %v469, %v3451
  %v3453 = vpop.f32.mrb[0].mxu0
  %3454 = vmatprep.mubr.bf16.mxu0 0
  %3455 = vmatmul.mubr.bf16.gmra.mrb[0].mxu0 %v2035
  %v3456 = vpop.f32.mrb[0].mxu0
  %v3457 = vadd.f32 %v469, %v3456
  %v3458 = vpop.f32.mrb[0].mxu0
  %v3459 = vpop.f32.mrb[0].mxu0
  %v3460 = vadd.f32 %v469, %v3459
  %v3461 = vpop.f32.mrb[0].mxu0
  %3462 = vmatprep.mubr.bf16.mxu0 0
  %3463 = vmatmul.mubr.bf16.gmra.mrb[0].mxu0 %v2038
  %v3464 = vpop.f32.mrb[0].mxu0
  %v3465 = vadd.f32 %v469, %v3464
  %v3466 = vpop.f32.mrb[0].mxu0
  %v3467 = vpop.f32.mrb[0].mxu0
  %v3468 = vadd.f32 %v469, %v3467
  %v3469 = vpop.f32.mrb[0].mxu0
  %3470 = vmatprep.mubr.bf16.mxu0 0
  %3471 = vmatmul.mubr.bf16.gmra.mrb[0].mxu0 %v2041
  %v3472 = vpop.f32.mrb[0].mxu0
  %v3473 = vadd.f32 %v469, %v3472
  %v3474 = vpop.f32.mrb[0].mxu0
  %v3475 = vpop.f32.mrb[0].mxu0
  %v3476 = vadd.f32 %v469, %v3475
  %v3477 = vpop.f32.mrb[0].mxu0
  %3478 = vmatprep.mubr.bf16.mxu0 0
  %3479 = vmatmul.mubr.bf16.gmra.mrb[0].mxu0 %v2044
  %v3480 = vpop.f32.mrb[0].mxu0
  %v3481 = vadd.f32 %v469, %v3480
  %v3482 = vpop.f32.mrb[0].mxu0
  %v3483 = vpop.f32.mrb[0].mxu0
  %v3484 = vadd.f32 %v469, %v3483
  %v3485 = vpop.f32.mrb[0].mxu0
  %3486 = vmatprep.mubr.bf16.mxu0 0
  %3487 = vmatmul.mubr.bf16.gmra.mrb[0].mxu0 %v2047
  %v3488 = vpop.f32.mrb[0].mxu0
  %v3489 = vadd.f32 %v469, %v3488
  %v3490 = vpop.f32.mrb[0].mxu0
  %v3491 = vpop.f32.mrb[0].mxu0
  %v3492 = vadd.f32 %v469, %v3491
  %v3493 = vpop.f32.mrb[0].mxu0
  %3494 = vmatprep.mubr.bf16.mxu0 0
  %3495 = vmatmul.mubr.bf16.gmra.mrb[0].mxu0 %v2050
  %v3496 = vpop.f32.mrb[0].mxu0
  %v3497 = vadd.f32 %v469, %v3496
  %v3498 = vpop.f32.mrb[0].mxu0
  %v3499 = vpop.f32.mrb[0].mxu0
  %v3500 = vadd.f32 %v469, %v3499
  %v3501 = vpop.f32.mrb[0].mxu0
  %3502 = vmatprep.mubr.bf16.mxu0 0
  %3503 = vmatmul.mubr.bf16.gmra.mrb[0].mxu0 %v2053
  %v3504 = vpop.f32.mrb[0].mxu0
  %v3505 = vadd.f32 %v469, %v3504
  %v3506 = vpop.f32.mrb[0].mxu0
  %v3507 = vpop.f32.mrb[0].mxu0
  %v3508 = vadd.f32 %v469, %v3507
  %v3509 = vpop.f32.mrb[0].mxu0
  %3510 = vmatprep.mubr.bf16.mxu0 0
  %3511 = vmatmul.mubr.bf16.gmra.mrb[0].mxu0 %v2056
  %v3512 = vpop.f32.mrb[0].mxu0
  %v3513 = vadd.f32 %v469, %v3512
  %v3514 = vpop.f32.mrb[0].mxu0
  %v3515 = vpop.f32.mrb[0].mxu0
  %v3516 = vadd.f32 %v469, %v3515
  %v3517 = vpop.f32.mrb[0].mxu0
  %3518 = vmatprep.mubr.bf16.mxu0 0
  %3519 = vmatmul.mubr.bf16.gmra.mrb[0].mxu0 %v2059
  %v3520 = vpop.f32.mrb[0].mxu0
  %v3521 = vadd.f32 %v469, %v3520
  %v3522 = vpop.f32.mrb[0].mxu0
  %v3523 = vpop.f32.mrb[0].mxu0
  %v3524 = vadd.f32 %v469, %v3523
  %v3525 = vpop.f32.mrb[0].mxu0
  %3526 = vmatprep.mubr.bf16.mxu0 0
  %3527 = vmatmul.mubr.bf16.gmra.mrb[0].mxu0 %v2062
  %v3528 = vpop.f32.mrb[0].mxu0
  %v3529 = vadd.f32 %v469, %v3528
  %v3530 = vpop.f32.mrb[0].mxu0
  %v3531 = vpop.f32.mrb[0].mxu0
  %v3532 = vadd.f32 %v469, %v3531
  %v3533 = vpop.f32.mrb[0].mxu0
  %3534 = vmatprep.mubr.bf16.mxu0 0
  %3535 = vmatmul.mubr.bf16.gmra.mrb[0].mxu0 %v2065
  %v3536 = vpop.f32.mrb[0].mxu0
  %v3537 = vadd.f32 %v469, %v3536
  %v3538 = vpop.f32.mrb[0].mxu0
  %v3539 = vpop.f32.mrb[0].mxu0
  %v3540 = vadd.f32 %v469, %v3539
  %v3541 = vpop.f32.mrb[0].mxu0
  %3542 = vmatprep.mubr.bf16.mxu0 0
  %3543 = vmatmul.mubr.bf16.gmra.mrb[0].mxu0 %v2068
  %v3544 = vpop.f32.mrb[0].mxu0
  %v3545 = vadd.f32 %v469, %v3544
  %v3546 = vpop.f32.mrb[0].mxu0
  %v3547 = vpop.f32.mrb[0].mxu0
  %v3548 = vadd.f32 %v469, %v3547
  %v3549 = vpop.f32.mrb[0].mxu0
  %3550 = vmatprep.mubr.bf16.mxu0 0
  %3551 = vmatmul.mubr.bf16.gmra.mrb[0].mxu0 %v2071
  %v3552 = vpop.f32.mrb[0].mxu0
  %v3553 = vadd.f32 %v469, %v3552
  %v3554 = vpop.f32.mrb[0].mxu0
  %v3555 = vpop.f32.mrb[0].mxu0
  %v3556 = vadd.f32 %v469, %v3555
  %v3557 = vpop.f32.mrb[0].mxu0
  %3558 = vmatprep.mubr.bf16.mxu0 0
  %3559 = vmatmul.mubr.bf16.gmra.mrb[0].mxu0 %v2074
  %v3560 = vpop.f32.mrb[0].mxu0
  %v3561 = vadd.f32 %v469, %v3560
  %v3562 = vpop.f32.mrb[0].mxu0
  %v3563 = vpop.f32.mrb[0].mxu0
  %v3564 = vadd.f32 %v469, %v3563
  %v3565 = vpop.f32.mrb[0].mxu0
  %3566 = vmatprep.mubr.bf16.mxu0 0
  %3567 = vmatmul.mubr.bf16.gmra.mrb[0].mxu0 %v2077
  %v3568 = vpop.f32.mrb[0].mxu0
  %v3569 = vadd.f32 %v469, %v3568
  %v3570 = vpop.f32.mrb[0].mxu0
  %v3571 = vpop.f32.mrb[0].mxu0
  %v3572 = vadd.f32 %v469, %v3571
  %v3573 = vpop.f32.mrb[0].mxu0
  %3574 = vmatprep.mubr.bf16.mxu0 0
  %3575 = vmatmul.mubr.bf16.gmra.mrb[0].mxu0 %v2080
  %v3576 = vpop.f32.mrb[0].mxu0
  %v3577 = vadd.f32 %v469, %v3576
  %v3578 = vpop.f32.mrb[0].mxu0
  %v3579 = vpop.f32.mrb[0].mxu0
  %v3580 = vadd.f32 %v469, %v3579
  %v3581 = vpop.f32.mrb[0].mxu0
  %3582 = vmatprep.mubr.bf16.mxu0 0
  %3583 = vmatmul.mubr.bf16.gmra.mrb[0].mxu0 %v2083
  %v3584 = vpop.f32.mrb[0].mxu0
  %v3585 = vadd.f32 %v469, %v3584
  %v3586 = vpop.f32.mrb[0].mxu0
  %v3587 = vpop.f32.mrb[0].mxu0
  %v3588 = vadd.f32 %v469, %v3587
  %v3589 = vpop.f32.mrb[0].mxu0
  %3590 = vmatprep.mubr.bf16.mxu0 0
  %3591 = vmatmul.mubr.bf16.gmra.mrb[0].mxu0 %v2086
  %v3592 = vpop.f32.mrb[0].mxu0
  %v3593 = vadd.f32 %v469, %v3592
  %v3594 = vpop.f32.mrb[0].mxu0
  %v3595 = vpop.f32.mrb[0].mxu0
  %v3596 = vadd.f32 %v469, %v3595
  %v3597 = vpop.f32.mrb[0].mxu0
  %3598 = vmatprep.mubr.bf16.mxu0 0
  %3599 = vmatmul.mubr.bf16.gmra.mrb[0].mxu0 %v2089
  %v3600 = vpop.f32.mrb[0].mxu0
  %v3601 = vadd.f32 %v469, %v3600
  %v3602 = vpop.f32.mrb[0].mxu0
  %v3603 = vpop.f32.mrb[0].mxu0
  %v3604 = vadd.f32 %v469, %v3603
  %v3605 = vpop.f32.mrb[0].mxu0
  %3606 = vmatprep.mubr.bf16.mxu0 0
  %3607 = vmatmul.mubr.bf16.gmra.mrb[0].mxu0 %v2092
  %v3608 = vpop.f32.mrb[0].mxu0
  %v3609 = vadd.f32 %v469, %v3608
  %v3610 = vpop.f32.mrb[0].mxu0
  %v3611 = vpop.f32.mrb[0].mxu0
  %v3612 = vadd.f32 %v469, %v3611
  %v3613 = vpop.f32.mrb[0].mxu0
  %3614 = vmatprep.mubr.bf16.mxu0 0
  %3615 = vmatmul.mubr.bf16.gmra.mrb[0].mxu0 %v2095
  %v3616 = vpop.f32.mrb[0].mxu0
  %v3617 = vadd.f32 %v469, %v3616
  %v3618 = vpop.f32.mrb[0].mxu0
  %v3619 = vpop.f32.mrb[0].mxu0
  %v3620 = vadd.f32 %v469, %v3619
  %v3621 = vpop.f32.mrb[0].mxu0
  %3622 = vmatprep.mubr.bf16.mxu0 0
  %3623 = vmatmul.mubr.bf16.gmra.mrb[0].mxu0 %v2098
  %v3624 = vpop.f32.mrb[0].mxu0
  %v3625 = vadd.f32 %v469, %v3624
  %v3626 = vpop.f32.mrb[0].mxu0
  %v3627 = vpop.f32.mrb[0].mxu0
  %v3628 = vadd.f32 %v469, %v3627
  %v3629 = vpop.f32.mrb[0].mxu0
  %3630 = vmatprep.mubr.bf16.mxu0 0
  %3631 = vmatmul.mubr.bf16.gmra.mrb[0].mxu0 %v2101
  %v3632 = vpop.f32.mrb[0].mxu0
  %v3633 = vadd.f32 %v469, %v3632
  %v3634 = vpop.f32.mrb[0].mxu0
  %v3635 = vpop.f32.mrb[0].mxu0
  %v3636 = vadd.f32 %v469, %v3635
  %v3637 = vpop.f32.mrb[0].mxu0
  %3638 = vmatprep.mubr.bf16.mxu0 0
  %3639 = vmatmul.mubr.bf16.gmra.mrb[0].mxu0 %v2104
  %v3640 = vpop.f32.mrb[0].mxu0
  %v3641 = vadd.f32 %v469, %v3640
  %v3642 = vpop.f32.mrb[0].mxu0
  %v3643 = vpop.f32.mrb[0].mxu0
  %v3644 = vadd.f32 %v469, %v3643
  %v3645 = vpop.f32.mrb[0].mxu0
  %3646 = vmatprep.mubr.bf16.mxu0 0
  %3647 = vmatmul.mubr.bf16.gmra.mrb[0].mxu0 %v2107
  %v3648 = vpop.f32.mrb[0].mxu0
  %v3649 = vadd.f32 %v469, %v3648
  %v3650 = vpop.f32.mrb[0].mxu0
  %v3651 = vpop.f32.mrb[0].mxu0
  %v3652 = vadd.f32 %v469, %v3651
  %v3653 = vpop.f32.mrb[0].mxu0
  %3654 = vmatprep.mubr.bf16.mxu0 0
  %3655 = vmatmul.mubr.bf16.gmra.mrb[0].mxu0 %v2110
  %v3656 = vpop.f32.mrb[0].mxu0
  %v3657 = vadd.f32 %v469, %v3656
  %v3658 = vpop.f32.mrb[0].mxu0
  %v3659 = vpop.f32.mrb[0].mxu0
  %v3660 = vadd.f32 %v469, %v3659
  %v3661 = vpop.f32.mrb[0].mxu0
  %3662 = vmatprep.mubr.bf16.mxu0 0
  %3663 = vmatmul.mubr.bf16.gmra.mrb[0].mxu0 %v2113
  %v3664 = vpop.f32.mrb[0].mxu0
  %v3665 = vadd.f32 %v469, %v3664
  %v3666 = vpop.f32.mrb[0].mxu0
  %v3667 = vpop.f32.mrb[0].mxu0
  %v3668 = vadd.f32 %v469, %v3667
  %v3669 = vpop.f32.mrb[0].mxu0
  %3670 = vmatprep.mubr.bf16.mxu0 0
  %3671 = vmatmul.mubr.bf16.gmra.mrb[0].mxu0 %v2116
  %v3672 = vpop.f32.mrb[0].mxu0
  %v3673 = vadd.f32 %v469, %v3672
  %v3674 = vpop.f32.mrb[0].mxu0
  %v3675 = vpop.f32.mrb[0].mxu0
  %v3676 = vadd.f32 %v469, %v3675
  %v3677 = vpop.f32.mrb[0].mxu0
  %3678 = vmatprep.mubr.bf16.mxu0 0
  %3679 = vmatmul.mubr.bf16.gmra.mrb[0].mxu0 %v2119
  %v3680 = vpop.f32.mrb[0].mxu0
  %v3681 = vadd.f32 %v469, %v3680
  %v3682 = vpop.f32.mrb[0].mxu0
  %v3683 = vpop.f32.mrb[0].mxu0
  %v3684 = vadd.f32 %v469, %v3683
  %v3685 = vpop.f32.mrb[0].mxu0
  %3686 = vmatprep.mubr.bf16.mxu0 0
  %3687 = vmatmul.mubr.bf16.gmra.mrb[0].mxu0 %v2122
  %v3688 = vpop.f32.mrb[0].mxu0
  %v3689 = vadd.f32 %v469, %v3688
  %v3690 = vpop.f32.mrb[0].mxu0
  %v3691 = vpop.f32.mrb[0].mxu0
  %v3692 = vadd.f32 %v469, %v3691
  %v3693 = vpop.f32.mrb[0].mxu0
  %3694 = vmatprep.mubr.bf16.mxu0 0
  %3695 = vmatmul.mubr.bf16.gmra.mrb[0].mxu0 %v2125
  %v3696 = vpop.f32.mrb[0].mxu0
  %v3697 = vadd.f32 %v469, %v3696
  %v3698 = vpop.f32.mrb[0].mxu0
  %v3699 = vpop.f32.mrb[0].mxu0
  %v3700 = vadd.f32 %v469, %v3699
  %v3701 = vpop.f32.mrb[0].mxu0
  %3702 = vmatprep.mubr.bf16.mxu0 0
  %3703 = vmatmul.mubr.bf16.gmra.mrb[0].mxu0 %v2128
  %v3704 = vpop.f32.mrb[0].mxu0
  %v3705 = vadd.f32 %v469, %v3704
  %v3706 = vpop.f32.mrb[0].mxu0
  %v3707 = vpop.f32.mrb[0].mxu0
  %v3708 = vadd.f32 %v469, %v3707
  %v3709 = vpop.f32.mrb[0].mxu0
  %3710 = vmatprep.mubr.bf16.mxu0 0
  %3711 = vmatmul.mubr.bf16.gmra.mrb[0].mxu0 %v2131
  %v3712 = vpop.f32.mrb[0].mxu0
  %v3713 = vadd.f32 %v469, %v3712
  %v3714 = vpop.f32.mrb[0].mxu0
  %v3715 = vpop.f32.mrb[0].mxu0
  %v3716 = vadd.f32 %v469, %v3715
  %v3717 = vpop.f32.mrb[0].mxu0
  %3718 = vmatprep.mubr.bf16.mxu0 0
  %3719 = vmatmul.mubr.bf16.gmra.mrb[0].mxu0 %v2134
  %v3720 = vpop.f32.mrb[0].mxu0
  %v3721 = vadd.f32 %v469, %v3720
  %v3722 = vpop.f32.mrb[0].mxu0
  %v3723 = vpop.f32.mrb[0].mxu0
  %v3724 = vadd.f32 %v469, %v3723
  %v3725 = vpop.f32.mrb[0].mxu0
  %3726 = vmatprep.mubr.bf16.mxu0 0
  %3727 = vmatmul.mubr.bf16.gmra.mrb[0].mxu0 %v2137
  %v3728 = vpop.f32.mrb[0].mxu0
  %v3729 = vadd.f32 %v469, %v3728
  %v3730 = vpop.f32.mrb[0].mxu0
  %v3731 = vpop.f32.mrb[0].mxu0
  %v3732 = vadd.f32 %v469, %v3731
  %v3733 = vpop.f32.mrb[0].mxu0
  %3734 = vmatprep.mubr.bf16.mxu0 0
  %3735 = vmatmul.mubr.bf16.gmra.mrb[0].mxu0 %v2140
  %v3736 = vpop.f32.mrb[0].mxu0
  %v3737 = vadd.f32 %v469, %v3736
  %v3738 = vpop.f32.mrb[0].mxu0
  %v3739 = vpop.f32.mrb[0].mxu0
  %v3740 = vadd.f32 %v469, %v3739
  %v3741 = vpop.f32.mrb[0].mxu0
  %3742 = vmatprep.mubr.bf16.mxu0 0
  %3743 = vmatmul.mubr.bf16.gmra.mrb[0].mxu0 %v2143
  %v3744 = vpop.f32.mrb[0].mxu0
  %v3745 = vadd.f32 %v469, %v3744
  %v3746 = vpop.f32.mrb[0].mxu0
  %v3747 = vpop.f32.mrb[0].mxu0
  %v3748 = vadd.f32 %v469, %v3747
  %v3749 = vpop.f32.mrb[0].mxu0
  %3750 = vmatprep.mubr.bf16.mxu0 0
  %3751 = vmatmul.mubr.bf16.gmra.mrb[0].mxu0 %v2146
  %v3752 = vpop.f32.mrb[0].mxu0
  %v3753 = vadd.f32 %v469, %v3752
  %v3754 = vpop.f32.mrb[0].mxu0
  %v3755 = vpop.f32.mrb[0].mxu0
  %v3756 = vadd.f32 %v469, %v3755
  %v3757 = vpop.f32.mrb[0].mxu0
  %3758 = vmatprep.mubr.bf16.mxu0 0
  %3759 = vmatmul.mubr.bf16.gmra.mrb[0].mxu0 %v2149
  %v3760 = vpop.f32.mrb[0].mxu0
  %v3761 = vadd.f32 %v469, %v3760
  %v3762 = vpop.f32.mrb[0].mxu0
  %v3763 = vpop.f32.mrb[0].mxu0
  %v3764 = vadd.f32 %v469, %v3763
  %v3765 = vpop.f32.mrb[0].mxu0
  %3766 = vmatprep.mubr.bf16.mxu0 0
  %3767 = vmatmul.mubr.bf16.gmra.mrb[0].mxu0 %v2152
  %v3768 = vpop.f32.mrb[0].mxu0
  %v3769 = vadd.f32 %v469, %v3768
  %v3770 = vpop.f32.mrb[0].mxu0
  %v3771 = vpop.f32.mrb[0].mxu0
  %v3772 = vadd.f32 %v469, %v3771
  %v3773 = vpop.f32.mrb[0].mxu0
  %3774 = vmatprep.mubr.bf16.mxu0 0
  %3775 = vmatmul.mubr.bf16.gmra.mrb[0].mxu0 %v2155
  %v3776 = vpop.f32.mrb[0].mxu0
  %v3777 = vadd.f32 %v469, %v3776
  %v3778 = vpop.f32.mrb[0].mxu0
  %v3779 = vpop.f32.mrb[0].mxu0
  %v3780 = vadd.f32 %v469, %v3779
  %v3781 = vpop.f32.mrb[0].mxu0
  %3782 = vmatprep.mubr.bf16.mxu0 0
  %3783 = vmatmul.mubr.bf16.gmra.mrb[0].mxu0 %v2158
  %v3784 = vpop.f32.mrb[0].mxu0
  %v3785 = vadd.f32 %v469, %v3784
  %v3786 = vpop.f32.mrb[0].mxu0
  %v3787 = vpop.f32.mrb[0].mxu0
  %v3788 = vadd.f32 %v469, %v3787
  %v3789 = vpop.f32.mrb[0].mxu0
  %3790 = vmatprep.mubr.bf16.mxu0 0
  %3791 = vmatmul.mubr.bf16.gmra.mrb[0].mxu0 %v2161
  %v3792 = vpop.f32.mrb[0].mxu0
  %v3793 = vadd.f32 %v469, %v3792
  %v3794 = vpop.f32.mrb[0].mxu0
  %v3795 = vpop.f32.mrb[0].mxu0
  %v3796 = vadd.f32 %v469, %v3795
  %v3797 = vpop.f32.mrb[0].mxu0
  %3798 = vmatprep.mubr.bf16.mxu0 0
  %3799 = vmatmul.mubr.bf16.gmra.mrb[0].mxu0 %v2164
  %v3800 = vpop.f32.mrb[0].mxu0
  %v3801 = vadd.f32 %v469, %v3800
  %v3802 = vpop.f32.mrb[0].mxu0
  %v3803 = vpop.f32.mrb[0].mxu0
  %v3804 = vadd.f32 %v469, %v3803
  %v3805 = vpop.f32.mrb[0].mxu0
  %3806 = vmatprep.mubr.bf16.mxu0 0
  %3807 = vmatmul.mubr.bf16.gmra.mrb[0].mxu0 %v2167
  %v3808 = vpop.f32.mrb[0].mxu0
  %v3809 = vadd.f32 %v469, %v3808
  %v3810 = vpop.f32.mrb[0].mxu0
  %v3811 = vpop.f32.mrb[0].mxu0
  %v3812 = vadd.f32 %v469, %v3811
  %v3813 = vpop.f32.mrb[0].mxu0
  %3814 = vmatprep.mubr.bf16.mxu0 0
  %3815 = vmatmul.mubr.bf16.gmra.mrb[0].mxu0 %v2170
  %v3816 = vpop.f32.mrb[0].mxu0
  %v3817 = vadd.f32 %v469, %v3816
  %v3818 = vpop.f32.mrb[0].mxu0
  %v3819 = vpop.f32.mrb[0].mxu0
  %v3820 = vadd.f32 %v469, %v3819
  %v3821 = vpop.f32.mrb[0].mxu0
  %3822 = vmatprep.mubr.bf16.mxu0 0
  %3823 = vmatmul.mubr.bf16.gmra.mrb[0].mxu0 %v2173
  %v3824 = vpop.f32.mrb[0].mxu0
  %v3825 = vadd.f32 %v469, %v3824
  %v3826 = vpop.f32.mrb[0].mxu0
  %v3827 = vpop.f32.mrb[0].mxu0
  %v3828 = vadd.f32 %v469, %v3827
  %v3829 = vpop.f32.mrb[0].mxu0
  %3830 = vmatprep.mubr.bf16.mxu0 0
  %3831 = vmatmul.mubr.bf16.gmra.mrb[0].mxu0 %v2176
  %v3832 = vpop.f32.mrb[0].mxu0
  %v3833 = vadd.f32 %v469, %v3832
  %v3834 = vpop.f32.mrb[0].mxu0
  %v3835 = vpop.f32.mrb[0].mxu0
  %v3836 = vadd.f32 %v469, %v3835
  %v3837 = vpop.f32.mrb[0].mxu0
  %3838 = vmatprep.mubr.bf16.mxu0 0
  %3839 = vmatmul.mubr.bf16.gmra.mrb[0].mxu0 %v2179
  %v3840 = vpop.f32.mrb[0].mxu0
  %v3841 = vadd.f32 %v469, %v3840
  %v3842 = vpop.f32.mrb[0].mxu0
  %v3843 = vpop.f32.mrb[0].mxu0
  %v3844 = vadd.f32 %v469, %v3843
  %v3845 = vpop.f32.mrb[0].mxu0
  %3846 = vmatprep.mubr.bf16.mxu0 0
  %3847 = vmatmul.mubr.bf16.gmra.mrb[0].mxu0 %v2182
  %v3848 = vpop.f32.mrb[0].mxu0
  %v3849 = vadd.f32 %v469, %v3848
  %v3850 = vpop.f32.mrb[0].mxu0
  %v3851 = vpop.f32.mrb[0].mxu0
  %v3852 = vadd.f32 %v469, %v3851
  %v3853 = vpop.f32.mrb[0].mxu0
  %3854 = vmatprep.mubr.bf16.mxu0 0
  %3855 = vmatmul.mubr.bf16.gmra.mrb[0].mxu0 %v2185
  %v3856 = vpop.f32.mrb[0].mxu0
  %v3857 = vadd.f32 %v469, %v3856
  %v3858 = vpop.f32.mrb[0].mxu0
  %v3859 = vpop.f32.mrb[0].mxu0
  %v3860 = vadd.f32 %v469, %v3859
  %v3861 = vpop.f32.mrb[0].mxu0
  %3862 = vmatprep.mubr.bf16.mxu0 0
  %3863 = vmatmul.mubr.bf16.gmra.mrb[0].mxu0 %v2188
  %v3864 = vpop.f32.mrb[0].mxu0
  %v3865 = vadd.f32 %v469, %v3864
  %v3866 = vpop.f32.mrb[0].mxu0
  %v3867 = vpop.f32.mrb[0].mxu0
  %v3868 = vadd.f32 %v469, %v3867
  %v3869 = vpop.f32.mrb[0].mxu0
  %3870 = vmatprep.mubr.bf16.mxu0 0
  %3871 = vmatmul.mubr.bf16.gmra.mrb[0].mxu0 %v2191
  %v3872 = vpop.f32.mrb[0].mxu0
  %v3873 = vadd.f32 %v469, %v3872
  %v3874 = vpop.f32.mrb[0].mxu0
  %v3875 = vpop.f32.mrb[0].mxu0
  %v3876 = vadd.f32 %v469, %v3875
  %v3877 = vpop.f32.mrb[0].mxu0
  %3878 = vmatprep.mubr.bf16.mxu0 0
  %3879 = vmatmul.mubr.bf16.gmra.mrb[0].mxu0 %v2194
  %v3880 = vpop.f32.mrb[0].mxu0
  %v3881 = vadd.f32 %v469, %v3880
  %v3882 = vpop.f32.mrb[0].mxu0
  %v3883 = vpop.f32.mrb[0].mxu0
  %v3884 = vadd.f32 %v469, %v3883
  %v3885 = vpop.f32.mrb[0].mxu0
  %3886 = vmatprep.mubr.bf16.mxu0 0
  %3887 = vmatmul.mubr.bf16.gmra.mrb[0].mxu0 %v2197
  %v3888 = vpop.f32.mrb[0].mxu0
  %v3889 = vadd.f32 %v469, %v3888
  %v3890 = vpop.f32.mrb[0].mxu0
  %v3891 = vpop.f32.mrb[0].mxu0
  %v3892 = vadd.f32 %v469, %v3891
  %v3893 = vpop.f32.mrb[0].mxu0
  %3894 = vmatprep.mubr.bf16.mxu0 0
  %3895 = vmatmul.mubr.bf16.gmra.mrb[0].mxu0 %v2200
  %v3896 = vpop.f32.mrb[0].mxu0
  %v3897 = vadd.f32 %v469, %v3896
  %v3898 = vpop.f32.mrb[0].mxu0
  %v3899 = vpop.f32.mrb[0].mxu0
  %v3900 = vadd.f32 %v469, %v3899
  %v3901 = vpop.f32.mrb[0].mxu0
  %3902 = vmatprep.mubr.bf16.mxu0 0
  %3903 = vmatmul.mubr.bf16.gmra.mrb[0].mxu0 %v2203
  %v3904 = vpop.f32.mrb[0].mxu0
  %v3905 = vadd.f32 %v469, %v3904
  %v3906 = vpop.f32.mrb[0].mxu0
  %v3907 = vpop.f32.mrb[0].mxu0
  %v3908 = vadd.f32 %v469, %v3907
  %v3909 = vpop.f32.mrb[0].mxu0
  %3910 = vmatprep.mubr.bf16.mxu0 0
  %3911 = vmatmul.mubr.bf16.gmra.mrb[0].mxu0 %v2206
  %v3912 = vpop.f32.mrb[0].mxu0
  %v3913 = vadd.f32 %v469, %v3912
  %v3914 = vpop.f32.mrb[0].mxu0
  %v3915 = vpop.f32.mrb[0].mxu0
  %v3916 = vadd.f32 %v469, %v3915
  %v3917 = vpop.f32.mrb[0].mxu0
  %3918 = vmatprep.mubr.bf16.mxu0 0
  %3919 = vmatmul.mubr.bf16.gmra.mrb[0].mxu0 %v2209
  %v3920 = vpop.f32.mrb[0].mxu0
  %v3921 = vadd.f32 %v469, %v3920
  %v3922 = vpop.f32.mrb[0].mxu0
  %v3923 = vpop.f32.mrb[0].mxu0
  %v3924 = vadd.f32 %v469, %v3923
  %v3925 = vpop.f32.mrb[0].mxu0
  %3926 = vmatprep.mubr.bf16.mxu0 0
  %3927 = vmatmul.mubr.bf16.gmra.mrb[0].mxu0 %v2212
  %v3928 = vpop.f32.mrb[0].mxu0
  %v3929 = vadd.f32 %v469, %v3928
  %v3930 = vpop.f32.mrb[0].mxu0
  %v3931 = vpop.f32.mrb[0].mxu0
  %v3932 = vadd.f32 %v469, %v3931
  %v3933 = vpop.f32.mrb[0].mxu0
  %3934 = vmatprep.mubr.bf16.mxu0 0
  %3935 = vmatmul.mubr.bf16.gmra.mrb[0].mxu0 %v2215
  %v3936 = vpop.f32.mrb[0].mxu0
  %v3937 = vadd.f32 %v469, %v3936
  %v3938 = vpop.f32.mrb[0].mxu0
  %v3939 = vpop.f32.mrb[0].mxu0
  %v3940 = vadd.f32 %v469, %v3939
  %v3941 = vpop.f32.mrb[0].mxu0
  %3942 = vmatprep.mubr.bf16.mxu0 0
  %3943 = vmatmul.mubr.bf16.gmra.mrb[0].mxu0 %v2218
  %v3944 = vpop.f32.mrb[0].mxu0
  %v3945 = vadd.f32 %v469, %v3944
  %v3946 = vpop.f32.mrb[0].mxu0
  %v3947 = vpop.f32.mrb[0].mxu0
  %v3948 = vadd.f32 %v469, %v3947
  %v3949 = vpop.f32.mrb[0].mxu0
  %3950 = vmatprep.mubr.bf16.mxu0 0
  %3951 = vmatmul.mubr.bf16.gmra.mrb[0].mxu0 %v2221
  %v3952 = vpop.f32.mrb[0].mxu0
  %v3953 = vadd.f32 %v469, %v3952
  %v3954 = vpop.f32.mrb[0].mxu0
  %v3955 = vpop.f32.mrb[0].mxu0
  %v3956 = vadd.f32 %v469, %v3955
  %v3957 = vpop.f32.mrb[0].mxu0
  %3958 = vmatprep.mubr.bf16.mxu0 0
  %3959 = vmatmul.mubr.bf16.gmra.mrb[0].mxu0 %v2224
  %v3960 = vpop.f32.mrb[0].mxu0
  %v3961 = vadd.f32 %v469, %v3960
  %v3962 = vpop.f32.mrb[0].mxu0
  %v3963 = vpop.f32.mrb[0].mxu0
  %v3964 = vadd.f32 %v469, %v3963
  %v3965 = vpop.f32.mrb[0].mxu0
  %3966 = vmatprep.mubr.bf16.mxu0 0
  %3967 = vmatmul.mubr.bf16.gmra.mrb[0].mxu0 %v2227
  %v3968 = vpop.f32.mrb[0].mxu0
  %v3969 = vadd.f32 %v469, %v3968
  %v3970 = vpop.f32.mrb[0].mxu0
  %v3971 = vpop.f32.mrb[0].mxu0
  %v3972 = vadd.f32 %v469, %v3971
  %v3973 = vpop.f32.mrb[0].mxu0
  %3974 = vmatprep.mubr.bf16.mxu0 0
  %3975 = vmatmul.mubr.bf16.gmra.mrb[0].mxu0 %v2230
  %v3976 = vpop.f32.mrb[0].mxu0
  %v3977 = vadd.f32 %v469, %v3976
  %v3978 = vpop.f32.mrb[0].mxu0
  %v3979 = vpop.f32.mrb[0].mxu0
  %v3980 = vadd.f32 %v469, %v3979
  %v3981 = vpop.f32.mrb[0].mxu0
  %3982 = vmatprep.mubr.bf16.mxu0 0
  %3983 = vmatmul.mubr.bf16.gmra.mrb[0].mxu0 %v2233
  %v3984 = vpop.f32.mrb[0].mxu0
  %v3985 = vadd.f32 %v469, %v3984
  %v3986 = vpop.f32.mrb[0].mxu0
  %v3987 = vpop.f32.mrb[0].mxu0
  %v3988 = vadd.f32 %v469, %v3987
  %v3989 = vpop.f32.mrb[0].mxu0
  %3990 = vmatprep.mubr.bf16.mxu0 0
  %3991 = vmatmul.mubr.bf16.gmra.mrb[0].mxu0 %v2236
  %v3992 = vpop.f32.mrb[0].mxu0
  %v3993 = vadd.f32 %v469, %v3992
  %v3994 = vpop.f32.mrb[0].mxu0
  %v3995 = vpop.f32.mrb[0].mxu0
  %v3996 = vadd.f32 %v469, %v3995
  %v3997 = vpop.f32.mrb[0].mxu0
  %3998 = vmatprep.mubr.bf16.mxu0 0
  %3999 = vmatmul.mubr.bf16.gmra.mrb[0].mxu0 %v2239
  %v4000 = vpop.f32.mrb[0].mxu0
  %v4001 = vadd.f32 %v469, %v4000
  %v4002 = vpop.f32.mrb[0].mxu0
  %v4003 = vpop.f32.mrb[0].mxu0
  %v4004 = vadd.f32 %v469, %v4003
  %v4005 = vpop.f32.mrb[0].mxu0
  %4006 = vmatprep.mubr.bf16.mxu0 0
  %4007 = vmatmul.mubr.bf16.gmra.mrb[0].mxu0 %v2242
  %v4008 = vpop.f32.mrb[0].mxu0
  %v4009 = vadd.f32 %v469, %v4008
  %v4010 = vpop.f32.mrb[0].mxu0
  %v4011 = vpop.f32.mrb[0].mxu0
  %v4012 = vadd.f32 %v469, %v4011
  %v4013 = vpop.f32.mrb[0].mxu0
  %4014 = vmatprep.mubr.bf16.mxu0 0
  %4015 = vmatmul.mubr.bf16.gmra.mrb[0].mxu0 %v2245
  %v4016 = vpop.f32.mrb[0].mxu0
  %v4017 = vadd.f32 %v469, %v4016
  %v4018 = vpop.f32.mrb[0].mxu0
  %v4019 = vpop.f32.mrb[0].mxu0
  %v4020 = vadd.f32 %v469, %v4019
  %v4021 = vpop.f32.mrb[0].mxu0
  %4022 = vmatprep.mubr.bf16.mxu0 0
  %4023 = vmatmul.mubr.bf16.gmra.mrb[0].mxu0 %v2248
  %v4024 = vpop.f32.mrb[0].mxu0
  %v4025 = vadd.f32 %v469, %v4024
  %v4026 = vpop.f32.mrb[0].mxu0
  %v4027 = vpop.f32.mrb[0].mxu0
  %v4028 = vadd.f32 %v469, %v4027
  %v4029 = vpop.f32.mrb[0].mxu0
  %4030 = vmatprep.mubr.bf16.mxu0 0
  %4031 = vmatmul.mubr.bf16.gmra.mrb[0].mxu0 %v2251
  %v4032 = vpop.f32.mrb[0].mxu0
  %v4033 = vadd.f32 %v469, %v4032
  %v4034 = vpop.f32.mrb[0].mxu0
  %v4035 = vpop.f32.mrb[0].mxu0
  %v4036 = vadd.f32 %v469, %v4035
  %v4037 = vpop.f32.mrb[0].mxu0
  %4038 = vmatprep.mubr.bf16.mxu0 0
  %4039 = vmatmul.mubr.bf16.gmra.mrb[0].mxu0 %v2254
  %v4040 = vpop.f32.mrb[0].mxu0
  %v4041 = vadd.f32 %v469, %v4040
  %v4042 = vpop.f32.mrb[0].mxu0
  %v4043 = vpop.f32.mrb[0].mxu0
  %v4044 = vadd.f32 %v469, %v4043
  %v4045 = vpop.f32.mrb[0].mxu0
  %4046 = vmatprep.mubr.bf16.mxu0 0
  %4047 = vmatmul.mubr.bf16.gmra.mrb[0].mxu0 %v2257
  %v4048 = vpop.f32.mrb[0].mxu0
  %v4049 = vadd.f32 %v469, %v4048
  %v4050 = vpop.f32.mrb[0].mxu0
  %v4051 = vpop.f32.mrb[0].mxu0
  %v4052 = vadd.f32 %v469, %v4051
  %v4053 = vpop.f32.mrb[0].mxu0
  %4054 = vmatprep.mubr.bf16.mxu0 0
  %4055 = vmatmul.mubr.bf16.gmra.mrb[0].mxu0 %v2260
  %v4056 = vpop.f32.mrb[0].mxu0
  %v4057 = vadd.f32 %v469, %v4056
  %v4058 = vpop.f32.mrb[0].mxu0
  %v4059 = vpop.f32.mrb[0].mxu0
  %v4060 = vpop.f32.mrb[0].mxu0
  %4061 = vdwg.mxu0
  %v4062 = vmax.f32 %v2297, 0.0
  %v4063 = vmax.f32 %v2300, 0.0
  %v4064 = vmax.f32 %v2305, 0.0
  %v4065 = vmax.f32 %v2308, 0.0
  %v4066 = vmax.f32 %v2313, 0.0
  %v4067 = vmax.f32 %v2316, 0.0
  %v4068 = vmax.f32 %v2321, 0.0
  %v4069 = vmax.f32 %v2324, 0.0
  %v4070 = vmax.f32 %v2329, 0.0
  %v4071 = vmax.f32 %v2332, 0.0
  %v4072 = vmax.f32 %v2337, 0.0
  %v4073 = vmax.f32 %v2340, 0.0
  %v4074 = vmax.f32 %v2345, 0.0
  %v4075 = vmax.f32 %v2348, 0.0
  %v4076 = vmax.f32 %v2353, 0.0
  %v4077 = vmax.f32 %v2356, 0.0
  %v4078 = vmax.f32 %v2361, 0.0
  %v4079 = vmax.f32 %v2364, 0.0
  %v4080 = vmax.f32 %v2369, 0.0
  %v4081 = vmax.f32 %v2372, 0.0
  %v4082 = vmax.f32 %v2377, 0.0
  %v4083 = vmax.f32 %v2380, 0.0
  %v4084 = vmax.f32 %v2385, 0.0
  %v4085 = vmax.f32 %v2388, 0.0
  %v4086 = vmax.f32 %v2393, 0.0
  %v4087 = vmax.f32 %v2396, 0.0
  %v4088 = vmax.f32 %v2401, 0.0
  %v4089 = vmax.f32 %v2404, 0.0
  %v4090 = vmax.f32 %v2409, 0.0
  %v4091 = vmax.f32 %v2412, 0.0
  %v4092 = vmax.f32 %v2417, 0.0
  %v4093 = vmax.f32 %v2420, 0.0
  %v4094 = vmax.f32 %v2425, 0.0
  %v4095 = vmax.f32 %v2428, 0.0
  %v4096 = vmax.f32 %v2433, 0.0
  %v4097 = vmax.f32 %v2436, 0.0
  %v4098 = vmax.f32 %v2441, 0.0
  %v4099 = vmax.f32 %v2444, 0.0
  %v4100 = vmax.f32 %v2449, 0.0
  %v4101 = vmax.f32 %v2452, 0.0
  %v4102 = vmax.f32 %v2457, 0.0
  %v4103 = vmax.f32 %v2460, 0.0
  %v4104 = vmax.f32 %v2465, 0.0
  %v4105 = vmax.f32 %v2468, 0.0
  %v4106 = vmax.f32 %v2473, 0.0
  %v4107 = vmax.f32 %v2476, 0.0
  %v4108 = vmax.f32 %v2481, 0.0
  %v4109 = vmax.f32 %v2484, 0.0
  %v4110 = vmax.f32 %v2489, 0.0
  %v4111 = vmax.f32 %v2492, 0.0
  %v4112 = vmax.f32 %v2497, 0.0
  %v4113 = vmax.f32 %v2500, 0.0
  %v4114 = vmax.f32 %v2505, 0.0
  %v4115 = vmax.f32 %v2508, 0.0
  %v4116 = vmax.f32 %v2513, 0.0
  %v4117 = vmax.f32 %v2516, 0.0
  %v4118 = vmax.f32 %v2521, 0.0
  %v4119 = vmax.f32 %v2524, 0.0
  %v4120 = vmax.f32 %v2529, 0.0
  %v4121 = vmax.f32 %v2532, 0.0
  %v4122 = vmax.f32 %v2537, 0.0
  %v4123 = vmax.f32 %v2540, 0.0
  %v4124 = vmax.f32 %v2545, 0.0
  %v4125 = vmax.f32 %v2548, 0.0
  %v4126 = vmax.f32 %v2553, 0.0
  %v4127 = vmax.f32 %v2556, 0.0
  %v4128 = vmax.f32 %v2561, 0.0
  %v4129 = vmax.f32 %v2564, 0.0
  %v4130 = vmax.f32 %v2569, 0.0
  %v4131 = vmax.f32 %v2572, 0.0
  %v4132 = vmax.f32 %v2577, 0.0
  %v4133 = vmax.f32 %v2580, 0.0
  %v4134 = vmax.f32 %v2585, 0.0
  %v4135 = vmax.f32 %v2588, 0.0
  %v4136 = vmax.f32 %v2593, 0.0
  %v4137 = vmax.f32 %v2596, 0.0
  %v4138 = vmax.f32 %v2601, 0.0
  %v4139 = vmax.f32 %v2604, 0.0
  %v4140 = vmax.f32 %v2609, 0.0
  %v4141 = vmax.f32 %v2612, 0.0
  %v4142 = vmax.f32 %v2617, 0.0
  %v4143 = vmax.f32 %v2620, 0.0
  %v4144 = vmax.f32 %v2625, 0.0
  %v4145 = vmax.f32 %v2628, 0.0
  %v4146 = vmax.f32 %v2633, 0.0
  %v4147 = vmax.f32 %v2636, 0.0
  %v4148 = vmax.f32 %v2641, 0.0
  %v4149 = vmax.f32 %v2644, 0.0
  %v4150 = vmax.f32 %v2649, 0.0
  %v4151 = vmax.f32 %v2652, 0.0
  %v4152 = vmax.f32 %v2657, 0.0
  %v4153 = vmax.f32 %v2660, 0.0
  %v4154 = vmax.f32 %v2665, 0.0
  %v4155 = vmax.f32 %v2668, 0.0
  %v4156 = vmax.f32 %v2673, 0.0
  %v4157 = vmax.f32 %v2676, 0.0
  %v4158 = vmax.f32 %v2681, 0.0
  %v4159 = vmax.f32 %v2684, 0.0
  %v4160 = vmax.f32 %v2689, 0.0
  %v4161 = vmax.f32 %v2692, 0.0
  %v4162 = vmax.f32 %v2697, 0.0
  %v4163 = vmax.f32 %v2700, 0.0
  %v4164 = vmax.f32 %v2705, 0.0
  %v4165 = vmax.f32 %v2708, 0.0
  %v4166 = vmax.f32 %v2713, 0.0
  %v4167 = vmax.f32 %v2716, 0.0
  %v4168 = vmax.f32 %v2721, 0.0
  %v4169 = vmax.f32 %v2724, 0.0
  %v4170 = vmax.f32 %v2729, 0.0
  %v4171 = vmax.f32 %v2732, 0.0
  %v4172 = vmax.f32 %v2737, 0.0
  %v4173 = vmax.f32 %v2740, 0.0
  %v4174 = vmax.f32 %v2745, 0.0
  %v4175 = vmax.f32 %v2748, 0.0
  %v4176 = vmax.f32 %v2753, 0.0
  %v4177 = vmax.f32 %v2756, 0.0
  %v4178 = vmax.f32 %v2761, 0.0
  %v4179 = vmax.f32 %v2764, 0.0
  %v4180 = vmax.f32 %v2769, 0.0
  %v4181 = vmax.f32 %v2772, 0.0
  %v4182 = vmax.f32 %v2777, 0.0
  %v4183 = vmax.f32 %v2780, 0.0
  %v4184 = vmax.f32 %v2785, 0.0
  %v4185 = vmax.f32 %v2788, 0.0
  %v4186 = vmax.f32 %v2793, 0.0
  %v4187 = vmax.f32 %v2796, 0.0
  %v4188 = vmax.f32 %v2801, 0.0
  %v4189 = vmax.f32 %v2804, 0.0
  %v4190 = vmax.f32 %v2809, 0.0
  %v4191 = vmax.f32 %v2812, 0.0
  %v4192 = vmax.f32 %v2817, 0.0
  %v4193 = vmax.f32 %v2820, 0.0
  %v4194 = vmax.f32 %v2825, 0.0
  %v4195 = vmax.f32 %v2828, 0.0
  %v4196 = vmax.f32 %v2833, 0.0
  %v4197 = vmax.f32 %v2836, 0.0
  %v4198 = vmax.f32 %v2841, 0.0
  %v4199 = vmax.f32 %v2844, 0.0
  %v4200 = vmax.f32 %v2849, 0.0
  %v4201 = vmax.f32 %v2852, 0.0
  %v4202 = vmax.f32 %v2857, 0.0
  %v4203 = vmax.f32 %v2860, 0.0
  %v4204 = vmax.f32 %v2865, 0.0
  %v4205 = vmax.f32 %v2868, 0.0
  %v4206 = vmax.f32 %v2873, 0.0
  %v4207 = vmax.f32 %v2876, 0.0
  %v4208 = vmax.f32 %v2881, 0.0
  %v4209 = vmax.f32 %v2884, 0.0
  %v4210 = vmax.f32 %v2889, 0.0
  %v4211 = vmax.f32 %v2892, 0.0
  %v4212 = vmax.f32 %v2897, 0.0
  %v4213 = vmax.f32 %v2900, 0.0
  %v4214 = vmax.f32 %v2905, 0.0
  %v4215 = vmax.f32 %v2908, 0.0
  %v4216 = vmax.f32 %v2913, 0.0
  %v4217 = vmax.f32 %v2916, 0.0
  %v4218 = vmax.f32 %v2921, 0.0
  %v4219 = vmax.f32 %v2924, 0.0
  %v4220 = vmax.f32 %v2929, 0.0
  %v4221 = vmax.f32 %v2932, 0.0
  %v4222 = vmax.f32 %v2937, 0.0
  %v4223 = vmax.f32 %v2940, 0.0
  %v4224 = vmax.f32 %v2945, 0.0
  %v4225 = vmax.f32 %v2948, 0.0
  %v4226 = vmax.f32 %v2953, 0.0
  %v4227 = vmax.f32 %v2956, 0.0
  %v4228 = vmax.f32 %v2961, 0.0
  %v4229 = vmax.f32 %v2964, 0.0
  %v4230 = vmax.f32 %v2969, 0.0
  %v4231 = vmax.f32 %v2972, 0.0
  %v4232 = vmax.f32 %v2977, 0.0
  %v4233 = vmax.f32 %v2980, 0.0
  %v4234 = vmax.f32 %v2985, 0.0
  %v4235 = vmax.f32 %v2988, 0.0
  %v4236 = vmax.f32 %v2993, 0.0
  %v4237 = vmax.f32 %v2996, 0.0
  %v4238 = vmax.f32 %v3001, 0.0
  %v4239 = vmax.f32 %v3004, 0.0
  %v4240 = vmax.f32 %v3009, 0.0
  %v4241 = vmax.f32 %v3012, 0.0
  %v4242 = vmax.f32 %v3017, 0.0
  %v4243 = vmax.f32 %v3020, 0.0
  %v4244 = vmax.f32 %v3025, 0.0
  %v4245 = vmax.f32 %v3028, 0.0
  %v4246 = vmax.f32 %v3033, 0.0
  %v4247 = vmax.f32 %v3036, 0.0
  %v4248 = vmax.f32 %v3041, 0.0
  %v4249 = vmax.f32 %v3044, 0.0
  %v4250 = vmax.f32 %v3049, 0.0
  %v4251 = vmax.f32 %v3052, 0.0
  %v4252 = vmax.f32 %v3057, 0.0
  %v4253 = vmax.f32 %v3060, 0.0
  %v4254 = vmax.f32 %v3065, 0.0
  %v4255 = vmax.f32 %v3068, 0.0
  %v4256 = vmax.f32 %v3073, 0.0
  %v4257 = vmax.f32 %v3076, 0.0
  %v4258 = vmax.f32 %v3081, 0.0
  %v4259 = vmax.f32 %v3084, 0.0
  %v4260 = vmax.f32 %v3089, 0.0
  %v4261 = vmax.f32 %v3092, 0.0
  %v4262 = vmax.f32 %v3097, 0.0
  %v4263 = vmax.f32 %v3100, 0.0
  %v4264 = vmax.f32 %v3105, 0.0
  %v4265 = vmax.f32 %v3108, 0.0
  %v4266 = vmax.f32 %v3113, 0.0
  %v4267 = vmax.f32 %v3116, 0.0
  %v4268 = vmax.f32 %v3121, 0.0
  %v4269 = vmax.f32 %v3124, 0.0
  %v4270 = vmax.f32 %v3129, 0.0
  %v4271 = vmax.f32 %v3132, 0.0
  %v4272 = vmax.f32 %v3137, 0.0
  %v4273 = vmax.f32 %v3140, 0.0
  %v4274 = vmax.f32 %v3145, 0.0
  %v4275 = vmax.f32 %v3148, 0.0
  %v4276 = vmax.f32 %v3153, 0.0
  %v4277 = vmax.f32 %v3156, 0.0
  %v4278 = vmax.f32 %v3161, 0.0
  %v4279 = vmax.f32 %v3164, 0.0
  %v4280 = vmax.f32 %v3169, 0.0
  %v4281 = vmax.f32 %v3172, 0.0
  %v4282 = vmax.f32 %v3177, 0.0
  %v4283 = vmax.f32 %v3180, 0.0
  %v4284 = vmax.f32 %v3185, 0.0
  %v4285 = vmax.f32 %v3188, 0.0
  %v4286 = vmax.f32 %v3193, 0.0
  %v4287 = vmax.f32 %v3196, 0.0
  %v4288 = vmax.f32 %v3201, 0.0
  %v4289 = vmax.f32 %v3204, 0.0
  %v4290 = vmax.f32 %v3209, 0.0
  %v4291 = vmax.f32 %v3212, 0.0
  %v4292 = vmax.f32 %v3217, 0.0
  %v4293 = vmax.f32 %v3220, 0.0
  %v4294 = vmax.f32 %v3225, 0.0
  %v4295 = vmax.f32 %v3228, 0.0
  %v4296 = vmax.f32 %v3233, 0.0
  %v4297 = vmax.f32 %v3236, 0.0
  %v4298 = vmax.f32 %v3241, 0.0
  %v4299 = vmax.f32 %v3244, 0.0
  %v4300 = vmax.f32 %v3249, 0.0
  %v4301 = vmax.f32 %v3252, 0.0
  %v4302 = vmax.f32 %v3257, 0.0
  %v4303 = vmax.f32 %v3260, 0.0
  %v4304 = vmax.f32 %v3265, 0.0
  %v4305 = vmax.f32 %v3268, 0.0
  %v4306 = vmax.f32 %v3273, 0.0
  %v4307 = vmax.f32 %v3276, 0.0
  %v4308 = vmax.f32 %v3281, 0.0
  %v4309 = vmax.f32 %v3284, 0.0
  %v4310 = vmax.f32 %v3289, 0.0
  %v4311 = vmax.f32 %v3292, 0.0
  %v4312 = vmax.f32 %v3297, 0.0
  %v4313 = vmax.f32 %v3300, 0.0
  %v4314 = vmax.f32 %v3305, 0.0
  %v4315 = vmax.f32 %v3308, 0.0
  %v4316 = vmax.f32 %v3313, 0.0
  %v4317 = vmax.f32 %v3316, 0.0
  %v4318 = vmax.f32 %v3321, 0.0
  %v4319 = vmax.f32 %v3324, 0.0
  %v4320 = vmax.f32 %v3329, 0.0
  %v4321 = vmax.f32 %v3332, 0.0
  %v4322 = vmax.f32 %v3337, 0.0
  %v4323 = vmax.f32 %v3340, 0.0
  %v4324 = vmax.f32 %v3345, 0.0
  %v4325 = vmax.f32 %v3348, 0.0
  %v4326 = vmax.f32 %v3353, 0.0
  %v4327 = vmax.f32 %v3356, 0.0
  %v4328 = vmax.f32 %v3361, 0.0
  %v4329 = vmax.f32 %v3364, 0.0
  %v4330 = vmax.f32 %v3369, 0.0
  %v4331 = vmax.f32 %v3372, 0.0
  %v4332 = vmax.f32 %v3377, 0.0
  %v4333 = vmax.f32 %v3380, 0.0
  %v4334 = vmax.f32 %v3385, 0.0
  %v4335 = vmax.f32 %v3388, 0.0
  %v4336 = vmax.f32 %v3393, 0.0
  %v4337 = vmax.f32 %v3396, 0.0
  %v4338 = vmax.f32 %v3401, 0.0
  %v4339 = vmax.f32 %v3404, 0.0
  %v4340 = vmax.f32 %v3409, 0.0
  %v4341 = vmax.f32 %v3412, 0.0
  %v4342 = vmax.f32 %v3417, 0.0
  %v4343 = vmax.f32 %v3420, 0.0
  %v4344 = vmax.f32 %v3425, 0.0
  %v4345 = vmax.f32 %v3428, 0.0
  %v4346 = vmax.f32 %v3433, 0.0
  %v4347 = vmax.f32 %v3436, 0.0
  %v4348 = vmax.f32 %v3441, 0.0
  %v4349 = vmax.f32 %v3444, 0.0
  %v4350 = vmax.f32 %v3449, 0.0
  %v4351 = vmax.f32 %v3452, 0.0
  %v4352 = vmax.f32 %v3457, 0.0
  %v4353 = vmax.f32 %v3460, 0.0
  %v4354 = vmax.f32 %v3465, 0.0
  %v4355 = vmax.f32 %v3468, 0.0
  %v4356 = vmax.f32 %v3473, 0.0
  %v4357 = vmax.f32 %v3476, 0.0
  %v4358 = vmax.f32 %v3481, 0.0
  %v4359 = vmax.f32 %v3484, 0.0
  %v4360 = vmax.f32 %v3489, 0.0
  %v4361 = vmax.f32 %v3492, 0.0
  %v4362 = vmax.f32 %v3497, 0.0
  %v4363 = vmax.f32 %v3500, 0.0
  %v4364 = vmax.f32 %v3505, 0.0
  %v4365 = vmax.f32 %v3508, 0.0
  %v4366 = vmax.f32 %v3513, 0.0
  %v4367 = vmax.f32 %v3516, 0.0
  %v4368 = vmax.f32 %v3521, 0.0
  %v4369 = vmax.f32 %v3524, 0.0
  %v4370 = vmax.f32 %v3529, 0.0
  %v4371 = vmax.f32 %v3532, 0.0
  %v4372 = vmax.f32 %v3537, 0.0
  %v4373 = vmax.f32 %v3540, 0.0
  %v4374 = vmax.f32 %v3545, 0.0
  %v4375 = vmax.f32 %v3548, 0.0
  %v4376 = vmax.f32 %v3553, 0.0
  %v4377 = vmax.f32 %v3556, 0.0
  %v4378 = vmax.f32 %v3561, 0.0
  %v4379 = vmax.f32 %v3564, 0.0
  %v4380 = vmax.f32 %v3569, 0.0
  %v4381 = vmax.f32 %v3572, 0.0
  %v4382 = vmax.f32 %v3577, 0.0
  %v4383 = vmax.f32 %v3580, 0.0
  %v4384 = vmax.f32 %v3585, 0.0
  %v4385 = vmax.f32 %v3588, 0.0
  %v4386 = vmax.f32 %v3593, 0.0
  %v4387 = vmax.f32 %v3596, 0.0
  %v4388 = vmax.f32 %v3601, 0.0
  %v4389 = vmax.f32 %v3604, 0.0
  %v4390 = vmax.f32 %v3609, 0.0
  %v4391 = vmax.f32 %v3612, 0.0
  %v4392 = vmax.f32 %v3617, 0.0
  %v4393 = vmax.f32 %v3620, 0.0
  %v4394 = vmax.f32 %v3625, 0.0
  %v4395 = vmax.f32 %v3628, 0.0
  %v4396 = vmax.f32 %v3633, 0.0
  %v4397 = vmax.f32 %v3636, 0.0
  %v4398 = vmax.f32 %v3641, 0.0
  %v4399 = vmax.f32 %v3644, 0.0
  %v4400 = vmax.f32 %v3649, 0.0
  %v4401 = vmax.f32 %v3652, 0.0
  %v4402 = vmax.f32 %v3657, 0.0
  %v4403 = vmax.f32 %v3660, 0.0
  %v4404 = vmax.f32 %v3665, 0.0
  %v4405 = vmax.f32 %v3668, 0.0
  %v4406 = vmax.f32 %v3673, 0.0
  %v4407 = vmax.f32 %v3676, 0.0
  %v4408 = vmax.f32 %v3681, 0.0
  %v4409 = vmax.f32 %v3684, 0.0
  %v4410 = vmax.f32 %v3689, 0.0
  %v4411 = vmax.f32 %v3692, 0.0
  %v4412 = vmax.f32 %v3697, 0.0
  %v4413 = vmax.f32 %v3700, 0.0
  %v4414 = vmax.f32 %v3705, 0.0
  %v4415 = vmax.f32 %v3708, 0.0
  %v4416 = vmax.f32 %v3713, 0.0
  %v4417 = vmax.f32 %v3716, 0.0
  %v4418 = vmax.f32 %v3721, 0.0
  %v4419 = vmax.f32 %v3724, 0.0
  %v4420 = vmax.f32 %v3729, 0.0
  %v4421 = vmax.f32 %v3732, 0.0
  %v4422 = vmax.f32 %v3737, 0.0
  %v4423 = vmax.f32 %v3740, 0.0
  %v4424 = vmax.f32 %v3745, 0.0
  %v4425 = vmax.f32 %v3748, 0.0
  %v4426 = vmax.f32 %v3753, 0.0
  %v4427 = vmax.f32 %v3756, 0.0
  %v4428 = vmax.f32 %v3761, 0.0
  %v4429 = vmax.f32 %v3764, 0.0
  %v4430 = vmax.f32 %v3769, 0.0
  %v4431 = vmax.f32 %v3772, 0.0
  %v4432 = vmax.f32 %v3777, 0.0
  %v4433 = vmax.f32 %v3780, 0.0
  %v4434 = vmax.f32 %v3785, 0.0
  %v4435 = vmax.f32 %v3788, 0.0
  %v4436 = vmax.f32 %v3793, 0.0
  %v4437 = vmax.f32 %v3796, 0.0
  %v4438 = vmax.f32 %v3801, 0.0
  %v4439 = vmax.f32 %v3804, 0.0
  %v4440 = vmax.f32 %v3809, 0.0
  %v4441 = vmax.f32 %v3812, 0.0
  %v4442 = vmax.f32 %v3817, 0.0
  %v4443 = vmax.f32 %v3820, 0.0
  %v4444 = vmax.f32 %v3825, 0.0
  %v4445 = vmax.f32 %v3828, 0.0
  %v4446 = vmax.f32 %v3833, 0.0
  %v4447 = vmax.f32 %v3836, 0.0
  %v4448 = vmax.f32 %v3841, 0.0
  %v4449 = vmax.f32 %v3844, 0.0
  %v4450 = vmax.f32 %v3849, 0.0
  %v4451 = vmax.f32 %v3852, 0.0
  %v4452 = vmax.f32 %v3857, 0.0
  %v4453 = vmax.f32 %v3860, 0.0
  %v4454 = vmax.f32 %v3865, 0.0
  %v4455 = vmax.f32 %v3868, 0.0
  %v4456 = vmax.f32 %v3873, 0.0
  %v4457 = vmax.f32 %v3876, 0.0
  %v4458 = vmax.f32 %v3881, 0.0
  %v4459 = vmax.f32 %v3884, 0.0
  %v4460 = vmax.f32 %v3889, 0.0
  %v4461 = vmax.f32 %v3892, 0.0
  %v4462 = vmax.f32 %v3897, 0.0
  %v4463 = vmax.f32 %v3900, 0.0
  %v4464 = vmax.f32 %v3905, 0.0
  %v4465 = vmax.f32 %v3908, 0.0
  %v4466 = vmax.f32 %v3913, 0.0
  %v4467 = vmax.f32 %v3916, 0.0
  %v4468 = vmax.f32 %v3921, 0.0
  %v4469 = vmax.f32 %v3924, 0.0
  %v4470 = vmax.f32 %v3929, 0.0
  %v4471 = vmax.f32 %v3932, 0.0
  %v4472 = vmax.f32 %v3937, 0.0
  %v4473 = vmax.f32 %v3940, 0.0
  %v4474 = vmax.f32 %v3945, 0.0
  %v4475 = vmax.f32 %v3948, 0.0
  %v4476 = vmax.f32 %v3953, 0.0
  %v4477 = vmax.f32 %v3956, 0.0
  %v4478 = vmax.f32 %v3961, 0.0
  %v4479 = vmax.f32 %v3964, 0.0
  %v4480 = vmax.f32 %v3969, 0.0
  %v4481 = vmax.f32 %v3972, 0.0
  %v4482 = vmax.f32 %v3977, 0.0
  %v4483 = vmax.f32 %v3980, 0.0
  %v4484 = vmax.f32 %v3985, 0.0
  %v4485 = vmax.f32 %v3988, 0.0
  %v4486 = vmax.f32 %v3993, 0.0
  %v4487 = vmax.f32 %v3996, 0.0
  %v4488 = vmax.f32 %v4001, 0.0
  %v4489 = vmax.f32 %v4004, 0.0
  %v4490 = vmax.f32 %v4009, 0.0
  %v4491 = vmax.f32 %v4012, 0.0
  %v4492 = vmax.f32 %v4017, 0.0
  %v4493 = vmax.f32 %v4020, 0.0
  %v4494 = vmax.f32 %v4025, 0.0
  %v4495 = vmax.f32 %v4028, 0.0
  %v4496 = vmax.f32 %v4033, 0.0
  %v4497 = vmax.f32 %v4036, 0.0
  %v4498 = vmax.f32 %v4041, 0.0
  %v4499 = vmax.f32 %v4044, 0.0
  %v4500 = vmax.f32 %v4049, 0.0
  %v4501 = vmax.f32 %v4052, 0.0
  %v4502 = vmax.f32 %v4057, 0.0
  %v4503 = vpack.c.bf16 %v4063, %v4062
  %v4504 = vpack.c.bf16 %v4065, %v4064
  %v4505 = vpack.c.bf16 %v4067, %v4066
  %v4506 = vpack.c.bf16 %v4069, %v4068
  %v4507 = vpack.c.bf16 %v4071, %v4070
  %v4508 = vpack.c.bf16 %v4073, %v4072
  %v4509 = vpack.c.bf16 %v4075, %v4074
  %v4510 = vpack.c.bf16 %v4077, %v4076
  %v4511 = vpack.c.bf16 %v4079, %v4078
  %v4512 = vpack.c.bf16 %v4081, %v4080
  %v4513 = vpack.c.bf16 %v4083, %v4082
  %v4514 = vpack.c.bf16 %v4085, %v4084
  %v4515 = vpack.c.bf16 %v4087, %v4086
  %v4516 = vpack.c.bf16 %v4089, %v4088
  %v4517 = vpack.c.bf16 %v4091, %v4090
  %v4518 = vpack.c.bf16 %v4093, %v4092
  %v4519 = vpack.c.bf16 %v4095, %v4094
  %v4520 = vpack.c.bf16 %v4097, %v4096
  %v4521 = vpack.c.bf16 %v4099, %v4098
  %v4522 = vpack.c.bf16 %v4101, %v4100
  %v4523 = vpack.c.bf16 %v4103, %v4102
  %v4524 = vpack.c.bf16 %v4105, %v4104
  %v4525 = vpack.c.bf16 %v4107, %v4106
  %v4526 = vpack.c.bf16 %v4109, %v4108
  %v4527 = vpack.c.bf16 %v4111, %v4110
  %v4528 = vpack.c.bf16 %v4113, %v4112
  %v4529 = vpack.c.bf16 %v4115, %v4114
  %v4530 = vpack.c.bf16 %v4117, %v4116
  %v4531 = vpack.c.bf16 %v4119, %v4118
  %v4532 = vpack.c.bf16 %v4121, %v4120
  %v4533 = vpack.c.bf16 %v4123, %v4122
  %v4534 = vpack.c.bf16 %v4125, %v4124
  %v4535 = vpack.c.bf16 %v4127, %v4126
  %v4536 = vpack.c.bf16 %v4129, %v4128
  %v4537 = vpack.c.bf16 %v4131, %v4130
  %v4538 = vpack.c.bf16 %v4133, %v4132
  %v4539 = vpack.c.bf16 %v4135, %v4134
  %v4540 = vpack.c.bf16 %v4137, %v4136
  %v4541 = vpack.c.bf16 %v4139, %v4138
  %v4542 = vpack.c.bf16 %v4141, %v4140
  %v4543 = vpack.c.bf16 %v4143, %v4142
  %v4544 = vpack.c.bf16 %v4145, %v4144
  %v4545 = vpack.c.bf16 %v4147, %v4146
  %v4546 = vpack.c.bf16 %v4149, %v4148
  %v4547 = vpack.c.bf16 %v4151, %v4150
  %v4548 = vpack.c.bf16 %v4153, %v4152
  %v4549 = vpack.c.bf16 %v4155, %v4154
  %v4550 = vpack.c.bf16 %v4157, %v4156
  %v4551 = vpack.c.bf16 %v4159, %v4158
  %v4552 = vpack.c.bf16 %v4161, %v4160
  %v4553 = vpack.c.bf16 %v4163, %v4162
  %v4554 = vpack.c.bf16 %v4165, %v4164
  %v4555 = vpack.c.bf16 %v4167, %v4166
  %v4556 = vpack.c.bf16 %v4169, %v4168
  %v4557 = vpack.c.bf16 %v4171, %v4170
  %v4558 = vpack.c.bf16 %v4173, %v4172
  %v4559 = vpack.c.bf16 %v4175, %v4174
  %v4560 = vpack.c.bf16 %v4177, %v4176
  %v4561 = vpack.c.bf16 %v4179, %v4178
  %v4562 = vpack.c.bf16 %v4181, %v4180
  %v4563 = vpack.c.bf16 %v4183, %v4182
  %v4564 = vpack.c.bf16 %v4185, %v4184
  %v4565 = vpack.c.bf16 %v4187, %v4186
  %v4566 = vpack.c.bf16 %v4189, %v4188
  %v4567 = vpack.c.bf16 %v4191, %v4190
  %v4568 = vpack.c.bf16 %v4193, %v4192
  %v4569 = vpack.c.bf16 %v4195, %v4194
  %v4570 = vpack.c.bf16 %v4197, %v4196
  %v4571 = vpack.c.bf16 %v4199, %v4198
  %v4572 = vpack.c.bf16 %v4201, %v4200
  %v4573 = vpack.c.bf16 %v4203, %v4202
  %v4574 = vpack.c.bf16 %v4205, %v4204
  %v4575 = vpack.c.bf16 %v4207, %v4206
  %v4576 = vpack.c.bf16 %v4209, %v4208
  %v4577 = vpack.c.bf16 %v4211, %v4210
  %v4578 = vpack.c.bf16 %v4213, %v4212
  %v4579 = vpack.c.bf16 %v4215, %v4214
  %v4580 = vpack.c.bf16 %v4217, %v4216
  %v4581 = vpack.c.bf16 %v4219, %v4218
  %v4582 = vpack.c.bf16 %v4221, %v4220
  %v4583 = vpack.c.bf16 %v4223, %v4222
  %v4584 = vpack.c.bf16 %v4225, %v4224
  %v4585 = vpack.c.bf16 %v4227, %v4226
  %v4586 = vpack.c.bf16 %v4229, %v4228
  %v4587 = vpack.c.bf16 %v4231, %v4230
  %v4588 = vpack.c.bf16 %v4233, %v4232
  %v4589 = vpack.c.bf16 %v4235, %v4234
  %v4590 = vpack.c.bf16 %v4237, %v4236
  %v4591 = vpack.c.bf16 %v4239, %v4238
  %v4592 = vpack.c.bf16 %v4241, %v4240
  %v4593 = vpack.c.bf16 %v4243, %v4242
  %v4594 = vpack.c.bf16 %v4245, %v4244
  %v4595 = vpack.c.bf16 %v4247, %v4246
  %v4596 = vpack.c.bf16 %v4249, %v4248
  %v4597 = vpack.c.bf16 %v4251, %v4250
  %v4598 = vpack.c.bf16 %v4253, %v4252
  %v4599 = vpack.c.bf16 %v4255, %v4254
  %v4600 = vpack.c.bf16 %v4257, %v4256
  %v4601 = vpack.c.bf16 %v4259, %v4258
  %v4602 = vpack.c.bf16 %v4261, %v4260
  %v4603 = vpack.c.bf16 %v4263, %v4262
  %v4604 = vpack.c.bf16 %v4265, %v4264
  %v4605 = vpack.c.bf16 %v4267, %v4266
  %v4606 = vpack.c.bf16 %v4269, %v4268
  %v4607 = vpack.c.bf16 %v4271, %v4270
  %v4608 = vpack.c.bf16 %v4273, %v4272
  %v4609 = vpack.c.bf16 %v4275, %v4274
  %v4610 = vpack.c.bf16 %v4277, %v4276
  %v4611 = vpack.c.bf16 %v4279, %v4278
  %v4612 = vpack.c.bf16 %v4281, %v4280
  %v4613 = vpack.c.bf16 %v4283, %v4282
  %v4614 = vpack.c.bf16 %v4285, %v4284
  %v4615 = vpack.c.bf16 %v4287, %v4286
  %v4616 = vpack.c.bf16 %v4289, %v4288
  %v4617 = vpack.c.bf16 %v4291, %v4290
  %v4618 = vpack.c.bf16 %v4293, %v4292
  %v4619 = vpack.c.bf16 %v4295, %v4294
  %v4620 = vpack.c.bf16 %v4297, %v4296
  %v4621 = vpack.c.bf16 %v4299, %v4298
  %v4622 = vpack.c.bf16 %v4301, %v4300
  %v4623 = vpack.c.bf16 %v4303, %v4302
  %v4624 = vpack.c.bf16 %v4305, %v4304
  %v4625 = vpack.c.bf16 %v4307, %v4306
  %v4626 = vpack.c.bf16 %v4309, %v4308
  %v4627 = vpack.c.bf16 %v4311, %v4310
  %v4628 = vpack.c.bf16 %v4313, %v4312
  %v4629 = vpack.c.bf16 %v4315, %v4314
  %v4630 = vpack.c.bf16 %v4317, %v4316
  %v4631 = vpack.c.bf16 %v4319, %v4318
  %v4632 = vpack.c.bf16 %v4321, %v4320
  %v4633 = vpack.c.bf16 %v4323, %v4322
  %v4634 = vpack.c.bf16 %v4325, %v4324
  %v4635 = vpack.c.bf16 %v4327, %v4326
  %v4636 = vpack.c.bf16 %v4329, %v4328
  %v4637 = vpack.c.bf16 %v4331, %v4330
  %v4638 = vpack.c.bf16 %v4333, %v4332
  %v4639 = vpack.c.bf16 %v4335, %v4334
  %v4640 = vpack.c.bf16 %v4337, %v4336
  %v4641 = vpack.c.bf16 %v4339, %v4338
  %v4642 = vpack.c.bf16 %v4341, %v4340
  %v4643 = vpack.c.bf16 %v4343, %v4342
  %v4644 = vpack.c.bf16 %v4345, %v4344
  %v4645 = vpack.c.bf16 %v4347, %v4346
  %v4646 = vpack.c.bf16 %v4349, %v4348
  %v4647 = vpack.c.bf16 %v4351, %v4350
  %v4648 = vpack.c.bf16 %v4353, %v4352
  %v4649 = vpack.c.bf16 %v4355, %v4354
  %v4650 = vpack.c.bf16 %v4357, %v4356
  %v4651 = vpack.c.bf16 %v4359, %v4358
  %v4652 = vpack.c.bf16 %v4361, %v4360
  %v4653 = vpack.c.bf16 %v4363, %v4362
  %v4654 = vpack.c.bf16 %v4365, %v4364
  %v4655 = vpack.c.bf16 %v4367, %v4366
  %v4656 = vpack.c.bf16 %v4369, %v4368
  %v4657 = vpack.c.bf16 %v4371, %v4370
  %v4658 = vpack.c.bf16 %v4373, %v4372
  %v4659 = vpack.c.bf16 %v4375, %v4374
  %v4660 = vpack.c.bf16 %v4377, %v4376
  %v4661 = vpack.c.bf16 %v4379, %v4378
  %v4662 = vpack.c.bf16 %v4381, %v4380
  %v4663 = vpack.c.bf16 %v4383, %v4382
  %v4664 = vpack.c.bf16 %v4385, %v4384
  %v4665 = vpack.c.bf16 %v4387, %v4386
  %v4666 = vpack.c.bf16 %v4389, %v4388
  %v4667 = vpack.c.bf16 %v4391, %v4390
  %v4668 = vpack.c.bf16 %v4393, %v4392
  %v4669 = vpack.c.bf16 %v4395, %v4394
  %v4670 = vpack.c.bf16 %v4397, %v4396
  %v4671 = vpack.c.bf16 %v4399, %v4398
  %v4672 = vpack.c.bf16 %v4401, %v4400
  %v4673 = vpack.c.bf16 %v4403, %v4402
  %v4674 = vpack.c.bf16 %v4405, %v4404
  %v4675 = vpack.c.bf16 %v4407, %v4406
  %v4676 = vpack.c.bf16 %v4409, %v4408
  %v4677 = vpack.c.bf16 %v4411, %v4410
  %v4678 = vpack.c.bf16 %v4413, %v4412
  %v4679 = vpack.c.bf16 %v4415, %v4414
  %v4680 = vpack.c.bf16 %v4417, %v4416
  %v4681 = vpack.c.bf16 %v4419, %v4418
  %v4682 = vpack.c.bf16 %v4421, %v4420
  %v4683 = vpack.c.bf16 %v4423, %v4422
  %v4684 = vpack.c.bf16 %v4425, %v4424
  %v4685 = vpack.c.bf16 %v4427, %v4426
  %v4686 = vpack.c.bf16 %v4429, %v4428
  %v4687 = vpack.c.bf16 %v4431, %v4430
  %v4688 = vpack.c.bf16 %v4433, %v4432
  %v4689 = vpack.c.bf16 %v4435, %v4434
  %v4690 = vpack.c.bf16 %v4437, %v4436
  %v4691 = vpack.c.bf16 %v4439, %v4438
  %v4692 = vpack.c.bf16 %v4441, %v4440
  %v4693 = vpack.c.bf16 %v4443, %v4442
  %v4694 = vpack.c.bf16 %v4445, %v4444
  %v4695 = vpack.c.bf16 %v4447, %v4446
  %v4696 = vpack.c.bf16 %v4449, %v4448
  %v4697 = vpack.c.bf16 %v4451, %v4450
  %v4698 = vpack.c.bf16 %v4453, %v4452
  %v4699 = vpack.c.bf16 %v4455, %v4454
  %v4700 = vpack.c.bf16 %v4457, %v4456
  %v4701 = vpack.c.bf16 %v4459, %v4458
  %v4702 = vpack.c.bf16 %v4461, %v4460
  %v4703 = vpack.c.bf16 %v4463, %v4462
  %v4704 = vpack.c.bf16 %v4465, %v4464
  %v4705 = vpack.c.bf16 %v4467, %v4466
  %v4706 = vpack.c.bf16 %v4469, %v4468
  %v4707 = vpack.c.bf16 %v4471, %v4470
  %v4708 = vpack.c.bf16 %v4473, %v4472
  %v4709 = vpack.c.bf16 %v4475, %v4474
  %v4710 = vpack.c.bf16 %v4477, %v4476
  %v4711 = vpack.c.bf16 %v4479, %v4478
  %v4712 = vpack.c.bf16 %v4481, %v4480
  %v4713 = vpack.c.bf16 %v4483, %v4482
  %v4714 = vpack.c.bf16 %v4485, %v4484
  %v4715 = vpack.c.bf16 %v4487, %v4486
  %v4716 = vpack.c.bf16 %v4489, %v4488
  %v4717 = vpack.c.bf16 %v4491, %v4490
  %v4718 = vpack.c.bf16 %v4493, %v4492
  %v4719 = vpack.c.bf16 %v4495, %v4494
  %v4720 = vpack.c.bf16 %v4497, %v4496
  %v4721 = vpack.c.bf16 %v4499, %v4498
  %v4722 = vpack.c.bf16 %v4501, %v4500
  %v4723 = vpack.c.bf16 %v4502, %v4502
  %v4945 = vunpack.c.l.b16 %v4503
  %v4946 = vunpack.c.h.b16 %v4503
  %v4947 = vunpack.c.l.b16 %v4504
  %v4948 = vunpack.c.h.b16 %v4504
  %v4949 = vunpack.c.l.b16 %v4505
  %v4950 = vunpack.c.h.b16 %v4505
  %v4951 = vunpack.c.l.b16 %v4506
  %v4952 = vunpack.c.h.b16 %v4506
  %v4953 = vunpack.c.l.b16 %v4507
  %v4954 = vunpack.c.h.b16 %v4507
  %v4955 = vunpack.c.l.b16 %v4508
  %v4956 = vunpack.c.h.b16 %v4508
  %v4957 = vunpack.c.l.b16 %v4509
  %v4958 = vunpack.c.h.b16 %v4509
  %v4959 = vunpack.c.l.b16 %v4510
  %v4960 = vunpack.c.h.b16 %v4510
  %v4961 = vunpack.c.l.b16 %v4511
  %v4962 = vunpack.c.h.b16 %v4511
  %v4963 = vunpack.c.l.b16 %v4512
  %v4964 = vunpack.c.h.b16 %v4512
  %v4965 = vunpack.c.l.b16 %v4513
  %v4966 = vunpack.c.h.b16 %v4513
  %v4967 = vunpack.c.l.b16 %v4514
  %v4968 = vunpack.c.h.b16 %v4514
  %v4969 = vunpack.c.l.b16 %v4515
  %v4970 = vunpack.c.h.b16 %v4515
  %v4971 = vunpack.c.l.b16 %v4516
  %v4972 = vunpack.c.h.b16 %v4516
  %v4973 = vunpack.c.l.b16 %v4517
  %v4974 = vunpack.c.h.b16 %v4517
  %v4975 = vunpack.c.l.b16 %v4518
  %v4976 = vunpack.c.h.b16 %v4518
  %v4977 = vunpack.c.l.b16 %v4519
  %v4978 = vunpack.c.h.b16 %v4519
  %v4979 = vunpack.c.l.b16 %v4520
  %v4980 = vunpack.c.h.b16 %v4520
  %v4981 = vunpack.c.l.b16 %v4521
  %v4982 = vunpack.c.h.b16 %v4521
  %v4983 = vunpack.c.l.b16 %v4522
  %v4984 = vunpack.c.h.b16 %v4522
  %v4985 = vunpack.c.l.b16 %v4523
  %v4986 = vunpack.c.h.b16 %v4523
  %v4987 = vunpack.c.l.b16 %v4524
  %v4988 = vunpack.c.h.b16 %v4524
  %v4989 = vunpack.c.l.b16 %v4525
  %v4990 = vunpack.c.h.b16 %v4525
  %v4991 = vunpack.c.l.b16 %v4526
  %v4992 = vunpack.c.h.b16 %v4526
  %v4993 = vunpack.c.l.b16 %v4527
  %v4994 = vunpack.c.h.b16 %v4527
  %v4995 = vunpack.c.l.b16 %v4528
  %v4996 = vunpack.c.h.b16 %v4528
  %v4997 = vunpack.c.l.b16 %v4529
  %v4998 = vunpack.c.h.b16 %v4529
  %v4999 = vunpack.c.l.b16 %v4530
  %v5000 = vunpack.c.h.b16 %v4530
  %v5001 = vunpack.c.l.b16 %v4531
  %v5002 = vunpack.c.h.b16 %v4531
  %v5003 = vunpack.c.l.b16 %v4532
  %v5004 = vunpack.c.h.b16 %v4532
  %v5005 = vunpack.c.l.b16 %v4533
  %v5006 = vunpack.c.h.b16 %v4533
  %v5007 = vunpack.c.l.b16 %v4534
  %v5008 = vunpack.c.h.b16 %v4534
  %v5009 = vunpack.c.l.b16 %v4535
  %v5010 = vunpack.c.h.b16 %v4535
  %v5011 = vunpack.c.l.b16 %v4536
  %v5012 = vunpack.c.h.b16 %v4536
  %v5013 = vunpack.c.l.b16 %v4537
  %v5014 = vunpack.c.h.b16 %v4537
  %v5015 = vunpack.c.l.b16 %v4538
  %v5016 = vunpack.c.h.b16 %v4538
  %v5017 = vunpack.c.l.b16 %v4539
  %v5018 = vunpack.c.h.b16 %v4539
  %v5019 = vunpack.c.l.b16 %v4540
  %v5020 = vunpack.c.h.b16 %v4540
  %v5021 = vunpack.c.l.b16 %v4541
  %v5022 = vunpack.c.h.b16 %v4541
  %v5023 = vunpack.c.l.b16 %v4542
  %v5024 = vunpack.c.h.b16 %v4542
  %v5025 = vunpack.c.l.b16 %v4543
  %v5026 = vunpack.c.h.b16 %v4543
  %v5027 = vunpack.c.l.b16 %v4544
  %v5028 = vunpack.c.h.b16 %v4544
  %v5029 = vunpack.c.l.b16 %v4545
  %v5030 = vunpack.c.h.b16 %v4545
  %v5031 = vunpack.c.l.b16 %v4546
  %v5032 = vunpack.c.h.b16 %v4546
  %v5033 = vunpack.c.l.b16 %v4547
  %v5034 = vunpack.c.h.b16 %v4547
  %v5035 = vunpack.c.l.b16 %v4548
  %v5036 = vunpack.c.h.b16 %v4548
  %v5037 = vunpack.c.l.b16 %v4549
  %v5038 = vunpack.c.h.b16 %v4549
  %v5039 = vunpack.c.l.b16 %v4550
  %v5040 = vunpack.c.h.b16 %v4550
  %v5041 = vunpack.c.l.b16 %v4551
  %v5042 = vunpack.c.h.b16 %v4551
  %v5043 = vunpack.c.l.b16 %v4552
  %v5044 = vunpack.c.h.b16 %v4552
  %v5045 = vunpack.c.l.b16 %v4553
  %v5046 = vunpack.c.h.b16 %v4553
  %v5047 = vunpack.c.l.b16 %v4554
  %v5048 = vunpack.c.h.b16 %v4554
  %v5049 = vunpack.c.l.b16 %v4555
  %v5050 = vunpack.c.h.b16 %v4555
  %v5051 = vunpack.c.l.b16 %v4556
  %v5052 = vunpack.c.h.b16 %v4556
  %v5053 = vunpack.c.l.b16 %v4557
  %v5054 = vunpack.c.h.b16 %v4557
  %v5055 = vunpack.c.l.b16 %v4558
  %v5056 = vunpack.c.h.b16 %v4558
  %v5057 = vunpack.c.l.b16 %v4559
  %v5058 = vunpack.c.h.b16 %v4559
  %v5059 = vunpack.c.l.b16 %v4560
  %v5060 = vunpack.c.h.b16 %v4560
  %v5061 = vunpack.c.l.b16 %v4561
  %v5062 = vunpack.c.h.b16 %v4561
  %v5063 = vunpack.c.l.b16 %v4562
  %v5064 = vunpack.c.h.b16 %v4562
  %v5065 = vunpack.c.l.b16 %v4563
  %v5066 = vunpack.c.h.b16 %v4563
  %v5067 = vunpack.c.l.b16 %v4564
  %v5068 = vunpack.c.h.b16 %v4564
  %v5069 = vunpack.c.l.b16 %v4565
  %v5070 = vunpack.c.h.b16 %v4565
  %v5071 = vunpack.c.l.b16 %v4566
  %v5072 = vunpack.c.h.b16 %v4566
  %v5073 = vunpack.c.l.b16 %v4567
  %v5074 = vunpack.c.h.b16 %v4567
  %v5075 = vunpack.c.l.b16 %v4568
  %v5076 = vunpack.c.h.b16 %v4568
  %v5077 = vunpack.c.l.b16 %v4569
  %v5078 = vunpack.c.h.b16 %v4569
  %v5079 = vunpack.c.l.b16 %v4570
  %v5080 = vunpack.c.h.b16 %v4570
  %v5081 = vunpack.c.l.b16 %v4571
  %v5082 = vunpack.c.h.b16 %v4571
  %v5083 = vunpack.c.l.b16 %v4572
  %v5084 = vunpack.c.h.b16 %v4572
  %v5085 = vunpack.c.l.b16 %v4573
  %v5086 = vunpack.c.h.b16 %v4573
  %v5087 = vunpack.c.l.b16 %v4574
  %v5088 = vunpack.c.h.b16 %v4574
  %v5089 = vunpack.c.l.b16 %v4575
  %v5090 = vunpack.c.h.b16 %v4575
  %v5091 = vunpack.c.l.b16 %v4576
  %v5092 = vunpack.c.h.b16 %v4576
  %v5093 = vunpack.c.l.b16 %v4577
  %v5094 = vunpack.c.h.b16 %v4577
  %v5095 = vunpack.c.l.b16 %v4578
  %v5096 = vunpack.c.h.b16 %v4578
  %v5097 = vunpack.c.l.b16 %v4579
  %v5098 = vunpack.c.h.b16 %v4579
  %v5099 = vunpack.c.l.b16 %v4580
  %v5100 = vunpack.c.h.b16 %v4580
  %v5101 = vunpack.c.l.b16 %v4581
  %v5102 = vunpack.c.h.b16 %v4581
  %v5103 = vunpack.c.l.b16 %v4582
  %v5104 = vunpack.c.h.b16 %v4582
  %v5105 = vunpack.c.l.b16 %v4583
  %v5106 = vunpack.c.h.b16 %v4583
  %v5107 = vunpack.c.l.b16 %v4584
  %v5108 = vunpack.c.h.b16 %v4584
  %v5109 = vunpack.c.l.b16 %v4585
  %v5110 = vunpack.c.h.b16 %v4585
  %v5111 = vunpack.c.l.b16 %v4586
  %v5112 = vunpack.c.h.b16 %v4586
  %v5113 = vunpack.c.l.b16 %v4587
  %v5114 = vunpack.c.h.b16 %v4587
  %v5115 = vunpack.c.l.b16 %v4588
  %v5116 = vunpack.c.h.b16 %v4588
  %v5117 = vunpack.c.l.b16 %v4589
  %v5118 = vunpack.c.h.b16 %v4589
  %v5119 = vunpack.c.l.b16 %v4590
  %v5120 = vunpack.c.h.b16 %v4590
  %v5121 = vunpack.c.l.b16 %v4591
  %v5122 = vunpack.c.h.b16 %v4591
  %v5123 = vunpack.c.l.b16 %v4592
  %v5124 = vunpack.c.h.b16 %v4592
  %v5125 = vunpack.c.l.b16 %v4593
  %v5126 = vunpack.c.h.b16 %v4593
  %v5127 = vunpack.c.l.b16 %v4594
  %v5128 = vunpack.c.h.b16 %v4594
  %v5129 = vunpack.c.l.b16 %v4595
  %v5130 = vunpack.c.h.b16 %v4595
  %v5131 = vunpack.c.l.b16 %v4596
  %v5132 = vunpack.c.h.b16 %v4596
  %v5133 = vunpack.c.l.b16 %v4597
  %v5134 = vunpack.c.h.b16 %v4597
  %v5135 = vunpack.c.l.b16 %v4598
  %v5136 = vunpack.c.h.b16 %v4598
  %v5137 = vunpack.c.l.b16 %v4599
  %v5138 = vunpack.c.h.b16 %v4599
  %v5139 = vunpack.c.l.b16 %v4600
  %v5140 = vunpack.c.h.b16 %v4600
  %v5141 = vunpack.c.l.b16 %v4601
  %v5142 = vunpack.c.h.b16 %v4601
  %v5143 = vunpack.c.l.b16 %v4602
  %v5144 = vunpack.c.h.b16 %v4602
  %v5145 = vunpack.c.l.b16 %v4603
  %v5146 = vunpack.c.h.b16 %v4603
  %v5147 = vunpack.c.l.b16 %v4604
  %v5148 = vunpack.c.h.b16 %v4604
  %v5149 = vunpack.c.l.b16 %v4605
  %v5150 = vunpack.c.h.b16 %v4605
  %v5151 = vunpack.c.l.b16 %v4606
  %v5152 = vunpack.c.h.b16 %v4606
  %v5153 = vunpack.c.l.b16 %v4607
  %v5154 = vunpack.c.h.b16 %v4607
  %v5155 = vunpack.c.l.b16 %v4608
  %v5156 = vunpack.c.h.b16 %v4608
  %v5157 = vunpack.c.l.b16 %v4609
  %v5158 = vunpack.c.h.b16 %v4609
  %v5159 = vunpack.c.l.b16 %v4610
  %v5160 = vunpack.c.h.b16 %v4610
  %v5161 = vunpack.c.l.b16 %v4611
  %v5162 = vunpack.c.h.b16 %v4611
  %v5163 = vunpack.c.l.b16 %v4612
  %v5164 = vunpack.c.h.b16 %v4612
  %v5165 = vunpack.c.l.b16 %v4613
  %v5166 = vunpack.c.h.b16 %v4613
  %v5167 = vunpack.c.l.b16 %v4614
  %v5168 = vunpack.c.h.b16 %v4614
  %v5169 = vunpack.c.l.b16 %v4615
  %v5170 = vunpack.c.h.b16 %v4615
  %v5171 = vunpack.c.l.b16 %v4616
  %v5172 = vunpack.c.h.b16 %v4616
  %v5173 = vunpack.c.l.b16 %v4617
  %v5174 = vunpack.c.h.b16 %v4617
  %v5175 = vunpack.c.l.b16 %v4618
  %v5176 = vunpack.c.h.b16 %v4618
  %v5177 = vunpack.c.l.b16 %v4619
  %v5178 = vunpack.c.h.b16 %v4619
  %v5179 = vunpack.c.l.b16 %v4620
  %v5180 = vunpack.c.h.b16 %v4620
  %v5181 = vunpack.c.l.b16 %v4621
  %v5182 = vunpack.c.h.b16 %v4621
  %v5183 = vunpack.c.l.b16 %v4622
  %v5184 = vunpack.c.h.b16 %v4622
  %v5185 = vunpack.c.l.b16 %v4623
  %v5186 = vunpack.c.h.b16 %v4623
  %v5187 = vunpack.c.l.b16 %v4624
  %v5188 = vunpack.c.h.b16 %v4624
  %v5189 = vunpack.c.l.b16 %v4625
  %v5190 = vunpack.c.h.b16 %v4625
  %v5191 = vunpack.c.l.b16 %v4626
  %v5192 = vunpack.c.h.b16 %v4626
  %v5193 = vunpack.c.l.b16 %v4627
  %v5194 = vunpack.c.h.b16 %v4627
  %v5195 = vunpack.c.l.b16 %v4628
  %v5196 = vunpack.c.h.b16 %v4628
  %v5197 = vunpack.c.l.b16 %v4629
  %v5198 = vunpack.c.h.b16 %v4629
  %v5199 = vunpack.c.l.b16 %v4630
  %v5200 = vunpack.c.h.b16 %v4630
  %v5201 = vunpack.c.l.b16 %v4631
  %v5202 = vunpack.c.h.b16 %v4631
  %v5203 = vunpack.c.l.b16 %v4632
  %v5204 = vunpack.c.h.b16 %v4632
  %v5205 = vunpack.c.l.b16 %v4633
  %v5206 = vunpack.c.h.b16 %v4633
  %v5207 = vunpack.c.l.b16 %v4634
  %v5208 = vunpack.c.h.b16 %v4634
  %v5209 = vunpack.c.l.b16 %v4635
  %v5210 = vunpack.c.h.b16 %v4635
  %v5211 = vunpack.c.l.b16 %v4636
  %v5212 = vunpack.c.h.b16 %v4636
  %v5213 = vunpack.c.l.b16 %v4637
  %v5214 = vunpack.c.h.b16 %v4637
  %v5215 = vunpack.c.l.b16 %v4638
  %v5216 = vunpack.c.h.b16 %v4638
  %v5217 = vunpack.c.l.b16 %v4639
  %v5218 = vunpack.c.h.b16 %v4639
  %v5219 = vunpack.c.l.b16 %v4640
  %v5220 = vunpack.c.h.b16 %v4640
  %v5221 = vunpack.c.l.b16 %v4641
  %v5222 = vunpack.c.h.b16 %v4641
  %v5223 = vunpack.c.l.b16 %v4642
  %v5224 = vunpack.c.h.b16 %v4642
  %v5225 = vunpack.c.l.b16 %v4643
  %v5226 = vunpack.c.h.b16 %v4643
  %v5227 = vunpack.c.l.b16 %v4644
  %v5228 = vunpack.c.h.b16 %v4644
  %v5229 = vunpack.c.l.b16 %v4645
  %v5230 = vunpack.c.h.b16 %v4645
  %v5231 = vunpack.c.l.b16 %v4646
  %v5232 = vunpack.c.h.b16 %v4646
  %v5233 = vunpack.c.l.b16 %v4647
  %v5234 = vunpack.c.h.b16 %v4647
  %v5235 = vunpack.c.l.b16 %v4648
  %v5236 = vunpack.c.h.b16 %v4648
  %v5237 = vunpack.c.l.b16 %v4649
  %v5238 = vunpack.c.h.b16 %v4649
  %v5239 = vunpack.c.l.b16 %v4650
  %v5240 = vunpack.c.h.b16 %v4650
  %v5241 = vunpack.c.l.b16 %v4651
  %v5242 = vunpack.c.h.b16 %v4651
  %v5243 = vunpack.c.l.b16 %v4652
  %v5244 = vunpack.c.h.b16 %v4652
  %v5245 = vunpack.c.l.b16 %v4653
  %v5246 = vunpack.c.h.b16 %v4653
  %v5247 = vunpack.c.l.b16 %v4654
  %v5248 = vunpack.c.h.b16 %v4654
  %v5249 = vunpack.c.l.b16 %v4655
  %v5250 = vunpack.c.h.b16 %v4655
  %v5251 = vunpack.c.l.b16 %v4656
  %v5252 = vunpack.c.h.b16 %v4656
  %v5253 = vunpack.c.l.b16 %v4657
  %v5254 = vunpack.c.h.b16 %v4657
  %v5255 = vunpack.c.l.b16 %v4658
  %v5256 = vunpack.c.h.b16 %v4658
  %v5257 = vunpack.c.l.b16 %v4659
  %v5258 = vunpack.c.h.b16 %v4659
  %v5259 = vunpack.c.l.b16 %v4660
  %v5260 = vunpack.c.h.b16 %v4660
  %v5261 = vunpack.c.l.b16 %v4661
  %v5262 = vunpack.c.h.b16 %v4661
  %v5263 = vunpack.c.l.b16 %v4662
  %v5264 = vunpack.c.h.b16 %v4662
  %v5265 = vunpack.c.l.b16 %v4663
  %v5266 = vunpack.c.h.b16 %v4663
  %v5267 = vunpack.c.l.b16 %v4664
  %v5268 = vunpack.c.h.b16 %v4664
  %v5269 = vunpack.c.l.b16 %v4665
  %v5270 = vunpack.c.h.b16 %v4665
  %v5271 = vunpack.c.l.b16 %v4666
  %v5272 = vunpack.c.h.b16 %v4666
  %v5273 = vunpack.c.l.b16 %v4667
  %v5274 = vunpack.c.h.b16 %v4667
  %v5275 = vunpack.c.l.b16 %v4668
  %v5276 = vunpack.c.h.b16 %v4668
  %v5277 = vunpack.c.l.b16 %v4669
  %v5278 = vunpack.c.h.b16 %v4669
  %v5279 = vunpack.c.l.b16 %v4670
  %v5280 = vunpack.c.h.b16 %v4670
  %v5281 = vunpack.c.l.b16 %v4671
  %v5282 = vunpack.c.h.b16 %v4671
  %v5283 = vunpack.c.l.b16 %v4672
  %v5284 = vunpack.c.h.b16 %v4672
  %v5285 = vunpack.c.l.b16 %v4673
  %v5286 = vunpack.c.h.b16 %v4673
  %v5287 = vunpack.c.l.b16 %v4674
  %v5288 = vunpack.c.h.b16 %v4674
  %v5289 = vunpack.c.l.b16 %v4675
  %v5290 = vunpack.c.h.b16 %v4675
  %v5291 = vunpack.c.l.b16 %v4676
  %v5292 = vunpack.c.h.b16 %v4676
  %v5293 = vunpack.c.l.b16 %v4677
  %v5294 = vunpack.c.h.b16 %v4677
  %v5295 = vunpack.c.l.b16 %v4678
  %v5296 = vunpack.c.h.b16 %v4678
  %v5297 = vunpack.c.l.b16 %v4679
  %v5298 = vunpack.c.h.b16 %v4679
  %v5299 = vunpack.c.l.b16 %v4680
  %v5300 = vunpack.c.h.b16 %v4680
  %v5301 = vunpack.c.l.b16 %v4681
  %v5302 = vunpack.c.h.b16 %v4681
  %v5303 = vunpack.c.l.b16 %v4682
  %v5304 = vunpack.c.h.b16 %v4682
  %v5305 = vunpack.c.l.b16 %v4683
  %v5306 = vunpack.c.h.b16 %v4683
  %v5307 = vunpack.c.l.b16 %v4684
  %v5308 = vunpack.c.h.b16 %v4684
  %v5309 = vunpack.c.l.b16 %v4685
  %v5310 = vunpack.c.h.b16 %v4685
  %v5311 = vunpack.c.l.b16 %v4686
  %v5312 = vunpack.c.h.b16 %v4686
  %v5313 = vunpack.c.l.b16 %v4687
  %v5314 = vunpack.c.h.b16 %v4687
  %v5315 = vunpack.c.l.b16 %v4688
  %v5316 = vunpack.c.h.b16 %v4688
  %v5317 = vunpack.c.l.b16 %v4689
  %v5318 = vunpack.c.h.b16 %v4689
  %v5319 = vunpack.c.l.b16 %v4690
  %v5320 = vunpack.c.h.b16 %v4690
  %v5321 = vunpack.c.l.b16 %v4691
  %v5322 = vunpack.c.h.b16 %v4691
  %v5323 = vunpack.c.l.b16 %v4692
  %v5324 = vunpack.c.h.b16 %v4692
  %v5325 = vunpack.c.l.b16 %v4693
  %v5326 = vunpack.c.h.b16 %v4693
  %v5327 = vunpack.c.l.b16 %v4694
  %v5328 = vunpack.c.h.b16 %v4694
  %v5329 = vunpack.c.l.b16 %v4695
  %v5330 = vunpack.c.h.b16 %v4695
  %v5331 = vunpack.c.l.b16 %v4696
  %v5332 = vunpack.c.h.b16 %v4696
  %v5333 = vunpack.c.l.b16 %v4697
  %v5334 = vunpack.c.h.b16 %v4697
  %v5335 = vunpack.c.l.b16 %v4698
  %v5336 = vunpack.c.h.b16 %v4698
  %v5337 = vunpack.c.l.b16 %v4699
  %v5338 = vunpack.c.h.b16 %v4699
  %v5339 = vunpack.c.l.b16 %v4700
  %v5340 = vunpack.c.h.b16 %v4700
  %v5341 = vunpack.c.l.b16 %v4701
  %v5342 = vunpack.c.h.b16 %v4701
  %v5343 = vunpack.c.l.b16 %v4702
  %v5344 = vunpack.c.h.b16 %v4702
  %v5345 = vunpack.c.l.b16 %v4703
  %v5346 = vunpack.c.h.b16 %v4703
  %v5347 = vunpack.c.l.b16 %v4704
  %v5348 = vunpack.c.h.b16 %v4704
  %v5349 = vunpack.c.l.b16 %v4705
  %v5350 = vunpack.c.h.b16 %v4705
  %v5351 = vunpack.c.l.b16 %v4706
  %v5352 = vunpack.c.h.b16 %v4706
  %v5353 = vunpack.c.l.b16 %v4707
  %v5354 = vunpack.c.h.b16 %v4707
  %v5355 = vunpack.c.l.b16 %v4708
  %v5356 = vunpack.c.h.b16 %v4708
  %v5357 = vunpack.c.l.b16 %v4709
  %v5358 = vunpack.c.h.b16 %v4709
  %v5359 = vunpack.c.l.b16 %v4710
  %v5360 = vunpack.c.h.b16 %v4710
  %v5361 = vunpack.c.l.b16 %v4711
  %v5362 = vunpack.c.h.b16 %v4711
  %v5363 = vunpack.c.l.b16 %v4712
  %v5364 = vunpack.c.h.b16 %v4712
  %v5365 = vunpack.c.l.b16 %v4713
  %v5366 = vunpack.c.h.b16 %v4713
  %v5367 = vunpack.c.l.b16 %v4714
  %v5368 = vunpack.c.h.b16 %v4714
  %v5369 = vunpack.c.l.b16 %v4715
  %v5370 = vunpack.c.h.b16 %v4715
  %v5371 = vunpack.c.l.b16 %v4716
  %v5372 = vunpack.c.h.b16 %v4716
  %v5373 = vunpack.c.l.b16 %v4717
  %v5374 = vunpack.c.h.b16 %v4717
  %v5375 = vunpack.c.l.b16 %v4718
  %v5376 = vunpack.c.h.b16 %v4718
  %v5377 = vunpack.c.l.b16 %v4719
  %v5378 = vunpack.c.h.b16 %v4719
  %v5379 = vunpack.c.l.b16 %v4720
  %v5380 = vunpack.c.h.b16 %v4720
  %v5381 = vunpack.c.l.b16 %v4721
  %v5382 = vunpack.c.h.b16 %v4721
  %v5383 = vunpack.c.l.b16 %v4722
  %v5384 = vunpack.c.h.b16 %v4722
  %v5385 = vunpack.c.l.b16 %v4723
  %v5386 = vpack.c.b16 %v4945, %v4945
  %v5387 = vpack.c.b16 %v4946, %v4946
  %v5388 = vpack.c.b16 %v4947, %v4947
  %v5389 = vpack.c.b16 %v4948, %v4948
  %v5390 = vpack.c.b16 %v4949, %v4949
  %v5391 = vpack.c.b16 %v4950, %v4950
  %v5392 = vpack.c.b16 %v4951, %v4951
  %v5393 = vpack.c.b16 %v4952, %v4952
  %v5394 = vpack.c.b16 %v4953, %v4953
  %v5395 = vpack.c.b16 %v4954, %v4954
  %v5396 = vpack.c.b16 %v4955, %v4955
  %v5397 = vpack.c.b16 %v4956, %v4956
  %v5398 = vpack.c.b16 %v4957, %v4957
  %v5399 = vpack.c.b16 %v4958, %v4958
  %v5400 = vpack.c.b16 %v4959, %v4959
  %v5401 = vpack.c.b16 %v4960, %v4960
  %v5402 = vpack.c.b16 %v4961, %v4961
  %v5403 = vpack.c.b16 %v4962, %v4962
  %v5404 = vpack.c.b16 %v4963, %v4963
  %v5405 = vpack.c.b16 %v4964, %v4964
  %v5406 = vpack.c.b16 %v4965, %v4965
  %v5407 = vpack.c.b16 %v4966, %v4966
  %v5408 = vpack.c.b16 %v4967, %v4967
  %v5409 = vpack.c.b16 %v4968, %v4968
  %v5410 = vpack.c.b16 %v4969, %v4969
  %v5411 = vpack.c.b16 %v4970, %v4970
  %v5412 = vpack.c.b16 %v4971, %v4971
  %v5413 = vpack.c.b16 %v4972, %v4972
  %v5414 = vpack.c.b16 %v4973, %v4973
  %v5415 = vpack.c.b16 %v4974, %v4974
  %v5416 = vpack.c.b16 %v4975, %v4975
  %v5417 = vpack.c.b16 %v4976, %v4976
  %v5418 = vpack.c.b16 %v4977, %v4977
  %v5419 = vpack.c.b16 %v4978, %v4978
  %v5420 = vpack.c.b16 %v4979, %v4979
  %v5421 = vpack.c.b16 %v4980, %v4980
  %v5422 = vpack.c.b16 %v4981, %v4981
  %v5423 = vpack.c.b16 %v4982, %v4982
  %v5424 = vpack.c.b16 %v4983, %v4983
  %v5425 = vpack.c.b16 %v4984, %v4984
  %v5426 = vpack.c.b16 %v4985, %v4985
  %v5427 = vpack.c.b16 %v4986, %v4986
  %v5428 = vpack.c.b16 %v4987, %v4987
  %v5429 = vpack.c.b16 %v4988, %v4988
  %v5430 = vpack.c.b16 %v4989, %v4989
  %v5431 = vpack.c.b16 %v4990, %v4990
  %v5432 = vpack.c.b16 %v4991, %v4991
  %v5433 = vpack.c.b16 %v4992, %v4992
  %v5434 = vpack.c.b16 %v4993, %v4993
  %v5435 = vpack.c.b16 %v4994, %v4994
  %v5436 = vpack.c.b16 %v4995, %v4995
  %v5437 = vpack.c.b16 %v4996, %v4996
  %v5438 = vpack.c.b16 %v4997, %v4997
  %v5439 = vpack.c.b16 %v4998, %v4998
  %v5440 = vpack.c.b16 %v4999, %v4999
  %v5441 = vpack.c.b16 %v5000, %v5000
  %v5442 = vpack.c.b16 %v5001, %v5001
  %v5443 = vpack.c.b16 %v5002, %v5002
  %v5444 = vpack.c.b16 %v5003, %v5003
  %v5445 = vpack.c.b16 %v5004, %v5004
  %v5446 = vpack.c.b16 %v5005, %v5005
  %v5447 = vpack.c.b16 %v5006, %v5006
  %v5448 = vpack.c.b16 %v5007, %v5007
  %v5449 = vpack.c.b16 %v5008, %v5008
  %v5450 = vpack.c.b16 %v5009, %v5009
  %v5451 = vpack.c.b16 %v5010, %v5010
  %v5452 = vpack.c.b16 %v5011, %v5011
  %v5453 = vpack.c.b16 %v5012, %v5012
  %v5454 = vpack.c.b16 %v5013, %v5013
  %v5455 = vpack.c.b16 %v5014, %v5014
  %v5456 = vpack.c.b16 %v5015, %v5015
  %v5457 = vpack.c.b16 %v5016, %v5016
  %v5458 = vpack.c.b16 %v5017, %v5017
  %v5459 = vpack.c.b16 %v5018, %v5018
  %v5460 = vpack.c.b16 %v5019, %v5019
  %v5461 = vpack.c.b16 %v5020, %v5020
  %v5462 = vpack.c.b16 %v5021, %v5021
  %v5463 = vpack.c.b16 %v5022, %v5022
  %v5464 = vpack.c.b16 %v5023, %v5023
  %v5465 = vpack.c.b16 %v5024, %v5024
  %v5466 = vpack.c.b16 %v5025, %v5025
  %v5467 = vpack.c.b16 %v5026, %v5026
  %v5468 = vpack.c.b16 %v5027, %v5027
  %v5469 = vpack.c.b16 %v5028, %v5028
  %v5470 = vpack.c.b16 %v5029, %v5029
  %v5471 = vpack.c.b16 %v5030, %v5030
  %v5472 = vpack.c.b16 %v5031, %v5031
  %v5473 = vpack.c.b16 %v5032, %v5032
  %v5474 = vpack.c.b16 %v5033, %v5033
  %v5475 = vpack.c.b16 %v5034, %v5034
  %v5476 = vpack.c.b16 %v5035, %v5035
  %v5477 = vpack.c.b16 %v5036, %v5036
  %v5478 = vpack.c.b16 %v5037, %v5037
  %v5479 = vpack.c.b16 %v5038, %v5038
  %v5480 = vpack.c.b16 %v5039, %v5039
  %v5481 = vpack.c.b16 %v5040, %v5040
  %v5482 = vpack.c.b16 %v5041, %v5041
  %v5483 = vpack.c.b16 %v5042, %v5042
  %v5484 = vpack.c.b16 %v5043, %v5043
  %v5485 = vpack.c.b16 %v5044, %v5044
  %v5486 = vpack.c.b16 %v5045, %v5045
  %v5487 = vpack.c.b16 %v5046, %v5046
  %v5488 = vpack.c.b16 %v5047, %v5047
  %v5489 = vpack.c.b16 %v5048, %v5048
  %v5490 = vpack.c.b16 %v5049, %v5049
  %v5491 = vpack.c.b16 %v5050, %v5050
  %v5492 = vpack.c.b16 %v5051, %v5051
  %v5493 = vpack.c.b16 %v5052, %v5052
  %v5494 = vpack.c.b16 %v5053, %v5053
  %v5495 = vpack.c.b16 %v5054, %v5054
  %v5496 = vpack.c.b16 %v5055, %v5055
  %v5497 = vpack.c.b16 %v5056, %v5056
  %v5498 = vpack.c.b16 %v5057, %v5057
  %v5499 = vpack.c.b16 %v5058, %v5058
  %v5500 = vpack.c.b16 %v5059, %v5059
  %v5501 = vpack.c.b16 %v5060, %v5060
  %v5502 = vpack.c.b16 %v5061, %v5061
  %v5503 = vpack.c.b16 %v5062, %v5062
  %v5504 = vpack.c.b16 %v5063, %v5063
  %v5505 = vpack.c.b16 %v5064, %v5064
  %v5506 = vpack.c.b16 %v5065, %v5065
  %v5507 = vpack.c.b16 %v5066, %v5066
  %v5508 = vpack.c.b16 %v5067, %v5067
  %v5509 = vpack.c.b16 %v5068, %v5068
  %v5510 = vpack.c.b16 %v5069, %v5069
  %v5511 = vpack.c.b16 %v5070, %v5070
  %v5512 = vpack.c.b16 %v5071, %v5071
  %v5513 = vpack.c.b16 %v5072, %v5072
  %v5514 = vpack.c.b16 %v5073, %v5073
  %v5515 = vpack.c.b16 %v5074, %v5074
  %v5516 = vpack.c.b16 %v5075, %v5075
  %v5517 = vpack.c.b16 %v5076, %v5076
  %v5518 = vpack.c.b16 %v5077, %v5077
  %v5519 = vpack.c.b16 %v5078, %v5078
  %v5520 = vpack.c.b16 %v5079, %v5079
  %v5521 = vpack.c.b16 %v5080, %v5080
  %v5522 = vpack.c.b16 %v5081, %v5081
  %v5523 = vpack.c.b16 %v5082, %v5082
  %v5524 = vpack.c.b16 %v5083, %v5083
  %v5525 = vpack.c.b16 %v5084, %v5084
  %v5526 = vpack.c.b16 %v5085, %v5085
  %v5527 = vpack.c.b16 %v5086, %v5086
  %v5528 = vpack.c.b16 %v5087, %v5087
  %v5529 = vpack.c.b16 %v5088, %v5088
  %v5530 = vpack.c.b16 %v5089, %v5089
  %v5531 = vpack.c.b16 %v5090, %v5090
  %v5532 = vpack.c.b16 %v5091, %v5091
  %v5533 = vpack.c.b16 %v5092, %v5092
  %v5534 = vpack.c.b16 %v5093, %v5093
  %v5535 = vpack.c.b16 %v5094, %v5094
  %v5536 = vpack.c.b16 %v5095, %v5095
  %v5537 = vpack.c.b16 %v5096, %v5096
  %v5538 = vpack.c.b16 %v5097, %v5097
  %v5539 = vpack.c.b16 %v5098, %v5098
  %v5540 = vpack.c.b16 %v5099, %v5099
  %v5541 = vpack.c.b16 %v5100, %v5100
  %v5542 = vpack.c.b16 %v5101, %v5101
  %v5543 = vpack.c.b16 %v5102, %v5102
  %v5544 = vpack.c.b16 %v5103, %v5103
  %v5545 = vpack.c.b16 %v5104, %v5104
  %v5546 = vpack.c.b16 %v5105, %v5105
  %v5547 = vpack.c.b16 %v5106, %v5106
  %v5548 = vpack.c.b16 %v5107, %v5107
  %v5549 = vpack.c.b16 %v5108, %v5108
  %v5550 = vpack.c.b16 %v5109, %v5109
  %v5551 = vpack.c.b16 %v5110, %v5110
  %v5552 = vpack.c.b16 %v5111, %v5111
  %v5553 = vpack.c.b16 %v5112, %v5112
  %v5554 = vpack.c.b16 %v5113, %v5113
  %v5555 = vpack.c.b16 %v5114, %v5114
  %v5556 = vpack.c.b16 %v5115, %v5115
  %v5557 = vpack.c.b16 %v5116, %v5116
  %v5558 = vpack.c.b16 %v5117, %v5117
  %v5559 = vpack.c.b16 %v5118, %v5118
  %v5560 = vpack.c.b16 %v5119, %v5119
  %v5561 = vpack.c.b16 %v5120, %v5120
  %v5562 = vpack.c.b16 %v5121, %v5121
  %v5563 = vpack.c.b16 %v5122, %v5122
  %v5564 = vpack.c.b16 %v5123, %v5123
  %v5565 = vpack.c.b16 %v5124, %v5124
  %v5566 = vpack.c.b16 %v5125, %v5125
  %v5567 = vpack.c.b16 %v5126, %v5126
  %v5568 = vpack.c.b16 %v5127, %v5127
  %v5569 = vpack.c.b16 %v5128, %v5128
  %v5570 = vpack.c.b16 %v5129, %v5129
  %v5571 = vpack.c.b16 %v5130, %v5130
  %v5572 = vpack.c.b16 %v5131, %v5131
  %v5573 = vpack.c.b16 %v5132, %v5132
  %v5574 = vpack.c.b16 %v5133, %v5133
  %v5575 = vpack.c.b16 %v5134, %v5134
  %v5576 = vpack.c.b16 %v5135, %v5135
  %v5577 = vpack.c.b16 %v5136, %v5136
  %v5578 = vpack.c.b16 %v5137, %v5137
  %v5579 = vpack.c.b16 %v5138, %v5138
  %v5580 = vpack.c.b16 %v5139, %v5139
  %v5581 = vpack.c.b16 %v5140, %v5140
  %v5582 = vpack.c.b16 %v5141, %v5141
  %v5583 = vpack.c.b16 %v5142, %v5142
  %v5584 = vpack.c.b16 %v5143, %v5143
  %v5585 = vpack.c.b16 %v5144, %v5144
  %v5586 = vpack.c.b16 %v5145, %v5145
  %v5587 = vpack.c.b16 %v5146, %v5146
  %v5588 = vpack.c.b16 %v5147, %v5147
  %v5589 = vpack.c.b16 %v5148, %v5148
  %v5590 = vpack.c.b16 %v5149, %v5149
  %v5591 = vpack.c.b16 %v5150, %v5150
  %v5592 = vpack.c.b16 %v5151, %v5151
  %v5593 = vpack.c.b16 %v5152, %v5152
  %v5594 = vpack.c.b16 %v5153, %v5153
  %v5595 = vpack.c.b16 %v5154, %v5154
  %v5596 = vpack.c.b16 %v5155, %v5155
  %v5597 = vpack.c.b16 %v5156, %v5156
  %v5598 = vpack.c.b16 %v5157, %v5157
  %v5599 = vpack.c.b16 %v5158, %v5158
  %v5600 = vpack.c.b16 %v5159, %v5159
  %v5601 = vpack.c.b16 %v5160, %v5160
  %v5602 = vpack.c.b16 %v5161, %v5161
  %v5603 = vpack.c.b16 %v5162, %v5162
  %v5604 = vpack.c.b16 %v5163, %v5163
  %v5605 = vpack.c.b16 %v5164, %v5164
  %v5606 = vpack.c.b16 %v5165, %v5165
  %v5607 = vpack.c.b16 %v5166, %v5166
  %v5608 = vpack.c.b16 %v5167, %v5167
  %v5609 = vpack.c.b16 %v5168, %v5168
  %v5610 = vpack.c.b16 %v5169, %v5169
  %v5611 = vpack.c.b16 %v5170, %v5170
  %v5612 = vpack.c.b16 %v5171, %v5171
  %v5613 = vpack.c.b16 %v5172, %v5172
  %v5614 = vpack.c.b16 %v5173, %v5173
  %v5615 = vpack.c.b16 %v5174, %v5174
  %v5616 = vpack.c.b16 %v5175, %v5175
  %v5617 = vpack.c.b16 %v5176, %v5176
  %v5618 = vpack.c.b16 %v5177, %v5177
  %v5619 = vpack.c.b16 %v5178, %v5178
  %v5620 = vpack.c.b16 %v5179, %v5179
  %v5621 = vpack.c.b16 %v5180, %v5180
  %v5622 = vpack.c.b16 %v5181, %v5181
  %v5623 = vpack.c.b16 %v5182, %v5182
  %v5624 = vpack.c.b16 %v5183, %v5183
  %v5625 = vpack.c.b16 %v5184, %v5184
  %v5626 = vpack.c.b16 %v5185, %v5185
  %v5627 = vpack.c.b16 %v5186, %v5186
  %v5628 = vpack.c.b16 %v5187, %v5187
  %v5629 = vpack.c.b16 %v5188, %v5188
  %v5630 = vpack.c.b16 %v5189, %v5189
  %v5631 = vpack.c.b16 %v5190, %v5190
  %v5632 = vpack.c.b16 %v5191, %v5191
  %v5633 = vpack.c.b16 %v5192, %v5192
  %v5634 = vpack.c.b16 %v5193, %v5193
  %v5635 = vpack.c.b16 %v5194, %v5194
  %v5636 = vpack.c.b16 %v5195, %v5195
  %v5637 = vpack.c.b16 %v5196, %v5196
  %v5638 = vpack.c.b16 %v5197, %v5197
  %v5639 = vpack.c.b16 %v5198, %v5198
  %v5640 = vpack.c.b16 %v5199, %v5199
  %v5641 = vpack.c.b16 %v5200, %v5200
  %v5642 = vpack.c.b16 %v5201, %v5201
  %v5643 = vpack.c.b16 %v5202, %v5202
  %v5644 = vpack.c.b16 %v5203, %v5203
  %v5645 = vpack.c.b16 %v5204, %v5204
  %v5646 = vpack.c.b16 %v5205, %v5205
  %v5647 = vpack.c.b16 %v5206, %v5206
  %v5648 = vpack.c.b16 %v5207, %v5207
  %v5649 = vpack.c.b16 %v5208, %v5208
  %v5650 = vpack.c.b16 %v5209, %v5209
  %v5651 = vpack.c.b16 %v5210, %v5210
  %v5652 = vpack.c.b16 %v5211, %v5211
  %v5653 = vpack.c.b16 %v5212, %v5212
  %v5654 = vpack.c.b16 %v5213, %v5213
  %v5655 = vpack.c.b16 %v5214, %v5214
  %v5656 = vpack.c.b16 %v5215, %v5215
  %v5657 = vpack.c.b16 %v5216, %v5216
  %v5658 = vpack.c.b16 %v5217, %v5217
  %v5659 = vpack.c.b16 %v5218, %v5218
  %v5660 = vpack.c.b16 %v5219, %v5219
  %v5661 = vpack.c.b16 %v5220, %v5220
  %v5662 = vpack.c.b16 %v5221, %v5221
  %v5663 = vpack.c.b16 %v5222, %v5222
  %v5664 = vpack.c.b16 %v5223, %v5223
  %v5665 = vpack.c.b16 %v5224, %v5224
  %v5666 = vpack.c.b16 %v5225, %v5225
  %v5667 = vpack.c.b16 %v5226, %v5226
  %v5668 = vpack.c.b16 %v5227, %v5227
  %v5669 = vpack.c.b16 %v5228, %v5228
  %v5670 = vpack.c.b16 %v5229, %v5229
  %v5671 = vpack.c.b16 %v5230, %v5230
  %v5672 = vpack.c.b16 %v5231, %v5231
  %v5673 = vpack.c.b16 %v5232, %v5232
  %v5674 = vpack.c.b16 %v5233, %v5233
  %v5675 = vpack.c.b16 %v5234, %v5234
  %v5676 = vpack.c.b16 %v5235, %v5235
  %v5677 = vpack.c.b16 %v5236, %v5236
  %v5678 = vpack.c.b16 %v5237, %v5237
  %v5679 = vpack.c.b16 %v5238, %v5238
  %v5680 = vpack.c.b16 %v5239, %v5239
  %v5681 = vpack.c.b16 %v5240, %v5240
  %v5682 = vpack.c.b16 %v5241, %v5241
  %v5683 = vpack.c.b16 %v5242, %v5242
  %v5684 = vpack.c.b16 %v5243, %v5243
  %v5685 = vpack.c.b16 %v5244, %v5244
  %v5686 = vpack.c.b16 %v5245, %v5245
  %v5687 = vpack.c.b16 %v5246, %v5246
  %v5688 = vpack.c.b16 %v5247, %v5247
  %v5689 = vpack.c.b16 %v5248, %v5248
  %v5690 = vpack.c.b16 %v5249, %v5249
  %v5691 = vpack.c.b16 %v5250, %v5250
  %v5692 = vpack.c.b16 %v5251, %v5251
  %v5693 = vpack.c.b16 %v5252, %v5252
  %v5694 = vpack.c.b16 %v5253, %v5253
  %v5695 = vpack.c.b16 %v5254, %v5254
  %v5696 = vpack.c.b16 %v5255, %v5255
  %v5697 = vpack.c.b16 %v5256, %v5256
  %v5698 = vpack.c.b16 %v5257, %v5257
  %v5699 = vpack.c.b16 %v5258, %v5258
  %v5700 = vpack.c.b16 %v5259, %v5259
  %v5701 = vpack.c.b16 %v5260, %v5260
  %v5702 = vpack.c.b16 %v5261, %v5261
  %v5703 = vpack.c.b16 %v5262, %v5262
  %v5704 = vpack.c.b16 %v5263, %v5263
  %v5705 = vpack.c.b16 %v5264, %v5264
  %v5706 = vpack.c.b16 %v5265, %v5265
  %v5707 = vpack.c.b16 %v5266, %v5266
  %v5708 = vpack.c.b16 %v5267, %v5267
  %v5709 = vpack.c.b16 %v5268, %v5268
  %v5710 = vpack.c.b16 %v5269, %v5269
  %v5711 = vpack.c.b16 %v5270, %v5270
  %v5712 = vpack.c.b16 %v5271, %v5271
  %v5713 = vpack.c.b16 %v5272, %v5272
  %v5714 = vpack.c.b16 %v5273, %v5273
  %v5715 = vpack.c.b16 %v5274, %v5274
  %v5716 = vpack.c.b16 %v5275, %v5275
  %v5717 = vpack.c.b16 %v5276, %v5276
  %v5718 = vpack.c.b16 %v5277, %v5277
  %v5719 = vpack.c.b16 %v5278, %v5278
  %v5720 = vpack.c.b16 %v5279, %v5279
  %v5721 = vpack.c.b16 %v5280, %v5280
  %v5722 = vpack.c.b16 %v5281, %v5281
  %v5723 = vpack.c.b16 %v5282, %v5282
  %v5724 = vpack.c.b16 %v5283, %v5283
  %v5725 = vpack.c.b16 %v5284, %v5284
  %v5726 = vpack.c.b16 %v5285, %v5285
  %v5727 = vpack.c.b16 %v5286, %v5286
  %v5728 = vpack.c.b16 %v5287, %v5287
  %v5729 = vpack.c.b16 %v5288, %v5288
  %v5730 = vpack.c.b16 %v5289, %v5289
  %v5731 = vpack.c.b16 %v5290, %v5290
  %v5732 = vpack.c.b16 %v5291, %v5291
  %v5733 = vpack.c.b16 %v5292, %v5292
  %v5734 = vpack.c.b16 %v5293, %v5293
  %v5735 = vpack.c.b16 %v5294, %v5294
  %v5736 = vpack.c.b16 %v5295, %v5295
  %v5737 = vpack.c.b16 %v5296, %v5296
  %v5738 = vpack.c.b16 %v5297, %v5297
  %v5739 = vpack.c.b16 %v5298, %v5298
  %v5740 = vpack.c.b16 %v5299, %v5299
  %v5741 = vpack.c.b16 %v5300, %v5300
  %v5742 = vpack.c.b16 %v5301, %v5301
  %v5743 = vpack.c.b16 %v5302, %v5302
  %v5744 = vpack.c.b16 %v5303, %v5303
  %v5745 = vpack.c.b16 %v5304, %v5304
  %v5746 = vpack.c.b16 %v5305, %v5305
  %v5747 = vpack.c.b16 %v5306, %v5306
  %v5748 = vpack.c.b16 %v5307, %v5307
  %v5749 = vpack.c.b16 %v5308, %v5308
  %v5750 = vpack.c.b16 %v5309, %v5309
  %v5751 = vpack.c.b16 %v5310, %v5310
  %v5752 = vpack.c.b16 %v5311, %v5311
  %v5753 = vpack.c.b16 %v5312, %v5312
  %v5754 = vpack.c.b16 %v5313, %v5313
  %v5755 = vpack.c.b16 %v5314, %v5314
  %v5756 = vpack.c.b16 %v5315, %v5315
  %v5757 = vpack.c.b16 %v5316, %v5316
  %v5758 = vpack.c.b16 %v5317, %v5317
  %v5759 = vpack.c.b16 %v5318, %v5318
  %v5760 = vpack.c.b16 %v5319, %v5319
  %v5761 = vpack.c.b16 %v5320, %v5320
  %v5762 = vpack.c.b16 %v5321, %v5321
  %v5763 = vpack.c.b16 %v5322, %v5322
  %v5764 = vpack.c.b16 %v5323, %v5323
  %v5765 = vpack.c.b16 %v5324, %v5324
  %v5766 = vpack.c.b16 %v5325, %v5325
  %v5767 = vpack.c.b16 %v5326, %v5326
  %v5768 = vpack.c.b16 %v5327, %v5327
  %v5769 = vpack.c.b16 %v5328, %v5328
  %v5770 = vpack.c.b16 %v5329, %v5329
  %v5771 = vpack.c.b16 %v5330, %v5330
  %v5772 = vpack.c.b16 %v5331, %v5331
  %v5773 = vpack.c.b16 %v5332, %v5332
  %v5774 = vpack.c.b16 %v5333, %v5333
  %v5775 = vpack.c.b16 %v5334, %v5334
  %v5776 = vpack.c.b16 %v5335, %v5335
  %v5777 = vpack.c.b16 %v5336, %v5336
  %v5778 = vpack.c.b16 %v5337, %v5337
  %v5779 = vpack.c.b16 %v5338, %v5338
  %v5780 = vpack.c.b16 %v5339, %v5339
  %v5781 = vpack.c.b16 %v5340, %v5340
  %v5782 = vpack.c.b16 %v5341, %v5341
  %v5783 = vpack.c.b16 %v5342, %v5342
  %v5784 = vpack.c.b16 %v5343, %v5343
  %v5785 = vpack.c.b16 %v5344, %v5344
  %v5786 = vpack.c.b16 %v5345, %v5345
  %v5787 = vpack.c.b16 %v5346, %v5346
  %v5788 = vpack.c.b16 %v5347, %v5347
  %v5789 = vpack.c.b16 %v5348, %v5348
  %v5790 = vpack.c.b16 %v5349, %v5349
  %v5791 = vpack.c.b16 %v5350, %v5350
  %v5792 = vpack.c.b16 %v5351, %v5351
  %v5793 = vpack.c.b16 %v5352, %v5352
  %v5794 = vpack.c.b16 %v5353, %v5353
  %v5795 = vpack.c.b16 %v5354, %v5354
  %v5796 = vpack.c.b16 %v5355, %v5355
  %v5797 = vpack.c.b16 %v5356, %v5356
  %v5798 = vpack.c.b16 %v5357, %v5357
  %v5799 = vpack.c.b16 %v5358, %v5358
  %v5800 = vpack.c.b16 %v5359, %v5359
  %v5801 = vpack.c.b16 %v5360, %v5360
  %v5802 = vpack.c.b16 %v5361, %v5361
  %v5803 = vpack.c.b16 %v5362, %v5362
  %v5804 = vpack.c.b16 %v5363, %v5363
  %v5805 = vpack.c.b16 %v5364, %v5364
  %v5806 = vpack.c.b16 %v5365, %v5365
  %v5807 = vpack.c.b16 %v5366, %v5366
  %v5808 = vpack.c.b16 %v5367, %v5367
  %v5809 = vpack.c.b16 %v5368, %v5368
  %v5810 = vpack.c.b16 %v5369, %v5369
  %v5811 = vpack.c.b16 %v5370, %v5370
  %v5812 = vpack.c.b16 %v5371, %v5371
  %v5813 = vpack.c.b16 %v5372, %v5372
  %v5814 = vpack.c.b16 %v5373, %v5373
  %v5815 = vpack.c.b16 %v5374, %v5374
  %v5816 = vpack.c.b16 %v5375, %v5375
  %v5817 = vpack.c.b16 %v5376, %v5376
  %v5818 = vpack.c.b16 %v5377, %v5377
  %v5819 = vpack.c.b16 %v5378, %v5378
  %v5820 = vpack.c.b16 %v5379, %v5379
  %v5821 = vpack.c.b16 %v5380, %v5380
  %v5822 = vpack.c.b16 %v5381, %v5381
  %v5823 = vpack.c.b16 %v5382, %v5382
  %v5824 = vpack.c.b16 %v5383, %v5383
  %v5825 = vpack.c.b16 %v5384, %v5384
  %v5826 = vpack.c.b16 %v5385, %v5385
  %vm6268 = vcmask 257024
  %6269 = vst.msk [vmem:[%s3] sm:$0xf] %vm6268, %v5386
  %6270 = vst.msk [vmem:[%s3 + $0x4] sm:$0xf] %vm6268, %v5387
  %6271 = vst.msk [vmem:[%s3 + $0x8] sm:$0xf] %vm6268, %v5388
  %6272 = vst.msk [vmem:[%s3 + $0xc] sm:$0xf] %vm6268, %v5389
  %6273 = vst.msk [vmem:[%s3 + $0x10] sm:$0xf] %vm6268, %v5390
  %6274 = vst.msk [vmem:[%s3 + $0x14] sm:$0xf] %vm6268, %v5391
  %6275 = vst.msk [vmem:[%s3 + $0x18] sm:$0xf] %vm6268, %v5392
  %6276 = vst.msk [vmem:[%s3 + $0x1c] sm:$0xf] %vm6268, %v5393
  %6277 = vst.msk [vmem:[%s3 + $0x20] sm:$0xf] %vm6268, %v5394
  %6278 = vst.msk [vmem:[%s3 + $0x24] sm:$0xf] %vm6268, %v5395
  %6279 = vst.msk [vmem:[%s3 + $0x28] sm:$0xf] %vm6268, %v5396
  %6280 = vst.msk [vmem:[%s3 + $0x2c] sm:$0xf] %vm6268, %v5397
  %6281 = vst.msk [vmem:[%s3 + $0x30] sm:$0xf] %vm6268, %v5398
  %6282 = vst.msk [vmem:[%s3 + $0x34] sm:$0xf] %vm6268, %v5399
  %6283 = vst.msk [vmem:[%s3 + $0x38] sm:$0xf] %vm6268, %v5400
  %6284 = vst.msk [vmem:[%s3 + $0x3c] sm:$0xf] %vm6268, %v5401
  %6285 = vst.msk [vmem:[%s3 + $0x40] sm:$0xf] %vm6268, %v5402
  %6286 = vst.msk [vmem:[%s3 + $0x44] sm:$0xf] %vm6268, %v5403
  %6287 = vst.msk [vmem:[%s3 + $0x48] sm:$0xf] %vm6268, %v5404
  %6288 = vst.msk [vmem:[%s3 + $0x4c] sm:$0xf] %vm6268, %v5405
  %6289 = vst.msk [vmem:[%s3 + $0x50] sm:$0xf] %vm6268, %v5406
  %6290 = vst.msk [vmem:[%s3 + $0x54] sm:$0xf] %vm6268, %v5407
  %6291 = vst.msk [vmem:[%s3 + $0x58] sm:$0xf] %vm6268, %v5408
  %6292 = vst.msk [vmem:[%s3 + $0x5c] sm:$0xf] %vm6268, %v5409
  %6293 = vst.msk [vmem:[%s3 + $0x60] sm:$0xf] %vm6268, %v5410
  %6294 = vst.msk [vmem:[%s3 + $0x64] sm:$0xf] %vm6268, %v5411
  %6295 = vst.msk [vmem:[%s3 + $0x68] sm:$0xf] %vm6268, %v5412
  %6296 = vst.msk [vmem:[%s3 + $0x6c] sm:$0xf] %vm6268, %v5413
  %6297 = vst.msk [vmem:[%s3 + $0x70] sm:$0xf] %vm6268, %v5414
  %6298 = vst.msk [vmem:[%s3 + $0x74] sm:$0xf] %vm6268, %v5415
  %6299 = vst.msk [vmem:[%s3 + $0x78] sm:$0xf] %vm6268, %v5416
  %6300 = vst.msk [vmem:[%s3 + $0x7c] sm:$0xf] %vm6268, %v5417
  %6301 = vst.msk [vmem:[%s3 + $0x80] sm:$0xf] %vm6268, %v5418
  %6302 = vst.msk [vmem:[%s3 + $0x84] sm:$0xf] %vm6268, %v5419
  %6303 = vst.msk [vmem:[%s3 + $0x88] sm:$0xf] %vm6268, %v5420
  %6304 = vst.msk [vmem:[%s3 + $0x8c] sm:$0xf] %vm6268, %v5421
  %6305 = vst.msk [vmem:[%s3 + $0x90] sm:$0xf] %vm6268, %v5422
  %6306 = vst.msk [vmem:[%s3 + $0x94] sm:$0xf] %vm6268, %v5423
  %6307 = vst.msk [vmem:[%s3 + $0x98] sm:$0xf] %vm6268, %v5424
  %6308 = vst.msk [vmem:[%s3 + $0x9c] sm:$0xf] %vm6268, %v5425
  %6309 = vst.msk [vmem:[%s3 + $0xa0] sm:$0xf] %vm6268, %v5426
  %6310 = vst.msk [vmem:[%s3 + $0xa4] sm:$0xf] %vm6268, %v5427
  %6311 = vst.msk [vmem:[%s3 + $0xa8] sm:$0xf] %vm6268, %v5428
  %6312 = vst.msk [vmem:[%s3 + $0xac] sm:$0xf] %vm6268, %v5429
  %6313 = vst.msk [vmem:[%s3 + $0xb0] sm:$0xf] %vm6268, %v5430
  %6314 = vst.msk [vmem:[%s3 + $0xb4] sm:$0xf] %vm6268, %v5431
  %6315 = vst.msk [vmem:[%s3 + $0xb8] sm:$0xf] %vm6268, %v5432
  %6316 = vst.msk [vmem:[%s3 + $0xbc] sm:$0xf] %vm6268, %v5433
  %6317 = vst.msk [vmem:[%s3 + $0xc0] sm:$0xf] %vm6268, %v5434
  %6318 = vst.msk [vmem:[%s3 + $0xc4] sm:$0xf] %vm6268, %v5435
  %6319 = vst.msk [vmem:[%s3 + $0xc8] sm:$0xf] %vm6268, %v5436
  %6320 = vst.msk [vmem:[%s3 + $0xcc] sm:$0xf] %vm6268, %v5437
  %6321 = vst.msk [vmem:[%s3 + $0xd0] sm:$0xf] %vm6268, %v5438
  %6322 = vst.msk [vmem:[%s3 + $0xd4] sm:$0xf] %vm6268, %v5439
  %6323 = vst.msk [vmem:[%s3 + $0xd8] sm:$0xf] %vm6268, %v5440
  %6324 = vst.msk [vmem:[%s3 + $0xdc] sm:$0xf] %vm6268, %v5441
  %6325 = vst.msk [vmem:[%s3 + $0xe0] sm:$0xf] %vm6268, %v5442
  %6326 = vst.msk [vmem:[%s3 + $0xe4] sm:$0xf] %vm6268, %v5443
  %6327 = vst.msk [vmem:[%s3 + $0xe8] sm:$0xf] %vm6268, %v5444
  %6328 = vst.msk [vmem:[%s3 + $0xec] sm:$0xf] %vm6268, %v5445
  %6329 = vst.msk [vmem:[%s3 + $0xf0] sm:$0xf] %vm6268, %v5446
  %6330 = vst.msk [vmem:[%s3 + $0xf4] sm:$0xf] %vm6268, %v5447
  %6331 = vst.msk [vmem:[%s3 + $0xf8] sm:$0xf] %vm6268, %v5448
  %6332 = vst.msk [vmem:[%s3 + $0xfc] sm:$0xf] %vm6268, %v5449
  %6333 = vst.msk [vmem:[%s3 + $0x100] sm:$0xf] %vm6268, %v5450
  %6334 = vst.msk [vmem:[%s3 + $0x104] sm:$0xf] %vm6268, %v5451
  %6335 = vst.msk [vmem:[%s3 + $0x108] sm:$0xf] %vm6268, %v5452
  %6336 = vst.msk [vmem:[%s3 + $0x10c] sm:$0xf] %vm6268, %v5453
  %6337 = vst.msk [vmem:[%s3 + $0x110] sm:$0xf] %vm6268, %v5454
  %6338 = vst.msk [vmem:[%s3 + $0x114] sm:$0xf] %vm6268, %v5455
  %6339 = vst.msk [vmem:[%s3 + $0x118] sm:$0xf] %vm6268, %v5456
  %6340 = vst.msk [vmem:[%s3 + $0x11c] sm:$0xf] %vm6268, %v5457
  %6341 = vst.msk [vmem:[%s3 + $0x120] sm:$0xf] %vm6268, %v5458
  %6342 = vst.msk [vmem:[%s3 + $0x124] sm:$0xf] %vm6268, %v5459
  %6343 = vst.msk [vmem:[%s3 + $0x128] sm:$0xf] %vm6268, %v5460
  %6344 = vst.msk [vmem:[%s3 + $0x12c] sm:$0xf] %vm6268, %v5461
  %6345 = vst.msk [vmem:[%s3 + $0x130] sm:$0xf] %vm6268, %v5462
  %6346 = vst.msk [vmem:[%s3 + $0x134] sm:$0xf] %vm6268, %v5463
  %6347 = vst.msk [vmem:[%s3 + $0x138] sm:$0xf] %vm6268, %v5464
  %6348 = vst.msk [vmem:[%s3 + $0x13c] sm:$0xf] %vm6268, %v5465
  %6349 = vst.msk [vmem:[%s3 + $0x140] sm:$0xf] %vm6268, %v5466
  %6350 = vst.msk [vmem:[%s3 + $0x144] sm:$0xf] %vm6268, %v5467
  %6351 = vst.msk [vmem:[%s3 + $0x148] sm:$0xf] %vm6268, %v5468
  %6352 = vst.msk [vmem:[%s3 + $0x14c] sm:$0xf] %vm6268, %v5469
  %6353 = vst.msk [vmem:[%s3 + $0x150] sm:$0xf] %vm6268, %v5470
  %6354 = vst.msk [vmem:[%s3 + $0x154] sm:$0xf] %vm6268, %v5471
  %6355 = vst.msk [vmem:[%s3 + $0x158] sm:$0xf] %vm6268, %v5472
  %6356 = vst.msk [vmem:[%s3 + $0x15c] sm:$0xf] %vm6268, %v5473
  %6357 = vst.msk [vmem:[%s3 + $0x160] sm:$0xf] %vm6268, %v5474
  %6358 = vst.msk [vmem:[%s3 + $0x164] sm:$0xf] %vm6268, %v5475
  %6359 = vst.msk [vmem:[%s3 + $0x168] sm:$0xf] %vm6268, %v5476
  %6360 = vst.msk [vmem:[%s3 + $0x16c] sm:$0xf] %vm6268, %v5477
  %6361 = vst.msk [vmem:[%s3 + $0x170] sm:$0xf] %vm6268, %v5478
  %6362 = vst.msk [vmem:[%s3 + $0x174] sm:$0xf] %vm6268, %v5479
  %6363 = vst.msk [vmem:[%s3 + $0x178] sm:$0xf] %vm6268, %v5480
  %6364 = vst.msk [vmem:[%s3 + $0x17c] sm:$0xf] %vm6268, %v5481
  %6365 = vst.msk [vmem:[%s3 + $0x180] sm:$0xf] %vm6268, %v5482
  %6366 = vst.msk [vmem:[%s3 + $0x184] sm:$0xf] %vm6268, %v5483
  %6367 = vst.msk [vmem:[%s3 + $0x188] sm:$0xf] %vm6268, %v5484
  %6368 = vst.msk [vmem:[%s3 + $0x18c] sm:$0xf] %vm6268, %v5485
  %6369 = vst.msk [vmem:[%s3 + $0x190] sm:$0xf] %vm6268, %v5486
  %6370 = vst.msk [vmem:[%s3 + $0x194] sm:$0xf] %vm6268, %v5487
  %6371 = vst.msk [vmem:[%s3 + $0x198] sm:$0xf] %vm6268, %v5488
  %6372 = vst.msk [vmem:[%s3 + $0x19c] sm:$0xf] %vm6268, %v5489
  %6373 = vst.msk [vmem:[%s3 + $0x1a0] sm:$0xf] %vm6268, %v5490
  %6374 = vst.msk [vmem:[%s3 + $0x1a4] sm:$0xf] %vm6268, %v5491
  %6375 = vst.msk [vmem:[%s3 + $0x1a8] sm:$0xf] %vm6268, %v5492
  %6376 = vst.msk [vmem:[%s3 + $0x1ac] sm:$0xf] %vm6268, %v5493
  %6377 = vst.msk [vmem:[%s3 + $0x1b0] sm:$0xf] %vm6268, %v5494
  %6378 = vst.msk [vmem:[%s3 + $0x1b4] sm:$0xf] %vm6268, %v5495
  %6379 = vst.msk [vmem:[%s3 + $0x1b8] sm:$0xf] %vm6268, %v5496
  %6380 = vst.msk [vmem:[%s3 + $0x1bc] sm:$0xf] %vm6268, %v5497
  %6381 = vst.msk [vmem:[%s3 + $0x1c0] sm:$0xf] %vm6268, %v5498
  %6382 = vst.msk [vmem:[%s3 + $0x1c4] sm:$0xf] %vm6268, %v5499
  %6383 = vst.msk [vmem:[%s3 + $0x1c8] sm:$0xf] %vm6268, %v5500
  %6384 = vst.msk [vmem:[%s3 + $0x1cc] sm:$0xf] %vm6268, %v5501
  %6385 = vst.msk [vmem:[%s3 + $0x1d0] sm:$0xf] %vm6268, %v5502
  %6386 = vst.msk [vmem:[%s3 + $0x1d4] sm:$0xf] %vm6268, %v5503
  %6387 = vst.msk [vmem:[%s3 + $0x1d8] sm:$0xf] %vm6268, %v5504
  %6388 = vst.msk [vmem:[%s3 + $0x1dc] sm:$0xf] %vm6268, %v5505
  %6389 = vst.msk [vmem:[%s3 + $0x1e0] sm:$0xf] %vm6268, %v5506
  %6390 = vst.msk [vmem:[%s3 + $0x1e4] sm:$0xf] %vm6268, %v5507
  %6391 = vst.msk [vmem:[%s3 + $0x1e8] sm:$0xf] %vm6268, %v5508
  %6392 = vst.msk [vmem:[%s3 + $0x1ec] sm:$0xf] %vm6268, %v5509
  %6393 = vst.msk [vmem:[%s3 + $0x1f0] sm:$0xf] %vm6268, %v5510
  %6394 = vst.msk [vmem:[%s3 + $0x1f4] sm:$0xf] %vm6268, %v5511
  %6395 = vst.msk [vmem:[%s3 + $0x1f8] sm:$0xf] %vm6268, %v5512
  %6396 = vst.msk [vmem:[%s3 + $0x1fc] sm:$0xf] %vm6268, %v5513
  %6397 = vst.msk [vmem:[%s3 + $0x200] sm:$0xf] %vm6268, %v5514
  %6398 = vst.msk [vmem:[%s3 + $0x204] sm:$0xf] %vm6268, %v5515
  %6399 = vst.msk [vmem:[%s3 + $0x208] sm:$0xf] %vm6268, %v5516
  %6400 = vst.msk [vmem:[%s3 + $0x20c] sm:$0xf] %vm6268, %v5517
  %6401 = vst.msk [vmem:[%s3 + $0x210] sm:$0xf] %vm6268, %v5518
  %6402 = vst.msk [vmem:[%s3 + $0x214] sm:$0xf] %vm6268, %v5519
  %6403 = vst.msk [vmem:[%s3 + $0x218] sm:$0xf] %vm6268, %v5520
  %6404 = vst.msk [vmem:[%s3 + $0x21c] sm:$0xf] %vm6268, %v5521
  %6405 = vst.msk [vmem:[%s3 + $0x220] sm:$0xf] %vm6268, %v5522
  %6406 = vst.msk [vmem:[%s3 + $0x224] sm:$0xf] %vm6268, %v5523
  %6407 = vst.msk [vmem:[%s3 + $0x228] sm:$0xf] %vm6268, %v5524
  %6408 = vst.msk [vmem:[%s3 + $0x22c] sm:$0xf] %vm6268, %v5525
  %6409 = vst.msk [vmem:[%s3 + $0x230] sm:$0xf] %vm6268, %v5526
  %6410 = vst.msk [vmem:[%s3 + $0x234] sm:$0xf] %vm6268, %v5527
  %6411 = vst.msk [vmem:[%s3 + $0x238] sm:$0xf] %vm6268, %v5528
  %6412 = vst.msk [vmem:[%s3 + $0x23c] sm:$0xf] %vm6268, %v5529
  %6413 = vst.msk [vmem:[%s3 + $0x240] sm:$0xf] %vm6268, %v5530
  %6414 = vst.msk [vmem:[%s3 + $0x244] sm:$0xf] %vm6268, %v5531
  %6415 = vst.msk [vmem:[%s3 + $0x248] sm:$0xf] %vm6268, %v5532
  %6416 = vst.msk [vmem:[%s3 + $0x24c] sm:$0xf] %vm6268, %v5533
  %6417 = vst.msk [vmem:[%s3 + $0x250] sm:$0xf] %vm6268, %v5534
  %6418 = vst.msk [vmem:[%s3 + $0x254] sm:$0xf] %vm6268, %v5535
  %6419 = vst.msk [vmem:[%s3 + $0x258] sm:$0xf] %vm6268, %v5536
  %6420 = vst.msk [vmem:[%s3 + $0x25c] sm:$0xf] %vm6268, %v5537
  %6421 = vst.msk [vmem:[%s3 + $0x260] sm:$0xf] %vm6268, %v5538
  %6422 = vst.msk [vmem:[%s3 + $0x264] sm:$0xf] %vm6268, %v5539
  %6423 = vst.msk [vmem:[%s3 + $0x268] sm:$0xf] %vm6268, %v5540
  %6424 = vst.msk [vmem:[%s3 + $0x26c] sm:$0xf] %vm6268, %v5541
  %6425 = vst.msk [vmem:[%s3 + $0x270] sm:$0xf] %vm6268, %v5542
  %6426 = vst.msk [vmem:[%s3 + $0x274] sm:$0xf] %vm6268, %v5543
  %6427 = vst.msk [vmem:[%s3 + $0x278] sm:$0xf] %vm6268, %v5544
  %6428 = vst.msk [vmem:[%s3 + $0x27c] sm:$0xf] %vm6268, %v5545
  %6429 = vst.msk [vmem:[%s3 + $0x280] sm:$0xf] %vm6268, %v5546
  %6430 = vst.msk [vmem:[%s3 + $0x284] sm:$0xf] %vm6268, %v5547
  %6431 = vst.msk [vmem:[%s3 + $0x288] sm:$0xf] %vm6268, %v5548
  %6432 = vst.msk [vmem:[%s3 + $0x28c] sm:$0xf] %vm6268, %v5549
  %6433 = vst.msk [vmem:[%s3 + $0x290] sm:$0xf] %vm6268, %v5550
  %6434 = vst.msk [vmem:[%s3 + $0x294] sm:$0xf] %vm6268, %v5551
  %6435 = vst.msk [vmem:[%s3 + $0x298] sm:$0xf] %vm6268, %v5552
  %6436 = vst.msk [vmem:[%s3 + $0x29c] sm:$0xf] %vm6268, %v5553
  %6437 = vst.msk [vmem:[%s3 + $0x2a0] sm:$0xf] %vm6268, %v5554
  %6438 = vst.msk [vmem:[%s3 + $0x2a4] sm:$0xf] %vm6268, %v5555
  %6439 = vst.msk [vmem:[%s3 + $0x2a8] sm:$0xf] %vm6268, %v5556
  %6440 = vst.msk [vmem:[%s3 + $0x2ac] sm:$0xf] %vm6268, %v5557
  %6441 = vst.msk [vmem:[%s3 + $0x2b0] sm:$0xf] %vm6268, %v5558
  %6442 = vst.msk [vmem:[%s3 + $0x2b4] sm:$0xf] %vm6268, %v5559
  %6443 = vst.msk [vmem:[%s3 + $0x2b8] sm:$0xf] %vm6268, %v5560
  %6444 = vst.msk [vmem:[%s3 + $0x2bc] sm:$0xf] %vm6268, %v5561
  %6445 = vst.msk [vmem:[%s3 + $0x2c0] sm:$0xf] %vm6268, %v5562
  %6446 = vst.msk [vmem:[%s3 + $0x2c4] sm:$0xf] %vm6268, %v5563
  %6447 = vst.msk [vmem:[%s3 + $0x2c8] sm:$0xf] %vm6268, %v5564
  %6448 = vst.msk [vmem:[%s3 + $0x2cc] sm:$0xf] %vm6268, %v5565
  %6449 = vst.msk [vmem:[%s3 + $0x2d0] sm:$0xf] %vm6268, %v5566
  %6450 = vst.msk [vmem:[%s3 + $0x2d4] sm:$0xf] %vm6268, %v5567
  %6451 = vst.msk [vmem:[%s3 + $0x2d8] sm:$0xf] %vm6268, %v5568
  %6452 = vst.msk [vmem:[%s3 + $0x2dc] sm:$0xf] %vm6268, %v5569
  %6453 = vst.msk [vmem:[%s3 + $0x2e0] sm:$0xf] %vm6268, %v5570
  %6454 = vst.msk [vmem:[%s3 + $0x2e4] sm:$0xf] %vm6268, %v5571
  %6455 = vst.msk [vmem:[%s3 + $0x2e8] sm:$0xf] %vm6268, %v5572
  %6456 = vst.msk [vmem:[%s3 + $0x2ec] sm:$0xf] %vm6268, %v5573
  %6457 = vst.msk [vmem:[%s3 + $0x2f0] sm:$0xf] %vm6268, %v5574
  %6458 = vst.msk [vmem:[%s3 + $0x2f4] sm:$0xf] %vm6268, %v5575
  %6459 = vst.msk [vmem:[%s3 + $0x2f8] sm:$0xf] %vm6268, %v5576
  %6460 = vst.msk [vmem:[%s3 + $0x2fc] sm:$0xf] %vm6268, %v5577
  %6461 = vst.msk [vmem:[%s3 + $0x300] sm:$0xf] %vm6268, %v5578
  %6462 = vst.msk [vmem:[%s3 + $0x304] sm:$0xf] %vm6268, %v5579
  %6463 = vst.msk [vmem:[%s3 + $0x308] sm:$0xf] %vm6268, %v5580
  %6464 = vst.msk [vmem:[%s3 + $0x30c] sm:$0xf] %vm6268, %v5581
  %6465 = vst.msk [vmem:[%s3 + $0x310] sm:$0xf] %vm6268, %v5582
  %6466 = vst.msk [vmem:[%s3 + $0x314] sm:$0xf] %vm6268, %v5583
  %6467 = vst.msk [vmem:[%s3 + $0x318] sm:$0xf] %vm6268, %v5584
  %6468 = vst.msk [vmem:[%s3 + $0x31c] sm:$0xf] %vm6268, %v5585
  %6469 = vst.msk [vmem:[%s3 + $0x320] sm:$0xf] %vm6268, %v5586
  %6470 = vst.msk [vmem:[%s3 + $0x324] sm:$0xf] %vm6268, %v5587
  %6471 = vst.msk [vmem:[%s3 + $0x328] sm:$0xf] %vm6268, %v5588
  %6472 = vst.msk [vmem:[%s3 + $0x32c] sm:$0xf] %vm6268, %v5589
  %6473 = vst.msk [vmem:[%s3 + $0x330] sm:$0xf] %vm6268, %v5590
  %6474 = vst.msk [vmem:[%s3 + $0x334] sm:$0xf] %vm6268, %v5591
  %6475 = vst.msk [vmem:[%s3 + $0x338] sm:$0xf] %vm6268, %v5592
  %6476 = vst.msk [vmem:[%s3 + $0x33c] sm:$0xf] %vm6268, %v5593
  %6477 = vst.msk [vmem:[%s3 + $0x340] sm:$0xf] %vm6268, %v5594
  %6478 = vst.msk [vmem:[%s3 + $0x344] sm:$0xf] %vm6268, %v5595
  %6479 = vst.msk [vmem:[%s3 + $0x348] sm:$0xf] %vm6268, %v5596
  %6480 = vst.msk [vmem:[%s3 + $0x34c] sm:$0xf] %vm6268, %v5597
  %6481 = vst.msk [vmem:[%s3 + $0x350] sm:$0xf] %vm6268, %v5598
  %6482 = vst.msk [vmem:[%s3 + $0x354] sm:$0xf] %vm6268, %v5599
  %6483 = vst.msk [vmem:[%s3 + $0x358] sm:$0xf] %vm6268, %v5600
  %6484 = vst.msk [vmem:[%s3 + $0x35c] sm:$0xf] %vm6268, %v5601
  %6485 = vst.msk [vmem:[%s3 + $0x360] sm:$0xf] %vm6268, %v5602
  %6486 = vst.msk [vmem:[%s3 + $0x364] sm:$0xf] %vm6268, %v5603
  %6487 = vst.msk [vmem:[%s3 + $0x368] sm:$0xf] %vm6268, %v5604
  %6488 = vst.msk [vmem:[%s3 + $0x36c] sm:$0xf] %vm6268, %v5605
  %6489 = vst.msk [vmem:[%s3 + $0x370] sm:$0xf] %vm6268, %v5606
  %6490 = vst.msk [vmem:[%s3 + $0x374] sm:$0xf] %vm6268, %v5607
  %6491 = vst.msk [vmem:[%s3 + $0x378] sm:$0xf] %vm6268, %v5608
  %6492 = vst.msk [vmem:[%s3 + $0x37c] sm:$0xf] %vm6268, %v5609
  %6493 = vst.msk [vmem:[%s3 + $0x380] sm:$0xf] %vm6268, %v5610
  %6494 = vst.msk [vmem:[%s3 + $0x384] sm:$0xf] %vm6268, %v5611
  %6495 = vst.msk [vmem:[%s3 + $0x388] sm:$0xf] %vm6268, %v5612
  %6496 = vst.msk [vmem:[%s3 + $0x38c] sm:$0xf] %vm6268, %v5613
  %6497 = vst.msk [vmem:[%s3 + $0x390] sm:$0xf] %vm6268, %v5614
  %6498 = vst.msk [vmem:[%s3 + $0x394] sm:$0xf] %vm6268, %v5615
  %6499 = vst.msk [vmem:[%s3 + $0x398] sm:$0xf] %vm6268, %v5616
  %6500 = vst.msk [vmem:[%s3 + $0x39c] sm:$0xf] %vm6268, %v5617
  %6501 = vst.msk [vmem:[%s3 + $0x3a0] sm:$0xf] %vm6268, %v5618
  %6502 = vst.msk [vmem:[%s3 + $0x3a4] sm:$0xf] %vm6268, %v5619
  %6503 = vst.msk [vmem:[%s3 + $0x3a8] sm:$0xf] %vm6268, %v5620
  %6504 = vst.msk [vmem:[%s3 + $0x3ac] sm:$0xf] %vm6268, %v5621
  %6505 = vst.msk [vmem:[%s3 + $0x3b0] sm:$0xf] %vm6268, %v5622
  %6506 = vst.msk [vmem:[%s3 + $0x3b4] sm:$0xf] %vm6268, %v5623
  %6507 = vst.msk [vmem:[%s3 + $0x3b8] sm:$0xf] %vm6268, %v5624
  %6508 = vst.msk [vmem:[%s3 + $0x3bc] sm:$0xf] %vm6268, %v5625
  %6509 = vst.msk [vmem:[%s3 + $0x3c0] sm:$0xf] %vm6268, %v5626
  %6510 = vst.msk [vmem:[%s3 + $0x3c4] sm:$0xf] %vm6268, %v5627
  %6511 = vst.msk [vmem:[%s3 + $0x3c8] sm:$0xf] %vm6268, %v5628
  %6512 = vst.msk [vmem:[%s3 + $0x3cc] sm:$0xf] %vm6268, %v5629
  %6513 = vst.msk [vmem:[%s3 + $0x3d0] sm:$0xf] %vm6268, %v5630
  %6514 = vst.msk [vmem:[%s3 + $0x3d4] sm:$0xf] %vm6268, %v5631
  %6515 = vst.msk [vmem:[%s3 + $0x3d8] sm:$0xf] %vm6268, %v5632
  %6516 = vst.msk [vmem:[%s3 + $0x3dc] sm:$0xf] %vm6268, %v5633
  %6517 = vst.msk [vmem:[%s3 + $0x3e0] sm:$0xf] %vm6268, %v5634
  %6518 = vst.msk [vmem:[%s3 + $0x3e4] sm:$0xf] %vm6268, %v5635
  %6519 = vst.msk [vmem:[%s3 + $0x3e8] sm:$0xf] %vm6268, %v5636
  %6520 = vst.msk [vmem:[%s3 + $0x3ec] sm:$0xf] %vm6268, %v5637
  %6521 = vst.msk [vmem:[%s3 + $0x3f0] sm:$0xf] %vm6268, %v5638
  %6522 = vst.msk [vmem:[%s3 + $0x3f4] sm:$0xf] %vm6268, %v5639
  %6523 = vst.msk [vmem:[%s3 + $0x3f8] sm:$0xf] %vm6268, %v5640
  %6524 = vst.msk [vmem:[%s3 + $0x3fc] sm:$0xf] %vm6268, %v5641
  %6525 = vst.msk [vmem:[%s3 + $0x400] sm:$0xf] %vm6268, %v5642
  %6526 = vst.msk [vmem:[%s3 + $0x404] sm:$0xf] %vm6268, %v5643
  %6527 = vst.msk [vmem:[%s3 + $0x408] sm:$0xf] %vm6268, %v5644
  %6528 = vst.msk [vmem:[%s3 + $0x40c] sm:$0xf] %vm6268, %v5645
  %6529 = vst.msk [vmem:[%s3 + $0x410] sm:$0xf] %vm6268, %v5646
  %6530 = vst.msk [vmem:[%s3 + $0x414] sm:$0xf] %vm6268, %v5647
  %6531 = vst.msk [vmem:[%s3 + $0x418] sm:$0xf] %vm6268, %v5648
  %6532 = vst.msk [vmem:[%s3 + $0x41c] sm:$0xf] %vm6268, %v5649
  %6533 = vst.msk [vmem:[%s3 + $0x420] sm:$0xf] %vm6268, %v5650
  %6534 = vst.msk [vmem:[%s3 + $0x424] sm:$0xf] %vm6268, %v5651
  %6535 = vst.msk [vmem:[%s3 + $0x428] sm:$0xf] %vm6268, %v5652
  %6536 = vst.msk [vmem:[%s3 + $0x42c] sm:$0xf] %vm6268, %v5653
  %6537 = vst.msk [vmem:[%s3 + $0x430] sm:$0xf] %vm6268, %v5654
  %6538 = vst.msk [vmem:[%s3 + $0x434] sm:$0xf] %vm6268, %v5655
  %6539 = vst.msk [vmem:[%s3 + $0x438] sm:$0xf] %vm6268, %v5656
  %6540 = vst.msk [vmem:[%s3 + $0x43c] sm:$0xf] %vm6268, %v5657
  %6541 = vst.msk [vmem:[%s3 + $0x440] sm:$0xf] %vm6268, %v5658
  %6542 = vst.msk [vmem:[%s3 + $0x444] sm:$0xf] %vm6268, %v5659
  %6543 = vst.msk [vmem:[%s3 + $0x448] sm:$0xf] %vm6268, %v5660
  %6544 = vst.msk [vmem:[%s3 + $0x44c] sm:$0xf] %vm6268, %v5661
  %6545 = vst.msk [vmem:[%s3 + $0x450] sm:$0xf] %vm6268, %v5662
  %6546 = vst.msk [vmem:[%s3 + $0x454] sm:$0xf] %vm6268, %v5663
  %6547 = vst.msk [vmem:[%s3 + $0x458] sm:$0xf] %vm6268, %v5664
  %6548 = vst.msk [vmem:[%s3 + $0x45c] sm:$0xf] %vm6268, %v5665
  %6549 = vst.msk [vmem:[%s3 + $0x460] sm:$0xf] %vm6268, %v5666
  %6550 = vst.msk [vmem:[%s3 + $0x464] sm:$0xf] %vm6268, %v5667
  %6551 = vst.msk [vmem:[%s3 + $0x468] sm:$0xf] %vm6268, %v5668
  %6552 = vst.msk [vmem:[%s3 + $0x46c] sm:$0xf] %vm6268, %v5669
  %6553 = vst.msk [vmem:[%s3 + $0x470] sm:$0xf] %vm6268, %v5670
  %6554 = vst.msk [vmem:[%s3 + $0x474] sm:$0xf] %vm6268, %v5671
  %6555 = vst.msk [vmem:[%s3 + $0x478] sm:$0xf] %vm6268, %v5672
  %6556 = vst.msk [vmem:[%s3 + $0x47c] sm:$0xf] %vm6268, %v5673
  %6557 = vst.msk [vmem:[%s3 + $0x480] sm:$0xf] %vm6268, %v5674
  %6558 = vst.msk [vmem:[%s3 + $0x484] sm:$0xf] %vm6268, %v5675
  %6559 = vst.msk [vmem:[%s3 + $0x488] sm:$0xf] %vm6268, %v5676
  %6560 = vst.msk [vmem:[%s3 + $0x48c] sm:$0xf] %vm6268, %v5677
  %6561 = vst.msk [vmem:[%s3 + $0x490] sm:$0xf] %vm6268, %v5678
  %6562 = vst.msk [vmem:[%s3 + $0x494] sm:$0xf] %vm6268, %v5679
  %6563 = vst.msk [vmem:[%s3 + $0x498] sm:$0xf] %vm6268, %v5680
  %6564 = vst.msk [vmem:[%s3 + $0x49c] sm:$0xf] %vm6268, %v5681
  %6565 = vst.msk [vmem:[%s3 + $0x4a0] sm:$0xf] %vm6268, %v5682
  %6566 = vst.msk [vmem:[%s3 + $0x4a4] sm:$0xf] %vm6268, %v5683
  %6567 = vst.msk [vmem:[%s3 + $0x4a8] sm:$0xf] %vm6268, %v5684
  %6568 = vst.msk [vmem:[%s3 + $0x4ac] sm:$0xf] %vm6268, %v5685
  %6569 = vst.msk [vmem:[%s3 + $0x4b0] sm:$0xf] %vm6268, %v5686
  %6570 = vst.msk [vmem:[%s3 + $0x4b4] sm:$0xf] %vm6268, %v5687
  %6571 = vst.msk [vmem:[%s3 + $0x4b8] sm:$0xf] %vm6268, %v5688
  %6572 = vst.msk [vmem:[%s3 + $0x4bc] sm:$0xf] %vm6268, %v5689
  %6573 = vst.msk [vmem:[%s3 + $0x4c0] sm:$0xf] %vm6268, %v5690
  %6574 = vst.msk [vmem:[%s3 + $0x4c4] sm:$0xf] %vm6268, %v5691
  %6575 = vst.msk [vmem:[%s3 + $0x4c8] sm:$0xf] %vm6268, %v5692
  %6576 = vst.msk [vmem:[%s3 + $0x4cc] sm:$0xf] %vm6268, %v5693
  %6577 = vst.msk [vmem:[%s3 + $0x4d0] sm:$0xf] %vm6268, %v5694
  %6578 = vst.msk [vmem:[%s3 + $0x4d4] sm:$0xf] %vm6268, %v5695
  %6579 = vst.msk [vmem:[%s3 + $0x4d8] sm:$0xf] %vm6268, %v5696
  %6580 = vst.msk [vmem:[%s3 + $0x4dc] sm:$0xf] %vm6268, %v5697
  %6581 = vst.msk [vmem:[%s3 + $0x4e0] sm:$0xf] %vm6268, %v5698
  %6582 = vst.msk [vmem:[%s3 + $0x4e4] sm:$0xf] %vm6268, %v5699
  %6583 = vst.msk [vmem:[%s3 + $0x4e8] sm:$0xf] %vm6268, %v5700
  %6584 = vst.msk [vmem:[%s3 + $0x4ec] sm:$0xf] %vm6268, %v5701
  %6585 = vst.msk [vmem:[%s3 + $0x4f0] sm:$0xf] %vm6268, %v5702
  %6586 = vst.msk [vmem:[%s3 + $0x4f4] sm:$0xf] %vm6268, %v5703
  %6587 = vst.msk [vmem:[%s3 + $0x4f8] sm:$0xf] %vm6268, %v5704
  %6588 = vst.msk [vmem:[%s3 + $0x4fc] sm:$0xf] %vm6268, %v5705
  %6589 = vst.msk [vmem:[%s3 + $0x500] sm:$0xf] %vm6268, %v5706
  %6590 = vst.msk [vmem:[%s3 + $0x504] sm:$0xf] %vm6268, %v5707
  %6591 = vst.msk [vmem:[%s3 + $0x508] sm:$0xf] %vm6268, %v5708
  %6592 = vst.msk [vmem:[%s3 + $0x50c] sm:$0xf] %vm6268, %v5709
  %6593 = vst.msk [vmem:[%s3 + $0x510] sm:$0xf] %vm6268, %v5710
  %6594 = vst.msk [vmem:[%s3 + $0x514] sm:$0xf] %vm6268, %v5711
  %6595 = vst.msk [vmem:[%s3 + $0x518] sm:$0xf] %vm6268, %v5712
  %6596 = vst.msk [vmem:[%s3 + $0x51c] sm:$0xf] %vm6268, %v5713
  %6597 = vst.msk [vmem:[%s3 + $0x520] sm:$0xf] %vm6268, %v5714
  %6598 = vst.msk [vmem:[%s3 + $0x524] sm:$0xf] %vm6268, %v5715
  %6599 = vst.msk [vmem:[%s3 + $0x528] sm:$0xf] %vm6268, %v5716
  %6600 = vst.msk [vmem:[%s3 + $0x52c] sm:$0xf] %vm6268, %v5717
  %6601 = vst.msk [vmem:[%s3 + $0x530] sm:$0xf] %vm6268, %v5718
  %6602 = vst.msk [vmem:[%s3 + $0x534] sm:$0xf] %vm6268, %v5719
  %6603 = vst.msk [vmem:[%s3 + $0x538] sm:$0xf] %vm6268, %v5720
  %6604 = vst.msk [vmem:[%s3 + $0x53c] sm:$0xf] %vm6268, %v5721
  %6605 = vst.msk [vmem:[%s3 + $0x540] sm:$0xf] %vm6268, %v5722
  %6606 = vst.msk [vmem:[%s3 + $0x544] sm:$0xf] %vm6268, %v5723
  %6607 = vst.msk [vmem:[%s3 + $0x548] sm:$0xf] %vm6268, %v5724
  %6608 = vst.msk [vmem:[%s3 + $0x54c] sm:$0xf] %vm6268, %v5725
  %6609 = vst.msk [vmem:[%s3 + $0x550] sm:$0xf] %vm6268, %v5726
  %6610 = vst.msk [vmem:[%s3 + $0x554] sm:$0xf] %vm6268, %v5727
  %6611 = vst.msk [vmem:[%s3 + $0x558] sm:$0xf] %vm6268, %v5728
  %6612 = vst.msk [vmem:[%s3 + $0x55c] sm:$0xf] %vm6268, %v5729
  %6613 = vst.msk [vmem:[%s3 + $0x560] sm:$0xf] %vm6268, %v5730
  %6614 = vst.msk [vmem:[%s3 + $0x564] sm:$0xf] %vm6268, %v5731
  %6615 = vst.msk [vmem:[%s3 + $0x568] sm:$0xf] %vm6268, %v5732
  %6616 = vst.msk [vmem:[%s3 + $0x56c] sm:$0xf] %vm6268, %v5733
  %6617 = vst.msk [vmem:[%s3 + $0x570] sm:$0xf] %vm6268, %v5734
  %6618 = vst.msk [vmem:[%s3 + $0x574] sm:$0xf] %vm6268, %v5735
  %6619 = vst.msk [vmem:[%s3 + $0x578] sm:$0xf] %vm6268, %v5736
  %6620 = vst.msk [vmem:[%s3 + $0x57c] sm:$0xf] %vm6268, %v5737
  %6621 = vst.msk [vmem:[%s3 + $0x580] sm:$0xf] %vm6268, %v5738
  %6622 = vst.msk [vmem:[%s3 + $0x584] sm:$0xf] %vm6268, %v5739
  %6623 = vst.msk [vmem:[%s3 + $0x588] sm:$0xf] %vm6268, %v5740
  %6624 = vst.msk [vmem:[%s3 + $0x58c] sm:$0xf] %vm6268, %v5741
  %6625 = vst.msk [vmem:[%s3 + $0x590] sm:$0xf] %vm6268, %v5742
  %6626 = vst.msk [vmem:[%s3 + $0x594] sm:$0xf] %vm6268, %v5743
  %6627 = vst.msk [vmem:[%s3 + $0x598] sm:$0xf] %vm6268, %v5744
  %6628 = vst.msk [vmem:[%s3 + $0x59c] sm:$0xf] %vm6268, %v5745
  %6629 = vst.msk [vmem:[%s3 + $0x5a0] sm:$0xf] %vm6268, %v5746
  %6630 = vst.msk [vmem:[%s3 + $0x5a4] sm:$0xf] %vm6268, %v5747
  %6631 = vst.msk [vmem:[%s3 + $0x5a8] sm:$0xf] %vm6268, %v5748
  %6632 = vst.msk [vmem:[%s3 + $0x5ac] sm:$0xf] %vm6268, %v5749
  %6633 = vst.msk [vmem:[%s3 + $0x5b0] sm:$0xf] %vm6268, %v5750
  %6634 = vst.msk [vmem:[%s3 + $0x5b4] sm:$0xf] %vm6268, %v5751
  %6635 = vst.msk [vmem:[%s3 + $0x5b8] sm:$0xf] %vm6268, %v5752
  %6636 = vst.msk [vmem:[%s3 + $0x5bc] sm:$0xf] %vm6268, %v5753
  %6637 = vst.msk [vmem:[%s3 + $0x5c0] sm:$0xf] %vm6268, %v5754
  %6638 = vst.msk [vmem:[%s3 + $0x5c4] sm:$0xf] %vm6268, %v5755
  %6639 = vst.msk [vmem:[%s3 + $0x5c8] sm:$0xf] %vm6268, %v5756
  %6640 = vst.msk [vmem:[%s3 + $0x5cc] sm:$0xf] %vm6268, %v5757
  %6641 = vst.msk [vmem:[%s3 + $0x5d0] sm:$0xf] %vm6268, %v5758
  %6642 = vst.msk [vmem:[%s3 + $0x5d4] sm:$0xf] %vm6268, %v5759
  %6643 = vst.msk [vmem:[%s3 + $0x5d8] sm:$0xf] %vm6268, %v5760
  %6644 = vst.msk [vmem:[%s3 + $0x5dc] sm:$0xf] %vm6268, %v5761
  %6645 = vst.msk [vmem:[%s3 + $0x5e0] sm:$0xf] %vm6268, %v5762
  %6646 = vst.msk [vmem:[%s3 + $0x5e4] sm:$0xf] %vm6268, %v5763
  %6647 = vst.msk [vmem:[%s3 + $0x5e8] sm:$0xf] %vm6268, %v5764
  %6648 = vst.msk [vmem:[%s3 + $0x5ec] sm:$0xf] %vm6268, %v5765
  %6649 = vst.msk [vmem:[%s3 + $0x5f0] sm:$0xf] %vm6268, %v5766
  %6650 = vst.msk [vmem:[%s3 + $0x5f4] sm:$0xf] %vm6268, %v5767
  %6651 = vst.msk [vmem:[%s3 + $0x5f8] sm:$0xf] %vm6268, %v5768
  %6652 = vst.msk [vmem:[%s3 + $0x5fc] sm:$0xf] %vm6268, %v5769
  %6653 = vst.msk [vmem:[%s3 + $0x600] sm:$0xf] %vm6268, %v5770
  %6654 = vst.msk [vmem:[%s3 + $0x604] sm:$0xf] %vm6268, %v5771
  %6655 = vst.msk [vmem:[%s3 + $0x608] sm:$0xf] %vm6268, %v5772
  %6656 = vst.msk [vmem:[%s3 + $0x60c] sm:$0xf] %vm6268, %v5773
  %6657 = vst.msk [vmem:[%s3 + $0x610] sm:$0xf] %vm6268, %v5774
  %6658 = vst.msk [vmem:[%s3 + $0x614] sm:$0xf] %vm6268, %v5775
  %6659 = vst.msk [vmem:[%s3 + $0x618] sm:$0xf] %vm6268, %v5776
  %6660 = vst.msk [vmem:[%s3 + $0x61c] sm:$0xf] %vm6268, %v5777
  %6661 = vst.msk [vmem:[%s3 + $0x620] sm:$0xf] %vm6268, %v5778
  %6662 = vst.msk [vmem:[%s3 + $0x624] sm:$0xf] %vm6268, %v5779
  %6663 = vst.msk [vmem:[%s3 + $0x628] sm:$0xf] %vm6268, %v5780
  %6664 = vst.msk [vmem:[%s3 + $0x62c] sm:$0xf] %vm6268, %v5781
  %6665 = vst.msk [vmem:[%s3 + $0x630] sm:$0xf] %vm6268, %v5782
  %6666 = vst.msk [vmem:[%s3 + $0x634] sm:$0xf] %vm6268, %v5783
  %6667 = vst.msk [vmem:[%s3 + $0x638] sm:$0xf] %vm6268, %v5784
  %6668 = vst.msk [vmem:[%s3 + $0x63c] sm:$0xf] %vm6268, %v5785
  %6669 = vst.msk [vmem:[%s3 + $0x640] sm:$0xf] %vm6268, %v5786
  %6670 = vst.msk [vmem:[%s3 + $0x644] sm:$0xf] %vm6268, %v5787
  %6671 = vst.msk [vmem:[%s3 + $0x648] sm:$0xf] %vm6268, %v5788
  %6672 = vst.msk [vmem:[%s3 + $0x64c] sm:$0xf] %vm6268, %v5789
  %6673 = vst.msk [vmem:[%s3 + $0x650] sm:$0xf] %vm6268, %v5790
  %6674 = vst.msk [vmem:[%s3 + $0x654] sm:$0xf] %vm6268, %v5791
  %6675 = vst.msk [vmem:[%s3 + $0x658] sm:$0xf] %vm6268, %v5792
  %6676 = vst.msk [vmem:[%s3 + $0x65c] sm:$0xf] %vm6268, %v5793
  %6677 = vst.msk [vmem:[%s3 + $0x660] sm:$0xf] %vm6268, %v5794
  %6678 = vst.msk [vmem:[%s3 + $0x664] sm:$0xf] %vm6268, %v5795
  %6679 = vst.msk [vmem:[%s3 + $0x668] sm:$0xf] %vm6268, %v5796
  %6680 = vst.msk [vmem:[%s3 + $0x66c] sm:$0xf] %vm6268, %v5797
  %6681 = vst.msk [vmem:[%s3 + $0x670] sm:$0xf] %vm6268, %v5798
  %6682 = vst.msk [vmem:[%s3 + $0x674] sm:$0xf] %vm6268, %v5799
  %6683 = vst.msk [vmem:[%s3 + $0x678] sm:$0xf] %vm6268, %v5800
  %6684 = vst.msk [vmem:[%s3 + $0x67c] sm:$0xf] %vm6268, %v5801
  %6685 = vst.msk [vmem:[%s3 + $0x680] sm:$0xf] %vm6268, %v5802
  %6686 = vst.msk [vmem:[%s3 + $0x684] sm:$0xf] %vm6268, %v5803
  %6687 = vst.msk [vmem:[%s3 + $0x688] sm:$0xf] %vm6268, %v5804
  %6688 = vst.msk [vmem:[%s3 + $0x68c] sm:$0xf] %vm6268, %v5805
  %6689 = vst.msk [vmem:[%s3 + $0x690] sm:$0xf] %vm6268, %v5806
  %6690 = vst.msk [vmem:[%s3 + $0x694] sm:$0xf] %vm6268, %v5807
  %6691 = vst.msk [vmem:[%s3 + $0x698] sm:$0xf] %vm6268, %v5808
  %6692 = vst.msk [vmem:[%s3 + $0x69c] sm:$0xf] %vm6268, %v5809
  %6693 = vst.msk [vmem:[%s3 + $0x6a0] sm:$0xf] %vm6268, %v5810
  %6694 = vst.msk [vmem:[%s3 + $0x6a4] sm:$0xf] %vm6268, %v5811
  %6695 = vst.msk [vmem:[%s3 + $0x6a8] sm:$0xf] %vm6268, %v5812
  %6696 = vst.msk [vmem:[%s3 + $0x6ac] sm:$0xf] %vm6268, %v5813
  %6697 = vst.msk [vmem:[%s3 + $0x6b0] sm:$0xf] %vm6268, %v5814
  %6698 = vst.msk [vmem:[%s3 + $0x6b4] sm:$0xf] %vm6268, %v5815
  %6699 = vst.msk [vmem:[%s3 + $0x6b8] sm:$0xf] %vm6268, %v5816
  %6700 = vst.msk [vmem:[%s3 + $0x6bc] sm:$0xf] %vm6268, %v5817
  %6701 = vst.msk [vmem:[%s3 + $0x6c0] sm:$0xf] %vm6268, %v5818
  %6702 = vst.msk [vmem:[%s3 + $0x6c4] sm:$0xf] %vm6268, %v5819
  %6703 = vst.msk [vmem:[%s3 + $0x6c8] sm:$0xf] %vm6268, %v5820
  %6704 = vst.msk [vmem:[%s3 + $0x6cc] sm:$0xf] %vm6268, %v5821
  %6705 = vst.msk [vmem:[%s3 + $0x6d0] sm:$0xf] %vm6268, %v5822
  %6706 = vst.msk [vmem:[%s3 + $0x6d4] sm:$0xf] %vm6268, %v5823
  %6707 = vst.msk [vmem:[%s3 + $0x6d8] sm:$0xf] %vm6268, %v5824
  %6708 = vst.msk [vmem:[%s3 + $0x6dc] sm:$0xf] %vm6268, %v5825
  %6709 = vst.msk [vmem:[%s3 + $0x6e0] sm:$0xf] %vm6268, %v5826
  // Predicated region
  $region14: #{gt_net_forward.5} parent=0 // pred_check
    _
  $region15: #{gt_net_forward.5} parent=0 // pred_check_branch
    %6711 = sbr.rel (0) target = $region17
  $region16: #{gt_net_forward.5} parent=0 // pred_region
    _
  $region17: #{gt_net_forward.5} parent=0 // pred_fallthru
    _
  // Predicated region
  $region18: #{gt_net_forward.5} parent=0 // pred_check
    _
  $region19: #{gt_net_forward.5} parent=0 // pred_check_branch
    %6713 = sbr.rel (0) target = $region21
  $region20: #{gt_net_forward.5} parent=0 // pred_region
    _
  $region21: #{gt_net_forward.5} parent=0 // pred_fallthru
    _

// kernel: gt_net_forward.6
$region0: #{gt_net_forward.6}
  #allocation0 [shape = 'u32[]', space=smem, size = 0x4, offset = 0x4, fixed_abs, tag = 'smem constant byte address 0x4 - core index']
  #allocation1 [shape = 'u32[144,128]{1,0:T(1,128)}', space=vmem, size = 0x12000, scoped, tag = 'internal scratch']
  %s0 = inlined_call_operand.vmem [shape: bf16[968,128], index: 0, kind: input, shape index: {}]
  %s1 = inlined_call_operand.vmem [shape: bf16[128,32], index: 1, kind: input, shape index: {}]
  %s2 = inlined_call_operand.vmem [shape: f32[1,32], index: 2, kind: input, shape index: {}]
  %s3 = inlined_call_operand.vmem [shape: bf16[968,32], index: 3, kind: output, shape index: {}]
  %s4 = sld [smem:[#allocation0]]
  $region22: #{gt_net_forward.6} parent=0
    _
  %s6 = ssub.s32 1, %s4
  %s7 = scalar_select 0, %s6, %s4
  // Predicated region
  $region2: #{gt_net_forward.6} parent=0 // pred_check
    _
  $region3: #{gt_net_forward.6} parent=0 // pred_check_branch
    %9 = sbr.rel (0) target = $region5
  $region4: #{gt_net_forward.6} parent=0 // pred_region
    _
  $region5: #{gt_net_forward.6} parent=0 // pred_fallthru
    _
  // Predicated region
  $region6: #{gt_net_forward.6} parent=0 // pred_check
    _
  $region7: #{gt_net_forward.6} parent=0 // pred_check_branch
    %11 = sbr.rel (0) target = $region9
  $region8: #{gt_net_forward.6} parent=0 // pred_region
    _
  $region9: #{gt_net_forward.6} parent=0 // pred_fallthru
    _
  // Predicated region
  $region10: #{gt_net_forward.6} parent=0 // pred_check
    _
  $region11: #{gt_net_forward.6} parent=0 // pred_check_branch
    %13 = sbr.rel (0) target = $region13
  $region12: #{gt_net_forward.6} parent=0 // pred_region
    _
  $region13: #{gt_net_forward.6} parent=0 // pred_fallthru
    _
  %v15 = vld [vmem:[%s0] sm:$0xf]
  %v16 = vld [vmem:[%s0 + $0x4] sm:$0xf]
  %v17 = vld [vmem:[%s0 + $0x8] sm:$0xf]
  %v18 = vld [vmem:[%s0 + $0xc] sm:$0xf]
  %v19 = vld [vmem:[%s0 + $0x10] sm:$0xf]
  %v20 = vld [vmem:[%s0 + $0x14] sm:$0xf]
  %v21 = vld [vmem:[%s0 + $0x18] sm:$0xf]
  %v22 = vld [vmem:[%s0 + $0x1c] sm:$0xf]
  %v23 = vld [vmem:[%s0 + $0x20] sm:$0xf]
  %v24 = vld [vmem:[%s0 + $0x24] sm:$0xf]
  %v25 = vld [vmem:[%s0 + $0x28] sm:$0xf]
  %v26 = vld [vmem:[%s0 + $0x2c] sm:$0xf]
  %v27 = vld [vmem:[%s0 + $0x30] sm:$0xf]
  %v28 = vld [vmem:[%s0 + $0x34] sm:$0xf]
  %v29 = vld [vmem:[%s0 + $0x38] sm:$0xf]
  %v30 = vld [vmem:[%s0 + $0x3c] sm:$0xf]
  %v31 = vld [vmem:[%s0 + $0x40] sm:$0xf]
  %v32 = vld [vmem:[%s0 + $0x44] sm:$0xf]
  %v33 = vld [vmem:[%s0 + $0x48] sm:$0xf]
  %v34 = vld [vmem:[%s0 + $0x4c] sm:$0xf]
  %v35 = vld [vmem:[%s0 + $0x50] sm:$0xf]
  %v36 = vld [vmem:[%s0 + $0x54] sm:$0xf]
  %v37 = vld [vmem:[%s0 + $0x58] sm:$0xf]
  %v38 = vld [vmem:[%s0 + $0x5c] sm:$0xf]
  %v39 = vld [vmem:[%s0 + $0x60] sm:$0xf]
  %v40 = vld [vmem:[%s0 + $0x64] sm:$0xf]
  %v41 = vld [vmem:[%s0 + $0x68] sm:$0xf]
  %v42 = vld [vmem:[%s0 + $0x6c] sm:$0xf]
  %v43 = vld [vmem:[%s0 + $0x70] sm:$0xf]
  %v44 = vld [vmem:[%s0 + $0x74] sm:$0xf]
  %v45 = vld [vmem:[%s0 + $0x78] sm:$0xf]
  %v46 = vld [vmem:[%s0 + $0x7c] sm:$0xf]
  %v47 = vld [vmem:[%s0 + $0x80] sm:$0xf]
  %v48 = vld [vmem:[%s0 + $0x84] sm:$0xf]
  %v49 = vld [vmem:[%s0 + $0x88] sm:$0xf]
  %v50 = vld [vmem:[%s0 + $0x8c] sm:$0xf]
  %v51 = vld [vmem:[%s0 + $0x90] sm:$0xf]
  %v52 = vld [vmem:[%s0 + $0x94] sm:$0xf]
  %v53 = vld [vmem:[%s0 + $0x98] sm:$0xf]
  %v54 = vld [vmem:[%s0 + $0x9c] sm:$0xf]
  %v55 = vld [vmem:[%s0 + $0xa0] sm:$0xf]
  %v56 = vld [vmem:[%s0 + $0xa4] sm:$0xf]
  %v57 = vld [vmem:[%s0 + $0xa8] sm:$0xf]
  %v58 = vld [vmem:[%s0 + $0xac] sm:$0xf]
  %v59 = vld [vmem:[%s0 + $0xb0] sm:$0xf]
  %v60 = vld [vmem:[%s0 + $0xb4] sm:$0xf]
  %v61 = vld [vmem:[%s0 + $0xb8] sm:$0xf]
  %v62 = vld [vmem:[%s0 + $0xbc] sm:$0xf]
  %v63 = vld [vmem:[%s0 + $0xc0] sm:$0xf]
  %v64 = vld [vmem:[%s0 + $0xc4] sm:$0xf]
  %v65 = vld [vmem:[%s0 + $0xc8] sm:$0xf]
  %v66 = vld [vmem:[%s0 + $0xcc] sm:$0xf]
  %v67 = vld [vmem:[%s0 + $0xd0] sm:$0xf]
  %v68 = vld [vmem:[%s0 + $0xd4] sm:$0xf]
  %v69 = vld [vmem:[%s0 + $0xd8] sm:$0xf]
  %v70 = vld [vmem:[%s0 + $0xdc] sm:$0xf]
  %v71 = vld [vmem:[%s0 + $0xe0] sm:$0xf]
  %v72 = vld [vmem:[%s0 + $0xe4] sm:$0xf]
  %v73 = vld [vmem:[%s0 + $0xe8] sm:$0xf]
  %v74 = vld [vmem:[%s0 + $0xec] sm:$0xf]
  %v75 = vld [vmem:[%s0 + $0xf0] sm:$0xf]
  %v76 = vld [vmem:[%s0 + $0xf4] sm:$0xf]
  %v77 = vld [vmem:[%s0 + $0xf8] sm:$0xf]
  %v78 = vld [vmem:[%s0 + $0xfc] sm:$0xf]
  %v79 = vld [vmem:[%s0 + $0x100] sm:$0xf]
  %v80 = vld [vmem:[%s0 + $0x104] sm:$0xf]
  %v81 = vld [vmem:[%s0 + $0x108] sm:$0xf]
  %v82 = vld [vmem:[%s0 + $0x10c] sm:$0xf]
  %v83 = vld [vmem:[%s0 + $0x110] sm:$0xf]
  %v84 = vld [vmem:[%s0 + $0x114] sm:$0xf]
  %v85 = vld [vmem:[%s0 + $0x118] sm:$0xf]
  %v86 = vld [vmem:[%s0 + $0x11c] sm:$0xf]
  %v87 = vld [vmem:[%s0 + $0x120] sm:$0xf]
  %v88 = vld [vmem:[%s0 + $0x124] sm:$0xf]
  %v89 = vld [vmem:[%s0 + $0x128] sm:$0xf]
  %v90 = vld [vmem:[%s0 + $0x12c] sm:$0xf]
  %v91 = vld [vmem:[%s0 + $0x130] sm:$0xf]
  %v92 = vld [vmem:[%s0 + $0x134] sm:$0xf]
  %v93 = vld [vmem:[%s0 + $0x138] sm:$0xf]
  %v94 = vld [vmem:[%s0 + $0x13c] sm:$0xf]
  %v95 = vld [vmem:[%s0 + $0x140] sm:$0xf]
  %v96 = vld [vmem:[%s0 + $0x144] sm:$0xf]
  %v97 = vld [vmem:[%s0 + $0x148] sm:$0xf]
  %v98 = vld [vmem:[%s0 + $0x14c] sm:$0xf]
  %v99 = vld [vmem:[%s0 + $0x150] sm:$0xf]
  %v100 = vld [vmem:[%s0 + $0x154] sm:$0xf]
  %v101 = vld [vmem:[%s0 + $0x158] sm:$0xf]
  %v102 = vld [vmem:[%s0 + $0x15c] sm:$0xf]
  %v103 = vld [vmem:[%s0 + $0x160] sm:$0xf]
  %v104 = vld [vmem:[%s0 + $0x164] sm:$0xf]
  %v105 = vld [vmem:[%s0 + $0x168] sm:$0xf]
  %v106 = vld [vmem:[%s0 + $0x16c] sm:$0xf]
  %v107 = vld [vmem:[%s0 + $0x170] sm:$0xf]
  %v108 = vld [vmem:[%s0 + $0x174] sm:$0xf]
  %v109 = vld [vmem:[%s0 + $0x178] sm:$0xf]
  %v110 = vld [vmem:[%s0 + $0x17c] sm:$0xf]
  %v111 = vld [vmem:[%s0 + $0x180] sm:$0xf]
  %v112 = vld [vmem:[%s0 + $0x184] sm:$0xf]
  %v113 = vld [vmem:[%s0 + $0x188] sm:$0xf]
  %v114 = vld [vmem:[%s0 + $0x18c] sm:$0xf]
  %v115 = vld [vmem:[%s0 + $0x190] sm:$0xf]
  %v116 = vld [vmem:[%s0 + $0x194] sm:$0xf]
  %v117 = vld [vmem:[%s0 + $0x198] sm:$0xf]
  %v118 = vld [vmem:[%s0 + $0x19c] sm:$0xf]
  %v119 = vld [vmem:[%s0 + $0x1a0] sm:$0xf]
  %v120 = vld [vmem:[%s0 + $0x1a4] sm:$0xf]
  %v121 = vld [vmem:[%s0 + $0x1a8] sm:$0xf]
  %v122 = vld [vmem:[%s0 + $0x1ac] sm:$0xf]
  %v123 = vld [vmem:[%s0 + $0x1b0] sm:$0xf]
  %v124 = vld [vmem:[%s0 + $0x1b4] sm:$0xf]
  %v125 = vld [vmem:[%s0 + $0x1b8] sm:$0xf]
  %v126 = vld [vmem:[%s0 + $0x1bc] sm:$0xf]
  %v127 = vld [vmem:[%s0 + $0x1c0] sm:$0xf]
  %v128 = vld [vmem:[%s0 + $0x1c4] sm:$0xf]
  %v129 = vld [vmem:[%s0 + $0x1c8] sm:$0xf]
  %v130 = vld [vmem:[%s0 + $0x1cc] sm:$0xf]
  %v131 = vld [vmem:[%s0 + $0x1d0] sm:$0xf]
  %v132 = vld [vmem:[%s0 + $0x1d4] sm:$0xf]
  %v133 = vld [vmem:[%s0 + $0x1d8] sm:$0xf]
  %v134 = vld [vmem:[%s0 + $0x1dc] sm:$0xf]
  %v135 = vld [vmem:[%s0 + $0x1e0] sm:$0xf]
  %v136 = vld [vmem:[%s1] sm:$0xf]
  %v137 = vld [vmem:[%s1 + $0x4] sm:$0xf]
  %v138 = vld [vmem:[%s1 + $0x8] sm:$0xf]
  %v139 = vld [vmem:[%s1 + $0xc] sm:$0xf]
  %v140 = vld [vmem:[%s1 + $0x10] sm:$0xf]
  %v141 = vld [vmem:[%s1 + $0x14] sm:$0xf]
  %v142 = vld [vmem:[%s1 + $0x18] sm:$0xf]
  %v143 = vld [vmem:[%s1 + $0x1c] sm:$0xf]
  %v144 = vld [vmem:[%s1 + $0x20] sm:$0xf]
  %v145 = vld [vmem:[%s1 + $0x24] sm:$0xf]
  %v146 = vld [vmem:[%s1 + $0x28] sm:$0xf]
  %v147 = vld [vmem:[%s1 + $0x2c] sm:$0xf]
  %v148 = vld [vmem:[%s1 + $0x30] sm:$0xf]
  %v149 = vld [vmem:[%s1 + $0x34] sm:$0xf]
  %v150 = vld [vmem:[%s1 + $0x38] sm:$0xf]
  %v151 = vld [vmem:[%s1 + $0x3c] sm:$0xf]
  %v152 = vld [vmem:[%s2] sm:$0x1]
  %v154 = vlaneseq
  %v155 = vshrl.u32 %v154, 7
  %v156 = vsub.s32 0, %v155
  %v157 = vrot.slane %v152, %v156
  %v280 = vunpack.c.l.b16 %v15
  %v281 = vunpack.c.l.b16 %v16
  %v282 = vunpack.c.l.b16 %v17
  %v283 = vunpack.c.l.b16 %v18
  %v284 = vunpack.c.l.b16 %v19
  %v285 = vunpack.c.l.b16 %v20
  %v286 = vunpack.c.l.b16 %v21
  %v287 = vunpack.c.l.b16 %v22
  %v288 = vunpack.c.l.b16 %v23
  %v289 = vunpack.c.l.b16 %v24
  %v290 = vunpack.c.l.b16 %v25
  %v291 = vunpack.c.l.b16 %v26
  %v292 = vunpack.c.l.b16 %v27
  %v293 = vunpack.c.l.b16 %v28
  %v294 = vunpack.c.l.b16 %v29
  %v295 = vunpack.c.l.b16 %v30
  %v296 = vunpack.c.l.b16 %v31
  %v297 = vunpack.c.l.b16 %v32
  %v298 = vunpack.c.l.b16 %v33
  %v299 = vunpack.c.l.b16 %v34
  %v300 = vunpack.c.l.b16 %v35
  %v301 = vunpack.c.l.b16 %v36
  %v302 = vunpack.c.l.b16 %v37
  %v303 = vunpack.c.l.b16 %v38
  %v304 = vunpack.c.l.b16 %v39
  %v305 = vunpack.c.l.b16 %v40
  %v306 = vunpack.c.l.b16 %v41
  %v307 = vunpack.c.l.b16 %v42
  %v308 = vunpack.c.l.b16 %v43
  %v309 = vunpack.c.l.b16 %v44
  %v310 = vunpack.c.l.b16 %v45
  %v311 = vunpack.c.l.b16 %v46
  %v312 = vunpack.c.l.b16 %v47
  %v313 = vunpack.c.l.b16 %v48
  %v314 = vunpack.c.l.b16 %v49
  %v315 = vunpack.c.l.b16 %v50
  %v316 = vunpack.c.l.b16 %v51
  %v317 = vunpack.c.l.b16 %v52
  %v318 = vunpack.c.l.b16 %v53
  %v319 = vunpack.c.l.b16 %v54
  %v320 = vunpack.c.l.b16 %v55
  %v321 = vunpack.c.l.b16 %v56
  %v322 = vunpack.c.l.b16 %v57
  %v323 = vunpack.c.l.b16 %v58
  %v324 = vunpack.c.l.b16 %v59
  %v325 = vunpack.c.l.b16 %v60
  %v326 = vunpack.c.l.b16 %v61
  %v327 = vunpack.c.l.b16 %v62
  %v328 = vunpack.c.l.b16 %v63
  %v329 = vunpack.c.l.b16 %v64
  %v330 = vunpack.c.l.b16 %v65
  %v331 = vunpack.c.l.b16 %v66
  %v332 = vunpack.c.l.b16 %v67
  %v333 = vunpack.c.l.b16 %v68
  %v334 = vunpack.c.l.b16 %v69
  %v335 = vunpack.c.l.b16 %v70
  %v336 = vunpack.c.l.b16 %v71
  %v337 = vunpack.c.l.b16 %v72
  %v338 = vunpack.c.l.b16 %v73
  %v339 = vunpack.c.l.b16 %v74
  %v340 = vunpack.c.l.b16 %v75
  %v341 = vunpack.c.l.b16 %v76
  %v342 = vunpack.c.l.b16 %v77
  %v343 = vunpack.c.l.b16 %v78
  %v344 = vunpack.c.l.b16 %v79
  %v345 = vunpack.c.l.b16 %v80
  %v346 = vunpack.c.l.b16 %v81
  %v347 = vunpack.c.l.b16 %v82
  %v348 = vunpack.c.l.b16 %v83
  %v349 = vunpack.c.l.b16 %v84
  %v350 = vunpack.c.l.b16 %v85
  %v351 = vunpack.c.l.b16 %v86
  %v352 = vunpack.c.l.b16 %v87
  %v353 = vunpack.c.l.b16 %v88
  %v354 = vunpack.c.l.b16 %v89
  %v355 = vunpack.c.l.b16 %v90
  %v356 = vunpack.c.l.b16 %v91
  %v357 = vunpack.c.l.b16 %v92
  %v358 = vunpack.c.l.b16 %v93
  %v359 = vunpack.c.l.b16 %v94
  %v360 = vunpack.c.l.b16 %v95
  %v361 = vunpack.c.l.b16 %v96
  %v362 = vunpack.c.l.b16 %v97
  %v363 = vunpack.c.l.b16 %v98
  %v364 = vunpack.c.l.b16 %v99
  %v365 = vunpack.c.l.b16 %v100
  %v366 = vunpack.c.l.b16 %v101
  %v367 = vunpack.c.l.b16 %v102
  %v368 = vunpack.c.l.b16 %v103
  %v369 = vunpack.c.l.b16 %v104
  %v370 = vunpack.c.l.b16 %v105
  %v371 = vunpack.c.l.b16 %v106
  %v372 = vunpack.c.l.b16 %v107
  %v373 = vunpack.c.l.b16 %v108
  %v374 = vunpack.c.l.b16 %v109
  %v375 = vunpack.c.l.b16 %v110
  %v376 = vunpack.c.l.b16 %v111
  %v377 = vunpack.c.l.b16 %v112
  %v378 = vunpack.c.l.b16 %v113
  %v379 = vunpack.c.l.b16 %v114
  %v380 = vunpack.c.l.b16 %v115
  %v381 = vunpack.c.l.b16 %v116
  %v382 = vunpack.c.l.b16 %v117
  %v383 = vunpack.c.l.b16 %v118
  %v384 = vunpack.c.l.b16 %v119
  %v385 = vunpack.c.l.b16 %v120
  %v386 = vunpack.c.l.b16 %v121
  %v387 = vunpack.c.l.b16 %v122
  %v388 = vunpack.c.l.b16 %v123
  %v389 = vunpack.c.l.b16 %v124
  %v390 = vunpack.c.l.b16 %v125
  %v391 = vunpack.c.l.b16 %v126
  %v392 = vunpack.c.l.b16 %v127
  %v393 = vunpack.c.l.b16 %v128
  %v394 = vunpack.c.l.b16 %v129
  %v395 = vunpack.c.l.b16 %v130
  %v396 = vunpack.c.l.b16 %v131
  %v397 = vunpack.c.l.b16 %v132
  %v398 = vunpack.c.l.b16 %v133
  %v399 = vunpack.c.l.b16 %v134
  %v400 = vunpack.c.l.b16 %v135
  %v401 = vpack.c.b16 %v281, %v280
  %v402 = vpack.c.b16 %v283, %v282
  %v403 = vpack.c.b16 %v285, %v284
  %v404 = vpack.c.b16 %v287, %v286
  %v405 = vpack.c.b16 %v289, %v288
  %v406 = vpack.c.b16 %v291, %v290
  %v407 = vpack.c.b16 %v293, %v292
  %v408 = vpack.c.b16 %v295, %v294
  %v409 = vpack.c.b16 %v297, %v296
  %v410 = vpack.c.b16 %v299, %v298
  %v411 = vpack.c.b16 %v301, %v300
  %v412 = vpack.c.b16 %v303, %v302
  %v413 = vpack.c.b16 %v305, %v304
  %v414 = vpack.c.b16 %v307, %v306
  %v415 = vpack.c.b16 %v309, %v308
  %v416 = vpack.c.b16 %v311, %v310
  %v417 = vpack.c.b16 %v313, %v312
  %v418 = vpack.c.b16 %v315, %v314
  %v419 = vpack.c.b16 %v317, %v316
  %v420 = vpack.c.b16 %v319, %v318
  %v421 = vpack.c.b16 %v321, %v320
  %v422 = vpack.c.b16 %v323, %v322
  %v423 = vpack.c.b16 %v325, %v324
  %v424 = vpack.c.b16 %v327, %v326
  %v425 = vpack.c.b16 %v329, %v328
  %v426 = vpack.c.b16 %v331, %v330
  %v427 = vpack.c.b16 %v333, %v332
  %v428 = vpack.c.b16 %v335, %v334
  %v429 = vpack.c.b16 %v337, %v336
  %v430 = vpack.c.b16 %v339, %v338
  %v431 = vpack.c.b16 %v341, %v340
  %v432 = vpack.c.b16 %v343, %v342
  %v433 = vpack.c.b16 %v345, %v344
  %v434 = vpack.c.b16 %v347, %v346
  %v435 = vpack.c.b16 %v349, %v348
  %v436 = vpack.c.b16 %v351, %v350
  %v437 = vpack.c.b16 %v353, %v352
  %v438 = vpack.c.b16 %v355, %v354
  %v439 = vpack.c.b16 %v357, %v356
  %v440 = vpack.c.b16 %v359, %v358
  %v441 = vpack.c.b16 %v361, %v360
  %v442 = vpack.c.b16 %v363, %v362
  %v443 = vpack.c.b16 %v365, %v364
  %v444 = vpack.c.b16 %v367, %v366
  %v445 = vpack.c.b16 %v369, %v368
  %v446 = vpack.c.b16 %v371, %v370
  %v447 = vpack.c.b16 %v373, %v372
  %v448 = vpack.c.b16 %v375, %v374
  %v449 = vpack.c.b16 %v377, %v376
  %v450 = vpack.c.b16 %v379, %v378
  %v451 = vpack.c.b16 %v381, %v380
  %v452 = vpack.c.b16 %v383, %v382
  %v453 = vpack.c.b16 %v385, %v384
  %v454 = vpack.c.b16 %v387, %v386
  %v455 = vpack.c.b16 %v389, %v388
  %v456 = vpack.c.b16 %v391, %v390
  %v457 = vpack.c.b16 %v393, %v392
  %v458 = vpack.c.b16 %v395, %v394
  %v459 = vpack.c.b16 %v397, %v396
  %v460 = vpack.c.b16 %v399, %v398
  %v461 = vpack.c.b16 %v400, %v400
  %v539 = vunpack.c.l.b16 %v136
  %v540 = vunpack.c.l.b16 %v137
  %v541 = vunpack.c.l.b16 %v138
  %v542 = vunpack.c.l.b16 %v139
  %v543 = vunpack.c.l.b16 %v140
  %v544 = vunpack.c.l.b16 %v141
  %v545 = vunpack.c.l.b16 %v142
  %v546 = vunpack.c.l.b16 %v143
  %v547 = vunpack.c.l.b16 %v144
  %v548 = vunpack.c.l.b16 %v145
  %v549 = vunpack.c.l.b16 %v146
  %v550 = vunpack.c.l.b16 %v147
  %v551 = vunpack.c.l.b16 %v148
  %v552 = vunpack.c.l.b16 %v149
  %v553 = vunpack.c.l.b16 %v150
  %v554 = vunpack.c.l.b16 %v151
  %v555 = vpack.c.b16 %v540, %v539
  %v556 = vpack.c.b16 %v542, %v541
  %v557 = vpack.c.b16 %v544, %v543
  %v558 = vpack.c.b16 %v546, %v545
  %v559 = vpack.c.b16 %v548, %v547
  %v560 = vpack.c.b16 %v550, %v549
  %v561 = vpack.c.b16 %v552, %v551
  %v562 = vpack.c.b16 %v554, %v553
  %571 = vmatprep.subr.bf16.mxu0 0
  %572 = vmatpush1.bf16.msra.mxu0 %v555
  %573 = vmatprep.subr.bf16.mxu0 0
  %574 = vmatpush1.bf16.msra.mxu0 %v556
  %575 = vmatprep.subr.bf16.mxu0 0
  %576 = vmatpush1.bf16.msra.mxu0 %v557
  %577 = vmatprep.subr.bf16.mxu0 0
  %578 = vmatpush1.bf16.msra.mxu0 %v558
  %579 = vmatprep.subr.bf16.mxu0 0
  %580 = vmatpush1.bf16.msra.mxu0 %v559
  %581 = vmatprep.subr.bf16.mxu0 0
  %582 = vmatpush1.bf16.msra.mxu0 %v560
  %583 = vmatprep.subr.bf16.mxu0 0
  %584 = vmatpush1.bf16.msra.mxu0 %v561
  %585 = vmatprep.subr.bf16.mxu0 0
  %586 = vmatpush1.bf16.msra.mxu0 %v562
  %587 = vmatprep.subr.bf16.mxu0 0
  %588 = vmatpush1.bf16.msra.mxu0 0
  %589 = vmatprep.subr.bf16.mxu0 0
  %590 = vmatpush1.bf16.msra.mxu0 0
  %591 = vmatprep.subr.bf16.mxu0 0
  %592 = vmatpush1.bf16.msra.mxu0 0
  %593 = vmatprep.subr.bf16.mxu0 0
  %594 = vmatpush1.bf16.msra.mxu0 0
  %595 = vmatprep.subr.bf16.mxu0 0
  %596 = vmatpush1.bf16.msra.mxu0 0
  %597 = vmatprep.subr.bf16.mxu0 0
  %598 = vmatpush1.bf16.msra.mxu0 0
  %599 = vmatprep.subr.bf16.mxu0 0
  %600 = vmatpush1.bf16.msra.mxu0 0
  %601 = vmatprep.subr.bf16.mxu0 0
  %602 = vmatpush1.bf16.msra.mxu0 0
  %603 = vmatprep.mubr.bf16.mxu0 0
  %604 = vmatmul.mubr.bf16.gmra.mrb[0].mxu0 %v401
  %v605 = vpop.f32.mrb[0].mxu0
  %v606 = vadd.f32 %v157, %v605
  %v607 = vpop.f32.mrb[0].mxu0
  %v608 = vpop.f32.mrb[0].mxu0
  %v609 = vadd.f32 %v157, %v608
  %v610 = vpop.f32.mrb[0].mxu0
  %611 = vmatprep.mubr.bf16.mxu0 0
  %612 = vmatmul.mubr.bf16.gmra.mrb[0].mxu0 %v402
  %v613 = vpop.f32.mrb[0].mxu0
  %v614 = vadd.f32 %v157, %v613
  %v615 = vpop.f32.mrb[0].mxu0
  %v616 = vpop.f32.mrb[0].mxu0
  %v617 = vadd.f32 %v157, %v616
  %v618 = vpop.f32.mrb[0].mxu0
  %619 = vmatprep.mubr.bf16.mxu0 0
  %620 = vmatmul.mubr.bf16.gmra.mrb[0].mxu0 %v403
  %v621 = vpop.f32.mrb[0].mxu0
  %v622 = vadd.f32 %v157, %v621
  %v623 = vpop.f32.mrb[0].mxu0
  %v624 = vpop.f32.mrb[0].mxu0
  %v625 = vadd.f32 %v157, %v624
  %v626 = vpop.f32.mrb[0].mxu0
  %627 = vmatprep.mubr.bf16.mxu0 0
  %628 = vmatmul.mubr.bf16.gmra.mrb[0].mxu0 %v404
  %v629 = vpop.f32.mrb[0].mxu0
  %v630 = vadd.f32 %v157, %v629
  %v631 = vpop.f32.mrb[0].mxu0
  %v632 = vpop.f32.mrb[0].mxu0
  %v633 = vadd.f32 %v157, %v632
  %v634 = vpop.f32.mrb[0].mxu0
  %635 = vmatprep.mubr.bf16.mxu0 0
  %636 = vmatmul.mubr.bf16.gmra.mrb[0].mxu0 %v405
  %v637 = vpop.f32.mrb[0].mxu0
  %v638 = vadd.f32 %v157, %v637
  %v639 = vpop.f32.mrb[0].mxu0
  %v640 = vpop.f32.mrb[0].mxu0
  %v641 = vadd.f32 %v157, %v640
  %v642 = vpop.f32.mrb[0].mxu0
  %643 = vmatprep.mubr.bf16.mxu0 0
  %644 = vmatmul.mubr.bf16.gmra.mrb[0].mxu0 %v406
  %v645 = vpop.f32.mrb[0].mxu0
  %v646 = vadd.f32 %v157, %v645
  %v647 = vpop.f32.mrb[0].mxu0
  %v648 = vpop.f32.mrb[0].mxu0
  %v649 = vadd.f32 %v157, %v648
  %v650 = vpop.f32.mrb[0].mxu0
  %651 = vmatprep.mubr.bf16.mxu0 0
  %652 = vmatmul.mubr.bf16.gmra.mrb[0].mxu0 %v407
  %v653 = vpop.f32.mrb[0].mxu0
  %v654 = vadd.f32 %v157, %v653
  %v655 = vpop.f32.mrb[0].mxu0
  %v656 = vpop.f32.mrb[0].mxu0
  %v657 = vadd.f32 %v157, %v656
  %v658 = vpop.f32.mrb[0].mxu0
  %659 = vmatprep.mubr.bf16.mxu0 0
  %660 = vmatmul.mubr.bf16.gmra.mrb[0].mxu0 %v408
  %v661 = vpop.f32.mrb[0].mxu0
  %v662 = vadd.f32 %v157, %v661
  %v663 = vpop.f32.mrb[0].mxu0
  %v664 = vpop.f32.mrb[0].mxu0
  %v665 = vadd.f32 %v157, %v664
  %v666 = vpop.f32.mrb[0].mxu0
  %667 = vmatprep.mubr.bf16.mxu0 0
  %668 = vmatmul.mubr.bf16.gmra.mrb[0].mxu0 %v409
  %v669 = vpop.f32.mrb[0].mxu0
  %v670 = vadd.f32 %v157, %v669
  %v671 = vpop.f32.mrb[0].mxu0
  %v672 = vpop.f32.mrb[0].mxu0
  %v673 = vadd.f32 %v157, %v672
  %v674 = vpop.f32.mrb[0].mxu0
  %675 = vmatprep.mubr.bf16.mxu0 0
  %676 = vmatmul.mubr.bf16.gmra.mrb[0].mxu0 %v410
  %v677 = vpop.f32.mrb[0].mxu0
  %v678 = vadd.f32 %v157, %v677
  %v679 = vpop.f32.mrb[0].mxu0
  %v680 = vpop.f32.mrb[0].mxu0
  %v681 = vadd.f32 %v157, %v680
  %v682 = vpop.f32.mrb[0].mxu0
  %683 = vmatprep.mubr.bf16.mxu0 0
  %684 = vmatmul.mubr.bf16.gmra.mrb[0].mxu0 %v411
  %v685 = vpop.f32.mrb[0].mxu0
  %v686 = vadd.f32 %v157, %v685
  %v687 = vpop.f32.mrb[0].mxu0
  %v688 = vpop.f32.mrb[0].mxu0
  %v689 = vadd.f32 %v157, %v688
  %v690 = vpop.f32.mrb[0].mxu0
  %691 = vmatprep.mubr.bf16.mxu0 0
  %692 = vmatmul.mubr.bf16.gmra.mrb[0].mxu0 %v412
  %v693 = vpop.f32.mrb[0].mxu0
  %v694 = vadd.f32 %v157, %v693
  %v695 = vpop.f32.mrb[0].mxu0
  %v696 = vpop.f32.mrb[0].mxu0
  %v697 = vadd.f32 %v157, %v696
  %v698 = vpop.f32.mrb[0].mxu0
  %699 = vmatprep.mubr.bf16.mxu0 0
  %700 = vmatmul.mubr.bf16.gmra.mrb[0].mxu0 %v413
  %v701 = vpop.f32.mrb[0].mxu0
  %v702 = vadd.f32 %v157, %v701
  %v703 = vpop.f32.mrb[0].mxu0
  %v704 = vpop.f32.mrb[0].mxu0
  %v705 = vadd.f32 %v157, %v704
  %v706 = vpop.f32.mrb[0].mxu0
  %707 = vmatprep.mubr.bf16.mxu0 0
  %708 = vmatmul.mubr.bf16.gmra.mrb[0].mxu0 %v414
  %v709 = vpop.f32.mrb[0].mxu0
  %v710 = vadd.f32 %v157, %v709
  %v711 = vpop.f32.mrb[0].mxu0
  %v712 = vpop.f32.mrb[0].mxu0
  %v713 = vadd.f32 %v157, %v712
  %v714 = vpop.f32.mrb[0].mxu0
  %715 = vmatprep.mubr.bf16.mxu0 0
  %716 = vmatmul.mubr.bf16.gmra.mrb[0].mxu0 %v415
  %v717 = vpop.f32.mrb[0].mxu0
  %v718 = vadd.f32 %v157, %v717
  %v719 = vpop.f32.mrb[0].mxu0
  %v720 = vpop.f32.mrb[0].mxu0
  %v721 = vadd.f32 %v157, %v720
  %v722 = vpop.f32.mrb[0].mxu0
  %723 = vmatprep.mubr.bf16.mxu0 0
  %724 = vmatmul.mubr.bf16.gmra.mrb[0].mxu0 %v416
  %v725 = vpop.f32.mrb[0].mxu0
  %v726 = vadd.f32 %v157, %v725
  %v727 = vpop.f32.mrb[0].mxu0
  %v728 = vpop.f32.mrb[0].mxu0
  %v729 = vadd.f32 %v157, %v728
  %v730 = vpop.f32.mrb[0].mxu0
  %731 = vmatprep.mubr.bf16.mxu0 0
  %732 = vmatmul.mubr.bf16.gmra.mrb[0].mxu0 %v417
  %v733 = vpop.f32.mrb[0].mxu0
  %v734 = vadd.f32 %v157, %v733
  %v735 = vpop.f32.mrb[0].mxu0
  %v736 = vpop.f32.mrb[0].mxu0
  %v737 = vadd.f32 %v157, %v736
  %v738 = vpop.f32.mrb[0].mxu0
  %739 = vmatprep.mubr.bf16.mxu0 0
  %740 = vmatmul.mubr.bf16.gmra.mrb[0].mxu0 %v418
  %v741 = vpop.f32.mrb[0].mxu0
  %v742 = vadd.f32 %v157, %v741
  %v743 = vpop.f32.mrb[0].mxu0
  %v744 = vpop.f32.mrb[0].mxu0
  %v745 = vadd.f32 %v157, %v744
  %v746 = vpop.f32.mrb[0].mxu0
  %747 = vmatprep.mubr.bf16.mxu0 0
  %748 = vmatmul.mubr.bf16.gmra.mrb[0].mxu0 %v419
  %v749 = vpop.f32.mrb[0].mxu0
  %v750 = vadd.f32 %v157, %v749
  %v751 = vpop.f32.mrb[0].mxu0
  %v752 = vpop.f32.mrb[0].mxu0
  %v753 = vadd.f32 %v157, %v752
  %v754 = vpop.f32.mrb[0].mxu0
  %755 = vmatprep.mubr.bf16.mxu0 0
  %756 = vmatmul.mubr.bf16.gmra.mrb[0].mxu0 %v420
  %v757 = vpop.f32.mrb[0].mxu0
  %v758 = vadd.f32 %v157, %v757
  %v759 = vpop.f32.mrb[0].mxu0
  %v760 = vpop.f32.mrb[0].mxu0
  %v761 = vadd.f32 %v157, %v760
  %v762 = vpop.f32.mrb[0].mxu0
  %763 = vmatprep.mubr.bf16.mxu0 0
  %764 = vmatmul.mubr.bf16.gmra.mrb[0].mxu0 %v421
  %v765 = vpop.f32.mrb[0].mxu0
  %v766 = vadd.f32 %v157, %v765
  %v767 = vpop.f32.mrb[0].mxu0
  %v768 = vpop.f32.mrb[0].mxu0
  %v769 = vadd.f32 %v157, %v768
  %v770 = vpop.f32.mrb[0].mxu0
  %771 = vmatprep.mubr.bf16.mxu0 0
  %772 = vmatmul.mubr.bf16.gmra.mrb[0].mxu0 %v422
  %v773 = vpop.f32.mrb[0].mxu0
  %v774 = vadd.f32 %v157, %v773
  %v775 = vpop.f32.mrb[0].mxu0
  %v776 = vpop.f32.mrb[0].mxu0
  %v777 = vadd.f32 %v157, %v776
  %v778 = vpop.f32.mrb[0].mxu0
  %779 = vmatprep.mubr.bf16.mxu0 0
  %780 = vmatmul.mubr.bf16.gmra.mrb[0].mxu0 %v423
  %v781 = vpop.f32.mrb[0].mxu0
  %v782 = vadd.f32 %v157, %v781
  %v783 = vpop.f32.mrb[0].mxu0
  %v784 = vpop.f32.mrb[0].mxu0
  %v785 = vadd.f32 %v157, %v784
  %v786 = vpop.f32.mrb[0].mxu0
  %787 = vmatprep.mubr.bf16.mxu0 0
  %788 = vmatmul.mubr.bf16.gmra.mrb[0].mxu0 %v424
  %v789 = vpop.f32.mrb[0].mxu0
  %v790 = vadd.f32 %v157, %v789
  %v791 = vpop.f32.mrb[0].mxu0
  %v792 = vpop.f32.mrb[0].mxu0
  %v793 = vadd.f32 %v157, %v792
  %v794 = vpop.f32.mrb[0].mxu0
  %795 = vmatprep.mubr.bf16.mxu0 0
  %796 = vmatmul.mubr.bf16.gmra.mrb[0].mxu0 %v425
  %v797 = vpop.f32.mrb[0].mxu0
  %v798 = vadd.f32 %v157, %v797
  %v799 = vpop.f32.mrb[0].mxu0
  %v800 = vpop.f32.mrb[0].mxu0
  %v801 = vadd.f32 %v157, %v800
  %v802 = vpop.f32.mrb[0].mxu0
  %803 = vmatprep.mubr.bf16.mxu0 0
  %804 = vmatmul.mubr.bf16.gmra.mrb[0].mxu0 %v426
  %v805 = vpop.f32.mrb[0].mxu0
  %v806 = vadd.f32 %v157, %v805
  %v807 = vpop.f32.mrb[0].mxu0
  %v808 = vpop.f32.mrb[0].mxu0
  %v809 = vadd.f32 %v157, %v808
  %v810 = vpop.f32.mrb[0].mxu0
  %811 = vmatprep.mubr.bf16.mxu0 0
  %812 = vmatmul.mubr.bf16.gmra.mrb[0].mxu0 %v427
  %v813 = vpop.f32.mrb[0].mxu0
  %v814 = vadd.f32 %v157, %v813
  %v815 = vpop.f32.mrb[0].mxu0
  %v816 = vpop.f32.mrb[0].mxu0
  %v817 = vadd.f32 %v157, %v816
  %v818 = vpop.f32.mrb[0].mxu0
  %819 = vmatprep.mubr.bf16.mxu0 0
  %820 = vmatmul.mubr.bf16.gmra.mrb[0].mxu0 %v428
  %v821 = vpop.f32.mrb[0].mxu0
  %v822 = vadd.f32 %v157, %v821
  %v823 = vpop.f32.mrb[0].mxu0
  %v824 = vpop.f32.mrb[0].mxu0
  %v825 = vadd.f32 %v157, %v824
  %v826 = vpop.f32.mrb[0].mxu0
  %827 = vmatprep.mubr.bf16.mxu0 0
  %828 = vmatmul.mubr.bf16.gmra.mrb[0].mxu0 %v429
  %v829 = vpop.f32.mrb[0].mxu0
  %v830 = vadd.f32 %v157, %v829
  %v831 = vpop.f32.mrb[0].mxu0
  %v832 = vpop.f32.mrb[0].mxu0
  %v833 = vadd.f32 %v157, %v832
  %v834 = vpop.f32.mrb[0].mxu0
  %835 = vmatprep.mubr.bf16.mxu0 0
  %836 = vmatmul.mubr.bf16.gmra.mrb[0].mxu0 %v430
  %v837 = vpop.f32.mrb[0].mxu0
  %v838 = vadd.f32 %v157, %v837
  %v839 = vpop.f32.mrb[0].mxu0
  %v840 = vpop.f32.mrb[0].mxu0
  %v841 = vadd.f32 %v157, %v840
  %v842 = vpop.f32.mrb[0].mxu0
  %843 = vmatprep.mubr.bf16.mxu0 0
  %844 = vmatmul.mubr.bf16.gmra.mrb[0].mxu0 %v431
  %v845 = vpop.f32.mrb[0].mxu0
  %v846 = vadd.f32 %v157, %v845
  %v847 = vpop.f32.mrb[0].mxu0
  %v848 = vpop.f32.mrb[0].mxu0
  %v849 = vadd.f32 %v157, %v848
  %v850 = vpop.f32.mrb[0].mxu0
  %851 = vmatprep.mubr.bf16.mxu0 0
  %852 = vmatmul.mubr.bf16.gmra.mrb[0].mxu0 %v432
  %v853 = vpop.f32.mrb[0].mxu0
  %v854 = vadd.f32 %v157, %v853
  %v855 = vpop.f32.mrb[0].mxu0
  %v856 = vpop.f32.mrb[0].mxu0
  %v857 = vadd.f32 %v157, %v856
  %v858 = vpop.f32.mrb[0].mxu0
  %859 = vmatprep.mubr.bf16.mxu0 0
  %860 = vmatmul.mubr.bf16.gmra.mrb[0].mxu0 %v433
  %v861 = vpop.f32.mrb[0].mxu0
  %v862 = vadd.f32 %v157, %v861
  %v863 = vpop.f32.mrb[0].mxu0
  %v864 = vpop.f32.mrb[0].mxu0
  %v865 = vadd.f32 %v157, %v864
  %v866 = vpop.f32.mrb[0].mxu0
  %867 = vmatprep.mubr.bf16.mxu0 0
  %868 = vmatmul.mubr.bf16.gmra.mrb[0].mxu0 %v434
  %v869 = vpop.f32.mrb[0].mxu0
  %v870 = vadd.f32 %v157, %v869
  %v871 = vpop.f32.mrb[0].mxu0
  %v872 = vpop.f32.mrb[0].mxu0
  %v873 = vadd.f32 %v157, %v872
  %v874 = vpop.f32.mrb[0].mxu0
  %875 = vmatprep.mubr.bf16.mxu0 0
  %876 = vmatmul.mubr.bf16.gmra.mrb[0].mxu0 %v435
  %v877 = vpop.f32.mrb[0].mxu0
  %v878 = vadd.f32 %v157, %v877
  %v879 = vpop.f32.mrb[0].mxu0
  %v880 = vpop.f32.mrb[0].mxu0
  %v881 = vadd.f32 %v157, %v880
  %v882 = vpop.f32.mrb[0].mxu0
  %883 = vmatprep.mubr.bf16.mxu0 0
  %884 = vmatmul.mubr.bf16.gmra.mrb[0].mxu0 %v436
  %v885 = vpop.f32.mrb[0].mxu0
  %v886 = vadd.f32 %v157, %v885
  %v887 = vpop.f32.mrb[0].mxu0
  %v888 = vpop.f32.mrb[0].mxu0
  %v889 = vadd.f32 %v157, %v888
  %v890 = vpop.f32.mrb[0].mxu0
  %891 = vmatprep.mubr.bf16.mxu0 0
  %892 = vmatmul.mubr.bf16.gmra.mrb[0].mxu0 %v437
  %v893 = vpop.f32.mrb[0].mxu0
  %v894 = vadd.f32 %v157, %v893
  %v895 = vpop.f32.mrb[0].mxu0
  %v896 = vpop.f32.mrb[0].mxu0
  %v897 = vadd.f32 %v157, %v896
  %v898 = vpop.f32.mrb[0].mxu0
  %899 = vmatprep.mubr.bf16.mxu0 0
  %900 = vmatmul.mubr.bf16.gmra.mrb[0].mxu0 %v438
  %v901 = vpop.f32.mrb[0].mxu0
  %v902 = vadd.f32 %v157, %v901
  %v903 = vpop.f32.mrb[0].mxu0
  %v904 = vpop.f32.mrb[0].mxu0
  %v905 = vadd.f32 %v157, %v904
  %v906 = vpop.f32.mrb[0].mxu0
  %907 = vmatprep.mubr.bf16.mxu0 0
  %908 = vmatmul.mubr.bf16.gmra.mrb[0].mxu0 %v439
  %v909 = vpop.f32.mrb[0].mxu0
  %v910 = vadd.f32 %v157, %v909
  %v911 = vpop.f32.mrb[0].mxu0
  %v912 = vpop.f32.mrb[0].mxu0
  %v913 = vadd.f32 %v157, %v912
  %v914 = vpop.f32.mrb[0].mxu0
  %915 = vmatprep.mubr.bf16.mxu0 0
  %916 = vmatmul.mubr.bf16.gmra.mrb[0].mxu0 %v440
  %v917 = vpop.f32.mrb[0].mxu0
  %v918 = vadd.f32 %v157, %v917
  %v919 = vpop.f32.mrb[0].mxu0
  %v920 = vpop.f32.mrb[0].mxu0
  %v921 = vadd.f32 %v157, %v920
  %v922 = vpop.f32.mrb[0].mxu0
  %923 = vmatprep.mubr.bf16.mxu0 0
  %924 = vmatmul.mubr.bf16.gmra.mrb[0].mxu0 %v441
  %v925 = vpop.f32.mrb[0].mxu0
  %v926 = vadd.f32 %v157, %v925
  %v927 = vpop.f32.mrb[0].mxu0
  %v928 = vpop.f32.mrb[0].mxu0
  %v929 = vadd.f32 %v157, %v928
  %v930 = vpop.f32.mrb[0].mxu0
  %931 = vmatprep.mubr.bf16.mxu0 0
  %932 = vmatmul.mubr.bf16.gmra.mrb[0].mxu0 %v442
  %v933 = vpop.f32.mrb[0].mxu0
  %v934 = vadd.f32 %v157, %v933
  %v935 = vpop.f32.mrb[0].mxu0
  %v936 = vpop.f32.mrb[0].mxu0
  %v937 = vadd.f32 %v157, %v936
  %v938 = vpop.f32.mrb[0].mxu0
  %939 = vmatprep.mubr.bf16.mxu0 0
  %940 = vmatmul.mubr.bf16.gmra.mrb[0].mxu0 %v443
  %v941 = vpop.f32.mrb[0].mxu0
  %v942 = vadd.f32 %v157, %v941
  %v943 = vpop.f32.mrb[0].mxu0
  %v944 = vpop.f32.mrb[0].mxu0
  %v945 = vadd.f32 %v157, %v944
  %v946 = vpop.f32.mrb[0].mxu0
  %947 = vmatprep.mubr.bf16.mxu0 0
  %948 = vmatmul.mubr.bf16.gmra.mrb[0].mxu0 %v444
  %v949 = vpop.f32.mrb[0].mxu0
  %v950 = vadd.f32 %v157, %v949
  %v951 = vpop.f32.mrb[0].mxu0
  %v952 = vpop.f32.mrb[0].mxu0
  %v953 = vadd.f32 %v157, %v952
  %v954 = vpop.f32.mrb[0].mxu0
  %955 = vmatprep.mubr.bf16.mxu0 0
  %956 = vmatmul.mubr.bf16.gmra.mrb[0].mxu0 %v445
  %v957 = vpop.f32.mrb[0].mxu0
  %v958 = vadd.f32 %v157, %v957
  %v959 = vpop.f32.mrb[0].mxu0
  %v960 = vpop.f32.mrb[0].mxu0
  %v961 = vadd.f32 %v157, %v960
  %v962 = vpop.f32.mrb[0].mxu0
  %963 = vmatprep.mubr.bf16.mxu0 0
  %964 = vmatmul.mubr.bf16.gmra.mrb[0].mxu0 %v446
  %v965 = vpop.f32.mrb[0].mxu0
  %v966 = vadd.f32 %v157, %v965
  %v967 = vpop.f32.mrb[0].mxu0
  %v968 = vpop.f32.mrb[0].mxu0
  %v969 = vadd.f32 %v157, %v968
  %v970 = vpop.f32.mrb[0].mxu0
  %971 = vmatprep.mubr.bf16.mxu0 0
  %972 = vmatmul.mubr.bf16.gmra.mrb[0].mxu0 %v447
  %v973 = vpop.f32.mrb[0].mxu0
  %v974 = vadd.f32 %v157, %v973
  %v975 = vpop.f32.mrb[0].mxu0
  %v976 = vpop.f32.mrb[0].mxu0
  %v977 = vadd.f32 %v157, %v976
  %v978 = vpop.f32.mrb[0].mxu0
  %979 = vmatprep.mubr.bf16.mxu0 0
  %980 = vmatmul.mubr.bf16.gmra.mrb[0].mxu0 %v448
  %v981 = vpop.f32.mrb[0].mxu0
  %v982 = vadd.f32 %v157, %v981
  %v983 = vpop.f32.mrb[0].mxu0
  %v984 = vpop.f32.mrb[0].mxu0
  %v985 = vadd.f32 %v157, %v984
  %v986 = vpop.f32.mrb[0].mxu0
  %987 = vmatprep.mubr.bf16.mxu0 0
  %988 = vmatmul.mubr.bf16.gmra.mrb[0].mxu0 %v449
  %v989 = vpop.f32.mrb[0].mxu0
  %v990 = vadd.f32 %v157, %v989
  %v991 = vpop.f32.mrb[0].mxu0
  %v992 = vpop.f32.mrb[0].mxu0
  %v993 = vadd.f32 %v157, %v992
  %v994 = vpop.f32.mrb[0].mxu0
  %995 = vmatprep.mubr.bf16.mxu0 0
  %996 = vmatmul.mubr.bf16.gmra.mrb[0].mxu0 %v450
  %v997 = vpop.f32.mrb[0].mxu0
  %v998 = vadd.f32 %v157, %v997
  %v999 = vpop.f32.mrb[0].mxu0
  %v1000 = vpop.f32.mrb[0].mxu0
  %v1001 = vadd.f32 %v157, %v1000
  %v1002 = vpop.f32.mrb[0].mxu0
  %1003 = vmatprep.mubr.bf16.mxu0 0
  %1004 = vmatmul.mubr.bf16.gmra.mrb[0].mxu0 %v451
  %v1005 = vpop.f32.mrb[0].mxu0
  %v1006 = vadd.f32 %v157, %v1005
  %v1007 = vpop.f32.mrb[0].mxu0
  %v1008 = vpop.f32.mrb[0].mxu0
  %v1009 = vadd.f32 %v157, %v1008
  %v1010 = vpop.f32.mrb[0].mxu0
  %1011 = vmatprep.mubr.bf16.mxu0 0
  %1012 = vmatmul.mubr.bf16.gmra.mrb[0].mxu0 %v452
  %v1013 = vpop.f32.mrb[0].mxu0
  %v1014 = vadd.f32 %v157, %v1013
  %v1015 = vpop.f32.mrb[0].mxu0
  %v1016 = vpop.f32.mrb[0].mxu0
  %v1017 = vadd.f32 %v157, %v1016
  %v1018 = vpop.f32.mrb[0].mxu0
  %1019 = vmatprep.mubr.bf16.mxu0 0
  %1020 = vmatmul.mubr.bf16.gmra.mrb[0].mxu0 %v453
  %v1021 = vpop.f32.mrb[0].mxu0
  %v1022 = vadd.f32 %v157, %v1021
  %v1023 = vpop.f32.mrb[0].mxu0
  %v1024 = vpop.f32.mrb[0].mxu0
  %v1025 = vadd.f32 %v157, %v1024
  %v1026 = vpop.f32.mrb[0].mxu0
  %1027 = vmatprep.mubr.bf16.mxu0 0
  %1028 = vmatmul.mubr.bf16.gmra.mrb[0].mxu0 %v454
  %v1029 = vpop.f32.mrb[0].mxu0
  %v1030 = vadd.f32 %v157, %v1029
  %v1031 = vpop.f32.mrb[0].mxu0
  %v1032 = vpop.f32.mrb[0].mxu0
  %v1033 = vadd.f32 %v157, %v1032
  %v1034 = vpop.f32.mrb[0].mxu0
  %1035 = vmatprep.mubr.bf16.mxu0 0
  %1036 = vmatmul.mubr.bf16.gmra.mrb[0].mxu0 %v455
  %v1037 = vpop.f32.mrb[0].mxu0
  %v1038 = vadd.f32 %v157, %v1037
  %v1039 = vpop.f32.mrb[0].mxu0
  %v1040 = vpop.f32.mrb[0].mxu0
  %v1041 = vadd.f32 %v157, %v1040
  %v1042 = vpop.f32.mrb[0].mxu0
  %1043 = vmatprep.mubr.bf16.mxu0 0
  %1044 = vmatmul.mubr.bf16.gmra.mrb[0].mxu0 %v456
  %v1045 = vpop.f32.mrb[0].mxu0
  %v1046 = vadd.f32 %v157, %v1045
  %v1047 = vpop.f32.mrb[0].mxu0
  %v1048 = vpop.f32.mrb[0].mxu0
  %v1049 = vadd.f32 %v157, %v1048
  %v1050 = vpop.f32.mrb[0].mxu0
  %1051 = vmatprep.mubr.bf16.mxu0 0
  %1052 = vmatmul.mubr.bf16.gmra.mrb[0].mxu0 %v457
  %v1053 = vpop.f32.mrb[0].mxu0
  %v1054 = vadd.f32 %v157, %v1053
  %v1055 = vpop.f32.mrb[0].mxu0
  %v1056 = vpop.f32.mrb[0].mxu0
  %v1057 = vadd.f32 %v157, %v1056
  %v1058 = vpop.f32.mrb[0].mxu0
  %1059 = vmatprep.mubr.bf16.mxu0 0
  %1060 = vmatmul.mubr.bf16.gmra.mrb[0].mxu0 %v458
  %v1061 = vpop.f32.mrb[0].mxu0
  %v1062 = vadd.f32 %v157, %v1061
  %v1063 = vpop.f32.mrb[0].mxu0
  %v1064 = vpop.f32.mrb[0].mxu0
  %v1065 = vadd.f32 %v157, %v1064
  %v1066 = vpop.f32.mrb[0].mxu0
  %1067 = vmatprep.mubr.bf16.mxu0 0
  %1068 = vmatmul.mubr.bf16.gmra.mrb[0].mxu0 %v459
  %v1069 = vpop.f32.mrb[0].mxu0
  %v1070 = vadd.f32 %v157, %v1069
  %v1071 = vpop.f32.mrb[0].mxu0
  %v1072 = vpop.f32.mrb[0].mxu0
  %v1073 = vadd.f32 %v157, %v1072
  %v1074 = vpop.f32.mrb[0].mxu0
  %1075 = vmatprep.mubr.bf16.mxu0 0
  %1076 = vmatmul.mubr.bf16.gmra.mrb[0].mxu0 %v460
  %v1077 = vpop.f32.mrb[0].mxu0
  %v1078 = vadd.f32 %v157, %v1077
  %v1079 = vpop.f32.mrb[0].mxu0
  %v1080 = vpop.f32.mrb[0].mxu0
  %v1081 = vadd.f32 %v157, %v1080
  %v1082 = vpop.f32.mrb[0].mxu0
  %1083 = vmatprep.mubr.bf16.mxu0 0
  %1084 = vmatmul.mubr.bf16.gmra.mrb[0].mxu0 %v461
  %v1085 = vpop.f32.mrb[0].mxu0
  %v1086 = vadd.f32 %v157, %v1085
  %v1087 = vpop.f32.mrb[0].mxu0
  %v1088 = vpop.f32.mrb[0].mxu0
  %v1089 = vpop.f32.mrb[0].mxu0
  %1090 = vdwg.mxu0
  %v1091 = vmax.f32 %v606, 0.0
  %v1092 = vmax.f32 %v609, 0.0
  %v1093 = vmax.f32 %v614, 0.0
  %v1094 = vmax.f32 %v617, 0.0
  %v1095 = vmax.f32 %v622, 0.0
  %v1096 = vmax.f32 %v625, 0.0
  %v1097 = vmax.f32 %v630, 0.0
  %v1098 = vmax.f32 %v633, 0.0
  %v1099 = vmax.f32 %v638, 0.0
  %v1100 = vmax.f32 %v641, 0.0
  %v1101 = vmax.f32 %v646, 0.0
  %v1102 = vmax.f32 %v649, 0.0
  %v1103 = vmax.f32 %v654, 0.0
  %v1104 = vmax.f32 %v657, 0.0
  %v1105 = vmax.f32 %v662, 0.0
  %v1106 = vmax.f32 %v665, 0.0
  %v1107 = vmax.f32 %v670, 0.0
  %v1108 = vmax.f32 %v673, 0.0
  %v1109 = vmax.f32 %v678, 0.0
  %v1110 = vmax.f32 %v681, 0.0
  %v1111 = vmax.f32 %v686, 0.0
  %v1112 = vmax.f32 %v689, 0.0
  %v1113 = vmax.f32 %v694, 0.0
  %v1114 = vmax.f32 %v697, 0.0
  %v1115 = vmax.f32 %v702, 0.0
  %v1116 = vmax.f32 %v705, 0.0
  %v1117 = vmax.f32 %v710, 0.0
  %v1118 = vmax.f32 %v713, 0.0
  %v1119 = vmax.f32 %v718, 0.0
  %v1120 = vmax.f32 %v721, 0.0
  %v1121 = vmax.f32 %v726, 0.0
  %v1122 = vmax.f32 %v729, 0.0
  %v1123 = vmax.f32 %v734, 0.0
  %v1124 = vmax.f32 %v737, 0.0
  %v1125 = vmax.f32 %v742, 0.0
  %v1126 = vmax.f32 %v745, 0.0
  %v1127 = vmax.f32 %v750, 0.0
  %v1128 = vmax.f32 %v753, 0.0
  %v1129 = vmax.f32 %v758, 0.0
  %v1130 = vmax.f32 %v761, 0.0
  %v1131 = vmax.f32 %v766, 0.0
  %v1132 = vmax.f32 %v769, 0.0
  %v1133 = vmax.f32 %v774, 0.0
  %v1134 = vmax.f32 %v777, 0.0
  %v1135 = vmax.f32 %v782, 0.0
  %v1136 = vmax.f32 %v785, 0.0
  %v1137 = vmax.f32 %v790, 0.0
  %v1138 = vmax.f32 %v793, 0.0
  %v1139 = vmax.f32 %v798, 0.0
  %v1140 = vmax.f32 %v801, 0.0
  %v1141 = vmax.f32 %v806, 0.0
  %v1142 = vmax.f32 %v809, 0.0
  %v1143 = vmax.f32 %v814, 0.0
  %v1144 = vmax.f32 %v817, 0.0
  %v1145 = vmax.f32 %v822, 0.0
  %v1146 = vmax.f32 %v825, 0.0
  %v1147 = vmax.f32 %v830, 0.0
  %v1148 = vmax.f32 %v833, 0.0
  %v1149 = vmax.f32 %v838, 0.0
  %v1150 = vmax.f32 %v841, 0.0
  %v1151 = vmax.f32 %v846, 0.0
  %v1152 = vmax.f32 %v849, 0.0
  %v1153 = vmax.f32 %v854, 0.0
  %v1154 = vmax.f32 %v857, 0.0
  %v1155 = vmax.f32 %v862, 0.0
  %v1156 = vmax.f32 %v865, 0.0
  %v1157 = vmax.f32 %v870, 0.0
  %v1158 = vmax.f32 %v873, 0.0
  %v1159 = vmax.f32 %v878, 0.0
  %v1160 = vmax.f32 %v881, 0.0
  %v1161 = vmax.f32 %v886, 0.0
  %v1162 = vmax.f32 %v889, 0.0
  %v1163 = vmax.f32 %v894, 0.0
  %v1164 = vmax.f32 %v897, 0.0
  %v1165 = vmax.f32 %v902, 0.0
  %v1166 = vmax.f32 %v905, 0.0
  %v1167 = vmax.f32 %v910, 0.0
  %v1168 = vmax.f32 %v913, 0.0
  %v1169 = vmax.f32 %v918, 0.0
  %v1170 = vmax.f32 %v921, 0.0
  %v1171 = vmax.f32 %v926, 0.0
  %v1172 = vmax.f32 %v929, 0.0
  %v1173 = vmax.f32 %v934, 0.0
  %v1174 = vmax.f32 %v937, 0.0
  %v1175 = vmax.f32 %v942, 0.0
  %v1176 = vmax.f32 %v945, 0.0
  %v1177 = vmax.f32 %v950, 0.0
  %v1178 = vmax.f32 %v953, 0.0
  %v1179 = vmax.f32 %v958, 0.0
  %v1180 = vmax.f32 %v961, 0.0
  %v1181 = vmax.f32 %v966, 0.0
  %v1182 = vmax.f32 %v969, 0.0
  %v1183 = vmax.f32 %v974, 0.0
  %v1184 = vmax.f32 %v977, 0.0
  %v1185 = vmax.f32 %v982, 0.0
  %v1186 = vmax.f32 %v985, 0.0
  %v1187 = vmax.f32 %v990, 0.0
  %v1188 = vmax.f32 %v993, 0.0
  %v1189 = vmax.f32 %v998, 0.0
  %v1190 = vmax.f32 %v1001, 0.0
  %v1191 = vmax.f32 %v1006, 0.0
  %v1192 = vmax.f32 %v1009, 0.0
  %v1193 = vmax.f32 %v1014, 0.0
  %v1194 = vmax.f32 %v1017, 0.0
  %v1195 = vmax.f32 %v1022, 0.0
  %v1196 = vmax.f32 %v1025, 0.0
  %v1197 = vmax.f32 %v1030, 0.0
  %v1198 = vmax.f32 %v1033, 0.0
  %v1199 = vmax.f32 %v1038, 0.0
  %v1200 = vmax.f32 %v1041, 0.0
  %v1201 = vmax.f32 %v1046, 0.0
  %v1202 = vmax.f32 %v1049, 0.0
  %v1203 = vmax.f32 %v1054, 0.0
  %v1204 = vmax.f32 %v1057, 0.0
  %v1205 = vmax.f32 %v1062, 0.0
  %v1206 = vmax.f32 %v1065, 0.0
  %v1207 = vmax.f32 %v1070, 0.0
  %v1208 = vmax.f32 %v1073, 0.0
  %v1209 = vmax.f32 %v1078, 0.0
  %v1210 = vmax.f32 %v1081, 0.0
  %v1211 = vmax.f32 %v1086, 0.0
  %v1212 = vpack.c.bf16 %v1092, %v1091
  %v1213 = vpack.c.bf16 %v1094, %v1093
  %v1214 = vpack.c.bf16 %v1096, %v1095
  %v1215 = vpack.c.bf16 %v1098, %v1097
  %v1216 = vpack.c.bf16 %v1100, %v1099
  %v1217 = vpack.c.bf16 %v1102, %v1101
  %v1218 = vpack.c.bf16 %v1104, %v1103
  %v1219 = vpack.c.bf16 %v1106, %v1105
  %v1220 = vpack.c.bf16 %v1108, %v1107
  %v1221 = vpack.c.bf16 %v1110, %v1109
  %v1222 = vpack.c.bf16 %v1112, %v1111
  %v1223 = vpack.c.bf16 %v1114, %v1113
  %v1224 = vpack.c.bf16 %v1116, %v1115
  %v1225 = vpack.c.bf16 %v1118, %v1117
  %v1226 = vpack.c.bf16 %v1120, %v1119
  %v1227 = vpack.c.bf16 %v1122, %v1121
  %v1228 = vpack.c.bf16 %v1124, %v1123
  %v1229 = vpack.c.bf16 %v1126, %v1125
  %v1230 = vpack.c.bf16 %v1128, %v1127
  %v1231 = vpack.c.bf16 %v1130, %v1129
  %v1232 = vpack.c.bf16 %v1132, %v1131
  %v1233 = vpack.c.bf16 %v1134, %v1133
  %v1234 = vpack.c.bf16 %v1136, %v1135
  %v1235 = vpack.c.bf16 %v1138, %v1137
  %v1236 = vpack.c.bf16 %v1140, %v1139
  %v1237 = vpack.c.bf16 %v1142, %v1141
  %v1238 = vpack.c.bf16 %v1144, %v1143
  %v1239 = vpack.c.bf16 %v1146, %v1145
  %v1240 = vpack.c.bf16 %v1148, %v1147
  %v1241 = vpack.c.bf16 %v1150, %v1149
  %v1242 = vpack.c.bf16 %v1152, %v1151
  %v1243 = vpack.c.bf16 %v1154, %v1153
  %v1244 = vpack.c.bf16 %v1156, %v1155
  %v1245 = vpack.c.bf16 %v1158, %v1157
  %v1246 = vpack.c.bf16 %v1160, %v1159
  %v1247 = vpack.c.bf16 %v1162, %v1161
  %v1248 = vpack.c.bf16 %v1164, %v1163
  %v1249 = vpack.c.bf16 %v1166, %v1165
  %v1250 = vpack.c.bf16 %v1168, %v1167
  %v1251 = vpack.c.bf16 %v1170, %v1169
  %v1252 = vpack.c.bf16 %v1172, %v1171
  %v1253 = vpack.c.bf16 %v1174, %v1173
  %v1254 = vpack.c.bf16 %v1176, %v1175
  %v1255 = vpack.c.bf16 %v1178, %v1177
  %v1256 = vpack.c.bf16 %v1180, %v1179
  %v1257 = vpack.c.bf16 %v1182, %v1181
  %v1258 = vpack.c.bf16 %v1184, %v1183
  %v1259 = vpack.c.bf16 %v1186, %v1185
  %v1260 = vpack.c.bf16 %v1188, %v1187
  %v1261 = vpack.c.bf16 %v1190, %v1189
  %v1262 = vpack.c.bf16 %v1192, %v1191
  %v1263 = vpack.c.bf16 %v1194, %v1193
  %v1264 = vpack.c.bf16 %v1196, %v1195
  %v1265 = vpack.c.bf16 %v1198, %v1197
  %v1266 = vpack.c.bf16 %v1200, %v1199
  %v1267 = vpack.c.bf16 %v1202, %v1201
  %v1268 = vpack.c.bf16 %v1204, %v1203
  %v1269 = vpack.c.bf16 %v1206, %v1205
  %v1270 = vpack.c.bf16 %v1208, %v1207
  %v1271 = vpack.c.bf16 %v1210, %v1209
  %v1272 = vpack.c.bf16 %v1211, %v1211
  %v1334 = vunpack.c.l.b16 %v1212
  %v1335 = vunpack.c.h.b16 %v1212
  %v1336 = vunpack.c.l.b16 %v1213
  %v1337 = vunpack.c.h.b16 %v1213
  %v1338 = vunpack.c.l.b16 %v1214
  %v1339 = vunpack.c.h.b16 %v1214
  %v1340 = vunpack.c.l.b16 %v1215
  %v1341 = vunpack.c.h.b16 %v1215
  %v1342 = vunpack.c.l.b16 %v1216
  %v1343 = vunpack.c.h.b16 %v1216
  %v1344 = vunpack.c.l.b16 %v1217
  %v1345 = vunpack.c.h.b16 %v1217
  %v1346 = vunpack.c.l.b16 %v1218
  %v1347 = vunpack.c.h.b16 %v1218
  %v1348 = vunpack.c.l.b16 %v1219
  %v1349 = vunpack.c.h.b16 %v1219
  %v1350 = vunpack.c.l.b16 %v1220
  %v1351 = vunpack.c.h.b16 %v1220
  %v1352 = vunpack.c.l.b16 %v1221
  %v1353 = vunpack.c.h.b16 %v1221
  %v1354 = vunpack.c.l.b16 %v1222
  %v1355 = vunpack.c.h.b16 %v1222
  %v1356 = vunpack.c.l.b16 %v1223
  %v1357 = vunpack.c.h.b16 %v1223
  %v1358 = vunpack.c.l.b16 %v1224
  %v1359 = vunpack.c.h.b16 %v1224
  %v1360 = vunpack.c.l.b16 %v1225
  %v1361 = vunpack.c.h.b16 %v1225
  %v1362 = vunpack.c.l.b16 %v1226
  %v1363 = vunpack.c.h.b16 %v1226
  %v1364 = vunpack.c.l.b16 %v1227
  %v1365 = vunpack.c.h.b16 %v1227
  %v1366 = vunpack.c.l.b16 %v1228
  %v1367 = vunpack.c.h.b16 %v1228
  %v1368 = vunpack.c.l.b16 %v1229
  %v1369 = vunpack.c.h.b16 %v1229
  %v1370 = vunpack.c.l.b16 %v1230
  %v1371 = vunpack.c.h.b16 %v1230
  %v1372 = vunpack.c.l.b16 %v1231
  %v1373 = vunpack.c.h.b16 %v1231
  %v1374 = vunpack.c.l.b16 %v1232
  %v1375 = vunpack.c.h.b16 %v1232
  %v1376 = vunpack.c.l.b16 %v1233
  %v1377 = vunpack.c.h.b16 %v1233
  %v1378 = vunpack.c.l.b16 %v1234
  %v1379 = vunpack.c.h.b16 %v1234
  %v1380 = vunpack.c.l.b16 %v1235
  %v1381 = vunpack.c.h.b16 %v1235
  %v1382 = vunpack.c.l.b16 %v1236
  %v1383 = vunpack.c.h.b16 %v1236
  %v1384 = vunpack.c.l.b16 %v1237
  %v1385 = vunpack.c.h.b16 %v1237
  %v1386 = vunpack.c.l.b16 %v1238
  %v1387 = vunpack.c.h.b16 %v1238
  %v1388 = vunpack.c.l.b16 %v1239
  %v1389 = vunpack.c.h.b16 %v1239
  %v1390 = vunpack.c.l.b16 %v1240
  %v1391 = vunpack.c.h.b16 %v1240
  %v1392 = vunpack.c.l.b16 %v1241
  %v1393 = vunpack.c.h.b16 %v1241
  %v1394 = vunpack.c.l.b16 %v1242
  %v1395 = vunpack.c.h.b16 %v1242
  %v1396 = vunpack.c.l.b16 %v1243
  %v1397 = vunpack.c.h.b16 %v1243
  %v1398 = vunpack.c.l.b16 %v1244
  %v1399 = vunpack.c.h.b16 %v1244
  %v1400 = vunpack.c.l.b16 %v1245
  %v1401 = vunpack.c.h.b16 %v1245
  %v1402 = vunpack.c.l.b16 %v1246
  %v1403 = vunpack.c.h.b16 %v1246
  %v1404 = vunpack.c.l.b16 %v1247
  %v1405 = vunpack.c.h.b16 %v1247
  %v1406 = vunpack.c.l.b16 %v1248
  %v1407 = vunpack.c.h.b16 %v1248
  %v1408 = vunpack.c.l.b16 %v1249
  %v1409 = vunpack.c.h.b16 %v1249
  %v1410 = vunpack.c.l.b16 %v1250
  %v1411 = vunpack.c.h.b16 %v1250
  %v1412 = vunpack.c.l.b16 %v1251
  %v1413 = vunpack.c.h.b16 %v1251
  %v1414 = vunpack.c.l.b16 %v1252
  %v1415 = vunpack.c.h.b16 %v1252
  %v1416 = vunpack.c.l.b16 %v1253
  %v1417 = vunpack.c.h.b16 %v1253
  %v1418 = vunpack.c.l.b16 %v1254
  %v1419 = vunpack.c.h.b16 %v1254
  %v1420 = vunpack.c.l.b16 %v1255
  %v1421 = vunpack.c.h.b16 %v1255
  %v1422 = vunpack.c.l.b16 %v1256
  %v1423 = vunpack.c.h.b16 %v1256
  %v1424 = vunpack.c.l.b16 %v1257
  %v1425 = vunpack.c.h.b16 %v1257
  %v1426 = vunpack.c.l.b16 %v1258
  %v1427 = vunpack.c.h.b16 %v1258
  %v1428 = vunpack.c.l.b16 %v1259
  %v1429 = vunpack.c.h.b16 %v1259
  %v1430 = vunpack.c.l.b16 %v1260
  %v1431 = vunpack.c.h.b16 %v1260
  %v1432 = vunpack.c.l.b16 %v1261
  %v1433 = vunpack.c.h.b16 %v1261
  %v1434 = vunpack.c.l.b16 %v1262
  %v1435 = vunpack.c.h.b16 %v1262
  %v1436 = vunpack.c.l.b16 %v1263
  %v1437 = vunpack.c.h.b16 %v1263
  %v1438 = vunpack.c.l.b16 %v1264
  %v1439 = vunpack.c.h.b16 %v1264
  %v1440 = vunpack.c.l.b16 %v1265
  %v1441 = vunpack.c.h.b16 %v1265
  %v1442 = vunpack.c.l.b16 %v1266
  %v1443 = vunpack.c.h.b16 %v1266
  %v1444 = vunpack.c.l.b16 %v1267
  %v1445 = vunpack.c.h.b16 %v1267
  %v1446 = vunpack.c.l.b16 %v1268
  %v1447 = vunpack.c.h.b16 %v1268
  %v1448 = vunpack.c.l.b16 %v1269
  %v1449 = vunpack.c.h.b16 %v1269
  %v1450 = vunpack.c.l.b16 %v1270
  %v1451 = vunpack.c.h.b16 %v1270
  %v1452 = vunpack.c.l.b16 %v1271
  %v1453 = vunpack.c.h.b16 %v1271
  %v1454 = vunpack.c.l.b16 %v1272
  %v1455 = vpack.c.b16 %v1334, %v1334
  %v1456 = vpack.c.b16 %v1335, %v1335
  %v1457 = vpack.c.b16 %v1336, %v1336
  %v1458 = vpack.c.b16 %v1337, %v1337
  %v1459 = vpack.c.b16 %v1338, %v1338
  %v1460 = vpack.c.b16 %v1339, %v1339
  %v1461 = vpack.c.b16 %v1340, %v1340
  %v1462 = vpack.c.b16 %v1341, %v1341
  %v1463 = vpack.c.b16 %v1342, %v1342
  %v1464 = vpack.c.b16 %v1343, %v1343
  %v1465 = vpack.c.b16 %v1344, %v1344
  %v1466 = vpack.c.b16 %v1345, %v1345
  %v1467 = vpack.c.b16 %v1346, %v1346
  %v1468 = vpack.c.b16 %v1347, %v1347
  %v1469 = vpack.c.b16 %v1348, %v1348
  %v1470 = vpack.c.b16 %v1349, %v1349
  %v1471 = vpack.c.b16 %v1350, %v1350
  %v1472 = vpack.c.b16 %v1351, %v1351
  %v1473 = vpack.c.b16 %v1352, %v1352
  %v1474 = vpack.c.b16 %v1353, %v1353
  %v1475 = vpack.c.b16 %v1354, %v1354
  %v1476 = vpack.c.b16 %v1355, %v1355
  %v1477 = vpack.c.b16 %v1356, %v1356
  %v1478 = vpack.c.b16 %v1357, %v1357
  %v1479 = vpack.c.b16 %v1358, %v1358
  %v1480 = vpack.c.b16 %v1359, %v1359
  %v1481 = vpack.c.b16 %v1360, %v1360
  %v1482 = vpack.c.b16 %v1361, %v1361
  %v1483 = vpack.c.b16 %v1362, %v1362
  %v1484 = vpack.c.b16 %v1363, %v1363
  %v1485 = vpack.c.b16 %v1364, %v1364
  %v1486 = vpack.c.b16 %v1365, %v1365
  %v1487 = vpack.c.b16 %v1366, %v1366
  %v1488 = vpack.c.b16 %v1367, %v1367
  %v1489 = vpack.c.b16 %v1368, %v1368
  %v1490 = vpack.c.b16 %v1369, %v1369
  %v1491 = vpack.c.b16 %v1370, %v1370
  %v1492 = vpack.c.b16 %v1371, %v1371
  %v1493 = vpack.c.b16 %v1372, %v1372
  %v1494 = vpack.c.b16 %v1373, %v1373
  %v1495 = vpack.c.b16 %v1374, %v1374
  %v1496 = vpack.c.b16 %v1375, %v1375
  %v1497 = vpack.c.b16 %v1376, %v1376
  %v1498 = vpack.c.b16 %v1377, %v1377
  %v1499 = vpack.c.b16 %v1378, %v1378
  %v1500 = vpack.c.b16 %v1379, %v1379
  %v1501 = vpack.c.b16 %v1380, %v1380
  %v1502 = vpack.c.b16 %v1381, %v1381
  %v1503 = vpack.c.b16 %v1382, %v1382
  %v1504 = vpack.c.b16 %v1383, %v1383
  %v1505 = vpack.c.b16 %v1384, %v1384
  %v1506 = vpack.c.b16 %v1385, %v1385
  %v1507 = vpack.c.b16 %v1386, %v1386
  %v1508 = vpack.c.b16 %v1387, %v1387
  %v1509 = vpack.c.b16 %v1388, %v1388
  %v1510 = vpack.c.b16 %v1389, %v1389
  %v1511 = vpack.c.b16 %v1390, %v1390
  %v1512 = vpack.c.b16 %v1391, %v1391
  %v1513 = vpack.c.b16 %v1392, %v1392
  %v1514 = vpack.c.b16 %v1393, %v1393
  %v1515 = vpack.c.b16 %v1394, %v1394
  %v1516 = vpack.c.b16 %v1395, %v1395
  %v1517 = vpack.c.b16 %v1396, %v1396
  %v1518 = vpack.c.b16 %v1397, %v1397
  %v1519 = vpack.c.b16 %v1398, %v1398
  %v1520 = vpack.c.b16 %v1399, %v1399
  %v1521 = vpack.c.b16 %v1400, %v1400
  %v1522 = vpack.c.b16 %v1401, %v1401
  %v1523 = vpack.c.b16 %v1402, %v1402
  %v1524 = vpack.c.b16 %v1403, %v1403
  %v1525 = vpack.c.b16 %v1404, %v1404
  %v1526 = vpack.c.b16 %v1405, %v1405
  %v1527 = vpack.c.b16 %v1406, %v1406
  %v1528 = vpack.c.b16 %v1407, %v1407
  %v1529 = vpack.c.b16 %v1408, %v1408
  %v1530 = vpack.c.b16 %v1409, %v1409
  %v1531 = vpack.c.b16 %v1410, %v1410
  %v1532 = vpack.c.b16 %v1411, %v1411
  %v1533 = vpack.c.b16 %v1412, %v1412
  %v1534 = vpack.c.b16 %v1413, %v1413
  %v1535 = vpack.c.b16 %v1414, %v1414
  %v1536 = vpack.c.b16 %v1415, %v1415
  %v1537 = vpack.c.b16 %v1416, %v1416
  %v1538 = vpack.c.b16 %v1417, %v1417
  %v1539 = vpack.c.b16 %v1418, %v1418
  %v1540 = vpack.c.b16 %v1419, %v1419
  %v1541 = vpack.c.b16 %v1420, %v1420
  %v1542 = vpack.c.b16 %v1421, %v1421
  %v1543 = vpack.c.b16 %v1422, %v1422
  %v1544 = vpack.c.b16 %v1423, %v1423
  %v1545 = vpack.c.b16 %v1424, %v1424
  %v1546 = vpack.c.b16 %v1425, %v1425
  %v1547 = vpack.c.b16 %v1426, %v1426
  %v1548 = vpack.c.b16 %v1427, %v1427
  %v1549 = vpack.c.b16 %v1428, %v1428
  %v1550 = vpack.c.b16 %v1429, %v1429
  %v1551 = vpack.c.b16 %v1430, %v1430
  %v1552 = vpack.c.b16 %v1431, %v1431
  %v1553 = vpack.c.b16 %v1432, %v1432
  %v1554 = vpack.c.b16 %v1433, %v1433
  %v1555 = vpack.c.b16 %v1434, %v1434
  %v1556 = vpack.c.b16 %v1435, %v1435
  %v1557 = vpack.c.b16 %v1436, %v1436
  %v1558 = vpack.c.b16 %v1437, %v1437
  %v1559 = vpack.c.b16 %v1438, %v1438
  %v1560 = vpack.c.b16 %v1439, %v1439
  %v1561 = vpack.c.b16 %v1440, %v1440
  %v1562 = vpack.c.b16 %v1441, %v1441
  %v1563 = vpack.c.b16 %v1442, %v1442
  %v1564 = vpack.c.b16 %v1443, %v1443
  %v1565 = vpack.c.b16 %v1444, %v1444
  %v1566 = vpack.c.b16 %v1445, %v1445
  %v1567 = vpack.c.b16 %v1446, %v1446
  %v1568 = vpack.c.b16 %v1447, %v1447
  %v1569 = vpack.c.b16 %v1448, %v1448
  %v1570 = vpack.c.b16 %v1449, %v1449
  %v1571 = vpack.c.b16 %v1450, %v1450
  %v1572 = vpack.c.b16 %v1451, %v1451
  %v1573 = vpack.c.b16 %v1452, %v1452
  %v1574 = vpack.c.b16 %v1453, %v1453
  %v1575 = vpack.c.b16 %v1454, %v1454
  %vm1697 = vcmask 257024
  %1698 = vst.msk [vmem:[%s3] sm:$0xf] %vm1697, %v1455
  %1699 = vst.msk [vmem:[%s3 + $0x4] sm:$0xf] %vm1697, %v1456
  %1700 = vst.msk [vmem:[%s3 + $0x8] sm:$0xf] %vm1697, %v1457
  %1701 = vst.msk [vmem:[%s3 + $0xc] sm:$0xf] %vm1697, %v1458
  %1702 = vst.msk [vmem:[%s3 + $0x10] sm:$0xf] %vm1697, %v1459
  %1703 = vst.msk [vmem:[%s3 + $0x14] sm:$0xf] %vm1697, %v1460
  %1704 = vst.msk [vmem:[%s3 + $0x18] sm:$0xf] %vm1697, %v1461
  %1705 = vst.msk [vmem:[%s3 + $0x1c] sm:$0xf] %vm1697, %v1462
  %1706 = vst.msk [vmem:[%s3 + $0x20] sm:$0xf] %vm1697, %v1463
  %1707 = vst.msk [vmem:[%s3 + $0x24] sm:$0xf] %vm1697, %v1464
  %1708 = vst.msk [vmem:[%s3 + $0x28] sm:$0xf] %vm1697, %v1465
  %1709 = vst.msk [vmem:[%s3 + $0x2c] sm:$0xf] %vm1697, %v1466
  %1710 = vst.msk [vmem:[%s3 + $0x30] sm:$0xf] %vm1697, %v1467
  %1711 = vst.msk [vmem:[%s3 + $0x34] sm:$0xf] %vm1697, %v1468
  %1712 = vst.msk [vmem:[%s3 + $0x38] sm:$0xf] %vm1697, %v1469
  %1713 = vst.msk [vmem:[%s3 + $0x3c] sm:$0xf] %vm1697, %v1470
  %1714 = vst.msk [vmem:[%s3 + $0x40] sm:$0xf] %vm1697, %v1471
  %1715 = vst.msk [vmem:[%s3 + $0x44] sm:$0xf] %vm1697, %v1472
  %1716 = vst.msk [vmem:[%s3 + $0x48] sm:$0xf] %vm1697, %v1473
  %1717 = vst.msk [vmem:[%s3 + $0x4c] sm:$0xf] %vm1697, %v1474
  %1718 = vst.msk [vmem:[%s3 + $0x50] sm:$0xf] %vm1697, %v1475
  %1719 = vst.msk [vmem:[%s3 + $0x54] sm:$0xf] %vm1697, %v1476
  %1720 = vst.msk [vmem:[%s3 + $0x58] sm:$0xf] %vm1697, %v1477
  %1721 = vst.msk [vmem:[%s3 + $0x5c] sm:$0xf] %vm1697, %v1478
  %1722 = vst.msk [vmem:[%s3 + $0x60] sm:$0xf] %vm1697, %v1479
  %1723 = vst.msk [vmem:[%s3 + $0x64] sm:$0xf] %vm1697, %v1480
  %1724 = vst.msk [vmem:[%s3 + $0x68] sm:$0xf] %vm1697, %v1481
  %1725 = vst.msk [vmem:[%s3 + $0x6c] sm:$0xf] %vm1697, %v1482
  %1726 = vst.msk [vmem:[%s3 + $0x70] sm:$0xf] %vm1697, %v1483
  %1727 = vst.msk [vmem:[%s3 + $0x74] sm:$0xf] %vm1697, %v1484
  %1728 = vst.msk [vmem:[%s3 + $0x78] sm:$0xf] %vm1697, %v1485
  %1729 = vst.msk [vmem:[%s3 + $0x7c] sm:$0xf] %vm1697, %v1486
  %1730 = vst.msk [vmem:[%s3 + $0x80] sm:$0xf] %vm1697, %v1487
  %1731 = vst.msk [vmem:[%s3 + $0x84] sm:$0xf] %vm1697, %v1488
  %1732 = vst.msk [vmem:[%s3 + $0x88] sm:$0xf] %vm1697, %v1489
  %1733 = vst.msk [vmem:[%s3 + $0x8c] sm:$0xf] %vm1697, %v1490
  %1734 = vst.msk [vmem:[%s3 + $0x90] sm:$0xf] %vm1697, %v1491
  %1735 = vst.msk [vmem:[%s3 + $0x94] sm:$0xf] %vm1697, %v1492
  %1736 = vst.msk [vmem:[%s3 + $0x98] sm:$0xf] %vm1697, %v1493
  %1737 = vst.msk [vmem:[%s3 + $0x9c] sm:$0xf] %vm1697, %v1494
  %1738 = vst.msk [vmem:[%s3 + $0xa0] sm:$0xf] %vm1697, %v1495
  %1739 = vst.msk [vmem:[%s3 + $0xa4] sm:$0xf] %vm1697, %v1496
  %1740 = vst.msk [vmem:[%s3 + $0xa8] sm:$0xf] %vm1697, %v1497
  %1741 = vst.msk [vmem:[%s3 + $0xac] sm:$0xf] %vm1697, %v1498
  %1742 = vst.msk [vmem:[%s3 + $0xb0] sm:$0xf] %vm1697, %v1499
  %1743 = vst.msk [vmem:[%s3 + $0xb4] sm:$0xf] %vm1697, %v1500
  %1744 = vst.msk [vmem:[%s3 + $0xb8] sm:$0xf] %vm1697, %v1501
  %1745 = vst.msk [vmem:[%s3 + $0xbc] sm:$0xf] %vm1697, %v1502
  %1746 = vst.msk [vmem:[%s3 + $0xc0] sm:$0xf] %vm1697, %v1503
  %1747 = vst.msk [vmem:[%s3 + $0xc4] sm:$0xf] %vm1697, %v1504
  %1748 = vst.msk [vmem:[%s3 + $0xc8] sm:$0xf] %vm1697, %v1505
  %1749 = vst.msk [vmem:[%s3 + $0xcc] sm:$0xf] %vm1697, %v1506
  %1750 = vst.msk [vmem:[%s3 + $0xd0] sm:$0xf] %vm1697, %v1507
  %1751 = vst.msk [vmem:[%s3 + $0xd4] sm:$0xf] %vm1697, %v1508
  %1752 = vst.msk [vmem:[%s3 + $0xd8] sm:$0xf] %vm1697, %v1509
  %1753 = vst.msk [vmem:[%s3 + $0xdc] sm:$0xf] %vm1697, %v1510
  %1754 = vst.msk [vmem:[%s3 + $0xe0] sm:$0xf] %vm1697, %v1511
  %1755 = vst.msk [vmem:[%s3 + $0xe4] sm:$0xf] %vm1697, %v1512
  %1756 = vst.msk [vmem:[%s3 + $0xe8] sm:$0xf] %vm1697, %v1513
  %1757 = vst.msk [vmem:[%s3 + $0xec] sm:$0xf] %vm1697, %v1514
  %1758 = vst.msk [vmem:[%s3 + $0xf0] sm:$0xf] %vm1697, %v1515
  %1759 = vst.msk [vmem:[%s3 + $0xf4] sm:$0xf] %vm1697, %v1516
  %1760 = vst.msk [vmem:[%s3 + $0xf8] sm:$0xf] %vm1697, %v1517
  %1761 = vst.msk [vmem:[%s3 + $0xfc] sm:$0xf] %vm1697, %v1518
  %1762 = vst.msk [vmem:[%s3 + $0x100] sm:$0xf] %vm1697, %v1519
  %1763 = vst.msk [vmem:[%s3 + $0x104] sm:$0xf] %vm1697, %v1520
  %1764 = vst.msk [vmem:[%s3 + $0x108] sm:$0xf] %vm1697, %v1521
  %1765 = vst.msk [vmem:[%s3 + $0x10c] sm:$0xf] %vm1697, %v1522
  %1766 = vst.msk [vmem:[%s3 + $0x110] sm:$0xf] %vm1697, %v1523
  %1767 = vst.msk [vmem:[%s3 + $0x114] sm:$0xf] %vm1697, %v1524
  %1768 = vst.msk [vmem:[%s3 + $0x118] sm:$0xf] %vm1697, %v1525
  %1769 = vst.msk [vmem:[%s3 + $0x11c] sm:$0xf] %vm1697, %v1526
  %1770 = vst.msk [vmem:[%s3 + $0x120] sm:$0xf] %vm1697, %v1527
  %1771 = vst.msk [vmem:[%s3 + $0x124] sm:$0xf] %vm1697, %v1528
  %1772 = vst.msk [vmem:[%s3 + $0x128] sm:$0xf] %vm1697, %v1529
  %1773 = vst.msk [vmem:[%s3 + $0x12c] sm:$0xf] %vm1697, %v1530
  %1774 = vst.msk [vmem:[%s3 + $0x130] sm:$0xf] %vm1697, %v1531
  %1775 = vst.msk [vmem:[%s3 + $0x134] sm:$0xf] %vm1697, %v1532
  %1776 = vst.msk [vmem:[%s3 + $0x138] sm:$0xf] %vm1697, %v1533
  %1777 = vst.msk [vmem:[%s3 + $0x13c] sm:$0xf] %vm1697, %v1534
  %1778 = vst.msk [vmem:[%s3 + $0x140] sm:$0xf] %vm1697, %v1535
  %1779 = vst.msk [vmem:[%s3 + $0x144] sm:$0xf] %vm1697, %v1536
  %1780 = vst.msk [vmem:[%s3 + $0x148] sm:$0xf] %vm1697, %v1537
  %1781 = vst.msk [vmem:[%s3 + $0x14c] sm:$0xf] %vm1697, %v1538
  %1782 = vst.msk [vmem:[%s3 + $0x150] sm:$0xf] %vm1697, %v1539
  %1783 = vst.msk [vmem:[%s3 + $0x154] sm:$0xf] %vm1697, %v1540
  %1784 = vst.msk [vmem:[%s3 + $0x158] sm:$0xf] %vm1697, %v1541
  %1785 = vst.msk [vmem:[%s3 + $0x15c] sm:$0xf] %vm1697, %v1542
  %1786 = vst.msk [vmem:[%s3 + $0x160] sm:$0xf] %vm1697, %v1543
  %1787 = vst.msk [vmem:[%s3 + $0x164] sm:$0xf] %vm1697, %v1544
  %1788 = vst.msk [vmem:[%s3 + $0x168] sm:$0xf] %vm1697, %v1545
  %1789 = vst.msk [vmem:[%s3 + $0x16c] sm:$0xf] %vm1697, %v1546
  %1790 = vst.msk [vmem:[%s3 + $0x170] sm:$0xf] %vm1697, %v1547
  %1791 = vst.msk [vmem:[%s3 + $0x174] sm:$0xf] %vm1697, %v1548
  %1792 = vst.msk [vmem:[%s3 + $0x178] sm:$0xf] %vm1697, %v1549
  %1793 = vst.msk [vmem:[%s3 + $0x17c] sm:$0xf] %vm1697, %v1550
  %1794 = vst.msk [vmem:[%s3 + $0x180] sm:$0xf] %vm1697, %v1551
  %1795 = vst.msk [vmem:[%s3 + $0x184] sm:$0xf] %vm1697, %v1552
  %1796 = vst.msk [vmem:[%s3 + $0x188] sm:$0xf] %vm1697, %v1553
  %1797 = vst.msk [vmem:[%s3 + $0x18c] sm:$0xf] %vm1697, %v1554
  %1798 = vst.msk [vmem:[%s3 + $0x190] sm:$0xf] %vm1697, %v1555
  %1799 = vst.msk [vmem:[%s3 + $0x194] sm:$0xf] %vm1697, %v1556
  %1800 = vst.msk [vmem:[%s3 + $0x198] sm:$0xf] %vm1697, %v1557
  %1801 = vst.msk [vmem:[%s3 + $0x19c] sm:$0xf] %vm1697, %v1558
  %1802 = vst.msk [vmem:[%s3 + $0x1a0] sm:$0xf] %vm1697, %v1559
  %1803 = vst.msk [vmem:[%s3 + $0x1a4] sm:$0xf] %vm1697, %v1560
  %1804 = vst.msk [vmem:[%s3 + $0x1a8] sm:$0xf] %vm1697, %v1561
  %1805 = vst.msk [vmem:[%s3 + $0x1ac] sm:$0xf] %vm1697, %v1562
  %1806 = vst.msk [vmem:[%s3 + $0x1b0] sm:$0xf] %vm1697, %v1563
  %1807 = vst.msk [vmem:[%s3 + $0x1b4] sm:$0xf] %vm1697, %v1564
  %1808 = vst.msk [vmem:[%s3 + $0x1b8] sm:$0xf] %vm1697, %v1565
  %1809 = vst.msk [vmem:[%s3 + $0x1bc] sm:$0xf] %vm1697, %v1566
  %1810 = vst.msk [vmem:[%s3 + $0x1c0] sm:$0xf] %vm1697, %v1567
  %1811 = vst.msk [vmem:[%s3 + $0x1c4] sm:$0xf] %vm1697, %v1568
  %1812 = vst.msk [vmem:[%s3 + $0x1c8] sm:$0xf] %vm1697, %v1569
  %1813 = vst.msk [vmem:[%s3 + $0x1cc] sm:$0xf] %vm1697, %v1570
  %1814 = vst.msk [vmem:[%s3 + $0x1d0] sm:$0xf] %vm1697, %v1571
  %1815 = vst.msk [vmem:[%s3 + $0x1d4] sm:$0xf] %vm1697, %v1572
  %1816 = vst.msk [vmem:[%s3 + $0x1d8] sm:$0xf] %vm1697, %v1573
  %1817 = vst.msk [vmem:[%s3 + $0x1dc] sm:$0xf] %vm1697, %v1574
  %1818 = vst.msk [vmem:[%s3 + $0x1e0] sm:$0xf] %vm1697, %v1575
  // Predicated region
  $region14: #{gt_net_forward.6} parent=0 // pred_check
    _
  $region15: #{gt_net_forward.6} parent=0 // pred_check_branch
    %1820 = sbr.rel (0) target = $region17
  $region16: #{gt_net_forward.6} parent=0 // pred_region
    _
  $region17: #{gt_net_forward.6} parent=0 // pred_fallthru
    _
  // Predicated region
  $region18: #{gt_net_forward.6} parent=0 // pred_check
    _
  $region19: #{gt_net_forward.6} parent=0 // pred_check_branch
    %1822 = sbr.rel (0) target = $region21
  $region20: #{gt_net_forward.6} parent=0 // pred_region
    _
  $region21: #{gt_net_forward.6} parent=0 // pred_fallthru
    _

// kernel: gt_net_forward.7
$region0: #{gt_net_forward.7}
  #allocation0 [shape = 'u32[]', space=smem, size = 0x4, offset = 0x4, fixed_abs, tag = 'smem constant byte address 0x4 - core index']
  #allocation1 [shape = 'u32[144,128]{1,0:T(1,128)}', space=vmem, size = 0x12000, scoped, tag = 'internal scratch']
  %s0 = inlined_call_operand.vmem [shape: bf16[288,128], index: 0, kind: input, shape index: {}]
  %s1 = inlined_call_operand.vmem [shape: bf16[128,64], index: 1, kind: input, shape index: {}]
  %s2 = inlined_call_operand.vmem [shape: f32[1,64], index: 2, kind: input, shape index: {}]
  %s3 = inlined_call_operand.vmem [shape: bf16[288,64], index: 3, kind: output, shape index: {}]
  %s4 = sld [smem:[#allocation0]]
  $region22: #{gt_net_forward.7} parent=0
    _
  %s6 = ssub.s32 1, %s4
  %s7 = scalar_select 0, %s6, %s4
  // Predicated region
  $region2: #{gt_net_forward.7} parent=0 // pred_check
    _
  $region3: #{gt_net_forward.7} parent=0 // pred_check_branch
    %9 = sbr.rel (0) target = $region5
  $region4: #{gt_net_forward.7} parent=0 // pred_region
    _
  $region5: #{gt_net_forward.7} parent=0 // pred_fallthru
    _
  // Predicated region
  $region6: #{gt_net_forward.7} parent=0 // pred_check
    _
  $region7: #{gt_net_forward.7} parent=0 // pred_check_branch
    %11 = sbr.rel (0) target = $region9
  $region8: #{gt_net_forward.7} parent=0 // pred_region
    _
  $region9: #{gt_net_forward.7} parent=0 // pred_fallthru
    _
  // Predicated region
  $region10: #{gt_net_forward.7} parent=0 // pred_check
    _
  $region11: #{gt_net_forward.7} parent=0 // pred_check_branch
    %13 = sbr.rel (0) target = $region13
  $region12: #{gt_net_forward.7} parent=0 // pred_region
    _
  $region13: #{gt_net_forward.7} parent=0 // pred_fallthru
    _
  %v15 = vld [vmem:[%s0] sm:$0xf]
  %v16 = vld [vmem:[%s0 + $0x4] sm:$0xf]
  %v17 = vld [vmem:[%s0 + $0x8] sm:$0xf]
  %v18 = vld [vmem:[%s0 + $0xc] sm:$0xf]
  %v19 = vld [vmem:[%s0 + $0x10] sm:$0xf]
  %v20 = vld [vmem:[%s0 + $0x14] sm:$0xf]
  %v21 = vld [vmem:[%s0 + $0x18] sm:$0xf]
  %v22 = vld [vmem:[%s0 + $0x1c] sm:$0xf]
  %v23 = vld [vmem:[%s0 + $0x20] sm:$0xf]
  %v24 = vld [vmem:[%s0 + $0x24] sm:$0xf]
  %v25 = vld [vmem:[%s0 + $0x28] sm:$0xf]
  %v26 = vld [vmem:[%s0 + $0x2c] sm:$0xf]
  %v27 = vld [vmem:[%s0 + $0x30] sm:$0xf]
  %v28 = vld [vmem:[%s0 + $0x34] sm:$0xf]
  %v29 = vld [vmem:[%s0 + $0x38] sm:$0xf]
  %v30 = vld [vmem:[%s0 + $0x3c] sm:$0xf]
  %v31 = vld [vmem:[%s0 + $0x40] sm:$0xf]
  %v32 = vld [vmem:[%s0 + $0x44] sm:$0xf]
  %v33 = vld [vmem:[%s0 + $0x48] sm:$0xf]
  %v34 = vld [vmem:[%s0 + $0x4c] sm:$0xf]
  %v35 = vld [vmem:[%s0 + $0x50] sm:$0xf]
  %v36 = vld [vmem:[%s0 + $0x54] sm:$0xf]
  %v37 = vld [vmem:[%s0 + $0x58] sm:$0xf]
  %v38 = vld [vmem:[%s0 + $0x5c] sm:$0xf]
  %v39 = vld [vmem:[%s0 + $0x60] sm:$0xf]
  %v40 = vld [vmem:[%s0 + $0x64] sm:$0xf]
  %v41 = vld [vmem:[%s0 + $0x68] sm:$0xf]
  %v42 = vld [vmem:[%s0 + $0x6c] sm:$0xf]
  %v43 = vld [vmem:[%s0 + $0x70] sm:$0xf]
  %v44 = vld [vmem:[%s0 + $0x74] sm:$0xf]
  %v45 = vld [vmem:[%s0 + $0x78] sm:$0xf]
  %v46 = vld [vmem:[%s0 + $0x7c] sm:$0xf]
  %v47 = vld [vmem:[%s0 + $0x80] sm:$0xf]
  %v48 = vld [vmem:[%s0 + $0x84] sm:$0xf]
  %v49 = vld [vmem:[%s0 + $0x88] sm:$0xf]
  %v50 = vld [vmem:[%s0 + $0x8c] sm:$0xf]
  %v51 = vld [vmem:[%s1] sm:$0xf]
  %v52 = vld [vmem:[%s1 + $0x4] sm:$0xf]
  %v53 = vld [vmem:[%s1 + $0x8] sm:$0xf]
  %v54 = vld [vmem:[%s1 + $0xc] sm:$0xf]
  %v55 = vld [vmem:[%s1 + $0x10] sm:$0xf]
  %v56 = vld [vmem:[%s1 + $0x14] sm:$0xf]
  %v57 = vld [vmem:[%s1 + $0x18] sm:$0xf]
  %v58 = vld [vmem:[%s1 + $0x1c] sm:$0xf]
  %v59 = vld [vmem:[%s1 + $0x20] sm:$0xf]
  %v60 = vld [vmem:[%s1 + $0x24] sm:$0xf]
  %v61 = vld [vmem:[%s1 + $0x28] sm:$0xf]
  %v62 = vld [vmem:[%s1 + $0x2c] sm:$0xf]
  %v63 = vld [vmem:[%s1 + $0x30] sm:$0xf]
  %v64 = vld [vmem:[%s1 + $0x34] sm:$0xf]
  %v65 = vld [vmem:[%s1 + $0x38] sm:$0xf]
  %v66 = vld [vmem:[%s1 + $0x3c] sm:$0xf]
  %v67 = vld [vmem:[%s2] sm:$0x1]
  %v69 = vlaneseq
  %v70 = vshrl.u32 %v69, 7
  %v71 = vsub.s32 0, %v70
  %v72 = vrot.slane %v67, %v71
  %v110 = vunpack.c.l.b16 %v15
  %v111 = vunpack.c.l.b16 %v16
  %v112 = vunpack.c.l.b16 %v17
  %v113 = vunpack.c.l.b16 %v18
  %v114 = vunpack.c.l.b16 %v19
  %v115 = vunpack.c.l.b16 %v20
  %v116 = vunpack.c.l.b16 %v21
  %v117 = vunpack.c.l.b16 %v22
  %v118 = vunpack.c.l.b16 %v23
  %v119 = vunpack.c.l.b16 %v24
  %v120 = vunpack.c.l.b16 %v25
  %v121 = vunpack.c.l.b16 %v26
  %v122 = vunpack.c.l.b16 %v27
  %v123 = vunpack.c.l.b16 %v28
  %v124 = vunpack.c.l.b16 %v29
  %v125 = vunpack.c.l.b16 %v30
  %v126 = vunpack.c.l.b16 %v31
  %v127 = vunpack.c.l.b16 %v32
  %v128 = vunpack.c.l.b16 %v33
  %v129 = vunpack.c.l.b16 %v34
  %v130 = vunpack.c.l.b16 %v35
  %v131 = vunpack.c.l.b16 %v36
  %v132 = vunpack.c.l.b16 %v37
  %v133 = vunpack.c.l.b16 %v38
  %v134 = vunpack.c.l.b16 %v39
  %v135 = vunpack.c.l.b16 %v40
  %v136 = vunpack.c.l.b16 %v41
  %v137 = vunpack.c.l.b16 %v42
  %v138 = vunpack.c.l.b16 %v43
  %v139 = vunpack.c.l.b16 %v44
  %v140 = vunpack.c.l.b16 %v45
  %v141 = vunpack.c.l.b16 %v46
  %v142 = vunpack.c.l.b16 %v47
  %v143 = vunpack.c.l.b16 %v48
  %v144 = vunpack.c.l.b16 %v49
  %v145 = vunpack.c.l.b16 %v50
  %v146 = vpack.c.b16 %v111, %v110
  %v147 = vpack.c.b16 %v113, %v112
  %v148 = vpack.c.b16 %v115, %v114
  %v149 = vpack.c.b16 %v117, %v116
  %v150 = vpack.c.b16 %v119, %v118
  %v151 = vpack.c.b16 %v121, %v120
  %v152 = vpack.c.b16 %v123, %v122
  %v153 = vpack.c.b16 %v125, %v124
  %v154 = vpack.c.b16 %v127, %v126
  %v155 = vpack.c.b16 %v129, %v128
  %v156 = vpack.c.b16 %v131, %v130
  %v157 = vpack.c.b16 %v133, %v132
  %v158 = vpack.c.b16 %v135, %v134
  %v159 = vpack.c.b16 %v137, %v136
  %v160 = vpack.c.b16 %v139, %v138
  %v161 = vpack.c.b16 %v141, %v140
  %v162 = vpack.c.b16 %v143, %v142
  %v163 = vpack.c.b16 %v145, %v144
  %v198 = vunpack.c.l.b16 %v51
  %v199 = vunpack.c.l.b16 %v52
  %v200 = vunpack.c.l.b16 %v53
  %v201 = vunpack.c.l.b16 %v54
  %v202 = vunpack.c.l.b16 %v55
  %v203 = vunpack.c.l.b16 %v56
  %v204 = vunpack.c.l.b16 %v57
  %v205 = vunpack.c.l.b16 %v58
  %v206 = vunpack.c.l.b16 %v59
  %v207 = vunpack.c.l.b16 %v60
  %v208 = vunpack.c.l.b16 %v61
  %v209 = vunpack.c.l.b16 %v62
  %v210 = vunpack.c.l.b16 %v63
  %v211 = vunpack.c.l.b16 %v64
  %v212 = vunpack.c.l.b16 %v65
  %v213 = vunpack.c.l.b16 %v66
  %v214 = vpack.c.b16 %v199, %v198
  %v215 = vpack.c.b16 %v201, %v200
  %v216 = vpack.c.b16 %v203, %v202
  %v217 = vpack.c.b16 %v205, %v204
  %v218 = vpack.c.b16 %v207, %v206
  %v219 = vpack.c.b16 %v209, %v208
  %v220 = vpack.c.b16 %v211, %v210
  %v221 = vpack.c.b16 %v213, %v212
  %230 = vmatprep.subr.bf16.mxu0 0
  %231 = vmatpush1.bf16.msra.mxu0 %v214
  %232 = vmatprep.subr.bf16.mxu0 0
  %233 = vmatpush1.bf16.msra.mxu0 %v215
  %234 = vmatprep.subr.bf16.mxu0 0
  %235 = vmatpush1.bf16.msra.mxu0 %v216
  %236 = vmatprep.subr.bf16.mxu0 0
  %237 = vmatpush1.bf16.msra.mxu0 %v217
  %238 = vmatprep.subr.bf16.mxu0 0
  %239 = vmatpush1.bf16.msra.mxu0 %v218
  %240 = vmatprep.subr.bf16.mxu0 0
  %241 = vmatpush1.bf16.msra.mxu0 %v219
  %242 = vmatprep.subr.bf16.mxu0 0
  %243 = vmatpush1.bf16.msra.mxu0 %v220
  %244 = vmatprep.subr.bf16.mxu0 0
  %245 = vmatpush1.bf16.msra.mxu0 %v221
  %246 = vmatprep.subr.bf16.mxu0 0
  %247 = vmatpush1.bf16.msra.mxu0 0
  %248 = vmatprep.subr.bf16.mxu0 0
  %249 = vmatpush1.bf16.msra.mxu0 0
  %250 = vmatprep.subr.bf16.mxu0 0
  %251 = vmatpush1.bf16.msra.mxu0 0
  %252 = vmatprep.subr.bf16.mxu0 0
  %253 = vmatpush1.bf16.msra.mxu0 0
  %254 = vmatprep.subr.bf16.mxu0 0
  %255 = vmatpush1.bf16.msra.mxu0 0
  %256 = vmatprep.subr.bf16.mxu0 0
  %257 = vmatpush1.bf16.msra.mxu0 0
  %258 = vmatprep.subr.bf16.mxu0 0
  %259 = vmatpush1.bf16.msra.mxu0 0
  %260 = vmatprep.subr.bf16.mxu0 0
  %261 = vmatpush1.bf16.msra.mxu0 0
  %262 = vmatprep.mubr.bf16.mxu0 0
  %263 = vmatmul.mubr.bf16.gmra.mrb[0].mxu0 %v146
  %v264 = vpop.f32.mrb[0].mxu0
  %v265 = vadd.f32 %v72, %v264
  %v266 = vpop.f32.mrb[0].mxu0
  %v267 = vpop.f32.mrb[0].mxu0
  %v268 = vadd.f32 %v72, %v267
  %v269 = vpop.f32.mrb[0].mxu0
  %270 = vmatprep.mubr.bf16.mxu0 0
  %271 = vmatmul.mubr.bf16.gmra.mrb[0].mxu0 %v147
  %v272 = vpop.f32.mrb[0].mxu0
  %v273 = vadd.f32 %v72, %v272
  %v274 = vpop.f32.mrb[0].mxu0
  %v275 = vpop.f32.mrb[0].mxu0
  %v276 = vadd.f32 %v72, %v275
  %v277 = vpop.f32.mrb[0].mxu0
  %278 = vmatprep.mubr.bf16.mxu0 0
  %279 = vmatmul.mubr.bf16.gmra.mrb[0].mxu0 %v148
  %v280 = vpop.f32.mrb[0].mxu0
  %v281 = vadd.f32 %v72, %v280
  %v282 = vpop.f32.mrb[0].mxu0
  %v283 = vpop.f32.mrb[0].mxu0
  %v284 = vadd.f32 %v72, %v283
  %v285 = vpop.f32.mrb[0].mxu0
  %286 = vmatprep.mubr.bf16.mxu0 0
  %287 = vmatmul.mubr.bf16.gmra.mrb[0].mxu0 %v149
  %v288 = vpop.f32.mrb[0].mxu0
  %v289 = vadd.f32 %v72, %v288
  %v290 = vpop.f32.mrb[0].mxu0
  %v291 = vpop.f32.mrb[0].mxu0
  %v292 = vadd.f32 %v72, %v291
  %v293 = vpop.f32.mrb[0].mxu0
  %294 = vmatprep.mubr.bf16.mxu0 0
  %295 = vmatmul.mubr.bf16.gmra.mrb[0].mxu0 %v150
  %v296 = vpop.f32.mrb[0].mxu0
  %v297 = vadd.f32 %v72, %v296
  %v298 = vpop.f32.mrb[0].mxu0
  %v299 = vpop.f32.mrb[0].mxu0
  %v300 = vadd.f32 %v72, %v299
  %v301 = vpop.f32.mrb[0].mxu0
  %302 = vmatprep.mubr.bf16.mxu0 0
  %303 = vmatmul.mubr.bf16.gmra.mrb[0].mxu0 %v151
  %v304 = vpop.f32.mrb[0].mxu0
  %v305 = vadd.f32 %v72, %v304
  %v306 = vpop.f32.mrb[0].mxu0
  %v307 = vpop.f32.mrb[0].mxu0
  %v308 = vadd.f32 %v72, %v307
  %v309 = vpop.f32.mrb[0].mxu0
  %310 = vmatprep.mubr.bf16.mxu0 0
  %311 = vmatmul.mubr.bf16.gmra.mrb[0].mxu0 %v152
  %v312 = vpop.f32.mrb[0].mxu0
  %v313 = vadd.f32 %v72, %v312
  %v314 = vpop.f32.mrb[0].mxu0
  %v315 = vpop.f32.mrb[0].mxu0
  %v316 = vadd.f32 %v72, %v315
  %v317 = vpop.f32.mrb[0].mxu0
  %318 = vmatprep.mubr.bf16.mxu0 0
  %319 = vmatmul.mubr.bf16.gmra.mrb[0].mxu0 %v153
  %v320 = vpop.f32.mrb[0].mxu0
  %v321 = vadd.f32 %v72, %v320
  %v322 = vpop.f32.mrb[0].mxu0
  %v323 = vpop.f32.mrb[0].mxu0
  %v324 = vadd.f32 %v72, %v323
  %v325 = vpop.f32.mrb[0].mxu0
  %326 = vmatprep.mubr.bf16.mxu0 0
  %327 = vmatmul.mubr.bf16.gmra.mrb[0].mxu0 %v154
  %v328 = vpop.f32.mrb[0].mxu0
  %v329 = vadd.f32 %v72, %v328
  %v330 = vpop.f32.mrb[0].mxu0
  %v331 = vpop.f32.mrb[0].mxu0
  %v332 = vadd.f32 %v72, %v331
  %v333 = vpop.f32.mrb[0].mxu0
  %334 = vmatprep.mubr.bf16.mxu0 0
  %335 = vmatmul.mubr.bf16.gmra.mrb[0].mxu0 %v155
  %v336 = vpop.f32.mrb[0].mxu0
  %v337 = vadd.f32 %v72, %v336
  %v338 = vpop.f32.mrb[0].mxu0
  %v339 = vpop.f32.mrb[0].mxu0
  %v340 = vadd.f32 %v72, %v339
  %v341 = vpop.f32.mrb[0].mxu0
  %342 = vmatprep.mubr.bf16.mxu0 0
  %343 = vmatmul.mubr.bf16.gmra.mrb[0].mxu0 %v156
  %v344 = vpop.f32.mrb[0].mxu0
  %v345 = vadd.f32 %v72, %v344
  %v346 = vpop.f32.mrb[0].mxu0
  %v347 = vpop.f32.mrb[0].mxu0
  %v348 = vadd.f32 %v72, %v347
  %v349 = vpop.f32.mrb[0].mxu0
  %350 = vmatprep.mubr.bf16.mxu0 0
  %351 = vmatmul.mubr.bf16.gmra.mrb[0].mxu0 %v157
  %v352 = vpop.f32.mrb[0].mxu0
  %v353 = vadd.f32 %v72, %v352
  %v354 = vpop.f32.mrb[0].mxu0
  %v355 = vpop.f32.mrb[0].mxu0
  %v356 = vadd.f32 %v72, %v355
  %v357 = vpop.f32.mrb[0].mxu0
  %358 = vmatprep.mubr.bf16.mxu0 0
  %359 = vmatmul.mubr.bf16.gmra.mrb[0].mxu0 %v158
  %v360 = vpop.f32.mrb[0].mxu0
  %v361 = vadd.f32 %v72, %v360
  %v362 = vpop.f32.mrb[0].mxu0
  %v363 = vpop.f32.mrb[0].mxu0
  %v364 = vadd.f32 %v72, %v363
  %v365 = vpop.f32.mrb[0].mxu0
  %366 = vmatprep.mubr.bf16.mxu0 0
  %367 = vmatmul.mubr.bf16.gmra.mrb[0].mxu0 %v159
  %v368 = vpop.f32.mrb[0].mxu0
  %v369 = vadd.f32 %v72, %v368
  %v370 = vpop.f32.mrb[0].mxu0
  %v371 = vpop.f32.mrb[0].mxu0
  %v372 = vadd.f32 %v72, %v371
  %v373 = vpop.f32.mrb[0].mxu0
  %374 = vmatprep.mubr.bf16.mxu0 0
  %375 = vmatmul.mubr.bf16.gmra.mrb[0].mxu0 %v160
  %v376 = vpop.f32.mrb[0].mxu0
  %v377 = vadd.f32 %v72, %v376
  %v378 = vpop.f32.mrb[0].mxu0
  %v379 = vpop.f32.mrb[0].mxu0
  %v380 = vadd.f32 %v72, %v379
  %v381 = vpop.f32.mrb[0].mxu0
  %382 = vmatprep.mubr.bf16.mxu0 0
  %383 = vmatmul.mubr.bf16.gmra.mrb[0].mxu0 %v161
  %v384 = vpop.f32.mrb[0].mxu0
  %v385 = vadd.f32 %v72, %v384
  %v386 = vpop.f32.mrb[0].mxu0
  %v387 = vpop.f32.mrb[0].mxu0
  %v388 = vadd.f32 %v72, %v387
  %v389 = vpop.f32.mrb[0].mxu0
  %390 = vmatprep.mubr.bf16.mxu0 0
  %391 = vmatmul.mubr.bf16.gmra.mrb[0].mxu0 %v162
  %v392 = vpop.f32.mrb[0].mxu0
  %v393 = vadd.f32 %v72, %v392
  %v394 = vpop.f32.mrb[0].mxu0
  %v395 = vpop.f32.mrb[0].mxu0
  %v396 = vadd.f32 %v72, %v395
  %v397 = vpop.f32.mrb[0].mxu0
  %398 = vmatprep.mubr.bf16.mxu0 0
  %399 = vmatmul.mubr.bf16.gmra.mrb[0].mxu0 %v163
  %v400 = vpop.f32.mrb[0].mxu0
  %v401 = vadd.f32 %v72, %v400
  %v402 = vpop.f32.mrb[0].mxu0
  %v403 = vpop.f32.mrb[0].mxu0
  %v404 = vadd.f32 %v72, %v403
  %v405 = vpop.f32.mrb[0].mxu0
  %406 = vdwg.mxu0
  %v407 = vmax.f32 %v265, 0.0
  %v408 = vmax.f32 %v268, 0.0
  %v409 = vmax.f32 %v273, 0.0
  %v410 = vmax.f32 %v276, 0.0
  %v411 = vmax.f32 %v281, 0.0
  %v412 = vmax.f32 %v284, 0.0
  %v413 = vmax.f32 %v289, 0.0
  %v414 = vmax.f32 %v292, 0.0
  %v415 = vmax.f32 %v297, 0.0
  %v416 = vmax.f32 %v300, 0.0
  %v417 = vmax.f32 %v305, 0.0
  %v418 = vmax.f32 %v308, 0.0
  %v419 = vmax.f32 %v313, 0.0
  %v420 = vmax.f32 %v316, 0.0
  %v421 = vmax.f32 %v321, 0.0
  %v422 = vmax.f32 %v324, 0.0
  %v423 = vmax.f32 %v329, 0.0
  %v424 = vmax.f32 %v332, 0.0
  %v425 = vmax.f32 %v337, 0.0
  %v426 = vmax.f32 %v340, 0.0
  %v427 = vmax.f32 %v345, 0.0
  %v428 = vmax.f32 %v348, 0.0
  %v429 = vmax.f32 %v353, 0.0
  %v430 = vmax.f32 %v356, 0.0
  %v431 = vmax.f32 %v361, 0.0
  %v432 = vmax.f32 %v364, 0.0
  %v433 = vmax.f32 %v369, 0.0
  %v434 = vmax.f32 %v372, 0.0
  %v435 = vmax.f32 %v377, 0.0
  %v436 = vmax.f32 %v380, 0.0
  %v437 = vmax.f32 %v385, 0.0
  %v438 = vmax.f32 %v388, 0.0
  %v439 = vmax.f32 %v393, 0.0
  %v440 = vmax.f32 %v396, 0.0
  %v441 = vmax.f32 %v401, 0.0
  %v442 = vmax.f32 %v404, 0.0
  %v443 = vpack.c.bf16 %v408, %v407
  %v444 = vpack.c.bf16 %v410, %v409
  %v445 = vpack.c.bf16 %v412, %v411
  %v446 = vpack.c.bf16 %v414, %v413
  %v447 = vpack.c.bf16 %v416, %v415
  %v448 = vpack.c.bf16 %v418, %v417
  %v449 = vpack.c.bf16 %v420, %v419
  %v450 = vpack.c.bf16 %v422, %v421
  %v451 = vpack.c.bf16 %v424, %v423
  %v452 = vpack.c.bf16 %v426, %v425
  %v453 = vpack.c.bf16 %v428, %v427
  %v454 = vpack.c.bf16 %v430, %v429
  %v455 = vpack.c.bf16 %v432, %v431
  %v456 = vpack.c.bf16 %v434, %v433
  %v457 = vpack.c.bf16 %v436, %v435
  %v458 = vpack.c.bf16 %v438, %v437
  %v459 = vpack.c.bf16 %v440, %v439
  %v460 = vpack.c.bf16 %v442, %v441
  %v479 = vunpack.c.l.b16 %v443
  %v480 = vunpack.c.h.b16 %v443
  %v481 = vunpack.c.l.b16 %v444
  %v482 = vunpack.c.h.b16 %v444
  %v483 = vunpack.c.l.b16 %v445
  %v484 = vunpack.c.h.b16 %v445
  %v485 = vunpack.c.l.b16 %v446
  %v486 = vunpack.c.h.b16 %v446
  %v487 = vunpack.c.l.b16 %v447
  %v488 = vunpack.c.h.b16 %v447
  %v489 = vunpack.c.l.b16 %v448
  %v490 = vunpack.c.h.b16 %v448
  %v491 = vunpack.c.l.b16 %v449
  %v492 = vunpack.c.h.b16 %v449
  %v493 = vunpack.c.l.b16 %v450
  %v494 = vunpack.c.h.b16 %v450
  %v495 = vunpack.c.l.b16 %v451
  %v496 = vunpack.c.h.b16 %v451
  %v497 = vunpack.c.l.b16 %v452
  %v498 = vunpack.c.h.b16 %v452
  %v499 = vunpack.c.l.b16 %v453
  %v500 = vunpack.c.h.b16 %v453
  %v501 = vunpack.c.l.b16 %v454
  %v502 = vunpack.c.h.b16 %v454
  %v503 = vunpack.c.l.b16 %v455
  %v504 = vunpack.c.h.b16 %v455
  %v505 = vunpack.c.l.b16 %v456
  %v506 = vunpack.c.h.b16 %v456
  %v507 = vunpack.c.l.b16 %v457
  %v508 = vunpack.c.h.b16 %v457
  %v509 = vunpack.c.l.b16 %v458
  %v510 = vunpack.c.h.b16 %v458
  %v511 = vunpack.c.l.b16 %v459
  %v512 = vunpack.c.h.b16 %v459
  %v513 = vunpack.c.l.b16 %v460
  %v514 = vunpack.c.h.b16 %v460
  %v515 = vpack.c.b16 %v479, %v479
  %v516 = vpack.c.b16 %v480, %v480
  %v517 = vpack.c.b16 %v481, %v481
  %v518 = vpack.c.b16 %v482, %v482
  %v519 = vpack.c.b16 %v483, %v483
  %v520 = vpack.c.b16 %v484, %v484
  %v521 = vpack.c.b16 %v485, %v485
  %v522 = vpack.c.b16 %v486, %v486
  %v523 = vpack.c.b16 %v487, %v487
  %v524 = vpack.c.b16 %v488, %v488
  %v525 = vpack.c.b16 %v489, %v489
  %v526 = vpack.c.b16 %v490, %v490
  %v527 = vpack.c.b16 %v491, %v491
  %v528 = vpack.c.b16 %v492, %v492
  %v529 = vpack.c.b16 %v493, %v493
  %v530 = vpack.c.b16 %v494, %v494
  %v531 = vpack.c.b16 %v495, %v495
  %v532 = vpack.c.b16 %v496, %v496
  %v533 = vpack.c.b16 %v497, %v497
  %v534 = vpack.c.b16 %v498, %v498
  %v535 = vpack.c.b16 %v499, %v499
  %v536 = vpack.c.b16 %v500, %v500
  %v537 = vpack.c.b16 %v501, %v501
  %v538 = vpack.c.b16 %v502, %v502
  %v539 = vpack.c.b16 %v503, %v503
  %v540 = vpack.c.b16 %v504, %v504
  %v541 = vpack.c.b16 %v505, %v505
  %v542 = vpack.c.b16 %v506, %v506
  %v543 = vpack.c.b16 %v507, %v507
  %v544 = vpack.c.b16 %v508, %v508
  %v545 = vpack.c.b16 %v509, %v509
  %v546 = vpack.c.b16 %v510, %v510
  %v547 = vpack.c.b16 %v511, %v511
  %v548 = vpack.c.b16 %v512, %v512
  %v549 = vpack.c.b16 %v513, %v513
  %v550 = vpack.c.b16 %v514, %v514
  %vm587 = vcmask 519168
  %588 = vst.msk [vmem:[%s3] sm:$0xf] %vm587, %v515
  %589 = vst.msk [vmem:[%s3 + $0x4] sm:$0xf] %vm587, %v516
  %590 = vst.msk [vmem:[%s3 + $0x8] sm:$0xf] %vm587, %v517
  %591 = vst.msk [vmem:[%s3 + $0xc] sm:$0xf] %vm587, %v518
  %592 = vst.msk [vmem:[%s3 + $0x10] sm:$0xf] %vm587, %v519
  %593 = vst.msk [vmem:[%s3 + $0x14] sm:$0xf] %vm587, %v520
  %594 = vst.msk [vmem:[%s3 + $0x18] sm:$0xf] %vm587, %v521
  %595 = vst.msk [vmem:[%s3 + $0x1c] sm:$0xf] %vm587, %v522
  %596 = vst.msk [vmem:[%s3 + $0x20] sm:$0xf] %vm587, %v523
  %597 = vst.msk [vmem:[%s3 + $0x24] sm:$0xf] %vm587, %v524
  %598 = vst.msk [vmem:[%s3 + $0x28] sm:$0xf] %vm587, %v525
  %599 = vst.msk [vmem:[%s3 + $0x2c] sm:$0xf] %vm587, %v526
  %600 = vst.msk [vmem:[%s3 + $0x30] sm:$0xf] %vm587, %v527
  %601 = vst.msk [vmem:[%s3 + $0x34] sm:$0xf] %vm587, %v528
  %602 = vst.msk [vmem:[%s3 + $0x38] sm:$0xf] %vm587, %v529
  %603 = vst.msk [vmem:[%s3 + $0x3c] sm:$0xf] %vm587, %v530
  %604 = vst.msk [vmem:[%s3 + $0x40] sm:$0xf] %vm587, %v531
  %605 = vst.msk [vmem:[%s3 + $0x44] sm:$0xf] %vm587, %v532
  %606 = vst.msk [vmem:[%s3 + $0x48] sm:$0xf] %vm587, %v533
  %607 = vst.msk [vmem:[%s3 + $0x4c] sm:$0xf] %vm587, %v534
  %608 = vst.msk [vmem:[%s3 + $0x50] sm:$0xf] %vm587, %v535
  %609 = vst.msk [vmem:[%s3 + $0x54] sm:$0xf] %vm587, %v536
  %610 = vst.msk [vmem:[%s3 + $0x58] sm:$0xf] %vm587, %v537
  %611 = vst.msk [vmem:[%s3 + $0x5c] sm:$0xf] %vm587, %v538
  %612 = vst.msk [vmem:[%s3 + $0x60] sm:$0xf] %vm587, %v539
  %613 = vst.msk [vmem:[%s3 + $0x64] sm:$0xf] %vm587, %v540
  %614 = vst.msk [vmem:[%s3 + $0x68] sm:$0xf] %vm587, %v541
  %615 = vst.msk [vmem:[%s3 + $0x6c] sm:$0xf] %vm587, %v542
  %616 = vst.msk [vmem:[%s3 + $0x70] sm:$0xf] %vm587, %v543
  %617 = vst.msk [vmem:[%s3 + $0x74] sm:$0xf] %vm587, %v544
  %618 = vst.msk [vmem:[%s3 + $0x78] sm:$0xf] %vm587, %v545
  %619 = vst.msk [vmem:[%s3 + $0x7c] sm:$0xf] %vm587, %v546
  %620 = vst.msk [vmem:[%s3 + $0x80] sm:$0xf] %vm587, %v547
  %621 = vst.msk [vmem:[%s3 + $0x84] sm:$0xf] %vm587, %v548
  %622 = vst.msk [vmem:[%s3 + $0x88] sm:$0xf] %vm587, %v549
  %623 = vst.msk [vmem:[%s3 + $0x8c] sm:$0xf] %vm587, %v550
  // Predicated region
  $region14: #{gt_net_forward.7} parent=0 // pred_check
    _
  $region15: #{gt_net_forward.7} parent=0 // pred_check_branch
    %625 = sbr.rel (0) target = $region17
  $region16: #{gt_net_forward.7} parent=0 // pred_region
    _
  $region17: #{gt_net_forward.7} parent=0 // pred_fallthru
    _
  // Predicated region
  $region18: #{gt_net_forward.7} parent=0 // pred_check
    _
  $region19: #{gt_net_forward.7} parent=0 // pred_check_branch
    %627 = sbr.rel (0) target = $region21
  $region20: #{gt_net_forward.7} parent=0 // pred_region
    _
  $region21: #{gt_net_forward.7} parent=0 // pred_fallthru
    _

// kernel: gt_net_forward.8
$region0: #{gt_net_forward.8}
  #allocation0 [shape = 'u32[]', space=smem, size = 0x4, offset = 0x4, fixed_abs, tag = 'smem constant byte address 0x4 - core index']
  #allocation1 [shape = 'u32[144,128]{1,0:T(1,128)}', space=vmem, size = 0x12000, scoped, tag = 'internal scratch']
  %s0 = inlined_call_operand.vmem [shape: bf16[98,256], index: 0, kind: input, shape index: {}]
  %s1 = inlined_call_operand.vmem [shape: bf16[256,64], index: 1, kind: input, shape index: {}]
  %s2 = inlined_call_operand.vmem [shape: f32[1,64], index: 2, kind: input, shape index: {}]
  %s3 = inlined_call_operand.vmem [shape: bf16[98,64], index: 3, kind: output, shape index: {}]
  %s4 = sld [smem:[#allocation0]]
  $region22: #{gt_net_forward.8} parent=0
    _
  %s6 = ssub.s32 1, %s4
  %s7 = scalar_select 0, %s6, %s4
  // Predicated region
  $region2: #{gt_net_forward.8} parent=0 // pred_check
    _
  $region3: #{gt_net_forward.8} parent=0 // pred_check_branch
    %9 = sbr.rel (0) target = $region5
  $region4: #{gt_net_forward.8} parent=0 // pred_region
    _
  $region5: #{gt_net_forward.8} parent=0 // pred_fallthru
    _
  // Predicated region
  $region6: #{gt_net_forward.8} parent=0 // pred_check
    _
  $region7: #{gt_net_forward.8} parent=0 // pred_check_branch
    %11 = sbr.rel (0) target = $region9
  $region8: #{gt_net_forward.8} parent=0 // pred_region
    _
  $region9: #{gt_net_forward.8} parent=0 // pred_fallthru
    _
  // Predicated region
  $region10: #{gt_net_forward.8} parent=0 // pred_check
    _
  $region11: #{gt_net_forward.8} parent=0 // pred_check_branch
    %13 = sbr.rel (0) target = $region13
  $region12: #{gt_net_forward.8} parent=0 // pred_region
    _
  $region13: #{gt_net_forward.8} parent=0 // pred_fallthru
    _
  %v15 = vld [vmem:[%s0] sm:$0xff]
  %v16 = vld [vmem:[%s0 + $0x8] sm:$0xff]
  %v17 = vld [vmem:[%s0 + $0x10] sm:$0xff]
  %v18 = vld [vmem:[%s0 + $0x18] sm:$0xff]
  %v19 = vld [vmem:[%s0 + $0x20] sm:$0xff]
  %v20 = vld [vmem:[%s0 + $0x28] sm:$0xff]
  %v21 = vld [vmem:[%s0 + $0x30] sm:$0xff]
  %v22 = vld [vmem:[%s0 + $0x38] sm:$0xff]
  %v23 = vld [vmem:[%s0 + $0x40] sm:$0xff]
  %v24 = vld [vmem:[%s0 + $0x48] sm:$0xff]
  %v25 = vld [vmem:[%s0 + $0x50] sm:$0xff]
  %v26 = vld [vmem:[%s0 + $0x58] sm:$0xff]
  %v27 = vld [vmem:[%s0 + $0x60] sm:$0x11]
  %v28 = vld [vmem:[%s1] sm:$0xf]
  %v29 = vld [vmem:[%s1 + $0x4] sm:$0xf]
  %v30 = vld [vmem:[%s1 + $0x8] sm:$0xf]
  %v31 = vld [vmem:[%s1 + $0xc] sm:$0xf]
  %v32 = vld [vmem:[%s1 + $0x10] sm:$0xf]
  %v33 = vld [vmem:[%s1 + $0x14] sm:$0xf]
  %v34 = vld [vmem:[%s1 + $0x18] sm:$0xf]
  %v35 = vld [vmem:[%s1 + $0x1c] sm:$0xf]
  %v36 = vld [vmem:[%s1 + $0x20] sm:$0xf]
  %v37 = vld [vmem:[%s1 + $0x24] sm:$0xf]
  %v38 = vld [vmem:[%s1 + $0x28] sm:$0xf]
  %v39 = vld [vmem:[%s1 + $0x2c] sm:$0xf]
  %v40 = vld [vmem:[%s1 + $0x30] sm:$0xf]
  %v41 = vld [vmem:[%s1 + $0x34] sm:$0xf]
  %v42 = vld [vmem:[%s1 + $0x38] sm:$0xf]
  %v43 = vld [vmem:[%s1 + $0x3c] sm:$0xf]
  %v44 = vld [vmem:[%s1 + $0x40] sm:$0xf]
  %v45 = vld [vmem:[%s1 + $0x44] sm:$0xf]
  %v46 = vld [vmem:[%s1 + $0x48] sm:$0xf]
  %v47 = vld [vmem:[%s1 + $0x4c] sm:$0xf]
  %v48 = vld [vmem:[%s1 + $0x50] sm:$0xf]
  %v49 = vld [vmem:[%s1 + $0x54] sm:$0xf]
  %v50 = vld [vmem:[%s1 + $0x58] sm:$0xf]
  %v51 = vld [vmem:[%s1 + $0x5c] sm:$0xf]
  %v52 = vld [vmem:[%s1 + $0x60] sm:$0xf]
  %v53 = vld [vmem:[%s1 + $0x64] sm:$0xf]
  %v54 = vld [vmem:[%s1 + $0x68] sm:$0xf]
  %v55 = vld [vmem:[%s1 + $0x6c] sm:$0xf]
  %v56 = vld [vmem:[%s1 + $0x70] sm:$0xf]
  %v57 = vld [vmem:[%s1 + $0x74] sm:$0xf]
  %v58 = vld [vmem:[%s1 + $0x78] sm:$0xf]
  %v59 = vld [vmem:[%s1 + $0x7c] sm:$0xf]
  %v60 = vld [vmem:[%s2] sm:$0x1]
  %v62 = vlaneseq
  %v63 = vshrl.u32 %v62, 7
  %v64 = vsub.s32 0, %v63
  %v65 = vrot.slane %v60, %v64
  %v80 = vunpack.c.l.b16 %v15
  %v81 = vunpack.c.h.b16 %v15
  %v82 = vunpack.c.l.b16 %v16
  %v83 = vunpack.c.h.b16 %v16
  %v84 = vunpack.c.l.b16 %v17
  %v85 = vunpack.c.h.b16 %v17
  %v86 = vunpack.c.l.b16 %v18
  %v87 = vunpack.c.h.b16 %v18
  %v88 = vunpack.c.l.b16 %v19
  %v89 = vunpack.c.h.b16 %v19
  %v90 = vunpack.c.l.b16 %v20
  %v91 = vunpack.c.h.b16 %v20
  %v92 = vunpack.c.l.b16 %v21
  %v93 = vunpack.c.h.b16 %v21
  %v94 = vunpack.c.l.b16 %v22
  %v95 = vunpack.c.h.b16 %v22
  %v96 = vunpack.c.l.b16 %v23
  %v97 = vunpack.c.h.b16 %v23
  %v98 = vunpack.c.l.b16 %v24
  %v99 = vunpack.c.h.b16 %v24
  %v100 = vunpack.c.l.b16 %v25
  %v101 = vunpack.c.h.b16 %v25
  %v102 = vunpack.c.l.b16 %v26
  %v103 = vunpack.c.h.b16 %v26
  %v104 = vunpack.c.l.b16 %v27
  %v105 = vunpack.c.h.b16 %v27
  %v106 = vpack.c.b16 %v82, %v80
  %v107 = vpack.c.b16 %v83, %v81
  %v108 = vpack.c.b16 %v86, %v84
  %v109 = vpack.c.b16 %v87, %v85
  %v110 = vpack.c.b16 %v90, %v88
  %v111 = vpack.c.b16 %v91, %v89
  %v112 = vpack.c.b16 %v94, %v92
  %v113 = vpack.c.b16 %v95, %v93
  %v114 = vpack.c.b16 %v98, %v96
  %v115 = vpack.c.b16 %v99, %v97
  %v116 = vpack.c.b16 %v102, %v100
  %v117 = vpack.c.b16 %v103, %v101
  %v118 = vpack.c.b16 %v104, %v104
  %v119 = vpack.c.b16 %v105, %v105
  %v166 = vunpack.c.l.b16 %v28
  %v167 = vunpack.c.l.b16 %v29
  %v168 = vunpack.c.l.b16 %v30
  %v169 = vunpack.c.l.b16 %v31
  %v170 = vunpack.c.l.b16 %v32
  %v171 = vunpack.c.l.b16 %v33
  %v172 = vunpack.c.l.b16 %v34
  %v173 = vunpack.c.l.b16 %v35
  %v174 = vunpack.c.l.b16 %v36
  %v175 = vunpack.c.l.b16 %v37
  %v176 = vunpack.c.l.b16 %v38
  %v177 = vunpack.c.l.b16 %v39
  %v178 = vunpack.c.l.b16 %v40
  %v179 = vunpack.c.l.b16 %v41
  %v180 = vunpack.c.l.b16 %v42
  %v181 = vunpack.c.l.b16 %v43
  %v182 = vunpack.c.l.b16 %v44
  %v183 = vunpack.c.l.b16 %v45
  %v184 = vunpack.c.l.b16 %v46
  %v185 = vunpack.c.l.b16 %v47
  %v186 = vunpack.c.l.b16 %v48
  %v187 = vunpack.c.l.b16 %v49
  %v188 = vunpack.c.l.b16 %v50
  %v189 = vunpack.c.l.b16 %v51
  %v190 = vunpack.c.l.b16 %v52
  %v191 = vunpack.c.l.b16 %v53
  %v192 = vunpack.c.l.b16 %v54
  %v193 = vunpack.c.l.b16 %v55
  %v194 = vunpack.c.l.b16 %v56
  %v195 = vunpack.c.l.b16 %v57
  %v196 = vunpack.c.l.b16 %v58
  %v197 = vunpack.c.l.b16 %v59
  %v198 = vpack.c.b16 %v167, %v166
  %v199 = vpack.c.b16 %v169, %v168
  %v200 = vpack.c.b16 %v171, %v170
  %v201 = vpack.c.b16 %v173, %v172
  %v202 = vpack.c.b16 %v175, %v174
  %v203 = vpack.c.b16 %v177, %v176
  %v204 = vpack.c.b16 %v179, %v178
  %v205 = vpack.c.b16 %v181, %v180
  %v206 = vpack.c.b16 %v183, %v182
  %v207 = vpack.c.b16 %v185, %v184
  %v208 = vpack.c.b16 %v187, %v186
  %v209 = vpack.c.b16 %v189, %v188
  %v210 = vpack.c.b16 %v191, %v190
  %v211 = vpack.c.b16 %v193, %v192
  %v212 = vpack.c.b16 %v195, %v194
  %v213 = vpack.c.b16 %v197, %v196
  %230 = vmatprep.subr.bf16.mxu0 0
  %231 = vmatpush1.bf16.msra.mxu0 %v198
  %232 = vmatprep.subr.bf16.mxu0 0
  %233 = vmatpush1.bf16.msra.mxu0 %v199
  %234 = vmatprep.subr.bf16.mxu0 0
  %235 = vmatpush1.bf16.msra.mxu0 %v200
  %236 = vmatprep.subr.bf16.mxu0 0
  %237 = vmatpush1.bf16.msra.mxu0 %v201
  %238 = vmatprep.subr.bf16.mxu0 0
  %239 = vmatpush1.bf16.msra.mxu0 %v202
  %240 = vmatprep.subr.bf16.mxu0 0
  %241 = vmatpush1.bf16.msra.mxu0 %v203
  %242 = vmatprep.subr.bf16.mxu0 0
  %243 = vmatpush1.bf16.msra.mxu0 %v204
  %244 = vmatprep.subr.bf16.mxu0 0
  %245 = vmatpush1.bf16.msra.mxu0 %v205
  %246 = vmatprep.subr.bf16.mxu0 0
  %247 = vmatpush1.bf16.msra.mxu0 %v206
  %248 = vmatprep.subr.bf16.mxu0 0
  %249 = vmatpush1.bf16.msra.mxu0 %v207
  %250 = vmatprep.subr.bf16.mxu0 0
  %251 = vmatpush1.bf16.msra.mxu0 %v208
  %252 = vmatprep.subr.bf16.mxu0 0
  %253 = vmatpush1.bf16.msra.mxu0 %v209
  %254 = vmatprep.subr.bf16.mxu0 0
  %255 = vmatpush1.bf16.msra.mxu0 %v210
  %256 = vmatprep.subr.bf16.mxu0 0
  %257 = vmatpush1.bf16.msra.mxu0 %v211
  %258 = vmatprep.subr.bf16.mxu0 0
  %259 = vmatpush1.bf16.msra.mxu0 %v212
  %260 = vmatprep.subr.bf16.mxu0 0
  %261 = vmatpush1.bf16.msra.mxu0 %v213
  %262 = vmatprep.mubr.bf16.mxu0 %v107
  %263 = vmatmul.mubr.bf16.gmra.mrb[0].mxu0 %v106
  %v264 = vpop.f32.mrb[0].mxu0
  %v265 = vadd.f32 %v65, %v264
  %v266 = vpop.f32.mrb[0].mxu0
  %v267 = vpop.f32.mrb[0].mxu0
  %v268 = vadd.f32 %v65, %v267
  %v269 = vpop.f32.mrb[0].mxu0
  %270 = vmatprep.mubr.bf16.mxu0 %v109
  %271 = vmatmul.mubr.bf16.gmra.mrb[0].mxu0 %v108
  %v272 = vpop.f32.mrb[0].mxu0
  %v273 = vadd.f32 %v65, %v272
  %v274 = vpop.f32.mrb[0].mxu0
  %v275 = vpop.f32.mrb[0].mxu0
  %v276 = vadd.f32 %v65, %v275
  %v277 = vpop.f32.mrb[0].mxu0
  %278 = vmatprep.mubr.bf16.mxu0 %v111
  %279 = vmatmul.mubr.bf16.gmra.mrb[0].mxu0 %v110
  %v280 = vpop.f32.mrb[0].mxu0
  %v281 = vadd.f32 %v65, %v280
  %v282 = vpop.f32.mrb[0].mxu0
  %v283 = vpop.f32.mrb[0].mxu0
  %v284 = vadd.f32 %v65, %v283
  %v285 = vpop.f32.mrb[0].mxu0
  %286 = vmatprep.mubr.bf16.mxu0 %v113
  %287 = vmatmul.mubr.bf16.gmra.mrb[0].mxu0 %v112
  %v288 = vpop.f32.mrb[0].mxu0
  %v289 = vadd.f32 %v65, %v288
  %v290 = vpop.f32.mrb[0].mxu0
  %v291 = vpop.f32.mrb[0].mxu0
  %v292 = vadd.f32 %v65, %v291
  %v293 = vpop.f32.mrb[0].mxu0
  %294 = vmatprep.mubr.bf16.mxu0 %v115
  %295 = vmatmul.mubr.bf16.gmra.mrb[0].mxu0 %v114
  %v296 = vpop.f32.mrb[0].mxu0
  %v297 = vadd.f32 %v65, %v296
  %v298 = vpop.f32.mrb[0].mxu0
  %v299 = vpop.f32.mrb[0].mxu0
  %v300 = vadd.f32 %v65, %v299
  %v301 = vpop.f32.mrb[0].mxu0
  %302 = vmatprep.mubr.bf16.mxu0 %v117
  %303 = vmatmul.mubr.bf16.gmra.mrb[0].mxu0 %v116
  %v304 = vpop.f32.mrb[0].mxu0
  %v305 = vadd.f32 %v65, %v304
  %v306 = vpop.f32.mrb[0].mxu0
  %v307 = vpop.f32.mrb[0].mxu0
  %v308 = vadd.f32 %v65, %v307
  %v309 = vpop.f32.mrb[0].mxu0
  %310 = vmatprep.mubr.bf16.mxu0 %v119
  %311 = vmatmul.mubr.bf16.gmra.mrb[0].mxu0 %v118
  %v312 = vpop.f32.mrb[0].mxu0
  %v313 = vadd.f32 %v65, %v312
  %v314 = vpop.f32.mrb[0].mxu0
  %v315 = vpop.f32.mrb[0].mxu0
  %v316 = vpop.f32.mrb[0].mxu0
  %317 = vdwg.mxu0
  %v318 = vmax.f32 %v265, 0.0
  %v319 = vmax.f32 %v268, 0.0
  %v320 = vmax.f32 %v273, 0.0
  %v321 = vmax.f32 %v276, 0.0
  %v322 = vmax.f32 %v281, 0.0
  %v323 = vmax.f32 %v284, 0.0
  %v324 = vmax.f32 %v289, 0.0
  %v325 = vmax.f32 %v292, 0.0
  %v326 = vmax.f32 %v297, 0.0
  %v327 = vmax.f32 %v300, 0.0
  %v328 = vmax.f32 %v305, 0.0
  %v329 = vmax.f32 %v308, 0.0
  %v330 = vmax.f32 %v313, 0.0
  %v331 = vpack.c.bf16 %v319, %v318
  %v332 = vpack.c.bf16 %v321, %v320
  %v333 = vpack.c.bf16 %v323, %v322
  %v334 = vpack.c.bf16 %v325, %v324
  %v335 = vpack.c.bf16 %v327, %v326
  %v336 = vpack.c.bf16 %v329, %v328
  %v337 = vpack.c.bf16 %v330, %v330
  %v345 = vunpack.c.l.b16 %v331
  %v346 = vunpack.c.h.b16 %v331
  %v347 = vunpack.c.l.b16 %v332
  %v348 = vunpack.c.h.b16 %v332
  %v349 = vunpack.c.l.b16 %v333
  %v350 = vunpack.c.h.b16 %v333
  %v351 = vunpack.c.l.b16 %v334
  %v352 = vunpack.c.h.b16 %v334
  %v353 = vunpack.c.l.b16 %v335
  %v354 = vunpack.c.h.b16 %v335
  %v355 = vunpack.c.l.b16 %v336
  %v356 = vunpack.c.h.b16 %v336
  %v357 = vunpack.c.l.b16 %v337
  %v358 = vpack.c.b16 %v345, %v345
  %v359 = vpack.c.b16 %v346, %v346
  %v360 = vpack.c.b16 %v347, %v347
  %v361 = vpack.c.b16 %v348, %v348
  %v362 = vpack.c.b16 %v349, %v349
  %v363 = vpack.c.b16 %v350, %v350
  %v364 = vpack.c.b16 %v351, %v351
  %v365 = vpack.c.b16 %v352, %v352
  %v366 = vpack.c.b16 %v353, %v353
  %v367 = vpack.c.b16 %v354, %v354
  %v368 = vpack.c.b16 %v355, %v355
  %v369 = vpack.c.b16 %v356, %v356
  %v370 = vpack.c.b16 %v357, %v357
  %vm384 = vcmask 519168
  %385 = vst.msk [vmem:[%s3] sm:$0xf] %vm384, %v358
  %386 = vst.msk [vmem:[%s3 + $0x4] sm:$0xf] %vm384, %v359
  %387 = vst.msk [vmem:[%s3 + $0x8] sm:$0xf] %vm384, %v360
  %388 = vst.msk [vmem:[%s3 + $0xc] sm:$0xf] %vm384, %v361
  %389 = vst.msk [vmem:[%s3 + $0x10] sm:$0xf] %vm384, %v362
  %390 = vst.msk [vmem:[%s3 + $0x14] sm:$0xf] %vm384, %v363
  %391 = vst.msk [vmem:[%s3 + $0x18] sm:$0xf] %vm384, %v364
  %392 = vst.msk [vmem:[%s3 + $0x1c] sm:$0xf] %vm384, %v365
  %393 = vst.msk [vmem:[%s3 + $0x20] sm:$0xf] %vm384, %v366
  %394 = vst.msk [vmem:[%s3 + $0x24] sm:$0xf] %vm384, %v367
  %395 = vst.msk [vmem:[%s3 + $0x28] sm:$0xf] %vm384, %v368
  %396 = vst.msk [vmem:[%s3 + $0x2c] sm:$0xf] %vm384, %v369
  %vm397 = vcmask 516096
  %398 = vst.msk [vmem:[%s3 + $0x30] sm:$0x1] %vm397, %v370
  // Predicated region
  $region14: #{gt_net_forward.8} parent=0 // pred_check
    _
  $region15: #{gt_net_forward.8} parent=0 // pred_check_branch
    %400 = sbr.rel (0) target = $region17
  $region16: #{gt_net_forward.8} parent=0 // pred_region
    _
  $region17: #{gt_net_forward.8} parent=0 // pred_fallthru
    _
  // Predicated region
  $region18: #{gt_net_forward.8} parent=0 // pred_check
    _
  $region19: #{gt_net_forward.8} parent=0 // pred_check_branch
    %402 = sbr.rel (0) target = $region21
  $region20: #{gt_net_forward.8} parent=0 // pred_region
    _
  $region21: #{gt_net_forward.8} parent=0 // pred_fallthru
    _

// kernel: gt_net_forward.9
$region0: #{gt_net_forward.9}
  #allocation0 [shape = 'u32[]', space=smem, size = 0x4, offset = 0x4, fixed_abs, tag = 'smem constant byte address 0x4 - core index']
  #allocation1 [shape = 'u32[144,128]{1,0:T(1,128)}', space=vmem, size = 0x12000, scoped, tag = 'internal scratch']
  %s0 = inlined_call_operand.vmem [shape: bf16[2,3136], index: 0, kind: input, shape index: {}]
  %s1 = inlined_call_operand.vmem [shape: bf16[3136,256], index: 1, kind: input, shape index: {}]
  %s2 = inlined_call_operand.vmem [shape: f32[1,256], index: 2, kind: input, shape index: {}]
  %s3 = inlined_call_operand.vmem [shape: f32[1,256], index: 3, kind: input, shape index: {}]
  %s4 = inlined_call_operand.vmem [shape: f32[1,256], index: 4, kind: input, shape index: {}]
  %s5 = inlined_call_operand.vmem [shape: bf16[256,16], index: 5, kind: input, shape index: {}]
  %s6 = inlined_call_operand.vmem [shape: f32[1,16], index: 6, kind: input, shape index: {}]
  %s7 = inlined_call_operand.hbm [shape: f32[2,16], index: 7, kind: output, shape index: {}]
  %s8 = sld [smem:[#allocation0]]
  $region38: #{gt_net_forward.9} parent=0
    _
  %s10 = ssub.s32 1, %s8
  %s11 = scalar_select 0, %s10, %s8
  $region1: #{gt_net_forward.9} parent=0
    #allocation2 [shape = 'u8[1024]{0}', space=vmem, size = 0x400, scoped, tag = 'output window, operand 0, single buffered']
    #allocation3 [shape = 's32[1]{0}', space=sflag, size = 0x4, scoped, tag = 'scoped memory for gt_net_forward.9']
    %12 = vsyncpa [#allocation3], 0
    // Predicated region
    $region2: #{gt_net_forward.9} parent=1 // pred_check
      _
    $region3: #{gt_net_forward.9} parent=1 // pred_check_branch
      %14 = sbr.rel (0) target = $region5
    $region4: #{gt_net_forward.9} parent=1 // pred_region
      _
    $region5: #{gt_net_forward.9} parent=1 // pred_fallthru
      _
    // Predicated region
    $region6: #{gt_net_forward.9} parent=1 // pred_check
      _
    $region7: #{gt_net_forward.9} parent=1 // pred_check_branch
      %16 = sbr.rel (0) target = $region9
    $region8: #{gt_net_forward.9} parent=1 // pred_region
      _
    $region9: #{gt_net_forward.9} parent=1 // pred_fallthru
      _
    // Predicated region
    $region10: #{gt_net_forward.9} parent=1 // pred_check
      _
    $region11: #{gt_net_forward.9} parent=1 // pred_check_branch
      %18 = sbr.rel (0) target = $region13
    $region12: #{gt_net_forward.9} parent=1 // pred_region
      _
    $region13: #{gt_net_forward.9} parent=1 // pred_fallthru
      _
    // Predicated region
    $region14: #{gt_net_forward.9} parent=1 // pred_check
      _
    $region15: #{gt_net_forward.9} parent=1 // pred_check_branch
      %20 = sbr.rel (0) target = $region17
    $region16: #{gt_net_forward.9} parent=1 // pred_region
      _
    $region17: #{gt_net_forward.9} parent=1 // pred_fallthru
      _
    // Predicated region
    $region18: #{gt_net_forward.9} parent=1 // pred_check
      _
    $region19: #{gt_net_forward.9} parent=1 // pred_check_branch
      %22 = sbr.rel (0) target = $region21
    $region20: #{gt_net_forward.9} parent=1 // pred_region
      _
    $region21: #{gt_net_forward.9} parent=1 // pred_fallthru
      _
    // Predicated region
    $region22: #{gt_net_forward.9} parent=1 // pred_check
      _
    $region23: #{gt_net_forward.9} parent=1 // pred_check_branch
      %24 = sbr.rel (0) target = $region25
    $region24: #{gt_net_forward.9} parent=1 // pred_region
      _
    $region25: #{gt_net_forward.9} parent=1 // pred_fallthru
      _
    // Predicated region
    $region26: #{gt_net_forward.9} parent=1 // pred_check
      _
    $region27: #{gt_net_forward.9} parent=1 // pred_check_branch
      %26 = sbr.rel (0) target = $region29
    $region28: #{gt_net_forward.9} parent=1 // pred_region
      _
    $region29: #{gt_net_forward.9} parent=1 // pred_fallthru
      _
    %v28 = vld [vmem:[%s0] sm:$0xff]
    %v29 = vld [vmem:[%s0 + $0x8] sm:$0xff]
    %v30 = vld [vmem:[%s0 + $0x10] sm:$0xff]
    %v31 = vld [vmem:[%s0 + $0x18] sm:$0x1]
    %v32 = vld [vmem:[%s1] sm:$0xff]
    %v33 = vld [vmem:[%s1 + $0x8] sm:$0xff]
    %v34 = vld [vmem:[%s1 + $0x10] sm:$0xff]
    %v35 = vld [vmem:[%s1 + $0x18] sm:$0xff]
    %v36 = vld [vmem:[%s1 + $0x20] sm:$0xff]
    %v37 = vld [vmem:[%s1 + $0x28] sm:$0xff]
    %v38 = vld [vmem:[%s1 + $0x30] sm:$0xff]
    %v39 = vld [vmem:[%s1 + $0x38] sm:$0xff]
    %v40 = vld [vmem:[%s1 + $0x40] sm:$0xff]
    %v41 = vld [vmem:[%s1 + $0x48] sm:$0xff]
    %v42 = vld [vmem:[%s1 + $0x50] sm:$0xff]
    %v43 = vld [vmem:[%s1 + $0x58] sm:$0xff]
    %v44 = vld [vmem:[%s1 + $0x60] sm:$0xff]
    %v45 = vld [vmem:[%s1 + $0x68] sm:$0xff]
    %v46 = vld [vmem:[%s1 + $0x70] sm:$0xff]
    %v47 = vld [vmem:[%s1 + $0x78] sm:$0xff]
    %v48 = vld [vmem:[%s1 + $0x80] sm:$0xff]
    %v49 = vld [vmem:[%s1 + $0x88] sm:$0xff]
    %v50 = vld [vmem:[%s1 + $0x90] sm:$0xff]
    %v51 = vld [vmem:[%s1 + $0x98] sm:$0xff]
    %v52 = vld [vmem:[%s1 + $0xa0] sm:$0xff]
    %v53 = vld [vmem:[%s1 + $0xa8] sm:$0xff]
    %v54 = vld [vmem:[%s1 + $0xb0] sm:$0xff]
    %v55 = vld [vmem:[%s1 + $0xb8] sm:$0xff]
    %v56 = vld [vmem:[%s1 + $0xc0] sm:$0xff]
    %v57 = vld [vmem:[%s1 + $0xc8] sm:$0xff]
    %v58 = vld [vmem:[%s1 + $0xd0] sm:$0xff]
    %v59 = vld [vmem:[%s1 + $0xd8] sm:$0xff]
    %v60 = vld [vmem:[%s1 + $0xe0] sm:$0xff]
    %v61 = vld [vmem:[%s1 + $0xe8] sm:$0xff]
    %v62 = vld [vmem:[%s1 + $0xf0] sm:$0xff]
    %v63 = vld [vmem:[%s1 + $0xf8] sm:$0xff]
    %v64 = vld [vmem:[%s1 + $0x100] sm:$0xff]
    %v65 = vld [vmem:[%s1 + $0x108] sm:$0xff]
    %v66 = vld [vmem:[%s1 + $0x110] sm:$0xff]
    %v67 = vld [vmem:[%s1 + $0x118] sm:$0xff]
    %v68 = vld [vmem:[%s1 + $0x120] sm:$0xff]
    %v69 = vld [vmem:[%s1 + $0x128] sm:$0xff]
    %v70 = vld [vmem:[%s1 + $0x130] sm:$0xff]
    %v71 = vld [vmem:[%s1 + $0x138] sm:$0xff]
    %v72 = vld [vmem:[%s1 + $0x140] sm:$0xff]
    %v73 = vld [vmem:[%s1 + $0x148] sm:$0xff]
    %v74 = vld [vmem:[%s1 + $0x150] sm:$0xff]
    %v75 = vld [vmem:[%s1 + $0x158] sm:$0xff]
    %v76 = vld [vmem:[%s1 + $0x160] sm:$0xff]
    %v77 = vld [vmem:[%s1 + $0x168] sm:$0xff]
    %v78 = vld [vmem:[%s1 + $0x170] sm:$0xff]
    %v79 = vld [vmem:[%s1 + $0x178] sm:$0xff]
    %v80 = vld [vmem:[%s1 + $0x180] sm:$0xff]
    %v81 = vld [vmem:[%s1 + $0x188] sm:$0xff]
    %v82 = vld [vmem:[%s1 + $0x190] sm:$0xff]
    %v83 = vld [vmem:[%s1 + $0x198] sm:$0xff]
    %v84 = vld [vmem:[%s1 + $0x1a0] sm:$0xff]
    %v85 = vld [vmem:[%s1 + $0x1a8] sm:$0xff]
    %v86 = vld [vmem:[%s1 + $0x1b0] sm:$0xff]
    %v87 = vld [vmem:[%s1 + $0x1b8] sm:$0xff]
    %v88 = vld [vmem:[%s1 + $0x1c0] sm:$0xff]
    %v89 = vld [vmem:[%s1 + $0x1c8] sm:$0xff]
    %v90 = vld [vmem:[%s1 + $0x1d0] sm:$0xff]
    %v91 = vld [vmem:[%s1 + $0x1d8] sm:$0xff]
    %v92 = vld [vmem:[%s1 + $0x1e0] sm:$0xff]
    %v93 = vld [vmem:[%s1 + $0x1e8] sm:$0xff]
    %v94 = vld [vmem:[%s1 + $0x1f0] sm:$0xff]
    %v95 = vld [vmem:[%s1 + $0x1f8] sm:$0xff]
    %v96 = vld [vmem:[%s1 + $0x200] sm:$0xff]
    %v97 = vld [vmem:[%s1 + $0x208] sm:$0xff]
    %v98 = vld [vmem:[%s1 + $0x210] sm:$0xff]
    %v99 = vld [vmem:[%s1 + $0x218] sm:$0xff]
    %v100 = vld [vmem:[%s1 + $0x220] sm:$0xff]
    %v101 = vld [vmem:[%s1 + $0x228] sm:$0xff]
    %v102 = vld [vmem:[%s1 + $0x230] sm:$0xff]
    %v103 = vld [vmem:[%s1 + $0x238] sm:$0xff]
    %v104 = vld [vmem:[%s1 + $0x240] sm:$0xff]
    %v105 = vld [vmem:[%s1 + $0x248] sm:$0xff]
    %v106 = vld [vmem:[%s1 + $0x250] sm:$0xff]
    %v107 = vld [vmem:[%s1 + $0x258] sm:$0xff]
    %v108 = vld [vmem:[%s1 + $0x260] sm:$0xff]
    %v109 = vld [vmem:[%s1 + $0x268] sm:$0xff]
    %v110 = vld [vmem:[%s1 + $0x270] sm:$0xff]
    %v111 = vld [vmem:[%s1 + $0x278] sm:$0xff]
    %v112 = vld [vmem:[%s1 + $0x280] sm:$0xff]
    %v113 = vld [vmem:[%s1 + $0x288] sm:$0xff]
    %v114 = vld [vmem:[%s1 + $0x290] sm:$0xff]
    %v115 = vld [vmem:[%s1 + $0x298] sm:$0xff]
    %v116 = vld [vmem:[%s1 + $0x2a0] sm:$0xff]
    %v117 = vld [vmem:[%s1 + $0x2a8] sm:$0xff]
    %v118 = vld [vmem:[%s1 + $0x2b0] sm:$0xff]
    %v119 = vld [vmem:[%s1 + $0x2b8] sm:$0xff]
    %v120 = vld [vmem:[%s1 + $0x2c0] sm:$0xff]
    %v121 = vld [vmem:[%s1 + $0x2c8] sm:$0xff]
    %v122 = vld [vmem:[%s1 + $0x2d0] sm:$0xff]
    %v123 = vld [vmem:[%s1 + $0x2d8] sm:$0xff]
    %v124 = vld [vmem:[%s1 + $0x2e0] sm:$0xff]
    %v125 = vld [vmem:[%s1 + $0x2e8] sm:$0xff]
    %v126 = vld [vmem:[%s1 + $0x2f0] sm:$0xff]
    %v127 = vld [vmem:[%s1 + $0x2f8] sm:$0xff]
    %v128 = vld [vmem:[%s1 + $0x300] sm:$0xff]
    %v129 = vld [vmem:[%s1 + $0x308] sm:$0xff]
    %v130 = vld [vmem:[%s1 + $0x310] sm:$0xff]
    %v131 = vld [vmem:[%s1 + $0x318] sm:$0xff]
    %v132 = vld [vmem:[%s1 + $0x320] sm:$0xff]
    %v133 = vld [vmem:[%s1 + $0x328] sm:$0xff]
    %v134 = vld [vmem:[%s1 + $0x330] sm:$0xff]
    %v135 = vld [vmem:[%s1 + $0x338] sm:$0xff]
    %v136 = vld [vmem:[%s1 + $0x340] sm:$0xff]
    %v137 = vld [vmem:[%s1 + $0x348] sm:$0xff]
    %v138 = vld [vmem:[%s1 + $0x350] sm:$0xff]
    %v139 = vld [vmem:[%s1 + $0x358] sm:$0xff]
    %v140 = vld [vmem:[%s1 + $0x360] sm:$0xff]
    %v141 = vld [vmem:[%s1 + $0x368] sm:$0xff]
    %v142 = vld [vmem:[%s1 + $0x370] sm:$0xff]
    %v143 = vld [vmem:[%s1 + $0x378] sm:$0xff]
    %v144 = vld [vmem:[%s1 + $0x380] sm:$0xff]
    %v145 = vld [vmem:[%s1 + $0x388] sm:$0xff]
    %v146 = vld [vmem:[%s1 + $0x390] sm:$0xff]
    %v147 = vld [vmem:[%s1 + $0x398] sm:$0xff]
    %v148 = vld [vmem:[%s1 + $0x3a0] sm:$0xff]
    %v149 = vld [vmem:[%s1 + $0x3a8] sm:$0xff]
    %v150 = vld [vmem:[%s1 + $0x3b0] sm:$0xff]
    %v151 = vld [vmem:[%s1 + $0x3b8] sm:$0xff]
    %v152 = vld [vmem:[%s1 + $0x3c0] sm:$0xff]
    %v153 = vld [vmem:[%s1 + $0x3c8] sm:$0xff]
    %v154 = vld [vmem:[%s1 + $0x3d0] sm:$0xff]
    %v155 = vld [vmem:[%s1 + $0x3d8] sm:$0xff]
    %v156 = vld [vmem:[%s1 + $0x3e0] sm:$0xff]
    %v157 = vld [vmem:[%s1 + $0x3e8] sm:$0xff]
    %v158 = vld [vmem:[%s1 + $0x3f0] sm:$0xff]
    %v159 = vld [vmem:[%s1 + $0x3f8] sm:$0xff]
    %v160 = vld [vmem:[%s1 + $0x400] sm:$0xff]
    %v161 = vld [vmem:[%s1 + $0x408] sm:$0xff]
    %v162 = vld [vmem:[%s1 + $0x410] sm:$0xff]
    %v163 = vld [vmem:[%s1 + $0x418] sm:$0xff]
    %v164 = vld [vmem:[%s1 + $0x420] sm:$0xff]
    %v165 = vld [vmem:[%s1 + $0x428] sm:$0xff]
    %v166 = vld [vmem:[%s1 + $0x430] sm:$0xff]
    %v167 = vld [vmem:[%s1 + $0x438] sm:$0xff]
    %v168 = vld [vmem:[%s1 + $0x440] sm:$0xff]
    %v169 = vld [vmem:[%s1 + $0x448] sm:$0xff]
    %v170 = vld [vmem:[%s1 + $0x450] sm:$0xff]
    %v171 = vld [vmem:[%s1 + $0x458] sm:$0xff]
    %v172 = vld [vmem:[%s1 + $0x460] sm:$0xff]
    %v173 = vld [vmem:[%s1 + $0x468] sm:$0xff]
    %v174 = vld [vmem:[%s1 + $0x470] sm:$0xff]
    %v175 = vld [vmem:[%s1 + $0x478] sm:$0xff]
    %v176 = vld [vmem:[%s1 + $0x480] sm:$0xff]
    %v177 = vld [vmem:[%s1 + $0x488] sm:$0xff]
    %v178 = vld [vmem:[%s1 + $0x490] sm:$0xff]
    %v179 = vld [vmem:[%s1 + $0x498] sm:$0xff]
    %v180 = vld [vmem:[%s1 + $0x4a0] sm:$0xff]
    %v181 = vld [vmem:[%s1 + $0x4a8] sm:$0xff]
    %v182 = vld [vmem:[%s1 + $0x4b0] sm:$0xff]
    %v183 = vld [vmem:[%s1 + $0x4b8] sm:$0xff]
    %v184 = vld [vmem:[%s1 + $0x4c0] sm:$0xff]
    %v185 = vld [vmem:[%s1 + $0x4c8] sm:$0xff]
    %v186 = vld [vmem:[%s1 + $0x4d0] sm:$0xff]
    %v187 = vld [vmem:[%s1 + $0x4d8] sm:$0xff]
    %v188 = vld [vmem:[%s1 + $0x4e0] sm:$0xff]
    %v189 = vld [vmem:[%s1 + $0x4e8] sm:$0xff]
    %v190 = vld [vmem:[%s1 + $0x4f0] sm:$0xff]
    %v191 = vld [vmem:[%s1 + $0x4f8] sm:$0xff]
    %v192 = vld [vmem:[%s1 + $0x500] sm:$0xff]
    %v193 = vld [vmem:[%s1 + $0x508] sm:$0xff]
    %v194 = vld [vmem:[%s1 + $0x510] sm:$0xff]
    %v195 = vld [vmem:[%s1 + $0x518] sm:$0xff]
    %v196 = vld [vmem:[%s1 + $0x520] sm:$0xff]
    %v197 = vld [vmem:[%s1 + $0x528] sm:$0xff]
    %v198 = vld [vmem:[%s1 + $0x530] sm:$0xff]
    %v199 = vld [vmem:[%s1 + $0x538] sm:$0xff]
    %v200 = vld [vmem:[%s1 + $0x540] sm:$0xff]
    %v201 = vld [vmem:[%s1 + $0x548] sm:$0xff]
    %v202 = vld [vmem:[%s1 + $0x550] sm:$0xff]
    %v203 = vld [vmem:[%s1 + $0x558] sm:$0xff]
    %v204 = vld [vmem:[%s1 + $0x560] sm:$0xff]
    %v205 = vld [vmem:[%s1 + $0x568] sm:$0xff]
    %v206 = vld [vmem:[%s1 + $0x570] sm:$0xff]
    %v207 = vld [vmem:[%s1 + $0x578] sm:$0xff]
    %v208 = vld [vmem:[%s1 + $0x580] sm:$0xff]
    %v209 = vld [vmem:[%s1 + $0x588] sm:$0xff]
    %v210 = vld [vmem:[%s1 + $0x590] sm:$0xff]
    %v211 = vld [vmem:[%s1 + $0x598] sm:$0xff]
    %v212 = vld [vmem:[%s1 + $0x5a0] sm:$0xff]
    %v213 = vld [vmem:[%s1 + $0x5a8] sm:$0xff]
    %v214 = vld [vmem:[%s1 + $0x5b0] sm:$0xff]
    %v215 = vld [vmem:[%s1 + $0x5b8] sm:$0xff]
    %v216 = vld [vmem:[%s1 + $0x5c0] sm:$0xff]
    %v217 = vld [vmem:[%s1 + $0x5c8] sm:$0xff]
    %v218 = vld [vmem:[%s1 + $0x5d0] sm:$0xff]
    %v219 = vld [vmem:[%s1 + $0x5d8] sm:$0xff]
    %v220 = vld [vmem:[%s1 + $0x5e0] sm:$0xff]
    %v221 = vld [vmem:[%s1 + $0x5e8] sm:$0xff]
    %v222 = vld [vmem:[%s1 + $0x5f0] sm:$0xff]
    %v223 = vld [vmem:[%s1 + $0x5f8] sm:$0xff]
    %v224 = vld [vmem:[%s1 + $0x600] sm:$0xff]
    %v225 = vld [vmem:[%s1 + $0x608] sm:$0xff]
    %v226 = vld [vmem:[%s1 + $0x610] sm:$0xff]
    %v227 = vld [vmem:[%s1 + $0x618] sm:$0xff]
    %v228 = vld [vmem:[%s1 + $0x620] sm:$0xff]
    %v229 = vld [vmem:[%s1 + $0x628] sm:$0xff]
    %v230 = vld [vmem:[%s1 + $0x630] sm:$0xff]
    %v231 = vld [vmem:[%s1 + $0x638] sm:$0xff]
    %v232 = vld [vmem:[%s1 + $0x640] sm:$0xff]
    %v233 = vld [vmem:[%s1 + $0x648] sm:$0xff]
    %v234 = vld [vmem:[%s1 + $0x650] sm:$0xff]
    %v235 = vld [vmem:[%s1 + $0x658] sm:$0xff]
    %v236 = vld [vmem:[%s1 + $0x660] sm:$0xff]
    %v237 = vld [vmem:[%s1 + $0x668] sm:$0xff]
    %v238 = vld [vmem:[%s1 + $0x670] sm:$0xff]
    %v239 = vld [vmem:[%s1 + $0x678] sm:$0xff]
    %v240 = vld [vmem:[%s1 + $0x680] sm:$0xff]
    %v241 = vld [vmem:[%s1 + $0x688] sm:$0xff]
    %v242 = vld [vmem:[%s1 + $0x690] sm:$0xff]
    %v243 = vld [vmem:[%s1 + $0x698] sm:$0xff]
    %v244 = vld [vmem:[%s1 + $0x6a0] sm:$0xff]
    %v245 = vld [vmem:[%s1 + $0x6a8] sm:$0xff]
    %v246 = vld [vmem:[%s1 + $0x6b0] sm:$0xff]
    %v247 = vld [vmem:[%s1 + $0x6b8] sm:$0xff]
    %v248 = vld [vmem:[%s1 + $0x6c0] sm:$0xff]
    %v249 = vld [vmem:[%s1 + $0x6c8] sm:$0xff]
    %v250 = vld [vmem:[%s1 + $0x6d0] sm:$0xff]
    %v251 = vld [vmem:[%s1 + $0x6d8] sm:$0xff]
    %v252 = vld [vmem:[%s1 + $0x6e0] sm:$0xff]
    %v253 = vld [vmem:[%s1 + $0x6e8] sm:$0xff]
    %v254 = vld [vmem:[%s1 + $0x6f0] sm:$0xff]
    %v255 = vld [vmem:[%s1 + $0x6f8] sm:$0xff]
    %v256 = vld [vmem:[%s1 + $0x700] sm:$0xff]
    %v257 = vld [vmem:[%s1 + $0x708] sm:$0xff]
    %v258 = vld [vmem:[%s1 + $0x710] sm:$0xff]
    %v259 = vld [vmem:[%s1 + $0x718] sm:$0xff]
    %v260 = vld [vmem:[%s1 + $0x720] sm:$0xff]
    %v261 = vld [vmem:[%s1 + $0x728] sm:$0xff]
    %v262 = vld [vmem:[%s1 + $0x730] sm:$0xff]
    %v263 = vld [vmem:[%s1 + $0x738] sm:$0xff]
    %v264 = vld [vmem:[%s1 + $0x740] sm:$0xff]
    %v265 = vld [vmem:[%s1 + $0x748] sm:$0xff]
    %v266 = vld [vmem:[%s1 + $0x750] sm:$0xff]
    %v267 = vld [vmem:[%s1 + $0x758] sm:$0xff]
    %v268 = vld [vmem:[%s1 + $0x760] sm:$0xff]
    %v269 = vld [vmem:[%s1 + $0x768] sm:$0xff]
    %v270 = vld [vmem:[%s1 + $0x770] sm:$0xff]
    %v271 = vld [vmem:[%s1 + $0x778] sm:$0xff]
    %v272 = vld [vmem:[%s1 + $0x780] sm:$0xff]
    %v273 = vld [vmem:[%s1 + $0x788] sm:$0xff]
    %v274 = vld [vmem:[%s1 + $0x790] sm:$0xff]
    %v275 = vld [vmem:[%s1 + $0x798] sm:$0xff]
    %v276 = vld [vmem:[%s1 + $0x7a0] sm:$0xff]
    %v277 = vld [vmem:[%s1 + $0x7a8] sm:$0xff]
    %v278 = vld [vmem:[%s1 + $0x7b0] sm:$0xff]
    %v279 = vld [vmem:[%s1 + $0x7b8] sm:$0xff]
    %v280 = vld [vmem:[%s1 + $0x7c0] sm:$0xff]
    %v281 = vld [vmem:[%s1 + $0x7c8] sm:$0xff]
    %v282 = vld [vmem:[%s1 + $0x7d0] sm:$0xff]
    %v283 = vld [vmem:[%s1 + $0x7d8] sm:$0xff]
    %v284 = vld [vmem:[%s1 + $0x7e0] sm:$0xff]
    %v285 = vld [vmem:[%s1 + $0x7e8] sm:$0xff]
    %v286 = vld [vmem:[%s1 + $0x7f0] sm:$0xff]
    %v287 = vld [vmem:[%s1 + $0x7f8] sm:$0xff]
    %v288 = vld [vmem:[%s1 + $0x800] sm:$0xff]
    %v289 = vld [vmem:[%s1 + $0x808] sm:$0xff]
    %v290 = vld [vmem:[%s1 + $0x810] sm:$0xff]
    %v291 = vld [vmem:[%s1 + $0x818] sm:$0xff]
    %v292 = vld [vmem:[%s1 + $0x820] sm:$0xff]
    %v293 = vld [vmem:[%s1 + $0x828] sm:$0xff]
    %v294 = vld [vmem:[%s1 + $0x830] sm:$0xff]
    %v295 = vld [vmem:[%s1 + $0x838] sm:$0xff]
    %v296 = vld [vmem:[%s1 + $0x840] sm:$0xff]
    %v297 = vld [vmem:[%s1 + $0x848] sm:$0xff]
    %v298 = vld [vmem:[%s1 + $0x850] sm:$0xff]
    %v299 = vld [vmem:[%s1 + $0x858] sm:$0xff]
    %v300 = vld [vmem:[%s1 + $0x860] sm:$0xff]
    %v301 = vld [vmem:[%s1 + $0x868] sm:$0xff]
    %v302 = vld [vmem:[%s1 + $0x870] sm:$0xff]
    %v303 = vld [vmem:[%s1 + $0x878] sm:$0xff]
    %v304 = vld [vmem:[%s1 + $0x880] sm:$0xff]
    %v305 = vld [vmem:[%s1 + $0x888] sm:$0xff]
    %v306 = vld [vmem:[%s1 + $0x890] sm:$0xff]
    %v307 = vld [vmem:[%s1 + $0x898] sm:$0xff]
    %v308 = vld [vmem:[%s1 + $0x8a0] sm:$0xff]
    %v309 = vld [vmem:[%s1 + $0x8a8] sm:$0xff]
    %v310 = vld [vmem:[%s1 + $0x8b0] sm:$0xff]
    %v311 = vld [vmem:[%s1 + $0x8b8] sm:$0xff]
    %v312 = vld [vmem:[%s1 + $0x8c0] sm:$0xff]
    %v313 = vld [vmem:[%s1 + $0x8c8] sm:$0xff]
    %v314 = vld [vmem:[%s1 + $0x8d0] sm:$0xff]
    %v315 = vld [vmem:[%s1 + $0x8d8] sm:$0xff]
    %v316 = vld [vmem:[%s1 + $0x8e0] sm:$0xff]
    %v317 = vld [vmem:[%s1 + $0x8e8] sm:$0xff]
    %v318 = vld [vmem:[%s1 + $0x8f0] sm:$0xff]
    %v319 = vld [vmem:[%s1 + $0x8f8] sm:$0xff]
    %v320 = vld [vmem:[%s1 + $0x900] sm:$0xff]
    %v321 = vld [vmem:[%s1 + $0x908] sm:$0xff]
    %v322 = vld [vmem:[%s1 + $0x910] sm:$0xff]
    %v323 = vld [vmem:[%s1 + $0x918] sm:$0xff]
    %v324 = vld [vmem:[%s1 + $0x920] sm:$0xff]
    %v325 = vld [vmem:[%s1 + $0x928] sm:$0xff]
    %v326 = vld [vmem:[%s1 + $0x930] sm:$0xff]
    %v327 = vld [vmem:[%s1 + $0x938] sm:$0xff]
    %v328 = vld [vmem:[%s1 + $0x940] sm:$0xff]
    %v329 = vld [vmem:[%s1 + $0x948] sm:$0xff]
    %v330 = vld [vmem:[%s1 + $0x950] sm:$0xff]
    %v331 = vld [vmem:[%s1 + $0x958] sm:$0xff]
    %v332 = vld [vmem:[%s1 + $0x960] sm:$0xff]
    %v333 = vld [vmem:[%s1 + $0x968] sm:$0xff]
    %v334 = vld [vmem:[%s1 + $0x970] sm:$0xff]
    %v335 = vld [vmem:[%s1 + $0x978] sm:$0xff]
    %v336 = vld [vmem:[%s1 + $0x980] sm:$0xff]
    %v337 = vld [vmem:[%s1 + $0x988] sm:$0xff]
    %v338 = vld [vmem:[%s1 + $0x990] sm:$0xff]
    %v339 = vld [vmem:[%s1 + $0x998] sm:$0xff]
    %v340 = vld [vmem:[%s1 + $0x9a0] sm:$0xff]
    %v341 = vld [vmem:[%s1 + $0x9a8] sm:$0xff]
    %v342 = vld [vmem:[%s1 + $0x9b0] sm:$0xff]
    %v343 = vld [vmem:[%s1 + $0x9b8] sm:$0xff]
    %v344 = vld [vmem:[%s1 + $0x9c0] sm:$0xff]
    %v345 = vld [vmem:[%s1 + $0x9c8] sm:$0xff]
    %v346 = vld [vmem:[%s1 + $0x9d0] sm:$0xff]
    %v347 = vld [vmem:[%s1 + $0x9d8] sm:$0xff]
    %v348 = vld [vmem:[%s1 + $0x9e0] sm:$0xff]
    %v349 = vld [vmem:[%s1 + $0x9e8] sm:$0xff]
    %v350 = vld [vmem:[%s1 + $0x9f0] sm:$0xff]
    %v351 = vld [vmem:[%s1 + $0x9f8] sm:$0xff]
    %v352 = vld [vmem:[%s1 + $0xa00] sm:$0xff]
    %v353 = vld [vmem:[%s1 + $0xa08] sm:$0xff]
    %v354 = vld [vmem:[%s1 + $0xa10] sm:$0xff]
    %v355 = vld [vmem:[%s1 + $0xa18] sm:$0xff]
    %v356 = vld [vmem:[%s1 + $0xa20] sm:$0xff]
    %v357 = vld [vmem:[%s1 + $0xa28] sm:$0xff]
    %v358 = vld [vmem:[%s1 + $0xa30] sm:$0xff]
    %v359 = vld [vmem:[%s1 + $0xa38] sm:$0xff]
    %v360 = vld [vmem:[%s1 + $0xa40] sm:$0xff]
    %v361 = vld [vmem:[%s1 + $0xa48] sm:$0xff]
    %v362 = vld [vmem:[%s1 + $0xa50] sm:$0xff]
    %v363 = vld [vmem:[%s1 + $0xa58] sm:$0xff]
    %v364 = vld [vmem:[%s1 + $0xa60] sm:$0xff]
    %v365 = vld [vmem:[%s1 + $0xa68] sm:$0xff]
    %v366 = vld [vmem:[%s1 + $0xa70] sm:$0xff]
    %v367 = vld [vmem:[%s1 + $0xa78] sm:$0xff]
    %v368 = vld [vmem:[%s1 + $0xa80] sm:$0xff]
    %v369 = vld [vmem:[%s1 + $0xa88] sm:$0xff]
    %v370 = vld [vmem:[%s1 + $0xa90] sm:$0xff]
    %v371 = vld [vmem:[%s1 + $0xa98] sm:$0xff]
    %v372 = vld [vmem:[%s1 + $0xaa0] sm:$0xff]
    %v373 = vld [vmem:[%s1 + $0xaa8] sm:$0xff]
    %v374 = vld [vmem:[%s1 + $0xab0] sm:$0xff]
    %v375 = vld [vmem:[%s1 + $0xab8] sm:$0xff]
    %v376 = vld [vmem:[%s1 + $0xac0] sm:$0xff]
    %v377 = vld [vmem:[%s1 + $0xac8] sm:$0xff]
    %v378 = vld [vmem:[%s1 + $0xad0] sm:$0xff]
    %v379 = vld [vmem:[%s1 + $0xad8] sm:$0xff]
    %v380 = vld [vmem:[%s1 + $0xae0] sm:$0xff]
    %v381 = vld [vmem:[%s1 + $0xae8] sm:$0xff]
    %v382 = vld [vmem:[%s1 + $0xaf0] sm:$0xff]
    %v383 = vld [vmem:[%s1 + $0xaf8] sm:$0xff]
    %v384 = vld [vmem:[%s1 + $0xb00] sm:$0xff]
    %v385 = vld [vmem:[%s1 + $0xb08] sm:$0xff]
    %v386 = vld [vmem:[%s1 + $0xb10] sm:$0xff]
    %v387 = vld [vmem:[%s1 + $0xb18] sm:$0xff]
    %v388 = vld [vmem:[%s1 + $0xb20] sm:$0xff]
    %v389 = vld [vmem:[%s1 + $0xb28] sm:$0xff]
    %v390 = vld [vmem:[%s1 + $0xb30] sm:$0xff]
    %v391 = vld [vmem:[%s1 + $0xb38] sm:$0xff]
    %v392 = vld [vmem:[%s1 + $0xb40] sm:$0xff]
    %v393 = vld [vmem:[%s1 + $0xb48] sm:$0xff]
    %v394 = vld [vmem:[%s1 + $0xb50] sm:$0xff]
    %v395 = vld [vmem:[%s1 + $0xb58] sm:$0xff]
    %v396 = vld [vmem:[%s1 + $0xb60] sm:$0xff]
    %v397 = vld [vmem:[%s1 + $0xb68] sm:$0xff]
    %v398 = vld [vmem:[%s1 + $0xb70] sm:$0xff]
    %v399 = vld [vmem:[%s1 + $0xb78] sm:$0xff]
    %v400 = vld [vmem:[%s1 + $0xb80] sm:$0xff]
    %v401 = vld [vmem:[%s1 + $0xb88] sm:$0xff]
    %v402 = vld [vmem:[%s1 + $0xb90] sm:$0xff]
    %v403 = vld [vmem:[%s1 + $0xb98] sm:$0xff]
    %v404 = vld [vmem:[%s1 + $0xba0] sm:$0xff]
    %v405 = vld [vmem:[%s1 + $0xba8] sm:$0xff]
    %v406 = vld [vmem:[%s1 + $0xbb0] sm:$0xff]
    %v407 = vld [vmem:[%s1 + $0xbb8] sm:$0xff]
    %v408 = vld [vmem:[%s1 + $0xbc0] sm:$0xff]
    %v409 = vld [vmem:[%s1 + $0xbc8] sm:$0xff]
    %v410 = vld [vmem:[%s1 + $0xbd0] sm:$0xff]
    %v411 = vld [vmem:[%s1 + $0xbd8] sm:$0xff]
    %v412 = vld [vmem:[%s1 + $0xbe0] sm:$0xff]
    %v413 = vld [vmem:[%s1 + $0xbe8] sm:$0xff]
    %v414 = vld [vmem:[%s1 + $0xbf0] sm:$0xff]
    %v415 = vld [vmem:[%s1 + $0xbf8] sm:$0xff]
    %v416 = vld [vmem:[%s1 + $0xc00] sm:$0xff]
    %v417 = vld [vmem:[%s1 + $0xc08] sm:$0xff]
    %v418 = vld [vmem:[%s1 + $0xc10] sm:$0xff]
    %v419 = vld [vmem:[%s1 + $0xc18] sm:$0xff]
    %v420 = vld [vmem:[%s1 + $0xc20] sm:$0xff]
    %v421 = vld [vmem:[%s1 + $0xc28] sm:$0xff]
    %v422 = vld [vmem:[%s1 + $0xc30] sm:$0xff]
    %v423 = vld [vmem:[%s1 + $0xc38] sm:$0xff]
    %v424 = vld [vmem:[%s2] sm:$0x3]
    %v426 = vlaneseq
    %v427 = vshrl.u32 %v426, 7
    %v428 = vsub.s32 0, %v427
    %v429 = vrot.slane %v424, %v428
    %v430 = vlaneseq
    %v431 = vshrl.u32 %v430, 7
    %v432 = vsub.s32 1, %v431
    %v433 = vrot.slane %v424, %v432
    %v440 = vcombine.high %v28, %v28
    %v442 = vunpack.c.l.s4 1966171168
    %v443 = vunpack.c.0.s8 %v442
    %v444 = vlaneseq
    %v445 = vshrl.u32 %v444, 7
    %v446 = vsub.s32 %v443, %v445
    %v447 = vrot.slane %v28, %v446
    %v449 = vunpack.c.l.s4 1966171168
    %v450 = vunpack.c.0.s8 %v449
    %v451 = vlaneseq
    %v452 = vshrl.u32 %v451, 7
    %v453 = vsub.s32 %v450, %v452
    %v454 = vrot.slane %v440, %v453
    %v455 = vcombine.high %v447, %v447
    %v456 = vcombine.high %v454, %v454
    %v458 = vunpack.c.l.s4 1966171168
    %v459 = vunpack.c.0.s8 %v458
    %v460 = vlaneseq
    %v461 = vshrl.u32 %v460, 7
    %v462 = vsub.s32 %v459, %v461
    %v463 = vrot.slane %v447, %v462
    %v465 = vunpack.c.l.s4 1966171168
    %v466 = vunpack.c.0.s8 %v465
    %v467 = vlaneseq
    %v468 = vshrl.u32 %v467, 7
    %v469 = vsub.s32 %v466, %v468
    %v470 = vrot.slane %v454, %v469
    %v472 = vunpack.c.l.s4 1966171168
    %v473 = vunpack.c.0.s8 %v472
    %v474 = vlaneseq
    %v475 = vshrl.u32 %v474, 7
    %v476 = vsub.s32 %v473, %v475
    %v477 = vrot.slane %v455, %v476
    %v479 = vunpack.c.l.s4 1966171168
    %v480 = vunpack.c.0.s8 %v479
    %v481 = vlaneseq
    %v482 = vshrl.u32 %v481, 7
    %v483 = vsub.s32 %v480, %v482
    %v484 = vrot.slane %v456, %v483
    %v485 = vcombine.high %v463, %v463
    %v486 = vcombine.high %v470, %v470
    %v487 = vcombine.high %v477, %v477
    %v488 = vcombine.high %v484, %v484
    %v489 = vcombine.high %v29, %v29
    %v491 = vunpack.c.l.s4 1966171168
    %v492 = vunpack.c.0.s8 %v491
    %v493 = vlaneseq
    %v494 = vshrl.u32 %v493, 7
    %v495 = vsub.s32 %v492, %v494
    %v496 = vrot.slane %v29, %v495
    %v498 = vunpack.c.l.s4 1966171168
    %v499 = vunpack.c.0.s8 %v498
    %v500 = vlaneseq
    %v501 = vshrl.u32 %v500, 7
    %v502 = vsub.s32 %v499, %v501
    %v503 = vrot.slane %v489, %v502
    %v504 = vcombine.high %v496, %v496
    %v505 = vcombine.high %v503, %v503
    %v507 = vunpack.c.l.s4 1966171168
    %v508 = vunpack.c.0.s8 %v507
    %v509 = vlaneseq
    %v510 = vshrl.u32 %v509, 7
    %v511 = vsub.s32 %v508, %v510
    %v512 = vrot.slane %v496, %v511
    %v514 = vunpack.c.l.s4 1966171168
    %v515 = vunpack.c.0.s8 %v514
    %v516 = vlaneseq
    %v517 = vshrl.u32 %v516, 7
    %v518 = vsub.s32 %v515, %v517
    %v519 = vrot.slane %v503, %v518
    %v521 = vunpack.c.l.s4 1966171168
    %v522 = vunpack.c.0.s8 %v521
    %v523 = vlaneseq
    %v524 = vshrl.u32 %v523, 7
    %v525 = vsub.s32 %v522, %v524
    %v526 = vrot.slane %v504, %v525
    %v528 = vunpack.c.l.s4 1966171168
    %v529 = vunpack.c.0.s8 %v528
    %v530 = vlaneseq
    %v531 = vshrl.u32 %v530, 7
    %v532 = vsub.s32 %v529, %v531
    %v533 = vrot.slane %v505, %v532
    %v534 = vcombine.high %v512, %v512
    %v535 = vcombine.high %v519, %v519
    %v536 = vcombine.high %v526, %v526
    %v537 = vcombine.high %v533, %v533
    %v538 = vcombine.high %v30, %v30
    %v540 = vunpack.c.l.s4 1966171168
    %v541 = vunpack.c.0.s8 %v540
    %v542 = vlaneseq
    %v543 = vshrl.u32 %v542, 7
    %v544 = vsub.s32 %v541, %v543
    %v545 = vrot.slane %v30, %v544
    %v547 = vunpack.c.l.s4 1966171168
    %v548 = vunpack.c.0.s8 %v547
    %v549 = vlaneseq
    %v550 = vshrl.u32 %v549, 7
    %v551 = vsub.s32 %v548, %v550
    %v552 = vrot.slane %v538, %v551
    %v553 = vcombine.high %v545, %v545
    %v554 = vcombine.high %v552, %v552
    %v556 = vunpack.c.l.s4 1966171168
    %v557 = vunpack.c.0.s8 %v556
    %v558 = vlaneseq
    %v559 = vshrl.u32 %v558, 7
    %v560 = vsub.s32 %v557, %v559
    %v561 = vrot.slane %v545, %v560
    %v563 = vunpack.c.l.s4 1966171168
    %v564 = vunpack.c.0.s8 %v563
    %v565 = vlaneseq
    %v566 = vshrl.u32 %v565, 7
    %v567 = vsub.s32 %v564, %v566
    %v568 = vrot.slane %v552, %v567
    %v570 = vunpack.c.l.s4 1966171168
    %v571 = vunpack.c.0.s8 %v570
    %v572 = vlaneseq
    %v573 = vshrl.u32 %v572, 7
    %v574 = vsub.s32 %v571, %v573
    %v575 = vrot.slane %v553, %v574
    %v577 = vunpack.c.l.s4 1966171168
    %v578 = vunpack.c.0.s8 %v577
    %v579 = vlaneseq
    %v580 = vshrl.u32 %v579, 7
    %v581 = vsub.s32 %v578, %v580
    %v582 = vrot.slane %v554, %v581
    %v583 = vcombine.high %v561, %v561
    %v584 = vcombine.high %v568, %v568
    %v585 = vcombine.high %v575, %v575
    %v586 = vcombine.high %v582, %v582
    %v588 = vunpack.c.l.s4 1966171168
    %v589 = vunpack.c.0.s8 %v588
    %v590 = vlaneseq
    %v591 = vshrl.u32 %v590, 7
    %v592 = vsub.s32 %v589, %v591
    %v593 = vrot.slane %v31, %v592
    %v595 = vunpack.c.l.s4 1966171168
    %v596 = vunpack.c.0.s8 %v595
    %v597 = vlaneseq
    %v598 = vshrl.u32 %v597, 7
    %v599 = vsub.s32 %v596, %v598
    %v600 = vrot.slane %v593, %v599
    %v1017 = vunpack.c.l.b16 %v32
    %v1018 = vunpack.c.h.b16 %v32
    %v1019 = vunpack.c.l.b16 %v33
    %v1020 = vunpack.c.h.b16 %v33
    %v1021 = vunpack.c.l.b16 %v34
    %v1022 = vunpack.c.h.b16 %v34
    %v1023 = vunpack.c.l.b16 %v35
    %v1024 = vunpack.c.h.b16 %v35
    %v1025 = vunpack.c.l.b16 %v36
    %v1026 = vunpack.c.h.b16 %v36
    %v1027 = vunpack.c.l.b16 %v37
    %v1028 = vunpack.c.h.b16 %v37
    %v1029 = vunpack.c.l.b16 %v38
    %v1030 = vunpack.c.h.b16 %v38
    %v1031 = vunpack.c.l.b16 %v39
    %v1032 = vunpack.c.h.b16 %v39
    %v1033 = vunpack.c.l.b16 %v40
    %v1034 = vunpack.c.h.b16 %v40
    %v1035 = vunpack.c.l.b16 %v41
    %v1036 = vunpack.c.h.b16 %v41
    %v1037 = vunpack.c.l.b16 %v42
    %v1038 = vunpack.c.h.b16 %v42
    %v1039 = vunpack.c.l.b16 %v43
    %v1040 = vunpack.c.h.b16 %v43
    %v1041 = vunpack.c.l.b16 %v44
    %v1042 = vunpack.c.h.b16 %v44
    %v1043 = vunpack.c.l.b16 %v45
    %v1044 = vunpack.c.h.b16 %v45
    %v1045 = vunpack.c.l.b16 %v46
    %v1046 = vunpack.c.h.b16 %v46
    %v1047 = vunpack.c.l.b16 %v47
    %v1048 = vunpack.c.h.b16 %v47
    %v1049 = vunpack.c.l.b16 %v48
    %v1050 = vunpack.c.h.b16 %v48
    %v1051 = vunpack.c.l.b16 %v49
    %v1052 = vunpack.c.h.b16 %v49
    %v1053 = vunpack.c.l.b16 %v50
    %v1054 = vunpack.c.h.b16 %v50
    %v1055 = vunpack.c.l.b16 %v51
    %v1056 = vunpack.c.h.b16 %v51
    %v1057 = vunpack.c.l.b16 %v52
    %v1058 = vunpack.c.h.b16 %v52
    %v1059 = vunpack.c.l.b16 %v53
    %v1060 = vunpack.c.h.b16 %v53
    %v1061 = vunpack.c.l.b16 %v54
    %v1062 = vunpack.c.h.b16 %v54
    %v1063 = vunpack.c.l.b16 %v55
    %v1064 = vunpack.c.h.b16 %v55
    %v1065 = vunpack.c.l.b16 %v56
    %v1066 = vunpack.c.h.b16 %v56
    %v1067 = vunpack.c.l.b16 %v57
    %v1068 = vunpack.c.h.b16 %v57
    %v1069 = vunpack.c.l.b16 %v58
    %v1070 = vunpack.c.h.b16 %v58
    %v1071 = vunpack.c.l.b16 %v59
    %v1072 = vunpack.c.h.b16 %v59
    %v1073 = vunpack.c.l.b16 %v60
    %v1074 = vunpack.c.h.b16 %v60
    %v1075 = vunpack.c.l.b16 %v61
    %v1076 = vunpack.c.h.b16 %v61
    %v1077 = vunpack.c.l.b16 %v62
    %v1078 = vunpack.c.h.b16 %v62
    %v1079 = vunpack.c.l.b16 %v63
    %v1080 = vunpack.c.h.b16 %v63
    %v1081 = vunpack.c.l.b16 %v64
    %v1082 = vunpack.c.h.b16 %v64
    %v1083 = vunpack.c.l.b16 %v65
    %v1084 = vunpack.c.h.b16 %v65
    %v1085 = vunpack.c.l.b16 %v66
    %v1086 = vunpack.c.h.b16 %v66
    %v1087 = vunpack.c.l.b16 %v67
    %v1088 = vunpack.c.h.b16 %v67
    %v1089 = vunpack.c.l.b16 %v68
    %v1090 = vunpack.c.h.b16 %v68
    %v1091 = vunpack.c.l.b16 %v69
    %v1092 = vunpack.c.h.b16 %v69
    %v1093 = vunpack.c.l.b16 %v70
    %v1094 = vunpack.c.h.b16 %v70
    %v1095 = vunpack.c.l.b16 %v71
    %v1096 = vunpack.c.h.b16 %v71
    %v1097 = vunpack.c.l.b16 %v72
    %v1098 = vunpack.c.h.b16 %v72
    %v1099 = vunpack.c.l.b16 %v73
    %v1100 = vunpack.c.h.b16 %v73
    %v1101 = vunpack.c.l.b16 %v74
    %v1102 = vunpack.c.h.b16 %v74
    %v1103 = vunpack.c.l.b16 %v75
    %v1104 = vunpack.c.h.b16 %v75
    %v1105 = vunpack.c.l.b16 %v76
    %v1106 = vunpack.c.h.b16 %v76
    %v1107 = vunpack.c.l.b16 %v77
    %v1108 = vunpack.c.h.b16 %v77
    %v1109 = vunpack.c.l.b16 %v78
    %v1110 = vunpack.c.h.b16 %v78
    %v1111 = vunpack.c.l.b16 %v79
    %v1112 = vunpack.c.h.b16 %v79
    %v1113 = vunpack.c.l.b16 %v80
    %v1114 = vunpack.c.h.b16 %v80
    %v1115 = vunpack.c.l.b16 %v81
    %v1116 = vunpack.c.h.b16 %v81
    %v1117 = vunpack.c.l.b16 %v82
    %v1118 = vunpack.c.h.b16 %v82
    %v1119 = vunpack.c.l.b16 %v83
    %v1120 = vunpack.c.h.b16 %v83
    %v1121 = vunpack.c.l.b16 %v84
    %v1122 = vunpack.c.h.b16 %v84
    %v1123 = vunpack.c.l.b16 %v85
    %v1124 = vunpack.c.h.b16 %v85
    %v1125 = vunpack.c.l.b16 %v86
    %v1126 = vunpack.c.h.b16 %v86
    %v1127 = vunpack.c.l.b16 %v87
    %v1128 = vunpack.c.h.b16 %v87
    %v1129 = vunpack.c.l.b16 %v88
    %v1130 = vunpack.c.h.b16 %v88
    %v1131 = vunpack.c.l.b16 %v89
    %v1132 = vunpack.c.h.b16 %v89
    %v1133 = vunpack.c.l.b16 %v90
    %v1134 = vunpack.c.h.b16 %v90
    %v1135 = vunpack.c.l.b16 %v91
    %v1136 = vunpack.c.h.b16 %v91
    %v1137 = vunpack.c.l.b16 %v92
    %v1138 = vunpack.c.h.b16 %v92
    %v1139 = vunpack.c.l.b16 %v93
    %v1140 = vunpack.c.h.b16 %v93
    %v1141 = vunpack.c.l.b16 %v94
    %v1142 = vunpack.c.h.b16 %v94
    %v1143 = vunpack.c.l.b16 %v95
    %v1144 = vunpack.c.h.b16 %v95
    %v1145 = vunpack.c.l.b16 %v96
    %v1146 = vunpack.c.h.b16 %v96
    %v1147 = vunpack.c.l.b16 %v97
    %v1148 = vunpack.c.h.b16 %v97
    %v1149 = vunpack.c.l.b16 %v98
    %v1150 = vunpack.c.h.b16 %v98
    %v1151 = vunpack.c.l.b16 %v99
    %v1152 = vunpack.c.h.b16 %v99
    %v1153 = vunpack.c.l.b16 %v100
    %v1154 = vunpack.c.h.b16 %v100
    %v1155 = vunpack.c.l.b16 %v101
    %v1156 = vunpack.c.h.b16 %v101
    %v1157 = vunpack.c.l.b16 %v102
    %v1158 = vunpack.c.h.b16 %v102
    %v1159 = vunpack.c.l.b16 %v103
    %v1160 = vunpack.c.h.b16 %v103
    %v1161 = vunpack.c.l.b16 %v104
    %v1162 = vunpack.c.h.b16 %v104
    %v1163 = vunpack.c.l.b16 %v105
    %v1164 = vunpack.c.h.b16 %v105
    %v1165 = vunpack.c.l.b16 %v106
    %v1166 = vunpack.c.h.b16 %v106
    %v1167 = vunpack.c.l.b16 %v107
    %v1168 = vunpack.c.h.b16 %v107
    %v1169 = vunpack.c.l.b16 %v108
    %v1170 = vunpack.c.h.b16 %v108
    %v1171 = vunpack.c.l.b16 %v109
    %v1172 = vunpack.c.h.b16 %v109
    %v1173 = vunpack.c.l.b16 %v110
    %v1174 = vunpack.c.h.b16 %v110
    %v1175 = vunpack.c.l.b16 %v111
    %v1176 = vunpack.c.h.b16 %v111
    %v1177 = vunpack.c.l.b16 %v112
    %v1178 = vunpack.c.h.b16 %v112
    %v1179 = vunpack.c.l.b16 %v113
    %v1180 = vunpack.c.h.b16 %v113
    %v1181 = vunpack.c.l.b16 %v114
    %v1182 = vunpack.c.h.b16 %v114
    %v1183 = vunpack.c.l.b16 %v115
    %v1184 = vunpack.c.h.b16 %v115
    %v1185 = vunpack.c.l.b16 %v116
    %v1186 = vunpack.c.h.b16 %v116
    %v1187 = vunpack.c.l.b16 %v117
    %v1188 = vunpack.c.h.b16 %v117
    %v1189 = vunpack.c.l.b16 %v118
    %v1190 = vunpack.c.h.b16 %v118
    %v1191 = vunpack.c.l.b16 %v119
    %v1192 = vunpack.c.h.b16 %v119
    %v1193 = vunpack.c.l.b16 %v120
    %v1194 = vunpack.c.h.b16 %v120
    %v1195 = vunpack.c.l.b16 %v121
    %v1196 = vunpack.c.h.b16 %v121
    %v1197 = vunpack.c.l.b16 %v122
    %v1198 = vunpack.c.h.b16 %v122
    %v1199 = vunpack.c.l.b16 %v123
    %v1200 = vunpack.c.h.b16 %v123
    %v1201 = vunpack.c.l.b16 %v124
    %v1202 = vunpack.c.h.b16 %v124
    %v1203 = vunpack.c.l.b16 %v125
    %v1204 = vunpack.c.h.b16 %v125
    %v1205 = vunpack.c.l.b16 %v126
    %v1206 = vunpack.c.h.b16 %v126
    %v1207 = vunpack.c.l.b16 %v127
    %v1208 = vunpack.c.h.b16 %v127
    %v1209 = vunpack.c.l.b16 %v128
    %v1210 = vunpack.c.h.b16 %v128
    %v1211 = vunpack.c.l.b16 %v129
    %v1212 = vunpack.c.h.b16 %v129
    %v1213 = vunpack.c.l.b16 %v130
    %v1214 = vunpack.c.h.b16 %v130
    %v1215 = vunpack.c.l.b16 %v131
    %v1216 = vunpack.c.h.b16 %v131
    %v1217 = vunpack.c.l.b16 %v132
    %v1218 = vunpack.c.h.b16 %v132
    %v1219 = vunpack.c.l.b16 %v133
    %v1220 = vunpack.c.h.b16 %v133
    %v1221 = vunpack.c.l.b16 %v134
    %v1222 = vunpack.c.h.b16 %v134
    %v1223 = vunpack.c.l.b16 %v135
    %v1224 = vunpack.c.h.b16 %v135
    %v1225 = vunpack.c.l.b16 %v136
    %v1226 = vunpack.c.h.b16 %v136
    %v1227 = vunpack.c.l.b16 %v137
    %v1228 = vunpack.c.h.b16 %v137
    %v1229 = vunpack.c.l.b16 %v138
    %v1230 = vunpack.c.h.b16 %v138
    %v1231 = vunpack.c.l.b16 %v139
    %v1232 = vunpack.c.h.b16 %v139
    %v1233 = vunpack.c.l.b16 %v140
    %v1234 = vunpack.c.h.b16 %v140
    %v1235 = vunpack.c.l.b16 %v141
    %v1236 = vunpack.c.h.b16 %v141
    %v1237 = vunpack.c.l.b16 %v142
    %v1238 = vunpack.c.h.b16 %v142
    %v1239 = vunpack.c.l.b16 %v143
    %v1240 = vunpack.c.h.b16 %v143
    %v1241 = vunpack.c.l.b16 %v144
    %v1242 = vunpack.c.h.b16 %v144
    %v1243 = vunpack.c.l.b16 %v145
    %v1244 = vunpack.c.h.b16 %v145
    %v1245 = vunpack.c.l.b16 %v146
    %v1246 = vunpack.c.h.b16 %v146
    %v1247 = vunpack.c.l.b16 %v147
    %v1248 = vunpack.c.h.b16 %v147
    %v1249 = vunpack.c.l.b16 %v148
    %v1250 = vunpack.c.h.b16 %v148
    %v1251 = vunpack.c.l.b16 %v149
    %v1252 = vunpack.c.h.b16 %v149
    %v1253 = vunpack.c.l.b16 %v150
    %v1254 = vunpack.c.h.b16 %v150
    %v1255 = vunpack.c.l.b16 %v151
    %v1256 = vunpack.c.h.b16 %v151
    %v1257 = vunpack.c.l.b16 %v152
    %v1258 = vunpack.c.h.b16 %v152
    %v1259 = vunpack.c.l.b16 %v153
    %v1260 = vunpack.c.h.b16 %v153
    %v1261 = vunpack.c.l.b16 %v154
    %v1262 = vunpack.c.h.b16 %v154
    %v1263 = vunpack.c.l.b16 %v155
    %v1264 = vunpack.c.h.b16 %v155
    %v1265 = vunpack.c.l.b16 %v156
    %v1266 = vunpack.c.h.b16 %v156
    %v1267 = vunpack.c.l.b16 %v157
    %v1268 = vunpack.c.h.b16 %v157
    %v1269 = vunpack.c.l.b16 %v158
    %v1270 = vunpack.c.h.b16 %v158
    %v1271 = vunpack.c.l.b16 %v159
    %v1272 = vunpack.c.h.b16 %v159
    %v1273 = vunpack.c.l.b16 %v160
    %v1274 = vunpack.c.h.b16 %v160
    %v1275 = vunpack.c.l.b16 %v161
    %v1276 = vunpack.c.h.b16 %v161
    %v1277 = vunpack.c.l.b16 %v162
    %v1278 = vunpack.c.h.b16 %v162
    %v1279 = vunpack.c.l.b16 %v163
    %v1280 = vunpack.c.h.b16 %v163
    %v1281 = vunpack.c.l.b16 %v164
    %v1282 = vunpack.c.h.b16 %v164
    %v1283 = vunpack.c.l.b16 %v165
    %v1284 = vunpack.c.h.b16 %v165
    %v1285 = vunpack.c.l.b16 %v166
    %v1286 = vunpack.c.h.b16 %v166
    %v1287 = vunpack.c.l.b16 %v167
    %v1288 = vunpack.c.h.b16 %v167
    %v1289 = vunpack.c.l.b16 %v168
    %v1290 = vunpack.c.h.b16 %v168
    %v1291 = vunpack.c.l.b16 %v169
    %v1292 = vunpack.c.h.b16 %v169
    %v1293 = vunpack.c.l.b16 %v170
    %v1294 = vunpack.c.h.b16 %v170
    %v1295 = vunpack.c.l.b16 %v171
    %v1296 = vunpack.c.h.b16 %v171
    %v1297 = vunpack.c.l.b16 %v172
    %v1298 = vunpack.c.h.b16 %v172
    %v1299 = vunpack.c.l.b16 %v173
    %v1300 = vunpack.c.h.b16 %v173
    %v1301 = vunpack.c.l.b16 %v174
    %v1302 = vunpack.c.h.b16 %v174
    %v1303 = vunpack.c.l.b16 %v175
    %v1304 = vunpack.c.h.b16 %v175
    %v1305 = vunpack.c.l.b16 %v176
    %v1306 = vunpack.c.h.b16 %v176
    %v1307 = vunpack.c.l.b16 %v177
    %v1308 = vunpack.c.h.b16 %v177
    %v1309 = vunpack.c.l.b16 %v178
    %v1310 = vunpack.c.h.b16 %v178
    %v1311 = vunpack.c.l.b16 %v179
    %v1312 = vunpack.c.h.b16 %v179
    %v1313 = vunpack.c.l.b16 %v180
    %v1314 = vunpack.c.h.b16 %v180
    %v1315 = vunpack.c.l.b16 %v181
    %v1316 = vunpack.c.h.b16 %v181
    %v1317 = vunpack.c.l.b16 %v182
    %v1318 = vunpack.c.h.b16 %v182
    %v1319 = vunpack.c.l.b16 %v183
    %v1320 = vunpack.c.h.b16 %v183
    %v1321 = vunpack.c.l.b16 %v184
    %v1322 = vunpack.c.h.b16 %v184
    %v1323 = vunpack.c.l.b16 %v185
    %v1324 = vunpack.c.h.b16 %v185
    %v1325 = vunpack.c.l.b16 %v186
    %v1326 = vunpack.c.h.b16 %v186
    %v1327 = vunpack.c.l.b16 %v187
    %v1328 = vunpack.c.h.b16 %v187
    %v1329 = vunpack.c.l.b16 %v188
    %v1330 = vunpack.c.h.b16 %v188
    %v1331 = vunpack.c.l.b16 %v189
    %v1332 = vunpack.c.h.b16 %v189
    %v1333 = vunpack.c.l.b16 %v190
    %v1334 = vunpack.c.h.b16 %v190
    %v1335 = vunpack.c.l.b16 %v191
    %v1336 = vunpack.c.h.b16 %v191
    %v1337 = vunpack.c.l.b16 %v192
    %v1338 = vunpack.c.h.b16 %v192
    %v1339 = vunpack.c.l.b16 %v193
    %v1340 = vunpack.c.h.b16 %v193
    %v1341 = vunpack.c.l.b16 %v194
    %v1342 = vunpack.c.h.b16 %v194
    %v1343 = vunpack.c.l.b16 %v195
    %v1344 = vunpack.c.h.b16 %v195
    %v1345 = vunpack.c.l.b16 %v196
    %v1346 = vunpack.c.h.b16 %v196
    %v1347 = vunpack.c.l.b16 %v197
    %v1348 = vunpack.c.h.b16 %v197
    %v1349 = vunpack.c.l.b16 %v198
    %v1350 = vunpack.c.h.b16 %v198
    %v1351 = vunpack.c.l.b16 %v199
    %v1352 = vunpack.c.h.b16 %v199
    %v1353 = vunpack.c.l.b16 %v200
    %v1354 = vunpack.c.h.b16 %v200
    %v1355 = vunpack.c.l.b16 %v201
    %v1356 = vunpack.c.h.b16 %v201
    %v1357 = vunpack.c.l.b16 %v202
    %v1358 = vunpack.c.h.b16 %v202
    %v1359 = vunpack.c.l.b16 %v203
    %v1360 = vunpack.c.h.b16 %v203
    %v1361 = vunpack.c.l.b16 %v204
    %v1362 = vunpack.c.h.b16 %v204
    %v1363 = vunpack.c.l.b16 %v205
    %v1364 = vunpack.c.h.b16 %v205
    %v1365 = vunpack.c.l.b16 %v206
    %v1366 = vunpack.c.h.b16 %v206
    %v1367 = vunpack.c.l.b16 %v207
    %v1368 = vunpack.c.h.b16 %v207
    %v1369 = vunpack.c.l.b16 %v208
    %v1370 = vunpack.c.h.b16 %v208
    %v1371 = vunpack.c.l.b16 %v209
    %v1372 = vunpack.c.h.b16 %v209
    %v1373 = vunpack.c.l.b16 %v210
    %v1374 = vunpack.c.h.b16 %v210
    %v1375 = vunpack.c.l.b16 %v211
    %v1376 = vunpack.c.h.b16 %v211
    %v1377 = vunpack.c.l.b16 %v212
    %v1378 = vunpack.c.h.b16 %v212
    %v1379 = vunpack.c.l.b16 %v213
    %v1380 = vunpack.c.h.b16 %v213
    %v1381 = vunpack.c.l.b16 %v214
    %v1382 = vunpack.c.h.b16 %v214
    %v1383 = vunpack.c.l.b16 %v215
    %v1384 = vunpack.c.h.b16 %v215
    %v1385 = vunpack.c.l.b16 %v216
    %v1386 = vunpack.c.h.b16 %v216
    %v1387 = vunpack.c.l.b16 %v217
    %v1388 = vunpack.c.h.b16 %v217
    %v1389 = vunpack.c.l.b16 %v218
    %v1390 = vunpack.c.h.b16 %v218
    %v1391 = vunpack.c.l.b16 %v219
    %v1392 = vunpack.c.h.b16 %v219
    %v1393 = vunpack.c.l.b16 %v220
    %v1394 = vunpack.c.h.b16 %v220
    %v1395 = vunpack.c.l.b16 %v221
    %v1396 = vunpack.c.h.b16 %v221
    %v1397 = vunpack.c.l.b16 %v222
    %v1398 = vunpack.c.h.b16 %v222
    %v1399 = vunpack.c.l.b16 %v223
    %v1400 = vunpack.c.h.b16 %v223
    %v1401 = vunpack.c.l.b16 %v224
    %v1402 = vunpack.c.h.b16 %v224
    %v1403 = vunpack.c.l.b16 %v225
    %v1404 = vunpack.c.h.b16 %v225
    %v1405 = vunpack.c.l.b16 %v226
    %v1406 = vunpack.c.h.b16 %v226
    %v1407 = vunpack.c.l.b16 %v227
    %v1408 = vunpack.c.h.b16 %v227
    %v1409 = vunpack.c.l.b16 %v228
    %v1410 = vunpack.c.h.b16 %v228
    %v1411 = vunpack.c.l.b16 %v229
    %v1412 = vunpack.c.h.b16 %v229
    %v1413 = vunpack.c.l.b16 %v230
    %v1414 = vunpack.c.h.b16 %v230
    %v1415 = vunpack.c.l.b16 %v231
    %v1416 = vunpack.c.h.b16 %v231
    %v1417 = vunpack.c.l.b16 %v232
    %v1418 = vunpack.c.h.b16 %v232
    %v1419 = vunpack.c.l.b16 %v233
    %v1420 = vunpack.c.h.b16 %v233
    %v1421 = vunpack.c.l.b16 %v234
    %v1422 = vunpack.c.h.b16 %v234
    %v1423 = vunpack.c.l.b16 %v235
    %v1424 = vunpack.c.h.b16 %v235
    %v1425 = vunpack.c.l.b16 %v236
    %v1426 = vunpack.c.h.b16 %v236
    %v1427 = vunpack.c.l.b16 %v237
    %v1428 = vunpack.c.h.b16 %v237
    %v1429 = vunpack.c.l.b16 %v238
    %v1430 = vunpack.c.h.b16 %v238
    %v1431 = vunpack.c.l.b16 %v239
    %v1432 = vunpack.c.h.b16 %v239
    %v1433 = vunpack.c.l.b16 %v240
    %v1434 = vunpack.c.h.b16 %v240
    %v1435 = vunpack.c.l.b16 %v241
    %v1436 = vunpack.c.h.b16 %v241
    %v1437 = vunpack.c.l.b16 %v242
    %v1438 = vunpack.c.h.b16 %v242
    %v1439 = vunpack.c.l.b16 %v243
    %v1440 = vunpack.c.h.b16 %v243
    %v1441 = vunpack.c.l.b16 %v244
    %v1442 = vunpack.c.h.b16 %v244
    %v1443 = vunpack.c.l.b16 %v245
    %v1444 = vunpack.c.h.b16 %v245
    %v1445 = vunpack.c.l.b16 %v246
    %v1446 = vunpack.c.h.b16 %v246
    %v1447 = vunpack.c.l.b16 %v247
    %v1448 = vunpack.c.h.b16 %v247
    %v1449 = vunpack.c.l.b16 %v248
    %v1450 = vunpack.c.h.b16 %v248
    %v1451 = vunpack.c.l.b16 %v249
    %v1452 = vunpack.c.h.b16 %v249
    %v1453 = vunpack.c.l.b16 %v250
    %v1454 = vunpack.c.h.b16 %v250
    %v1455 = vunpack.c.l.b16 %v251
    %v1456 = vunpack.c.h.b16 %v251
    %v1457 = vunpack.c.l.b16 %v252
    %v1458 = vunpack.c.h.b16 %v252
    %v1459 = vunpack.c.l.b16 %v253
    %v1460 = vunpack.c.h.b16 %v253
    %v1461 = vunpack.c.l.b16 %v254
    %v1462 = vunpack.c.h.b16 %v254
    %v1463 = vunpack.c.l.b16 %v255
    %v1464 = vunpack.c.h.b16 %v255
    %v1465 = vunpack.c.l.b16 %v256
    %v1466 = vunpack.c.h.b16 %v256
    %v1467 = vunpack.c.l.b16 %v257
    %v1468 = vunpack.c.h.b16 %v257
    %v1469 = vunpack.c.l.b16 %v258
    %v1470 = vunpack.c.h.b16 %v258
    %v1471 = vunpack.c.l.b16 %v259
    %v1472 = vunpack.c.h.b16 %v259
    %v1473 = vunpack.c.l.b16 %v260
    %v1474 = vunpack.c.h.b16 %v260
    %v1475 = vunpack.c.l.b16 %v261
    %v1476 = vunpack.c.h.b16 %v261
    %v1477 = vunpack.c.l.b16 %v262
    %v1478 = vunpack.c.h.b16 %v262
    %v1479 = vunpack.c.l.b16 %v263
    %v1480 = vunpack.c.h.b16 %v263
    %v1481 = vunpack.c.l.b16 %v264
    %v1482 = vunpack.c.h.b16 %v264
    %v1483 = vunpack.c.l.b16 %v265
    %v1484 = vunpack.c.h.b16 %v265
    %v1485 = vunpack.c.l.b16 %v266
    %v1486 = vunpack.c.h.b16 %v266
    %v1487 = vunpack.c.l.b16 %v267
    %v1488 = vunpack.c.h.b16 %v267
    %v1489 = vunpack.c.l.b16 %v268
    %v1490 = vunpack.c.h.b16 %v268
    %v1491 = vunpack.c.l.b16 %v269
    %v1492 = vunpack.c.h.b16 %v269
    %v1493 = vunpack.c.l.b16 %v270
    %v1494 = vunpack.c.h.b16 %v270
    %v1495 = vunpack.c.l.b16 %v271
    %v1496 = vunpack.c.h.b16 %v271
    %v1497 = vunpack.c.l.b16 %v272
    %v1498 = vunpack.c.h.b16 %v272
    %v1499 = vunpack.c.l.b16 %v273
    %v1500 = vunpack.c.h.b16 %v273
    %v1501 = vunpack.c.l.b16 %v274
    %v1502 = vunpack.c.h.b16 %v274
    %v1503 = vunpack.c.l.b16 %v275
    %v1504 = vunpack.c.h.b16 %v275
    %v1505 = vunpack.c.l.b16 %v276
    %v1506 = vunpack.c.h.b16 %v276
    %v1507 = vunpack.c.l.b16 %v277
    %v1508 = vunpack.c.h.b16 %v277
    %v1509 = vunpack.c.l.b16 %v278
    %v1510 = vunpack.c.h.b16 %v278
    %v1511 = vunpack.c.l.b16 %v279
    %v1512 = vunpack.c.h.b16 %v279
    %v1513 = vunpack.c.l.b16 %v280
    %v1514 = vunpack.c.h.b16 %v280
    %v1515 = vunpack.c.l.b16 %v281
    %v1516 = vunpack.c.h.b16 %v281
    %v1517 = vunpack.c.l.b16 %v282
    %v1518 = vunpack.c.h.b16 %v282
    %v1519 = vunpack.c.l.b16 %v283
    %v1520 = vunpack.c.h.b16 %v283
    %v1521 = vunpack.c.l.b16 %v284
    %v1522 = vunpack.c.h.b16 %v284
    %v1523 = vunpack.c.l.b16 %v285
    %v1524 = vunpack.c.h.b16 %v285
    %v1525 = vunpack.c.l.b16 %v286
    %v1526 = vunpack.c.h.b16 %v286
    %v1527 = vunpack.c.l.b16 %v287
    %v1528 = vunpack.c.h.b16 %v287
    %v1529 = vunpack.c.l.b16 %v288
    %v1530 = vunpack.c.h.b16 %v288
    %v1531 = vunpack.c.l.b16 %v289
    %v1532 = vunpack.c.h.b16 %v289
    %v1533 = vunpack.c.l.b16 %v290
    %v1534 = vunpack.c.h.b16 %v290
    %v1535 = vunpack.c.l.b16 %v291
    %v1536 = vunpack.c.h.b16 %v291
    %v1537 = vunpack.c.l.b16 %v292
    %v1538 = vunpack.c.h.b16 %v292
    %v1539 = vunpack.c.l.b16 %v293
    %v1540 = vunpack.c.h.b16 %v293
    %v1541 = vunpack.c.l.b16 %v294
    %v1542 = vunpack.c.h.b16 %v294
    %v1543 = vunpack.c.l.b16 %v295
    %v1544 = vunpack.c.h.b16 %v295
    %v1545 = vunpack.c.l.b16 %v296
    %v1546 = vunpack.c.h.b16 %v296
    %v1547 = vunpack.c.l.b16 %v297
    %v1548 = vunpack.c.h.b16 %v297
    %v1549 = vunpack.c.l.b16 %v298
    %v1550 = vunpack.c.h.b16 %v298
    %v1551 = vunpack.c.l.b16 %v299
    %v1552 = vunpack.c.h.b16 %v299
    %v1553 = vunpack.c.l.b16 %v300
    %v1554 = vunpack.c.h.b16 %v300
    %v1555 = vunpack.c.l.b16 %v301
    %v1556 = vunpack.c.h.b16 %v301
    %v1557 = vunpack.c.l.b16 %v302
    %v1558 = vunpack.c.h.b16 %v302
    %v1559 = vunpack.c.l.b16 %v303
    %v1560 = vunpack.c.h.b16 %v303
    %v1561 = vunpack.c.l.b16 %v304
    %v1562 = vunpack.c.h.b16 %v304
    %v1563 = vunpack.c.l.b16 %v305
    %v1564 = vunpack.c.h.b16 %v305
    %v1565 = vunpack.c.l.b16 %v306
    %v1566 = vunpack.c.h.b16 %v306
    %v1567 = vunpack.c.l.b16 %v307
    %v1568 = vunpack.c.h.b16 %v307
    %v1569 = vunpack.c.l.b16 %v308
    %v1570 = vunpack.c.h.b16 %v308
    %v1571 = vunpack.c.l.b16 %v309
    %v1572 = vunpack.c.h.b16 %v309
    %v1573 = vunpack.c.l.b16 %v310
    %v1574 = vunpack.c.h.b16 %v310
    %v1575 = vunpack.c.l.b16 %v311
    %v1576 = vunpack.c.h.b16 %v311
    %v1577 = vunpack.c.l.b16 %v312
    %v1578 = vunpack.c.h.b16 %v312
    %v1579 = vunpack.c.l.b16 %v313
    %v1580 = vunpack.c.h.b16 %v313
    %v1581 = vunpack.c.l.b16 %v314
    %v1582 = vunpack.c.h.b16 %v314
    %v1583 = vunpack.c.l.b16 %v315
    %v1584 = vunpack.c.h.b16 %v315
    %v1585 = vunpack.c.l.b16 %v316
    %v1586 = vunpack.c.h.b16 %v316
    %v1587 = vunpack.c.l.b16 %v317
    %v1588 = vunpack.c.h.b16 %v317
    %v1589 = vunpack.c.l.b16 %v318
    %v1590 = vunpack.c.h.b16 %v318
    %v1591 = vunpack.c.l.b16 %v319
    %v1592 = vunpack.c.h.b16 %v319
    %v1593 = vunpack.c.l.b16 %v320
    %v1594 = vunpack.c.h.b16 %v320
    %v1595 = vunpack.c.l.b16 %v321
    %v1596 = vunpack.c.h.b16 %v321
    %v1597 = vunpack.c.l.b16 %v322
    %v1598 = vunpack.c.h.b16 %v322
    %v1599 = vunpack.c.l.b16 %v323
    %v1600 = vunpack.c.h.b16 %v323
    %v1601 = vunpack.c.l.b16 %v324
    %v1602 = vunpack.c.h.b16 %v324
    %v1603 = vunpack.c.l.b16 %v325
    %v1604 = vunpack.c.h.b16 %v325
    %v1605 = vunpack.c.l.b16 %v326
    %v1606 = vunpack.c.h.b16 %v326
    %v1607 = vunpack.c.l.b16 %v327
    %v1608 = vunpack.c.h.b16 %v327
    %v1609 = vunpack.c.l.b16 %v328
    %v1610 = vunpack.c.h.b16 %v328
    %v1611 = vunpack.c.l.b16 %v329
    %v1612 = vunpack.c.h.b16 %v329
    %v1613 = vunpack.c.l.b16 %v330
    %v1614 = vunpack.c.h.b16 %v330
    %v1615 = vunpack.c.l.b16 %v331
    %v1616 = vunpack.c.h.b16 %v331
    %v1617 = vunpack.c.l.b16 %v332
    %v1618 = vunpack.c.h.b16 %v332
    %v1619 = vunpack.c.l.b16 %v333
    %v1620 = vunpack.c.h.b16 %v333
    %v1621 = vunpack.c.l.b16 %v334
    %v1622 = vunpack.c.h.b16 %v334
    %v1623 = vunpack.c.l.b16 %v335
    %v1624 = vunpack.c.h.b16 %v335
    %v1625 = vunpack.c.l.b16 %v336
    %v1626 = vunpack.c.h.b16 %v336
    %v1627 = vunpack.c.l.b16 %v337
    %v1628 = vunpack.c.h.b16 %v337
    %v1629 = vunpack.c.l.b16 %v338
    %v1630 = vunpack.c.h.b16 %v338
    %v1631 = vunpack.c.l.b16 %v339
    %v1632 = vunpack.c.h.b16 %v339
    %v1633 = vunpack.c.l.b16 %v340
    %v1634 = vunpack.c.h.b16 %v340
    %v1635 = vunpack.c.l.b16 %v341
    %v1636 = vunpack.c.h.b16 %v341
    %v1637 = vunpack.c.l.b16 %v342
    %v1638 = vunpack.c.h.b16 %v342
    %v1639 = vunpack.c.l.b16 %v343
    %v1640 = vunpack.c.h.b16 %v343
    %v1641 = vunpack.c.l.b16 %v344
    %v1642 = vunpack.c.h.b16 %v344
    %v1643 = vunpack.c.l.b16 %v345
    %v1644 = vunpack.c.h.b16 %v345
    %v1645 = vunpack.c.l.b16 %v346
    %v1646 = vunpack.c.h.b16 %v346
    %v1647 = vunpack.c.l.b16 %v347
    %v1648 = vunpack.c.h.b16 %v347
    %v1649 = vunpack.c.l.b16 %v348
    %v1650 = vunpack.c.h.b16 %v348
    %v1651 = vunpack.c.l.b16 %v349
    %v1652 = vunpack.c.h.b16 %v349
    %v1653 = vunpack.c.l.b16 %v350
    %v1654 = vunpack.c.h.b16 %v350
    %v1655 = vunpack.c.l.b16 %v351
    %v1656 = vunpack.c.h.b16 %v351
    %v1657 = vunpack.c.l.b16 %v352
    %v1658 = vunpack.c.h.b16 %v352
    %v1659 = vunpack.c.l.b16 %v353
    %v1660 = vunpack.c.h.b16 %v353
    %v1661 = vunpack.c.l.b16 %v354
    %v1662 = vunpack.c.h.b16 %v354
    %v1663 = vunpack.c.l.b16 %v355
    %v1664 = vunpack.c.h.b16 %v355
    %v1665 = vunpack.c.l.b16 %v356
    %v1666 = vunpack.c.h.b16 %v356
    %v1667 = vunpack.c.l.b16 %v357
    %v1668 = vunpack.c.h.b16 %v357
    %v1669 = vunpack.c.l.b16 %v358
    %v1670 = vunpack.c.h.b16 %v358
    %v1671 = vunpack.c.l.b16 %v359
    %v1672 = vunpack.c.h.b16 %v359
    %v1673 = vunpack.c.l.b16 %v360
    %v1674 = vunpack.c.h.b16 %v360
    %v1675 = vunpack.c.l.b16 %v361
    %v1676 = vunpack.c.h.b16 %v361
    %v1677 = vunpack.c.l.b16 %v362
    %v1678 = vunpack.c.h.b16 %v362
    %v1679 = vunpack.c.l.b16 %v363
    %v1680 = vunpack.c.h.b16 %v363
    %v1681 = vunpack.c.l.b16 %v364
    %v1682 = vunpack.c.h.b16 %v364
    %v1683 = vunpack.c.l.b16 %v365
    %v1684 = vunpack.c.h.b16 %v365
    %v1685 = vunpack.c.l.b16 %v366
    %v1686 = vunpack.c.h.b16 %v366
    %v1687 = vunpack.c.l.b16 %v367
    %v1688 = vunpack.c.h.b16 %v367
    %v1689 = vunpack.c.l.b16 %v368
    %v1690 = vunpack.c.h.b16 %v368
    %v1691 = vunpack.c.l.b16 %v369
    %v1692 = vunpack.c.h.b16 %v369
    %v1693 = vunpack.c.l.b16 %v370
    %v1694 = vunpack.c.h.b16 %v370
    %v1695 = vunpack.c.l.b16 %v371
    %v1696 = vunpack.c.h.b16 %v371
    %v1697 = vunpack.c.l.b16 %v372
    %v1698 = vunpack.c.h.b16 %v372
    %v1699 = vunpack.c.l.b16 %v373
    %v1700 = vunpack.c.h.b16 %v373
    %v1701 = vunpack.c.l.b16 %v374
    %v1702 = vunpack.c.h.b16 %v374
    %v1703 = vunpack.c.l.b16 %v375
    %v1704 = vunpack.c.h.b16 %v375
    %v1705 = vunpack.c.l.b16 %v376
    %v1706 = vunpack.c.h.b16 %v376
    %v1707 = vunpack.c.l.b16 %v377
    %v1708 = vunpack.c.h.b16 %v377
    %v1709 = vunpack.c.l.b16 %v378
    %v1710 = vunpack.c.h.b16 %v378
    %v1711 = vunpack.c.l.b16 %v379
    %v1712 = vunpack.c.h.b16 %v379
    %v1713 = vunpack.c.l.b16 %v380
    %v1714 = vunpack.c.h.b16 %v380
    %v1715 = vunpack.c.l.b16 %v381
    %v1716 = vunpack.c.h.b16 %v381
    %v1717 = vunpack.c.l.b16 %v382
    %v1718 = vunpack.c.h.b16 %v382
    %v1719 = vunpack.c.l.b16 %v383
    %v1720 = vunpack.c.h.b16 %v383
    %v1721 = vunpack.c.l.b16 %v384
    %v1722 = vunpack.c.h.b16 %v384
    %v1723 = vunpack.c.l.b16 %v385
    %v1724 = vunpack.c.h.b16 %v385
    %v1725 = vunpack.c.l.b16 %v386
    %v1726 = vunpack.c.h.b16 %v386
    %v1727 = vunpack.c.l.b16 %v387
    %v1728 = vunpack.c.h.b16 %v387
    %v1729 = vunpack.c.l.b16 %v388
    %v1730 = vunpack.c.h.b16 %v388
    %v1731 = vunpack.c.l.b16 %v389
    %v1732 = vunpack.c.h.b16 %v389
    %v1733 = vunpack.c.l.b16 %v390
    %v1734 = vunpack.c.h.b16 %v390
    %v1735 = vunpack.c.l.b16 %v391
    %v1736 = vunpack.c.h.b16 %v391
    %v1737 = vunpack.c.l.b16 %v392
    %v1738 = vunpack.c.h.b16 %v392
    %v1739 = vunpack.c.l.b16 %v393
    %v1740 = vunpack.c.h.b16 %v393
    %v1741 = vunpack.c.l.b16 %v394
    %v1742 = vunpack.c.h.b16 %v394
    %v1743 = vunpack.c.l.b16 %v395
    %v1744 = vunpack.c.h.b16 %v395
    %v1745 = vunpack.c.l.b16 %v396
    %v1746 = vunpack.c.h.b16 %v396
    %v1747 = vunpack.c.l.b16 %v397
    %v1748 = vunpack.c.h.b16 %v397
    %v1749 = vunpack.c.l.b16 %v398
    %v1750 = vunpack.c.h.b16 %v398
    %v1751 = vunpack.c.l.b16 %v399
    %v1752 = vunpack.c.h.b16 %v399
    %v1753 = vunpack.c.l.b16 %v400
    %v1754 = vunpack.c.h.b16 %v400
    %v1755 = vunpack.c.l.b16 %v401
    %v1756 = vunpack.c.h.b16 %v401
    %v1757 = vunpack.c.l.b16 %v402
    %v1758 = vunpack.c.h.b16 %v402
    %v1759 = vunpack.c.l.b16 %v403
    %v1760 = vunpack.c.h.b16 %v403
    %v1761 = vunpack.c.l.b16 %v404
    %v1762 = vunpack.c.h.b16 %v404
    %v1763 = vunpack.c.l.b16 %v405
    %v1764 = vunpack.c.h.b16 %v405
    %v1765 = vunpack.c.l.b16 %v406
    %v1766 = vunpack.c.h.b16 %v406
    %v1767 = vunpack.c.l.b16 %v407
    %v1768 = vunpack.c.h.b16 %v407
    %v1769 = vunpack.c.l.b16 %v408
    %v1770 = vunpack.c.h.b16 %v408
    %v1771 = vunpack.c.l.b16 %v409
    %v1772 = vunpack.c.h.b16 %v409
    %v1773 = vunpack.c.l.b16 %v410
    %v1774 = vunpack.c.h.b16 %v410
    %v1775 = vunpack.c.l.b16 %v411
    %v1776 = vunpack.c.h.b16 %v411
    %v1777 = vunpack.c.l.b16 %v412
    %v1778 = vunpack.c.h.b16 %v412
    %v1779 = vunpack.c.l.b16 %v413
    %v1780 = vunpack.c.h.b16 %v413
    %v1781 = vunpack.c.l.b16 %v414
    %v1782 = vunpack.c.h.b16 %v414
    %v1783 = vunpack.c.l.b16 %v415
    %v1784 = vunpack.c.h.b16 %v415
    %v1785 = vunpack.c.l.b16 %v416
    %v1786 = vunpack.c.h.b16 %v416
    %v1787 = vunpack.c.l.b16 %v417
    %v1788 = vunpack.c.h.b16 %v417
    %v1789 = vunpack.c.l.b16 %v418
    %v1790 = vunpack.c.h.b16 %v418
    %v1791 = vunpack.c.l.b16 %v419
    %v1792 = vunpack.c.h.b16 %v419
    %v1793 = vunpack.c.l.b16 %v420
    %v1794 = vunpack.c.h.b16 %v420
    %v1795 = vunpack.c.l.b16 %v421
    %v1796 = vunpack.c.h.b16 %v421
    %v1797 = vunpack.c.l.b16 %v422
    %v1798 = vunpack.c.h.b16 %v422
    %v1799 = vunpack.c.l.b16 %v423
    %v1800 = vunpack.c.h.b16 %v423
    %v1801 = vpack.c.b16 %v1019, %v1017
    %v1802 = vpack.c.b16 %v1020, %v1018
    %v1803 = vpack.c.b16 %v1023, %v1021
    %v1804 = vpack.c.b16 %v1024, %v1022
    %v1805 = vpack.c.b16 %v1027, %v1025
    %v1806 = vpack.c.b16 %v1028, %v1026
    %v1807 = vpack.c.b16 %v1031, %v1029
    %v1808 = vpack.c.b16 %v1032, %v1030
    %v1809 = vpack.c.b16 %v1035, %v1033
    %v1810 = vpack.c.b16 %v1036, %v1034
    %v1811 = vpack.c.b16 %v1039, %v1037
    %v1812 = vpack.c.b16 %v1040, %v1038
    %v1813 = vpack.c.b16 %v1043, %v1041
    %v1814 = vpack.c.b16 %v1044, %v1042
    %v1815 = vpack.c.b16 %v1047, %v1045
    %v1816 = vpack.c.b16 %v1048, %v1046
    %v1817 = vpack.c.b16 %v1051, %v1049
    %v1818 = vpack.c.b16 %v1052, %v1050
    %v1819 = vpack.c.b16 %v1055, %v1053
    %v1820 = vpack.c.b16 %v1056, %v1054
    %v1821 = vpack.c.b16 %v1059, %v1057
    %v1822 = vpack.c.b16 %v1060, %v1058
    %v1823 = vpack.c.b16 %v1063, %v1061
    %v1824 = vpack.c.b16 %v1064, %v1062
    %v1825 = vpack.c.b16 %v1067, %v1065
    %v1826 = vpack.c.b16 %v1068, %v1066
    %v1827 = vpack.c.b16 %v1071, %v1069
    %v1828 = vpack.c.b16 %v1072, %v1070
    %v1829 = vpack.c.b16 %v1075, %v1073
    %v1830 = vpack.c.b16 %v1076, %v1074
    %v1831 = vpack.c.b16 %v1079, %v1077
    %v1832 = vpack.c.b16 %v1080, %v1078
    %v1833 = vpack.c.b16 %v1083, %v1081
    %v1834 = vpack.c.b16 %v1084, %v1082
    %v1835 = vpack.c.b16 %v1087, %v1085
    %v1836 = vpack.c.b16 %v1088, %v1086
    %v1837 = vpack.c.b16 %v1091, %v1089
    %v1838 = vpack.c.b16 %v1092, %v1090
    %v1839 = vpack.c.b16 %v1095, %v1093
    %v1840 = vpack.c.b16 %v1096, %v1094
    %v1841 = vpack.c.b16 %v1099, %v1097
    %v1842 = vpack.c.b16 %v1100, %v1098
    %v1843 = vpack.c.b16 %v1103, %v1101
    %v1844 = vpack.c.b16 %v1104, %v1102
    %v1845 = vpack.c.b16 %v1107, %v1105
    %v1846 = vpack.c.b16 %v1108, %v1106
    %v1847 = vpack.c.b16 %v1111, %v1109
    %v1848 = vpack.c.b16 %v1112, %v1110
    %v1849 = vpack.c.b16 %v1115, %v1113
    %v1850 = vpack.c.b16 %v1116, %v1114
    %v1851 = vpack.c.b16 %v1119, %v1117
    %v1852 = vpack.c.b16 %v1120, %v1118
    %v1853 = vpack.c.b16 %v1123, %v1121
    %v1854 = vpack.c.b16 %v1124, %v1122
    %v1855 = vpack.c.b16 %v1127, %v1125
    %v1856 = vpack.c.b16 %v1128, %v1126
    %v1857 = vpack.c.b16 %v1131, %v1129
    %v1858 = vpack.c.b16 %v1132, %v1130
    %v1859 = vpack.c.b16 %v1135, %v1133
    %v1860 = vpack.c.b16 %v1136, %v1134
    %v1861 = vpack.c.b16 %v1139, %v1137
    %v1862 = vpack.c.b16 %v1140, %v1138
    %v1863 = vpack.c.b16 %v1143, %v1141
    %v1864 = vpack.c.b16 %v1144, %v1142
    %v1865 = vpack.c.b16 %v1147, %v1145
    %v1866 = vpack.c.b16 %v1148, %v1146
    %v1867 = vpack.c.b16 %v1151, %v1149
    %v1868 = vpack.c.b16 %v1152, %v1150
    %v1869 = vpack.c.b16 %v1155, %v1153
    %v1870 = vpack.c.b16 %v1156, %v1154
    %v1871 = vpack.c.b16 %v1159, %v1157
    %v1872 = vpack.c.b16 %v1160, %v1158
    %v1873 = vpack.c.b16 %v1163, %v1161
    %v1874 = vpack.c.b16 %v1164, %v1162
    %v1875 = vpack.c.b16 %v1167, %v1165
    %v1876 = vpack.c.b16 %v1168, %v1166
    %v1877 = vpack.c.b16 %v1171, %v1169
    %v1878 = vpack.c.b16 %v1172, %v1170
    %v1879 = vpack.c.b16 %v1175, %v1173
    %v1880 = vpack.c.b16 %v1176, %v1174
    %v1881 = vpack.c.b16 %v1179, %v1177
    %v1882 = vpack.c.b16 %v1180, %v1178
    %v1883 = vpack.c.b16 %v1183, %v1181
    %v1884 = vpack.c.b16 %v1184, %v1182
    %v1885 = vpack.c.b16 %v1187, %v1185
    %v1886 = vpack.c.b16 %v1188, %v1186
    %v1887 = vpack.c.b16 %v1191, %v1189
    %v1888 = vpack.c.b16 %v1192, %v1190
    %v1889 = vpack.c.b16 %v1195, %v1193
    %v1890 = vpack.c.b16 %v1196, %v1194
    %v1891 = vpack.c.b16 %v1199, %v1197
    %v1892 = vpack.c.b16 %v1200, %v1198
    %v1893 = vpack.c.b16 %v1203, %v1201
    %v1894 = vpack.c.b16 %v1204, %v1202
    %v1895 = vpack.c.b16 %v1207, %v1205
    %v1896 = vpack.c.b16 %v1208, %v1206
    %v1897 = vpack.c.b16 %v1211, %v1209
    %v1898 = vpack.c.b16 %v1212, %v1210
    %v1899 = vpack.c.b16 %v1215, %v1213
    %v1900 = vpack.c.b16 %v1216, %v1214
    %v1901 = vpack.c.b16 %v1219, %v1217
    %v1902 = vpack.c.b16 %v1220, %v1218
    %v1903 = vpack.c.b16 %v1223, %v1221
    %v1904 = vpack.c.b16 %v1224, %v1222
    %v1905 = vpack.c.b16 %v1227, %v1225
    %v1906 = vpack.c.b16 %v1228, %v1226
    %v1907 = vpack.c.b16 %v1231, %v1229
    %v1908 = vpack.c.b16 %v1232, %v1230
    %v1909 = vpack.c.b16 %v1235, %v1233
    %v1910 = vpack.c.b16 %v1236, %v1234
    %v1911 = vpack.c.b16 %v1239, %v1237
    %v1912 = vpack.c.b16 %v1240, %v1238
    %v1913 = vpack.c.b16 %v1243, %v1241
    %v1914 = vpack.c.b16 %v1244, %v1242
    %v1915 = vpack.c.b16 %v1247, %v1245
    %v1916 = vpack.c.b16 %v1248, %v1246
    %v1917 = vpack.c.b16 %v1251, %v1249
    %v1918 = vpack.c.b16 %v1252, %v1250
    %v1919 = vpack.c.b16 %v1255, %v1253
    %v1920 = vpack.c.b16 %v1256, %v1254
    %v1921 = vpack.c.b16 %v1259, %v1257
    %v1922 = vpack.c.b16 %v1260, %v1258
    %v1923 = vpack.c.b16 %v1263, %v1261
    %v1924 = vpack.c.b16 %v1264, %v1262
    %v1925 = vpack.c.b16 %v1267, %v1265
    %v1926 = vpack.c.b16 %v1268, %v1266
    %v1927 = vpack.c.b16 %v1271, %v1269
    %v1928 = vpack.c.b16 %v1272, %v1270
    %v1929 = vpack.c.b16 %v1275, %v1273
    %v1930 = vpack.c.b16 %v1276, %v1274
    %v1931 = vpack.c.b16 %v1279, %v1277
    %v1932 = vpack.c.b16 %v1280, %v1278
    %v1933 = vpack.c.b16 %v1283, %v1281
    %v1934 = vpack.c.b16 %v1284, %v1282
    %v1935 = vpack.c.b16 %v1287, %v1285
    %v1936 = vpack.c.b16 %v1288, %v1286
    %v1937 = vpack.c.b16 %v1291, %v1289
    %v1938 = vpack.c.b16 %v1292, %v1290
    %v1939 = vpack.c.b16 %v1295, %v1293
    %v1940 = vpack.c.b16 %v1296, %v1294
    %v1941 = vpack.c.b16 %v1299, %v1297
    %v1942 = vpack.c.b16 %v1300, %v1298
    %v1943 = vpack.c.b16 %v1303, %v1301
    %v1944 = vpack.c.b16 %v1304, %v1302
    %v1945 = vpack.c.b16 %v1307, %v1305
    %v1946 = vpack.c.b16 %v1308, %v1306
    %v1947 = vpack.c.b16 %v1311, %v1309
    %v1948 = vpack.c.b16 %v1312, %v1310
    %v1949 = vpack.c.b16 %v1315, %v1313
    %v1950 = vpack.c.b16 %v1316, %v1314
    %v1951 = vpack.c.b16 %v1319, %v1317
    %v1952 = vpack.c.b16 %v1320, %v1318
    %v1953 = vpack.c.b16 %v1323, %v1321
    %v1954 = vpack.c.b16 %v1324, %v1322
    %v1955 = vpack.c.b16 %v1327, %v1325
    %v1956 = vpack.c.b16 %v1328, %v1326
    %v1957 = vpack.c.b16 %v1331, %v1329
    %v1958 = vpack.c.b16 %v1332, %v1330
    %v1959 = vpack.c.b16 %v1335, %v1333
    %v1960 = vpack.c.b16 %v1336, %v1334
    %v1961 = vpack.c.b16 %v1339, %v1337
    %v1962 = vpack.c.b16 %v1340, %v1338
    %v1963 = vpack.c.b16 %v1343, %v1341
    %v1964 = vpack.c.b16 %v1344, %v1342
    %v1965 = vpack.c.b16 %v1347, %v1345
    %v1966 = vpack.c.b16 %v1348, %v1346
    %v1967 = vpack.c.b16 %v1351, %v1349
    %v1968 = vpack.c.b16 %v1352, %v1350
    %v1969 = vpack.c.b16 %v1355, %v1353
    %v1970 = vpack.c.b16 %v1356, %v1354
    %v1971 = vpack.c.b16 %v1359, %v1357
    %v1972 = vpack.c.b16 %v1360, %v1358
    %v1973 = vpack.c.b16 %v1363, %v1361
    %v1974 = vpack.c.b16 %v1364, %v1362
    %v1975 = vpack.c.b16 %v1367, %v1365
    %v1976 = vpack.c.b16 %v1368, %v1366
    %v1977 = vpack.c.b16 %v1371, %v1369
    %v1978 = vpack.c.b16 %v1372, %v1370
    %v1979 = vpack.c.b16 %v1375, %v1373
    %v1980 = vpack.c.b16 %v1376, %v1374
    %v1981 = vpack.c.b16 %v1379, %v1377
    %v1982 = vpack.c.b16 %v1380, %v1378
    %v1983 = vpack.c.b16 %v1383, %v1381
    %v1984 = vpack.c.b16 %v1384, %v1382
    %v1985 = vpack.c.b16 %v1387, %v1385
    %v1986 = vpack.c.b16 %v1388, %v1386
    %v1987 = vpack.c.b16 %v1391, %v1389
    %v1988 = vpack.c.b16 %v1392, %v1390
    %v1989 = vpack.c.b16 %v1395, %v1393
    %v1990 = vpack.c.b16 %v1396, %v1394
    %v1991 = vpack.c.b16 %v1399, %v1397
    %v1992 = vpack.c.b16 %v1400, %v1398
    %v1993 = vpack.c.b16 %v1403, %v1401
    %v1994 = vpack.c.b16 %v1404, %v1402
    %v1995 = vpack.c.b16 %v1407, %v1405
    %v1996 = vpack.c.b16 %v1408, %v1406
    %v1997 = vpack.c.b16 %v1411, %v1409
    %v1998 = vpack.c.b16 %v1412, %v1410
    %v1999 = vpack.c.b16 %v1415, %v1413
    %v2000 = vpack.c.b16 %v1416, %v1414
    %v2001 = vpack.c.b16 %v1419, %v1417
    %v2002 = vpack.c.b16 %v1420, %v1418
    %v2003 = vpack.c.b16 %v1423, %v1421
    %v2004 = vpack.c.b16 %v1424, %v1422
    %v2005 = vpack.c.b16 %v1427, %v1425
    %v2006 = vpack.c.b16 %v1428, %v1426
    %v2007 = vpack.c.b16 %v1431, %v1429
    %v2008 = vpack.c.b16 %v1432, %v1430
    %v2009 = vpack.c.b16 %v1435, %v1433
    %v2010 = vpack.c.b16 %v1436, %v1434
    %v2011 = vpack.c.b16 %v1439, %v1437
    %v2012 = vpack.c.b16 %v1440, %v1438
    %v2013 = vpack.c.b16 %v1443, %v1441
    %v2014 = vpack.c.b16 %v1444, %v1442
    %v2015 = vpack.c.b16 %v1447, %v1445
    %v2016 = vpack.c.b16 %v1448, %v1446
    %v2017 = vpack.c.b16 %v1451, %v1449
    %v2018 = vpack.c.b16 %v1452, %v1450
    %v2019 = vpack.c.b16 %v1455, %v1453
    %v2020 = vpack.c.b16 %v1456, %v1454
    %v2021 = vpack.c.b16 %v1459, %v1457
    %v2022 = vpack.c.b16 %v1460, %v1458
    %v2023 = vpack.c.b16 %v1463, %v1461
    %v2024 = vpack.c.b16 %v1464, %v1462
    %v2025 = vpack.c.b16 %v1467, %v1465
    %v2026 = vpack.c.b16 %v1468, %v1466
    %v2027 = vpack.c.b16 %v1471, %v1469
    %v2028 = vpack.c.b16 %v1472, %v1470
    %v2029 = vpack.c.b16 %v1475, %v1473
    %v2030 = vpack.c.b16 %v1476, %v1474
    %v2031 = vpack.c.b16 %v1479, %v1477
    %v2032 = vpack.c.b16 %v1480, %v1478
    %v2033 = vpack.c.b16 %v1483, %v1481
    %v2034 = vpack.c.b16 %v1484, %v1482
    %v2035 = vpack.c.b16 %v1487, %v1485
    %v2036 = vpack.c.b16 %v1488, %v1486
    %v2037 = vpack.c.b16 %v1491, %v1489
    %v2038 = vpack.c.b16 %v1492, %v1490
    %v2039 = vpack.c.b16 %v1495, %v1493
    %v2040 = vpack.c.b16 %v1496, %v1494
    %v2041 = vpack.c.b16 %v1499, %v1497
    %v2042 = vpack.c.b16 %v1500, %v1498
    %v2043 = vpack.c.b16 %v1503, %v1501
    %v2044 = vpack.c.b16 %v1504, %v1502
    %v2045 = vpack.c.b16 %v1507, %v1505
    %v2046 = vpack.c.b16 %v1508, %v1506
    %v2047 = vpack.c.b16 %v1511, %v1509
    %v2048 = vpack.c.b16 %v1512, %v1510
    %v2049 = vpack.c.b16 %v1515, %v1513
    %v2050 = vpack.c.b16 %v1516, %v1514
    %v2051 = vpack.c.b16 %v1519, %v1517
    %v2052 = vpack.c.b16 %v1520, %v1518
    %v2053 = vpack.c.b16 %v1523, %v1521
    %v2054 = vpack.c.b16 %v1524, %v1522
    %v2055 = vpack.c.b16 %v1527, %v1525
    %v2056 = vpack.c.b16 %v1528, %v1526
    %v2057 = vpack.c.b16 %v1531, %v1529
    %v2058 = vpack.c.b16 %v1532, %v1530
    %v2059 = vpack.c.b16 %v1535, %v1533
    %v2060 = vpack.c.b16 %v1536, %v1534
    %v2061 = vpack.c.b16 %v1539, %v1537
    %v2062 = vpack.c.b16 %v1540, %v1538
    %v2063 = vpack.c.b16 %v1543, %v1541
    %v2064 = vpack.c.b16 %v1544, %v1542
    %v2065 = vpack.c.b16 %v1547, %v1545
    %v2066 = vpack.c.b16 %v1548, %v1546
    %v2067 = vpack.c.b16 %v1551, %v1549
    %v2068 = vpack.c.b16 %v1552, %v1550
    %v2069 = vpack.c.b16 %v1555, %v1553
    %v2070 = vpack.c.b16 %v1556, %v1554
    %v2071 = vpack.c.b16 %v1559, %v1557
    %v2072 = vpack.c.b16 %v1560, %v1558
    %v2073 = vpack.c.b16 %v1563, %v1561
    %v2074 = vpack.c.b16 %v1564, %v1562
    %v2075 = vpack.c.b16 %v1567, %v1565
    %v2076 = vpack.c.b16 %v1568, %v1566
    %v2077 = vpack.c.b16 %v1571, %v1569
    %v2078 = vpack.c.b16 %v1572, %v1570
    %v2079 = vpack.c.b16 %v1575, %v1573
    %v2080 = vpack.c.b16 %v1576, %v1574
    %v2081 = vpack.c.b16 %v1579, %v1577
    %v2082 = vpack.c.b16 %v1580, %v1578
    %v2083 = vpack.c.b16 %v1583, %v1581
    %v2084 = vpack.c.b16 %v1584, %v1582
    %v2085 = vpack.c.b16 %v1587, %v1585
    %v2086 = vpack.c.b16 %v1588, %v1586
    %v2087 = vpack.c.b16 %v1591, %v1589
    %v2088 = vpack.c.b16 %v1592, %v1590
    %v2089 = vpack.c.b16 %v1595, %v1593
    %v2090 = vpack.c.b16 %v1596, %v1594
    %v2091 = vpack.c.b16 %v1599, %v1597
    %v2092 = vpack.c.b16 %v1600, %v1598
    %v2093 = vpack.c.b16 %v1603, %v1601
    %v2094 = vpack.c.b16 %v1604, %v1602
    %v2095 = vpack.c.b16 %v1607, %v1605
    %v2096 = vpack.c.b16 %v1608, %v1606
    %v2097 = vpack.c.b16 %v1611, %v1609
    %v2098 = vpack.c.b16 %v1612, %v1610
    %v2099 = vpack.c.b16 %v1615, %v1613
    %v2100 = vpack.c.b16 %v1616, %v1614
    %v2101 = vpack.c.b16 %v1619, %v1617
    %v2102 = vpack.c.b16 %v1620, %v1618
    %v2103 = vpack.c.b16 %v1623, %v1621
    %v2104 = vpack.c.b16 %v1624, %v1622
    %v2105 = vpack.c.b16 %v1627, %v1625
    %v2106 = vpack.c.b16 %v1628, %v1626
    %v2107 = vpack.c.b16 %v1631, %v1629
    %v2108 = vpack.c.b16 %v1632, %v1630
    %v2109 = vpack.c.b16 %v1635, %v1633
    %v2110 = vpack.c.b16 %v1636, %v1634
    %v2111 = vpack.c.b16 %v1639, %v1637
    %v2112 = vpack.c.b16 %v1640, %v1638
    %v2113 = vpack.c.b16 %v1643, %v1641
    %v2114 = vpack.c.b16 %v1644, %v1642
    %v2115 = vpack.c.b16 %v1647, %v1645
    %v2116 = vpack.c.b16 %v1648, %v1646
    %v2117 = vpack.c.b16 %v1651, %v1649
    %v2118 = vpack.c.b16 %v1652, %v1650
    %v2119 = vpack.c.b16 %v1655, %v1653
    %v2120 = vpack.c.b16 %v1656, %v1654
    %v2121 = vpack.c.b16 %v1659, %v1657
    %v2122 = vpack.c.b16 %v1660, %v1658
    %v2123 = vpack.c.b16 %v1663, %v1661
    %v2124 = vpack.c.b16 %v1664, %v1662
    %v2125 = vpack.c.b16 %v1667, %v1665
    %v2126 = vpack.c.b16 %v1668, %v1666
    %v2127 = vpack.c.b16 %v1671, %v1669
    %v2128 = vpack.c.b16 %v1672, %v1670
    %v2129 = vpack.c.b16 %v1675, %v1673
    %v2130 = vpack.c.b16 %v1676, %v1674
    %v2131 = vpack.c.b16 %v1679, %v1677
    %v2132 = vpack.c.b16 %v1680, %v1678
    %v2133 = vpack.c.b16 %v1683, %v1681
    %v2134 = vpack.c.b16 %v1684, %v1682
    %v2135 = vpack.c.b16 %v1687, %v1685
    %v2136 = vpack.c.b16 %v1688, %v1686
    %v2137 = vpack.c.b16 %v1691, %v1689
    %v2138 = vpack.c.b16 %v1692, %v1690
    %v2139 = vpack.c.b16 %v1695, %v1693
    %v2140 = vpack.c.b16 %v1696, %v1694
    %v2141 = vpack.c.b16 %v1699, %v1697
    %v2142 = vpack.c.b16 %v1700, %v1698
    %v2143 = vpack.c.b16 %v1703, %v1701
    %v2144 = vpack.c.b16 %v1704, %v1702
    %v2145 = vpack.c.b16 %v1707, %v1705
    %v2146 = vpack.c.b16 %v1708, %v1706
    %v2147 = vpack.c.b16 %v1711, %v1709
    %v2148 = vpack.c.b16 %v1712, %v1710
    %v2149 = vpack.c.b16 %v1715, %v1713
    %v2150 = vpack.c.b16 %v1716, %v1714
    %v2151 = vpack.c.b16 %v1719, %v1717
    %v2152 = vpack.c.b16 %v1720, %v1718
    %v2153 = vpack.c.b16 %v1723, %v1721
    %v2154 = vpack.c.b16 %v1724, %v1722
    %v2155 = vpack.c.b16 %v1727, %v1725
    %v2156 = vpack.c.b16 %v1728, %v1726
    %v2157 = vpack.c.b16 %v1731, %v1729
    %v2158 = vpack.c.b16 %v1732, %v1730
    %v2159 = vpack.c.b16 %v1735, %v1733
    %v2160 = vpack.c.b16 %v1736, %v1734
    %v2161 = vpack.c.b16 %v1739, %v1737
    %v2162 = vpack.c.b16 %v1740, %v1738
    %v2163 = vpack.c.b16 %v1743, %v1741
    %v2164 = vpack.c.b16 %v1744, %v1742
    %v2165 = vpack.c.b16 %v1747, %v1745
    %v2166 = vpack.c.b16 %v1748, %v1746
    %v2167 = vpack.c.b16 %v1751, %v1749
    %v2168 = vpack.c.b16 %v1752, %v1750
    %v2169 = vpack.c.b16 %v1755, %v1753
    %v2170 = vpack.c.b16 %v1756, %v1754
    %v2171 = vpack.c.b16 %v1759, %v1757
    %v2172 = vpack.c.b16 %v1760, %v1758
    %v2173 = vpack.c.b16 %v1763, %v1761
    %v2174 = vpack.c.b16 %v1764, %v1762
    %v2175 = vpack.c.b16 %v1767, %v1765
    %v2176 = vpack.c.b16 %v1768, %v1766
    %v2177 = vpack.c.b16 %v1771, %v1769
    %v2178 = vpack.c.b16 %v1772, %v1770
    %v2179 = vpack.c.b16 %v1775, %v1773
    %v2180 = vpack.c.b16 %v1776, %v1774
    %v2181 = vpack.c.b16 %v1779, %v1777
    %v2182 = vpack.c.b16 %v1780, %v1778
    %v2183 = vpack.c.b16 %v1783, %v1781
    %v2184 = vpack.c.b16 %v1784, %v1782
    %v2185 = vpack.c.b16 %v1787, %v1785
    %v2186 = vpack.c.b16 %v1788, %v1786
    %v2187 = vpack.c.b16 %v1791, %v1789
    %v2188 = vpack.c.b16 %v1792, %v1790
    %v2189 = vpack.c.b16 %v1795, %v1793
    %v2190 = vpack.c.b16 %v1796, %v1794
    %v2191 = vpack.c.b16 %v1799, %v1797
    %v2192 = vpack.c.b16 %v1800, %v1798
    %vm2585 = vcmask 523264
    %v2587 = vsel %vm2585, %v600, 0
    %2589 = vmatprep.subr.bf16.mxu0 %v1802
    %2590 = vmatpush1.bf16.msra.mxu0 %v1801
    %2591 = vmatprep.subr.bf16.mxu0 %v1804
    %2592 = vmatpush1.bf16.msra.mxu0 %v1803
    %2593 = vmatprep.subr.bf16.mxu0 %v1806
    %2594 = vmatpush1.bf16.msra.mxu0 %v1805
    %2595 = vmatprep.subr.bf16.mxu0 %v1808
    %2596 = vmatpush1.bf16.msra.mxu0 %v1807
    %2597 = vmatprep.subr.bf16.mxu0 %v1810
    %2598 = vmatpush1.bf16.msra.mxu0 %v1809
    %2599 = vmatprep.subr.bf16.mxu0 %v1812
    %2600 = vmatpush1.bf16.msra.mxu0 %v1811
    %2601 = vmatprep.subr.bf16.mxu0 %v1814
    %2602 = vmatpush1.bf16.msra.mxu0 %v1813
    %2603 = vmatprep.subr.bf16.mxu0 %v1816
    %2604 = vmatpush1.bf16.msra.mxu0 %v1815
    %2605 = vmatprep.subr.bf16.mxu0 %v1818
    %2606 = vmatpush1.bf16.msra.mxu0 %v1817
    %2607 = vmatprep.subr.bf16.mxu0 %v1820
    %2608 = vmatpush1.bf16.msra.mxu0 %v1819
    %2609 = vmatprep.subr.bf16.mxu0 %v1822
    %2610 = vmatpush1.bf16.msra.mxu0 %v1821
    %2611 = vmatprep.subr.bf16.mxu0 %v1824
    %2612 = vmatpush1.bf16.msra.mxu0 %v1823
    %2613 = vmatprep.subr.bf16.mxu0 %v1826
    %2614 = vmatpush1.bf16.msra.mxu0 %v1825
    %2615 = vmatprep.subr.bf16.mxu0 %v1828
    %2616 = vmatpush1.bf16.msra.mxu0 %v1827
    %2617 = vmatprep.subr.bf16.mxu0 %v1830
    %2618 = vmatpush1.bf16.msra.mxu0 %v1829
    %2619 = vmatprep.subr.bf16.mxu0 %v1832
    %2620 = vmatpush1.bf16.msra.mxu0 %v1831
    %2621 = vmatprep.mubr.bf16.mxu0 %v477
    %2622 = vmatmul.mubr.bf16.gmra.mrb[0].mxu0 %v463
    %v2623 = vpop.f32.mrb[0].mxu0
    %v2624 = vadd.f32 %v429, %v2623
    %v2625 = vpop.f32.mrb[0].mxu0
    %v2626 = vadd.f32 %v433, %v2625
    %v2627 = vpop.f32.mrb[0].mxu0
    %v2628 = vpop.f32.mrb[0].mxu0
    %2629 = vdwg.mxu0
    %2630 = vmatprep.subr.bf16.mxu0 %v1834
    %2631 = vmatpush1.bf16.msra.mxu0 %v1833
    %2632 = vmatprep.subr.bf16.mxu0 %v1836
    %2633 = vmatpush1.bf16.msra.mxu0 %v1835
    %2634 = vmatprep.subr.bf16.mxu0 %v1838
    %2635 = vmatpush1.bf16.msra.mxu0 %v1837
    %2636 = vmatprep.subr.bf16.mxu0 %v1840
    %2637 = vmatpush1.bf16.msra.mxu0 %v1839
    %2638 = vmatprep.subr.bf16.mxu0 %v1842
    %2639 = vmatpush1.bf16.msra.mxu0 %v1841
    %2640 = vmatprep.subr.bf16.mxu0 %v1844
    %2641 = vmatpush1.bf16.msra.mxu0 %v1843
    %2642 = vmatprep.subr.bf16.mxu0 %v1846
    %2643 = vmatpush1.bf16.msra.mxu0 %v1845
    %2644 = vmatprep.subr.bf16.mxu0 %v1848
    %2645 = vmatpush1.bf16.msra.mxu0 %v1847
    %2646 = vmatprep.subr.bf16.mxu0 %v1850
    %2647 = vmatpush1.bf16.msra.mxu0 %v1849
    %2648 = vmatprep.subr.bf16.mxu0 %v1852
    %2649 = vmatpush1.bf16.msra.mxu0 %v1851
    %2650 = vmatprep.subr.bf16.mxu0 %v1854
    %2651 = vmatpush1.bf16.msra.mxu0 %v1853
    %2652 = vmatprep.subr.bf16.mxu0 %v1856
    %2653 = vmatpush1.bf16.msra.mxu0 %v1855
    %2654 = vmatprep.subr.bf16.mxu0 %v1858
    %2655 = vmatpush1.bf16.msra.mxu0 %v1857
    %2656 = vmatprep.subr.bf16.mxu0 %v1860
    %2657 = vmatpush1.bf16.msra.mxu0 %v1859
    %2658 = vmatprep.subr.bf16.mxu0 %v1862
    %2659 = vmatpush1.bf16.msra.mxu0 %v1861
    %2660 = vmatprep.subr.bf16.mxu0 %v1864
    %2661 = vmatpush1.bf16.msra.mxu0 %v1863
    %2662 = vmatprep.mubr.bf16.mxu0 %v487
    %2663 = vmatmul.mubr.bf16.gmra.mrb[0].mxu0 %v485
    %v2664 = vpop.f32.mrb[0].mxu0
    %v2665 = vadd.f32 %v2624, %v2664
    %v2666 = vpop.f32.mrb[0].mxu0
    %v2667 = vadd.f32 %v2626, %v2666
    %v2668 = vpop.f32.mrb[0].mxu0
    %v2669 = vpop.f32.mrb[0].mxu0
    %2670 = vdwg.mxu0
    %2671 = vmatprep.subr.bf16.mxu0 %v1866
    %2672 = vmatpush1.bf16.msra.mxu0 %v1865
    %2673 = vmatprep.subr.bf16.mxu0 %v1868
    %2674 = vmatpush1.bf16.msra.mxu0 %v1867
    %2675 = vmatprep.subr.bf16.mxu0 %v1870
    %2676 = vmatpush1.bf16.msra.mxu0 %v1869
    %2677 = vmatprep.subr.bf16.mxu0 %v1872
    %2678 = vmatpush1.bf16.msra.mxu0 %v1871
    %2679 = vmatprep.subr.bf16.mxu0 %v1874
    %2680 = vmatpush1.bf16.msra.mxu0 %v1873
    %2681 = vmatprep.subr.bf16.mxu0 %v1876
    %2682 = vmatpush1.bf16.msra.mxu0 %v1875
    %2683 = vmatprep.subr.bf16.mxu0 %v1878
    %2684 = vmatpush1.bf16.msra.mxu0 %v1877
    %2685 = vmatprep.subr.bf16.mxu0 %v1880
    %2686 = vmatpush1.bf16.msra.mxu0 %v1879
    %2687 = vmatprep.subr.bf16.mxu0 %v1882
    %2688 = vmatpush1.bf16.msra.mxu0 %v1881
    %2689 = vmatprep.subr.bf16.mxu0 %v1884
    %2690 = vmatpush1.bf16.msra.mxu0 %v1883
    %2691 = vmatprep.subr.bf16.mxu0 %v1886
    %2692 = vmatpush1.bf16.msra.mxu0 %v1885
    %2693 = vmatprep.subr.bf16.mxu0 %v1888
    %2694 = vmatpush1.bf16.msra.mxu0 %v1887
    %2695 = vmatprep.subr.bf16.mxu0 %v1890
    %2696 = vmatpush1.bf16.msra.mxu0 %v1889
    %2697 = vmatprep.subr.bf16.mxu0 %v1892
    %2698 = vmatpush1.bf16.msra.mxu0 %v1891
    %2699 = vmatprep.subr.bf16.mxu0 %v1894
    %2700 = vmatpush1.bf16.msra.mxu0 %v1893
    %2701 = vmatprep.subr.bf16.mxu0 %v1896
    %2702 = vmatpush1.bf16.msra.mxu0 %v1895
    %2703 = vmatprep.mubr.bf16.mxu0 %v484
    %2704 = vmatmul.mubr.bf16.gmra.mrb[0].mxu0 %v470
    %v2705 = vpop.f32.mrb[0].mxu0
    %v2706 = vadd.f32 %v2665, %v2705
    %v2707 = vpop.f32.mrb[0].mxu0
    %v2708 = vadd.f32 %v2667, %v2707
    %v2709 = vpop.f32.mrb[0].mxu0
    %v2710 = vpop.f32.mrb[0].mxu0
    %2711 = vdwg.mxu0
    %2712 = vmatprep.subr.bf16.mxu0 %v1898
    %2713 = vmatpush1.bf16.msra.mxu0 %v1897
    %2714 = vmatprep.subr.bf16.mxu0 %v1900
    %2715 = vmatpush1.bf16.msra.mxu0 %v1899
    %2716 = vmatprep.subr.bf16.mxu0 %v1902
    %2717 = vmatpush1.bf16.msra.mxu0 %v1901
    %2718 = vmatprep.subr.bf16.mxu0 %v1904
    %2719 = vmatpush1.bf16.msra.mxu0 %v1903
    %2720 = vmatprep.subr.bf16.mxu0 %v1906
    %2721 = vmatpush1.bf16.msra.mxu0 %v1905
    %2722 = vmatprep.subr.bf16.mxu0 %v1908
    %2723 = vmatpush1.bf16.msra.mxu0 %v1907
    %2724 = vmatprep.subr.bf16.mxu0 %v1910
    %2725 = vmatpush1.bf16.msra.mxu0 %v1909
    %2726 = vmatprep.subr.bf16.mxu0 %v1912
    %2727 = vmatpush1.bf16.msra.mxu0 %v1911
    %2728 = vmatprep.subr.bf16.mxu0 %v1914
    %2729 = vmatpush1.bf16.msra.mxu0 %v1913
    %2730 = vmatprep.subr.bf16.mxu0 %v1916
    %2731 = vmatpush1.bf16.msra.mxu0 %v1915
    %2732 = vmatprep.subr.bf16.mxu0 %v1918
    %2733 = vmatpush1.bf16.msra.mxu0 %v1917
    %2734 = vmatprep.subr.bf16.mxu0 %v1920
    %2735 = vmatpush1.bf16.msra.mxu0 %v1919
    %2736 = vmatprep.subr.bf16.mxu0 %v1922
    %2737 = vmatpush1.bf16.msra.mxu0 %v1921
    %2738 = vmatprep.subr.bf16.mxu0 %v1924
    %2739 = vmatpush1.bf16.msra.mxu0 %v1923
    %2740 = vmatprep.subr.bf16.mxu0 %v1926
    %2741 = vmatpush1.bf16.msra.mxu0 %v1925
    %2742 = vmatprep.subr.bf16.mxu0 %v1928
    %2743 = vmatpush1.bf16.msra.mxu0 %v1927
    %2744 = vmatprep.mubr.bf16.mxu0 %v488
    %2745 = vmatmul.mubr.bf16.gmra.mrb[0].mxu0 %v486
    %v2746 = vpop.f32.mrb[0].mxu0
    %v2747 = vadd.f32 %v2706, %v2746
    %v2748 = vpop.f32.mrb[0].mxu0
    %v2749 = vadd.f32 %v2708, %v2748
    %v2750 = vpop.f32.mrb[0].mxu0
    %v2751 = vpop.f32.mrb[0].mxu0
    %2752 = vdwg.mxu0
    %2753 = vmatprep.subr.bf16.mxu0 %v1930
    %2754 = vmatpush1.bf16.msra.mxu0 %v1929
    %2755 = vmatprep.subr.bf16.mxu0 %v1932
    %2756 = vmatpush1.bf16.msra.mxu0 %v1931
    %2757 = vmatprep.subr.bf16.mxu0 %v1934
    %2758 = vmatpush1.bf16.msra.mxu0 %v1933
    %2759 = vmatprep.subr.bf16.mxu0 %v1936
    %2760 = vmatpush1.bf16.msra.mxu0 %v1935
    %2761 = vmatprep.subr.bf16.mxu0 %v1938
    %2762 = vmatpush1.bf16.msra.mxu0 %v1937
    %2763 = vmatprep.subr.bf16.mxu0 %v1940
    %2764 = vmatpush1.bf16.msra.mxu0 %v1939
    %2765 = vmatprep.subr.bf16.mxu0 %v1942
    %2766 = vmatpush1.bf16.msra.mxu0 %v1941
    %2767 = vmatprep.subr.bf16.mxu0 %v1944
    %2768 = vmatpush1.bf16.msra.mxu0 %v1943
    %2769 = vmatprep.subr.bf16.mxu0 %v1946
    %2770 = vmatpush1.bf16.msra.mxu0 %v1945
    %2771 = vmatprep.subr.bf16.mxu0 %v1948
    %2772 = vmatpush1.bf16.msra.mxu0 %v1947
    %2773 = vmatprep.subr.bf16.mxu0 %v1950
    %2774 = vmatpush1.bf16.msra.mxu0 %v1949
    %2775 = vmatprep.subr.bf16.mxu0 %v1952
    %2776 = vmatpush1.bf16.msra.mxu0 %v1951
    %2777 = vmatprep.subr.bf16.mxu0 %v1954
    %2778 = vmatpush1.bf16.msra.mxu0 %v1953
    %2779 = vmatprep.subr.bf16.mxu0 %v1956
    %2780 = vmatpush1.bf16.msra.mxu0 %v1955
    %2781 = vmatprep.subr.bf16.mxu0 %v1958
    %2782 = vmatpush1.bf16.msra.mxu0 %v1957
    %2783 = vmatprep.subr.bf16.mxu0 %v1960
    %2784 = vmatpush1.bf16.msra.mxu0 %v1959
    %2785 = vmatprep.mubr.bf16.mxu0 %v526
    %2786 = vmatmul.mubr.bf16.gmra.mrb[0].mxu0 %v512
    %v2787 = vpop.f32.mrb[0].mxu0
    %v2788 = vadd.f32 %v2747, %v2787
    %v2789 = vpop.f32.mrb[0].mxu0
    %v2790 = vadd.f32 %v2749, %v2789
    %v2791 = vpop.f32.mrb[0].mxu0
    %v2792 = vpop.f32.mrb[0].mxu0
    %2793 = vdwg.mxu0
    %2794 = vmatprep.subr.bf16.mxu0 %v1962
    %2795 = vmatpush1.bf16.msra.mxu0 %v1961
    %2796 = vmatprep.subr.bf16.mxu0 %v1964
    %2797 = vmatpush1.bf16.msra.mxu0 %v1963
    %2798 = vmatprep.subr.bf16.mxu0 %v1966
    %2799 = vmatpush1.bf16.msra.mxu0 %v1965
    %2800 = vmatprep.subr.bf16.mxu0 %v1968
    %2801 = vmatpush1.bf16.msra.mxu0 %v1967
    %2802 = vmatprep.subr.bf16.mxu0 %v1970
    %2803 = vmatpush1.bf16.msra.mxu0 %v1969
    %2804 = vmatprep.subr.bf16.mxu0 %v1972
    %2805 = vmatpush1.bf16.msra.mxu0 %v1971
    %2806 = vmatprep.subr.bf16.mxu0 %v1974
    %2807 = vmatpush1.bf16.msra.mxu0 %v1973
    %2808 = vmatprep.subr.bf16.mxu0 %v1976
    %2809 = vmatpush1.bf16.msra.mxu0 %v1975
    %2810 = vmatprep.subr.bf16.mxu0 %v1978
    %2811 = vmatpush1.bf16.msra.mxu0 %v1977
    %2812 = vmatprep.subr.bf16.mxu0 %v1980
    %2813 = vmatpush1.bf16.msra.mxu0 %v1979
    %2814 = vmatprep.subr.bf16.mxu0 %v1982
    %2815 = vmatpush1.bf16.msra.mxu0 %v1981
    %2816 = vmatprep.subr.bf16.mxu0 %v1984
    %2817 = vmatpush1.bf16.msra.mxu0 %v1983
    %2818 = vmatprep.subr.bf16.mxu0 %v1986
    %2819 = vmatpush1.bf16.msra.mxu0 %v1985
    %2820 = vmatprep.subr.bf16.mxu0 %v1988
    %2821 = vmatpush1.bf16.msra.mxu0 %v1987
    %2822 = vmatprep.subr.bf16.mxu0 %v1990
    %2823 = vmatpush1.bf16.msra.mxu0 %v1989
    %2824 = vmatprep.subr.bf16.mxu0 %v1992
    %2825 = vmatpush1.bf16.msra.mxu0 %v1991
    %2826 = vmatprep.mubr.bf16.mxu0 %v536
    %2827 = vmatmul.mubr.bf16.gmra.mrb[0].mxu0 %v534
    %v2828 = vpop.f32.mrb[0].mxu0
    %v2829 = vadd.f32 %v2788, %v2828
    %v2830 = vpop.f32.mrb[0].mxu0
    %v2831 = vadd.f32 %v2790, %v2830
    %v2832 = vpop.f32.mrb[0].mxu0
    %v2833 = vpop.f32.mrb[0].mxu0
    %2834 = vdwg.mxu0
    %2835 = vmatprep.subr.bf16.mxu0 %v1994
    %2836 = vmatpush1.bf16.msra.mxu0 %v1993
    %2837 = vmatprep.subr.bf16.mxu0 %v1996
    %2838 = vmatpush1.bf16.msra.mxu0 %v1995
    %2839 = vmatprep.subr.bf16.mxu0 %v1998
    %2840 = vmatpush1.bf16.msra.mxu0 %v1997
    %2841 = vmatprep.subr.bf16.mxu0 %v2000
    %2842 = vmatpush1.bf16.msra.mxu0 %v1999
    %2843 = vmatprep.subr.bf16.mxu0 %v2002
    %2844 = vmatpush1.bf16.msra.mxu0 %v2001
    %2845 = vmatprep.subr.bf16.mxu0 %v2004
    %2846 = vmatpush1.bf16.msra.mxu0 %v2003
    %2847 = vmatprep.subr.bf16.mxu0 %v2006
    %2848 = vmatpush1.bf16.msra.mxu0 %v2005
    %2849 = vmatprep.subr.bf16.mxu0 %v2008
    %2850 = vmatpush1.bf16.msra.mxu0 %v2007
    %2851 = vmatprep.subr.bf16.mxu0 %v2010
    %2852 = vmatpush1.bf16.msra.mxu0 %v2009
    %2853 = vmatprep.subr.bf16.mxu0 %v2012
    %2854 = vmatpush1.bf16.msra.mxu0 %v2011
    %2855 = vmatprep.subr.bf16.mxu0 %v2014
    %2856 = vmatpush1.bf16.msra.mxu0 %v2013
    %2857 = vmatprep.subr.bf16.mxu0 %v2016
    %2858 = vmatpush1.bf16.msra.mxu0 %v2015
    %2859 = vmatprep.subr.bf16.mxu0 %v2018
    %2860 = vmatpush1.bf16.msra.mxu0 %v2017
    %2861 = vmatprep.subr.bf16.mxu0 %v2020
    %2862 = vmatpush1.bf16.msra.mxu0 %v2019
    %2863 = vmatprep.subr.bf16.mxu0 %v2022
    %2864 = vmatpush1.bf16.msra.mxu0 %v2021
    %2865 = vmatprep.subr.bf16.mxu0 %v2024
    %2866 = vmatpush1.bf16.msra.mxu0 %v2023
    %2867 = vmatprep.mubr.bf16.mxu0 %v533
    %2868 = vmatmul.mubr.bf16.gmra.mrb[0].mxu0 %v519
    %v2869 = vpop.f32.mrb[0].mxu0
    %v2870 = vadd.f32 %v2829, %v2869
    %v2871 = vpop.f32.mrb[0].mxu0
    %v2872 = vadd.f32 %v2831, %v2871
    %v2873 = vpop.f32.mrb[0].mxu0
    %v2874 = vpop.f32.mrb[0].mxu0
    %2875 = vdwg.mxu0
    %2876 = vmatprep.subr.bf16.mxu0 %v2026
    %2877 = vmatpush1.bf16.msra.mxu0 %v2025
    %2878 = vmatprep.subr.bf16.mxu0 %v2028
    %2879 = vmatpush1.bf16.msra.mxu0 %v2027
    %2880 = vmatprep.subr.bf16.mxu0 %v2030
    %2881 = vmatpush1.bf16.msra.mxu0 %v2029
    %2882 = vmatprep.subr.bf16.mxu0 %v2032
    %2883 = vmatpush1.bf16.msra.mxu0 %v2031
    %2884 = vmatprep.subr.bf16.mxu0 %v2034
    %2885 = vmatpush1.bf16.msra.mxu0 %v2033
    %2886 = vmatprep.subr.bf16.mxu0 %v2036
    %2887 = vmatpush1.bf16.msra.mxu0 %v2035
    %2888 = vmatprep.subr.bf16.mxu0 %v2038
    %2889 = vmatpush1.bf16.msra.mxu0 %v2037
    %2890 = vmatprep.subr.bf16.mxu0 %v2040
    %2891 = vmatpush1.bf16.msra.mxu0 %v2039
    %2892 = vmatprep.subr.bf16.mxu0 %v2042
    %2893 = vmatpush1.bf16.msra.mxu0 %v2041
    %2894 = vmatprep.subr.bf16.mxu0 %v2044
    %2895 = vmatpush1.bf16.msra.mxu0 %v2043
    %2896 = vmatprep.subr.bf16.mxu0 %v2046
    %2897 = vmatpush1.bf16.msra.mxu0 %v2045
    %2898 = vmatprep.subr.bf16.mxu0 %v2048
    %2899 = vmatpush1.bf16.msra.mxu0 %v2047
    %2900 = vmatprep.subr.bf16.mxu0 %v2050
    %2901 = vmatpush1.bf16.msra.mxu0 %v2049
    %2902 = vmatprep.subr.bf16.mxu0 %v2052
    %2903 = vmatpush1.bf16.msra.mxu0 %v2051
    %2904 = vmatprep.subr.bf16.mxu0 %v2054
    %2905 = vmatpush1.bf16.msra.mxu0 %v2053
    %2906 = vmatprep.subr.bf16.mxu0 %v2056
    %2907 = vmatpush1.bf16.msra.mxu0 %v2055
    %2908 = vmatprep.mubr.bf16.mxu0 %v537
    %2909 = vmatmul.mubr.bf16.gmra.mrb[0].mxu0 %v535
    %v2910 = vpop.f32.mrb[0].mxu0
    %v2911 = vadd.f32 %v2870, %v2910
    %v2912 = vpop.f32.mrb[0].mxu0
    %v2913 = vadd.f32 %v2872, %v2912
    %v2914 = vpop.f32.mrb[0].mxu0
    %v2915 = vpop.f32.mrb[0].mxu0
    %2916 = vdwg.mxu0
    %2917 = vmatprep.subr.bf16.mxu0 %v2058
    %2918 = vmatpush1.bf16.msra.mxu0 %v2057
    %2919 = vmatprep.subr.bf16.mxu0 %v2060
    %2920 = vmatpush1.bf16.msra.mxu0 %v2059
    %2921 = vmatprep.subr.bf16.mxu0 %v2062
    %2922 = vmatpush1.bf16.msra.mxu0 %v2061
    %2923 = vmatprep.subr.bf16.mxu0 %v2064
    %2924 = vmatpush1.bf16.msra.mxu0 %v2063
    %2925 = vmatprep.subr.bf16.mxu0 %v2066
    %2926 = vmatpush1.bf16.msra.mxu0 %v2065
    %2927 = vmatprep.subr.bf16.mxu0 %v2068
    %2928 = vmatpush1.bf16.msra.mxu0 %v2067
    %2929 = vmatprep.subr.bf16.mxu0 %v2070
    %2930 = vmatpush1.bf16.msra.mxu0 %v2069
    %2931 = vmatprep.subr.bf16.mxu0 %v2072
    %2932 = vmatpush1.bf16.msra.mxu0 %v2071
    %2933 = vmatprep.subr.bf16.mxu0 %v2074
    %2934 = vmatpush1.bf16.msra.mxu0 %v2073
    %2935 = vmatprep.subr.bf16.mxu0 %v2076
    %2936 = vmatpush1.bf16.msra.mxu0 %v2075
    %2937 = vmatprep.subr.bf16.mxu0 %v2078
    %2938 = vmatpush1.bf16.msra.mxu0 %v2077
    %2939 = vmatprep.subr.bf16.mxu0 %v2080
    %2940 = vmatpush1.bf16.msra.mxu0 %v2079
    %2941 = vmatprep.subr.bf16.mxu0 %v2082
    %2942 = vmatpush1.bf16.msra.mxu0 %v2081
    %2943 = vmatprep.subr.bf16.mxu0 %v2084
    %2944 = vmatpush1.bf16.msra.mxu0 %v2083
    %2945 = vmatprep.subr.bf16.mxu0 %v2086
    %2946 = vmatpush1.bf16.msra.mxu0 %v2085
    %2947 = vmatprep.subr.bf16.mxu0 %v2088
    %2948 = vmatpush1.bf16.msra.mxu0 %v2087
    %2949 = vmatprep.mubr.bf16.mxu0 %v575
    %2950 = vmatmul.mubr.bf16.gmra.mrb[0].mxu0 %v561
    %v2951 = vpop.f32.mrb[0].mxu0
    %v2952 = vadd.f32 %v2911, %v2951
    %v2953 = vpop.f32.mrb[0].mxu0
    %v2954 = vadd.f32 %v2913, %v2953
    %v2955 = vpop.f32.mrb[0].mxu0
    %v2956 = vpop.f32.mrb[0].mxu0
    %2957 = vdwg.mxu0
    %2958 = vmatprep.subr.bf16.mxu0 %v2090
    %2959 = vmatpush1.bf16.msra.mxu0 %v2089
    %2960 = vmatprep.subr.bf16.mxu0 %v2092
    %2961 = vmatpush1.bf16.msra.mxu0 %v2091
    %2962 = vmatprep.subr.bf16.mxu0 %v2094
    %2963 = vmatpush1.bf16.msra.mxu0 %v2093
    %2964 = vmatprep.subr.bf16.mxu0 %v2096
    %2965 = vmatpush1.bf16.msra.mxu0 %v2095
    %2966 = vmatprep.subr.bf16.mxu0 %v2098
    %2967 = vmatpush1.bf16.msra.mxu0 %v2097
    %2968 = vmatprep.subr.bf16.mxu0 %v2100
    %2969 = vmatpush1.bf16.msra.mxu0 %v2099
    %2970 = vmatprep.subr.bf16.mxu0 %v2102
    %2971 = vmatpush1.bf16.msra.mxu0 %v2101
    %2972 = vmatprep.subr.bf16.mxu0 %v2104
    %2973 = vmatpush1.bf16.msra.mxu0 %v2103
    %2974 = vmatprep.subr.bf16.mxu0 %v2106
    %2975 = vmatpush1.bf16.msra.mxu0 %v2105
    %2976 = vmatprep.subr.bf16.mxu0 %v2108
    %2977 = vmatpush1.bf16.msra.mxu0 %v2107
    %2978 = vmatprep.subr.bf16.mxu0 %v2110
    %2979 = vmatpush1.bf16.msra.mxu0 %v2109
    %2980 = vmatprep.subr.bf16.mxu0 %v2112
    %2981 = vmatpush1.bf16.msra.mxu0 %v2111
    %2982 = vmatprep.subr.bf16.mxu0 %v2114
    %2983 = vmatpush1.bf16.msra.mxu0 %v2113
    %2984 = vmatprep.subr.bf16.mxu0 %v2116
    %2985 = vmatpush1.bf16.msra.mxu0 %v2115
    %2986 = vmatprep.subr.bf16.mxu0 %v2118
    %2987 = vmatpush1.bf16.msra.mxu0 %v2117
    %2988 = vmatprep.subr.bf16.mxu0 %v2120
    %2989 = vmatpush1.bf16.msra.mxu0 %v2119
    %2990 = vmatprep.mubr.bf16.mxu0 %v585
    %2991 = vmatmul.mubr.bf16.gmra.mrb[0].mxu0 %v583
    %v2992 = vpop.f32.mrb[0].mxu0
    %v2993 = vadd.f32 %v2952, %v2992
    %v2994 = vpop.f32.mrb[0].mxu0
    %v2995 = vadd.f32 %v2954, %v2994
    %v2996 = vpop.f32.mrb[0].mxu0
    %v2997 = vpop.f32.mrb[0].mxu0
    %2998 = vdwg.mxu0
    %2999 = vmatprep.subr.bf16.mxu0 %v2122
    %3000 = vmatpush1.bf16.msra.mxu0 %v2121
    %3001 = vmatprep.subr.bf16.mxu0 %v2124
    %3002 = vmatpush1.bf16.msra.mxu0 %v2123
    %3003 = vmatprep.subr.bf16.mxu0 %v2126
    %3004 = vmatpush1.bf16.msra.mxu0 %v2125
    %3005 = vmatprep.subr.bf16.mxu0 %v2128
    %3006 = vmatpush1.bf16.msra.mxu0 %v2127
    %3007 = vmatprep.subr.bf16.mxu0 %v2130
    %3008 = vmatpush1.bf16.msra.mxu0 %v2129
    %3009 = vmatprep.subr.bf16.mxu0 %v2132
    %3010 = vmatpush1.bf16.msra.mxu0 %v2131
    %3011 = vmatprep.subr.bf16.mxu0 %v2134
    %3012 = vmatpush1.bf16.msra.mxu0 %v2133
    %3013 = vmatprep.subr.bf16.mxu0 %v2136
    %3014 = vmatpush1.bf16.msra.mxu0 %v2135
    %3015 = vmatprep.subr.bf16.mxu0 %v2138
    %3016 = vmatpush1.bf16.msra.mxu0 %v2137
    %3017 = vmatprep.subr.bf16.mxu0 %v2140
    %3018 = vmatpush1.bf16.msra.mxu0 %v2139
    %3019 = vmatprep.subr.bf16.mxu0 %v2142
    %3020 = vmatpush1.bf16.msra.mxu0 %v2141
    %3021 = vmatprep.subr.bf16.mxu0 %v2144
    %3022 = vmatpush1.bf16.msra.mxu0 %v2143
    %3023 = vmatprep.subr.bf16.mxu0 %v2146
    %3024 = vmatpush1.bf16.msra.mxu0 %v2145
    %3025 = vmatprep.subr.bf16.mxu0 %v2148
    %3026 = vmatpush1.bf16.msra.mxu0 %v2147
    %3027 = vmatprep.subr.bf16.mxu0 %v2150
    %3028 = vmatpush1.bf16.msra.mxu0 %v2149
    %3029 = vmatprep.subr.bf16.mxu0 %v2152
    %3030 = vmatpush1.bf16.msra.mxu0 %v2151
    %3031 = vmatprep.mubr.bf16.mxu0 %v582
    %3032 = vmatmul.mubr.bf16.gmra.mrb[0].mxu0 %v568
    %v3033 = vpop.f32.mrb[0].mxu0
    %v3034 = vadd.f32 %v2993, %v3033
    %v3035 = vpop.f32.mrb[0].mxu0
    %v3036 = vadd.f32 %v2995, %v3035
    %v3037 = vpop.f32.mrb[0].mxu0
    %v3038 = vpop.f32.mrb[0].mxu0
    %3039 = vdwg.mxu0
    %3040 = vmatprep.subr.bf16.mxu0 %v2154
    %3041 = vmatpush1.bf16.msra.mxu0 %v2153
    %3042 = vmatprep.subr.bf16.mxu0 %v2156
    %3043 = vmatpush1.bf16.msra.mxu0 %v2155
    %3044 = vmatprep.subr.bf16.mxu0 %v2158
    %3045 = vmatpush1.bf16.msra.mxu0 %v2157
    %3046 = vmatprep.subr.bf16.mxu0 %v2160
    %3047 = vmatpush1.bf16.msra.mxu0 %v2159
    %3048 = vmatprep.subr.bf16.mxu0 %v2162
    %3049 = vmatpush1.bf16.msra.mxu0 %v2161
    %3050 = vmatprep.subr.bf16.mxu0 %v2164
    %3051 = vmatpush1.bf16.msra.mxu0 %v2163
    %3052 = vmatprep.subr.bf16.mxu0 %v2166
    %3053 = vmatpush1.bf16.msra.mxu0 %v2165
    %3054 = vmatprep.subr.bf16.mxu0 %v2168
    %3055 = vmatpush1.bf16.msra.mxu0 %v2167
    %3056 = vmatprep.subr.bf16.mxu0 %v2170
    %3057 = vmatpush1.bf16.msra.mxu0 %v2169
    %3058 = vmatprep.subr.bf16.mxu0 %v2172
    %3059 = vmatpush1.bf16.msra.mxu0 %v2171
    %3060 = vmatprep.subr.bf16.mxu0 %v2174
    %3061 = vmatpush1.bf16.msra.mxu0 %v2173
    %3062 = vmatprep.subr.bf16.mxu0 %v2176
    %3063 = vmatpush1.bf16.msra.mxu0 %v2175
    %3064 = vmatprep.subr.bf16.mxu0 %v2178
    %3065 = vmatpush1.bf16.msra.mxu0 %v2177
    %3066 = vmatprep.subr.bf16.mxu0 %v2180
    %3067 = vmatpush1.bf16.msra.mxu0 %v2179
    %3068 = vmatprep.subr.bf16.mxu0 %v2182
    %3069 = vmatpush1.bf16.msra.mxu0 %v2181
    %3070 = vmatprep.subr.bf16.mxu0 %v2184
    %3071 = vmatpush1.bf16.msra.mxu0 %v2183
    %3072 = vmatprep.mubr.bf16.mxu0 %v586
    %3073 = vmatmul.mubr.bf16.gmra.mrb[0].mxu0 %v584
    %v3074 = vpop.f32.mrb[0].mxu0
    %v3075 = vadd.f32 %v3034, %v3074
    %v3076 = vpop.f32.mrb[0].mxu0
    %v3077 = vadd.f32 %v3036, %v3076
    %v3078 = vpop.f32.mrb[0].mxu0
    %v3079 = vpop.f32.mrb[0].mxu0
    %3080 = vdwg.mxu0
    %3081 = vmatprep.subr.bf16.mxu0 %v2186
    %3082 = vmatpush1.bf16.msra.mxu0 %v2185
    %3083 = vmatprep.subr.bf16.mxu0 %v2188
    %3084 = vmatpush1.bf16.msra.mxu0 %v2187
    %3085 = vmatprep.subr.bf16.mxu0 %v2190
    %3086 = vmatpush1.bf16.msra.mxu0 %v2189
    %3087 = vmatprep.subr.bf16.mxu0 %v2192
    %3088 = vmatpush1.bf16.msra.mxu0 %v2191
    %3089 = vmatprep.subr.bf16.mxu0 0
    %3090 = vmatpush1.bf16.msra.mxu0 0
    %3091 = vmatprep.subr.bf16.mxu0 0
    %3092 = vmatpush1.bf16.msra.mxu0 0
    %3093 = vmatprep.subr.bf16.mxu0 0
    %3094 = vmatpush1.bf16.msra.mxu0 0
    %3095 = vmatprep.subr.bf16.mxu0 0
    %3096 = vmatpush1.bf16.msra.mxu0 0
    %3097 = vmatprep.subr.bf16.mxu0 0
    %3098 = vmatpush1.bf16.msra.mxu0 0
    %3099 = vmatprep.subr.bf16.mxu0 0
    %3100 = vmatpush1.bf16.msra.mxu0 0
    %3101 = vmatprep.subr.bf16.mxu0 0
    %3102 = vmatpush1.bf16.msra.mxu0 0
    %3103 = vmatprep.subr.bf16.mxu0 0
    %3104 = vmatpush1.bf16.msra.mxu0 0
    %3105 = vmatprep.subr.bf16.mxu0 0
    %3106 = vmatpush1.bf16.msra.mxu0 0
    %3107 = vmatprep.subr.bf16.mxu0 0
    %3108 = vmatpush1.bf16.msra.mxu0 0
    %3109 = vmatprep.subr.bf16.mxu0 0
    %3110 = vmatpush1.bf16.msra.mxu0 0
    %3111 = vmatprep.subr.bf16.mxu0 0
    %3112 = vmatpush1.bf16.msra.mxu0 0
    %3113 = vmatprep.mubr.bf16.mxu0 0
    %3114 = vmatmul.mubr.bf16.gmra.mrb[0].mxu0 %v2587
    %v3115 = vpop.f32.mrb[0].mxu0
    %v3116 = vadd.f32 %v3075, %v3115
    %v3117 = vpop.f32.mrb[0].mxu0
    %v3118 = vadd.f32 %v3077, %v3117
    %v3119 = vpop.f32.mrb[0].mxu0
    %v3120 = vpop.f32.mrb[0].mxu0
    %3121 = vdwg.mxu0
    %vm3122 = vcmask 1041408
    %v3123 = vsel %vm3122, %v3116, 0.0
    %v3124 = vrot.slane %v3123, 4
    %v3125 = vadd.f32 %v3123, %v3124
    %v3126 = vrot.slane %v3125, 2
    %v3127 = vadd.f32 %v3125, %v3126
    %v3128 = vrot.slane %v3127, 1
    %v3129 = vadd.f32 %v3127, %v3128
    %v3130 = vsel %vm3122, %v3118, 0.0
    %v3131 = vrot.slane %v3130, 4
    %v3132 = vadd.f32 %v3130, %v3131
    %v3133 = vrot.slane %v3132, 2
    %v3134 = vadd.f32 %v3132, %v3133
    %v3135 = vrot.slane %v3134, 1
    %v3136 = vadd.f32 %v3134, %v3135
    %v3137 = vrcp.pop 2.0
    %v3138 = vmul.f32 %v3129, %v3137
    %v3139 = vmul.f32 %v3136, %v3137
    %v3140 = vsub.f32 %v3116, %v3138
    %v3141 = vsub.f32 %v3118, %v3139
    %v3142 = vmul.f32 %v3140, %v3140
    %v3143 = vmul.f32 %v3141, %v3141
    %v3144 = vsel %vm3122, %v3142, 0.0
    %v3145 = vrot.slane %v3144, 4
    %v3146 = vadd.f32 %v3144, %v3145
    %v3147 = vrot.slane %v3146, 2
    %v3148 = vadd.f32 %v3146, %v3147
    %v3149 = vrot.slane %v3148, 1
    %v3150 = vadd.f32 %v3148, %v3149
    %v3151 = vsel %vm3122, %v3143, 0.0
    %v3152 = vrot.slane %v3151, 4
    %v3153 = vadd.f32 %v3151, %v3152
    %v3154 = vrot.slane %v3153, 2
    %v3155 = vadd.f32 %v3153, %v3154
    %v3156 = vrot.slane %v3155, 1
    %v3157 = vadd.f32 %v3155, %v3156
    %v3158 = vmul.f32 %v3150, %v3137
    %v3159 = vmul.f32 %v3157, %v3137
    %v3160 = vadd.f32 %v3158, 1e-05
    %v3161 = vadd.f32 %v3159, 1e-05
    %v3162 = vrsqrt.pop %v3160
    %v3163 = vrsqrt.pop %v3161
    %v3164 = vmul.f32 %v3140, %v3162
    %v3165 = vmul.f32 %v3141, %v3163
    %v3166 = vld [vmem:[%s3] sm:$0x3]
    %v3168 = vlaneseq
    %v3169 = vshrl.u32 %v3168, 7
    %v3170 = vsub.s32 0, %v3169
    %v3171 = vrot.slane %v3166, %v3170
    %v3172 = vlaneseq
    %v3173 = vshrl.u32 %v3172, 7
    %v3174 = vsub.s32 1, %v3173
    %v3175 = vrot.slane %v3166, %v3174
    %v3178 = vmul.f32 %v3164, %v3171
    %v3179 = vmul.f32 %v3165, %v3175
    %v3180 = vld [vmem:[%s4] sm:$0x3]
    %v3182 = vlaneseq
    %v3183 = vshrl.u32 %v3182, 7
    %v3184 = vsub.s32 0, %v3183
    %v3185 = vrot.slane %v3180, %v3184
    %v3186 = vlaneseq
    %v3187 = vshrl.u32 %v3186, 7
    %v3188 = vsub.s32 1, %v3187
    %v3189 = vrot.slane %v3180, %v3188
    %v3192 = vadd.f32 %v3178, %v3185
    %v3193 = vadd.f32 %v3179, %v3189
    %v3194 = vmax.f32 %v3192, 0.0
    %v3195 = vmax.f32 %v3193, 0.0
    %v3196 = vpack.c.bf16 %v3194, %v3194
    %v3197 = vpack.c.bf16 %v3195, %v3195
    %v3198 = vld [vmem:[%s5] sm:$0xf]
    %v3199 = vld [vmem:[%s5 + $0x4] sm:$0xf]
    %v3200 = vld [vmem:[%s5 + $0x8] sm:$0xf]
    %v3201 = vld [vmem:[%s5 + $0xc] sm:$0xf]
    %v3202 = vld [vmem:[%s5 + $0x10] sm:$0xf]
    %v3203 = vld [vmem:[%s5 + $0x14] sm:$0xf]
    %v3204 = vld [vmem:[%s5 + $0x18] sm:$0xf]
    %v3205 = vld [vmem:[%s5 + $0x1c] sm:$0xf]
    %v3206 = vld [vmem:[%s5 + $0x20] sm:$0xf]
    %v3207 = vld [vmem:[%s5 + $0x24] sm:$0xf]
    %v3208 = vld [vmem:[%s5 + $0x28] sm:$0xf]
    %v3209 = vld [vmem:[%s5 + $0x2c] sm:$0xf]
    %v3210 = vld [vmem:[%s5 + $0x30] sm:$0xf]
    %v3211 = vld [vmem:[%s5 + $0x34] sm:$0xf]
    %v3212 = vld [vmem:[%s5 + $0x38] sm:$0xf]
    %v3213 = vld [vmem:[%s5 + $0x3c] sm:$0xf]
    %v3214 = vld [vmem:[%s5 + $0x40] sm:$0xf]
    %v3215 = vld [vmem:[%s5 + $0x44] sm:$0xf]
    %v3216 = vld [vmem:[%s5 + $0x48] sm:$0xf]
    %v3217 = vld [vmem:[%s5 + $0x4c] sm:$0xf]
    %v3218 = vld [vmem:[%s5 + $0x50] sm:$0xf]
    %v3219 = vld [vmem:[%s5 + $0x54] sm:$0xf]
    %v3220 = vld [vmem:[%s5 + $0x58] sm:$0xf]
    %v3221 = vld [vmem:[%s5 + $0x5c] sm:$0xf]
    %v3222 = vld [vmem:[%s5 + $0x60] sm:$0xf]
    %v3223 = vld [vmem:[%s5 + $0x64] sm:$0xf]
    %v3224 = vld [vmem:[%s5 + $0x68] sm:$0xf]
    %v3225 = vld [vmem:[%s5 + $0x6c] sm:$0xf]
    %v3226 = vld [vmem:[%s5 + $0x70] sm:$0xf]
    %v3227 = vld [vmem:[%s5 + $0x74] sm:$0xf]
    %v3228 = vld [vmem:[%s5 + $0x78] sm:$0xf]
    %v3229 = vld [vmem:[%s5 + $0x7c] sm:$0xf]
    %v3230 = vld [vmem:[%s6] sm:$0x1]
    %v3232 = vlaneseq
    %v3233 = vshrl.u32 %v3232, 7
    %v3234 = vsub.s32 0, %v3233
    %v3235 = vrot.slane %v3230, %v3234
    %v3269 = vunpack.c.l.b16 %v3198
    %v3270 = vunpack.c.l.b16 %v3199
    %v3271 = vunpack.c.l.b16 %v3200
    %v3272 = vunpack.c.l.b16 %v3201
    %v3273 = vunpack.c.l.b16 %v3202
    %v3274 = vunpack.c.l.b16 %v3203
    %v3275 = vunpack.c.l.b16 %v3204
    %v3276 = vunpack.c.l.b16 %v3205
    %v3277 = vunpack.c.l.b16 %v3206
    %v3278 = vunpack.c.l.b16 %v3207
    %v3279 = vunpack.c.l.b16 %v3208
    %v3280 = vunpack.c.l.b16 %v3209
    %v3281 = vunpack.c.l.b16 %v3210
    %v3282 = vunpack.c.l.b16 %v3211
    %v3283 = vunpack.c.l.b16 %v3212
    %v3284 = vunpack.c.l.b16 %v3213
    %v3285 = vunpack.c.l.b16 %v3214
    %v3286 = vunpack.c.l.b16 %v3215
    %v3287 = vunpack.c.l.b16 %v3216
    %v3288 = vunpack.c.l.b16 %v3217
    %v3289 = vunpack.c.l.b16 %v3218
    %v3290 = vunpack.c.l.b16 %v3219
    %v3291 = vunpack.c.l.b16 %v3220
    %v3292 = vunpack.c.l.b16 %v3221
    %v3293 = vunpack.c.l.b16 %v3222
    %v3294 = vunpack.c.l.b16 %v3223
    %v3295 = vunpack.c.l.b16 %v3224
    %v3296 = vunpack.c.l.b16 %v3225
    %v3297 = vunpack.c.l.b16 %v3226
    %v3298 = vunpack.c.l.b16 %v3227
    %v3299 = vunpack.c.l.b16 %v3228
    %v3300 = vunpack.c.l.b16 %v3229
    %v3301 = vpack.c.b16 %v3270, %v3269
    %v3302 = vpack.c.b16 %v3272, %v3271
    %v3303 = vpack.c.b16 %v3274, %v3273
    %v3304 = vpack.c.b16 %v3276, %v3275
    %v3305 = vpack.c.b16 %v3278, %v3277
    %v3306 = vpack.c.b16 %v3280, %v3279
    %v3307 = vpack.c.b16 %v3282, %v3281
    %v3308 = vpack.c.b16 %v3284, %v3283
    %v3309 = vpack.c.b16 %v3286, %v3285
    %v3310 = vpack.c.b16 %v3288, %v3287
    %v3311 = vpack.c.b16 %v3290, %v3289
    %v3312 = vpack.c.b16 %v3292, %v3291
    %v3313 = vpack.c.b16 %v3294, %v3293
    %v3314 = vpack.c.b16 %v3296, %v3295
    %v3315 = vpack.c.b16 %v3298, %v3297
    %v3316 = vpack.c.b16 %v3300, %v3299
    %3333 = vmatprep.subr.bf16.mxu0 0
    %3334 = vmatpush1.bf16.msra.mxu0 %v3301
    %3335 = vmatprep.subr.bf16.mxu0 0
    %3336 = vmatpush1.bf16.msra.mxu0 %v3302
    %3337 = vmatprep.subr.bf16.mxu0 0
    %3338 = vmatpush1.bf16.msra.mxu0 %v3303
    %3339 = vmatprep.subr.bf16.mxu0 0
    %3340 = vmatpush1.bf16.msra.mxu0 %v3304
    %3341 = vmatprep.subr.bf16.mxu0 0
    %3342 = vmatpush1.bf16.msra.mxu0 %v3305
    %3343 = vmatprep.subr.bf16.mxu0 0
    %3344 = vmatpush1.bf16.msra.mxu0 %v3306
    %3345 = vmatprep.subr.bf16.mxu0 0
    %3346 = vmatpush1.bf16.msra.mxu0 %v3307
    %3347 = vmatprep.subr.bf16.mxu0 0
    %3348 = vmatpush1.bf16.msra.mxu0 %v3308
    %3349 = vmatprep.subr.bf16.mxu0 0
    %3350 = vmatpush1.bf16.msra.mxu0 %v3309
    %3351 = vmatprep.subr.bf16.mxu0 0
    %3352 = vmatpush1.bf16.msra.mxu0 %v3310
    %3353 = vmatprep.subr.bf16.mxu0 0
    %3354 = vmatpush1.bf16.msra.mxu0 %v3311
    %3355 = vmatprep.subr.bf16.mxu0 0
    %3356 = vmatpush1.bf16.msra.mxu0 %v3312
    %3357 = vmatprep.subr.bf16.mxu0 0
    %3358 = vmatpush1.bf16.msra.mxu0 %v3313
    %3359 = vmatprep.subr.bf16.mxu0 0
    %3360 = vmatpush1.bf16.msra.mxu0 %v3314
    %3361 = vmatprep.subr.bf16.mxu0 0
    %3362 = vmatpush1.bf16.msra.mxu0 %v3315
    %3363 = vmatprep.subr.bf16.mxu0 0
    %3364 = vmatpush1.bf16.msra.mxu0 %v3316
    %3365 = vmatprep.mubr.bf16.mxu0 %v3197
    %3366 = vmatmul.mubr.bf16.gmra.mrb[0].mxu0 %v3196
    %v3367 = vpop.f32.mrb[0].mxu0
    %v3368 = vadd.f32 %v3235, %v3367
    %v3369 = vpop.f32.mrb[0].mxu0
    %v3370 = vpop.f32.mrb[0].mxu0
    %v3371 = vpop.f32.mrb[0].mxu0
    %3372 = vdwg.mxu0
    %vm3373 = vcmask 123904
    %3374 = vst.msk [vmem:[#allocation2] sm:$0x3] %vm3373, %v3368
    // Predicated region
    $region30: #{gt_net_forward.9} parent=1 // pred_check
      _
    $region31: #{gt_net_forward.9} parent=1 // pred_check_branch
      %3376 = sbr.rel (0) target = $region33
    $region32: #{gt_net_forward.9} parent=1 // pred_region
      %s3378 = ssub.s32 32, 32
      %3379 = vsyncadd [#allocation3], %s3378
      %s3381 = sshll.u32 [#allocation2], 4
      %s3382 = int_to_ptr.vmem [resolvable:$true] %s3381
      %3384 = dma.vmem_to_hbm [thread:$0]  %s3382, 32, %s7, [#allocation3]
    $region33: #{gt_net_forward.9} parent=1 // pred_fallthru
      _
    // Predicated region
    $region34: #{gt_net_forward.9} parent=1 // pred_check
      _
    $region35: #{gt_net_forward.9} parent=1 // pred_check_branch
      %3386 = sbr.rel (0) target = $region37
    $region36: #{gt_net_forward.9} parent=1 // pred_region
      %3387 = dma.done [#allocation3], 32
    $region37: #{gt_net_forward.9} parent=1 // pred_fallthru
      _
    %3388 = vsyncpa [#allocation3], 1

</llo_original>
